<compile_context>
chip_gen: v5e
topology: v5e:2x2
jax: 0.10.0
libtpu: 0.0.40
codegen_flags: <defaults>
</compile_context>

<pallas_src>
import functools

import jax
import jax.numpy as jnp
from jax import lax
from jax.experimental import pallas as pl
from jax.experimental.pallas import tpu as pltpu


# --------------------------- fused conv+ELU+pool kernel ----------------------
def _l0sx_fused_kernel(xq_ref, w_ref, b_ref, col_ref, conv_ref, pool_ref,
                       *, K, Ho, Wo, precision):
    """One batch element: dilated(d=2) conv + bias + ELU + maxpool(3,2,1).

    xq_ref  : (1, 4, K*Cin, Hq*Wo)  parity-split, width-tap packed, padded input
    w_ref   : (K, Cout, K*Cin)      weights grouped per height tap
    b_ref   : (Cout, 1)             bias
    col_ref : (1, Ho*Wo)            column index j of each flattened position
    conv_ref: (1, 4, Cout, Ho*Wo)   ELU(conv) in parity-quadrant layout (lane dense)
    pool_ref: (1, Cout, Ho*Wo)      pooled output (lane dense)
    """
    HoWo = Ho * Wo
    neg_inf = jnp.float32(-jnp.inf)

    # ---- conv + bias + ELU, one parity quadrant at a time (q = 2*a + b) -----
    # Static unrolled tap loop: MXU pushes interleave with the next tap's VMEM
    # slice.  Cout underfills the MXU rows; batch is kept on the (parallel)
    # grid for megacore instead of being folded into lanes - at these sizes the
    # kernel is HBM/overhead bound, not MXU bound.
    elu_q = []
    for q in range(4):
        acc = jnp.dot(w_ref[0], xq_ref[0, q, :, 0:HoWo],
                      preferred_element_type=jnp.float32, precision=precision)
        for kh in range(1, K):  # height taps: contiguous VMEM slices, no HBM cost
            rhs = xq_ref[0, q, :, kh * Wo: kh * Wo + HoWo]    # (K*Cin, Ho*Wo)
            acc = acc + jnp.dot(w_ref[kh], rhs,
                                preferred_element_type=jnp.float32,
                                precision=precision)
        acc = acc + b_ref[...]                                # (Cout, 1) broadcast
        # ELU (alpha=1); exp argument is clamped so no inf is ever produced.
        e = jnp.where(acc > 0.0, acc, jnp.exp(jnp.minimum(acc, 0.0)) - 1.0)
        conv_ref[0, q] = e
        elu_q.append(e)

    q00, q01, q10, q11 = elu_q

    # ---- fused 3x3 / stride-2 / pad-1 max pool -------------------------------
    # pooled[i, j] = max over conv rows {2i-1, 2i, 2i+1} x cols {2j-1, 2j, 2j+1}
    #             = max(q00[i,j], q01[i,j], q01[i,j-1], q10[i,j], q10[i-1,j],
    #                   q11[i,j], q11[i,j-1], q11[i-1,j], q11[i-1,j-1])
    # with out-of-range (i-1 < 0 / j-1 < 0) treated as -inf.  In the flattened
    # (i*Wo + j) lane layout a (-1) row/col access is a lane roll by Wo / 1;
    # invalid (and wrapped) positions are masked to -inf.
    first_col = col_ref[...] == 0                                    # j == 0
    first_row = lax.broadcasted_iota(jnp.int32, (1, HoWo), 1) < Wo   # i == 0

    def shifted(x, s, invalid):
        # y[k] = x[k - s] where valid, else -inf
        return jnp.where(invalid, neg_inf, pltpu.roll(x, shift=s, axis=1))

    # init from real data (no -inf fill of the accumulator)
    m = jnp.maximum(jnp.maximum(q00, q01), jnp.maximum(q10, q11))
    m = jnp.maximum(m, shifted(q01, 1, first_col))
    m = jnp.maximum(m, shifted(q10, Wo, first_row))
    m = jnp.maximum(m, shifted(q11, 1, first_col))
    m = jnp.maximum(m, shifted(q11, Wo, first_row))
    m = jnp.maximum(m, shifted(q11, Wo + 1,
                               jnp.logical_or(first_row, first_col)))
    pool_ref[0] = m


# ---------------------------------- wrapper ----------------------------------
def l0sx_forward(x, weight, bias, *, dilation=2, matmul_dtype=jnp.float32,
                 vmem_limit_bytes=48 * 1024 * 1024):
    """L0SX forward: returns (pooled, conved).

    x: (N, Cin, H, W) f32 NCHW, weight: (Cout, Cin, K, K), bias: (Cout,).
    Set matmul_dtype=jnp.bfloat16 on v6e/v7x for ~3x MXU throughput (f32
    accumulation is kept); default f32 keeps the output exact vs. the f32 ref.
    """
    N, Cin, H, W = x.shape
    Cout, Cin_w, K, K_w = weight.shape
    assert Cin_w == Cin and K_w == K and K % 2 == 1
    assert dilation == 2, "parity-quadrant fast path assumes dilation == 2"
    assert H % 2 == 0 and W % 2 == 0, "even H, W required"
    # TODO(synk): support odd H/W (PyTorch MaxPool2d(3,2,1) allows them).

    pad = dilation * (K // 2)                 # 'same' padding (inferno convention)
    Ho, Wo = H // 2, W // 2
    Hq, Wq = (H + 2 * pad) // 2, (W + 2 * pad) // 2   # per-parity padded extents
    KC, HoWo = K * Cin, Ho * Wo

    # ---- layout glue: one cheap pass over the (small) input ------------------
    # Parity-split the zero-padded input and pre-extract the K *width* taps so
    # each in-kernel height-tap matmul RHS is a contiguous (K*Cin, Ho*Wo) VMEM
    # slice.  HBM footprint is K x the input - the K^2 x HBM im2col is gone.
    xp = jnp.pad(x, ((0, 0), (0, 0), (pad, pad), (pad, pad)))
    xq = xp.reshape(N, Cin, Hq, 2, Wq, 2)          # [n,ci,u,a,v,b] = xp[n,ci,2u+a,2v+b]
    xq = xq.transpose(0, 3, 5, 1, 2, 4)            # (N, 2, 2, Cin, Hq, Wq)
    xq = jnp.stack([xq[..., kw:kw + Wo] for kw in range(K)], axis=3)
    xq = xq.reshape(N, 4, KC, Hq * Wo).astype(matmul_dtype)

    # w2[kh, co, kw*Cin + ci] = weight[co, ci, kh, kw]
    w2 = weight.transpose(2, 0, 3, 1).reshape(K, Cout, KC).astype(matmul_dtype)
    b2 = bias.reshape(Cout, 1).astype(jnp.float32)
    col = jnp.tile(jnp.arange(Wo, dtype=jnp.int32), Ho).reshape(1, HoWo)

    precision = (lax.Precision.HIGHEST if matmul_dtype == jnp.float32
                 else lax.Precision.DEFAULT)
    kernel = functools.partial(_l0sx_fused_kernel, K=K, Ho=Ho, Wo=Wo,
                               precision=precision)

    # TODO(synk): for large H*W, add a second grid axis tiling the flattened
    # Ho*Wo dimension so per-step blocks stay a few MB (v7x VMEM is 64 MiB).
    conv_q, pool_flat = pl.pallas_call(
        kernel,
        grid=(N,),
        in_specs=[
            pl.BlockSpec((1, 4, KC, Hq * Wo), lambda n: (n, 0, 0, 0)),
            pl.BlockSpec((K, Cout, KC), lambda n: (0, 0, 0)),
            pl.BlockSpec((Cout, 1), lambda n: (0, 0)),
            pl.BlockSpec((1, HoWo), lambda n: (0, 0)),
        ],
        out_specs=[
            pl.BlockSpec((1, 4, Cout, HoWo), lambda n: (n, 0, 0, 0)),
            pl.BlockSpec((1, Cout, HoWo), lambda n: (n, 0, 0)),
        ],
        out_shape=[
            jax.ShapeDtypeStruct((N, 4, Cout, HoWo), jnp.float32),
            jax.ShapeDtypeStruct((N, Cout, HoWo), jnp.float32),
        ],
        compiler_params=pltpu.CompilerParams(
            dimension_semantics=("parallel",),      # batch -> megacore on v7x
            vmem_limit_bytes=vmem_limit_bytes,
        ),
    )(xq, w2, b2, col)

    # un-interleave the parity quadrants back to NCHW (one cheap XLA transpose)
    conved = (conv_q.reshape(N, 2, 2, Cout, Ho, Wo)
              .transpose(0, 3, 4, 1, 5, 2)
              .reshape(N, Cout, H, W))
    pooled = pool_flat.reshape(N, Cout, Ho, Wo)
    return pooled, conved


# ---------------------------- pure-JAX reference ------------------------------
def _reference(x, weight, bias, dilation=2):
    K = weight.shape[-1]
    pad = dilation * (K // 2)
    conv = lax.conv_general_dilated(
        x, weight, window_strides=(1, 1), padding=((pad, pad), (pad, pad)),
        rhs_dilation=(dilation, dilation),
        dimension_numbers=("NCHW", "OIHW", "NCHW"),
        precision=lax.Precision.HIGHEST)
    conv = conv + bias.reshape(1, -1, 1, 1)
    conv = jnp.where(conv > 0.0, conv, jnp.exp(conv) - 1.0)
    pooled = lax.reduce_window(
        conv, -jnp.inf, lax.max, window_dimensions=(1, 1, 3, 3),
        window_strides=(1, 1, 2, 2), padding=((0, 0), (0, 0), (1, 1), (1, 1)))
    return pooled, conv


if __name__ == "__main__":
    N, H, W = 2, 16, 16
    in_channels, base_width, K = 4, 4, 7

    key = jax.random.PRNGKey(0)
    kx, kw, kb = jax.random.split(key, 3)
    x = jax.random.normal(kx, (N, in_channels, H, W), jnp.float32)
    weight = 0.1 * jax.random.normal(kw, (base_width, in_channels, K, K),
                                     jnp.float32)
    bias = 0.1 * jax.random.normal(kb, (base_width,), jnp.float32)

    pooled, conved = jax.jit(l0sx_forward)(x, weight, bias)
    jax.block_until_ready((pooled, conved))

    assert conved.shape == (N, base_width, H, W)
    assert pooled.shape == (N, base_width, H // 2, W // 2)

    ref_pooled, ref_conved = _reference(x, weight, bias)
    assert jnp.allclose(conved, ref_conved, atol=2e-5, rtol=2e-5), (
        "conved mismatch: max err %e"
        % float(jnp.max(jnp.abs(conved - ref_conved))))
    assert jnp.allclose(pooled, ref_pooled, atol=2e-5, rtol=2e-5), (
        "pooled mismatch: max err %e"
        % float(jnp.max(jnp.abs(pooled - ref_pooled))))

    print("KERNEL_OK")
</pallas_src>

<mosaic_0001>
module attributes {stable_mosaic.version = 11 : i64} {
  func.func @_l0sx_fused_kernel(%arg0: i32, %arg1: memref<1x4x28x112xf32, #tpu.memory_space<vmem>>, %arg2: memref<7x4x28xf32, #tpu.memory_space<vmem>>, %arg3: memref<4x1xf32, #tpu.memory_space<vmem>>, %arg4: memref<1x64xi32, #tpu.memory_space<vmem>>, %arg5: memref<1x4x4x64xf32, #tpu.memory_space<vmem>>, %arg6: memref<1x4x64xf32, #tpu.memory_space<vmem>>) attributes {dimension_semantics = [#tpu.dimension_semantics<parallel>], iteration_bounds = array<i64: 2>, scalar_prefetch = 0 : i64, scratch_operands = 0 : i64, tpu.core_type = #tpu.core_type<tc>, window_params = [{transform_indices = @transform_0, window_bounds = array<i64: 1, 4, 28, 112>}, {pipeline_mode = #tpu.pipeline_mode<synchronous>, transform_indices = @transform_1, window_bounds = array<i64: 7, 4, 28>}, {pipeline_mode = #tpu.pipeline_mode<synchronous>, transform_indices = @transform_2, window_bounds = array<i64: 4, 1>}, {pipeline_mode = #tpu.pipeline_mode<synchronous>, transform_indices = @transform_3, window_bounds = array<i64: 1, 64>}, {transform_indices = @transform_4, window_bounds = array<i64: 1, 4, 4, 64>}, {transform_indices = @transform_5, window_bounds = array<i64: 1, 4, 64>}]} {
    %c0 = arith.constant 0 : index
    %c0_0 = arith.constant 0 : index
    %c0_1 = arith.constant 0 : index
    %0 = vector.load %arg2[%c0, %c0_0, %c0_1] : memref<7x4x28xf32, #tpu.memory_space<vmem>>, vector<1x4x28xf32>
    %1 = vector.shape_cast %0 : vector<1x4x28xf32> to vector<4x28xf32>
    %c0_2 = arith.constant 0 : index
    %c0_3 = arith.constant 0 : index
    %c0_4 = arith.constant 0 : index
    %c0_5 = arith.constant 0 : index
    %2 = vector.load %arg1[%c0_2, %c0_3, %c0_4, %c0_5] : memref<1x4x28x112xf32, #tpu.memory_space<vmem>>, vector<1x1x28x64xf32>
    %3 = vector.shape_cast %2 : vector<1x1x28x64xf32> to vector<28x64xf32>
    %cst = arith.constant dense<0.000000e+00> : vector<4x64xf32>
    %4 = tpu.matmul %1, %3, %cst {dimension_numbers = #tpu.dot_dimension_numbers<[1], [0], [0], [1], [0, 0, 1, 1], [], []>, precision = #tpu.contract_precision<fp32>} : vector<4x28xf32>, vector<28x64xf32>, vector<4x64xf32> -> vector<4x64xf32>
    %c0_6 = arith.constant 0 : index
    %c0_7 = arith.constant 0 : index
    %c0_8 = arith.constant 0 : index
    %c8 = arith.constant 8 : index
    %5 = vector.load %arg1[%c0_6, %c0_7, %c0_8, %c8] : memref<1x4x28x112xf32, #tpu.memory_space<vmem>>, vector<1x1x28x64xf32>
    %6 = vector.shape_cast %5 : vector<1x1x28x64xf32> to vector<28x64xf32>
    %c1 = arith.constant 1 : index
    %c0_9 = arith.constant 0 : index
    %c0_10 = arith.constant 0 : index
    %7 = vector.load %arg2[%c1, %c0_9, %c0_10] : memref<7x4x28xf32, #tpu.memory_space<vmem>>, vector<1x4x28xf32>
    %8 = vector.shape_cast %7 : vector<1x4x28xf32> to vector<4x28xf32>
    %cst_11 = arith.constant dense<0.000000e+00> : vector<4x64xf32>
    %9 = tpu.matmul %8, %6, %cst_11 {dimension_numbers = #tpu.dot_dimension_numbers<[1], [0], [0], [1], [0, 0, 1, 1], [], []>, precision = #tpu.contract_precision<fp32>} : vector<4x28xf32>, vector<28x64xf32>, vector<4x64xf32> -> vector<4x64xf32>
    %10 = arith.addf %4, %9 : vector<4x64xf32>
    %c0_12 = arith.constant 0 : index
    %c0_13 = arith.constant 0 : index
    %c0_14 = arith.constant 0 : index
    %c16 = arith.constant 16 : index
    %11 = vector.load %arg1[%c0_12, %c0_13, %c0_14, %c16] : memref<1x4x28x112xf32, #tpu.memory_space<vmem>>, vector<1x1x28x64xf32>
    %12 = vector.shape_cast %11 : vector<1x1x28x64xf32> to vector<28x64xf32>
    %c2 = arith.constant 2 : index
    %c0_15 = arith.constant 0 : index
    %c0_16 = arith.constant 0 : index
    %13 = vector.load %arg2[%c2, %c0_15, %c0_16] : memref<7x4x28xf32, #tpu.memory_space<vmem>>, vector<1x4x28xf32>
    %14 = vector.shape_cast %13 : vector<1x4x28xf32> to vector<4x28xf32>
    %cst_17 = arith.constant dense<0.000000e+00> : vector<4x64xf32>
    %15 = tpu.matmul %14, %12, %cst_17 {dimension_numbers = #tpu.dot_dimension_numbers<[1], [0], [0], [1], [0, 0, 1, 1], [], []>, precision = #tpu.contract_precision<fp32>} : vector<4x28xf32>, vector<28x64xf32>, vector<4x64xf32> -> vector<4x64xf32>
    %16 = arith.addf %10, %15 : vector<4x64xf32>
    %c0_18 = arith.constant 0 : index
    %c0_19 = arith.constant 0 : index
    %c0_20 = arith.constant 0 : index
    %c24 = arith.constant 24 : index
    %17 = vector.load %arg1[%c0_18, %c0_19, %c0_20, %c24] : memref<1x4x28x112xf32, #tpu.memory_space<vmem>>, vector<1x1x28x64xf32>
    %18 = vector.shape_cast %17 : vector<1x1x28x64xf32> to vector<28x64xf32>
    %c3 = arith.constant 3 : index
    %c0_21 = arith.constant 0 : index
    %c0_22 = arith.constant 0 : index
    %19 = vector.load %arg2[%c3, %c0_21, %c0_22] : memref<7x4x28xf32, #tpu.memory_space<vmem>>, vector<1x4x28xf32>
    %20 = vector.shape_cast %19 : vector<1x4x28xf32> to vector<4x28xf32>
    %cst_23 = arith.constant dense<0.000000e+00> : vector<4x64xf32>
    %21 = tpu.matmul %20, %18, %cst_23 {dimension_numbers = #tpu.dot_dimension_numbers<[1], [0], [0], [1], [0, 0, 1, 1], [], []>, precision = #tpu.contract_precision<fp32>} : vector<4x28xf32>, vector<28x64xf32>, vector<4x64xf32> -> vector<4x64xf32>
    %22 = arith.addf %16, %21 : vector<4x64xf32>
    %c0_24 = arith.constant 0 : index
    %c0_25 = arith.constant 0 : index
    %c0_26 = arith.constant 0 : index
    %c32 = arith.constant 32 : index
    %23 = vector.load %arg1[%c0_24, %c0_25, %c0_26, %c32] : memref<1x4x28x112xf32, #tpu.memory_space<vmem>>, vector<1x1x28x64xf32>
    %24 = vector.shape_cast %23 : vector<1x1x28x64xf32> to vector<28x64xf32>
    %c4 = arith.constant 4 : index
    %c0_27 = arith.constant 0 : index
    %c0_28 = arith.constant 0 : index
    %25 = vector.load %arg2[%c4, %c0_27, %c0_28] : memref<7x4x28xf32, #tpu.memory_space<vmem>>, vector<1x4x28xf32>
    %26 = vector.shape_cast %25 : vector<1x4x28xf32> to vector<4x28xf32>
    %cst_29 = arith.constant dense<0.000000e+00> : vector<4x64xf32>
    %27 = tpu.matmul %26, %24, %cst_29 {dimension_numbers = #tpu.dot_dimension_numbers<[1], [0], [0], [1], [0, 0, 1, 1], [], []>, precision = #tpu.contract_precision<fp32>} : vector<4x28xf32>, vector<28x64xf32>, vector<4x64xf32> -> vector<4x64xf32>
    %28 = arith.addf %22, %27 : vector<4x64xf32>
    %c0_30 = arith.constant 0 : index
    %c0_31 = arith.constant 0 : index
    %c0_32 = arith.constant 0 : index
    %c40 = arith.constant 40 : index
    %29 = vector.load %arg1[%c0_30, %c0_31, %c0_32, %c40] : memref<1x4x28x112xf32, #tpu.memory_space<vmem>>, vector<1x1x28x64xf32>
    %30 = vector.shape_cast %29 : vector<1x1x28x64xf32> to vector<28x64xf32>
    %c5 = arith.constant 5 : index
    %c0_33 = arith.constant 0 : index
    %c0_34 = arith.constant 0 : index
    %31 = vector.load %arg2[%c5, %c0_33, %c0_34] : memref<7x4x28xf32, #tpu.memory_space<vmem>>, vector<1x4x28xf32>
    %32 = vector.shape_cast %31 : vector<1x4x28xf32> to vector<4x28xf32>
    %cst_35 = arith.constant dense<0.000000e+00> : vector<4x64xf32>
    %33 = tpu.matmul %32, %30, %cst_35 {dimension_numbers = #tpu.dot_dimension_numbers<[1], [0], [0], [1], [0, 0, 1, 1], [], []>, precision = #tpu.contract_precision<fp32>} : vector<4x28xf32>, vector<28x64xf32>, vector<4x64xf32> -> vector<4x64xf32>
    %34 = arith.addf %28, %33 : vector<4x64xf32>
    %c0_36 = arith.constant 0 : index
    %c0_37 = arith.constant 0 : index
    %c0_38 = arith.constant 0 : index
    %c48 = arith.constant 48 : index
    %35 = vector.load %arg1[%c0_36, %c0_37, %c0_38, %c48] : memref<1x4x28x112xf32, #tpu.memory_space<vmem>>, vector<1x1x28x64xf32>
    %36 = vector.shape_cast %35 : vector<1x1x28x64xf32> to vector<28x64xf32>
    %c6 = arith.constant 6 : index
    %c0_39 = arith.constant 0 : index
    %c0_40 = arith.constant 0 : index
    %37 = vector.load %arg2[%c6, %c0_39, %c0_40] : memref<7x4x28xf32, #tpu.memory_space<vmem>>, vector<1x4x28xf32>
    %38 = vector.shape_cast %37 : vector<1x4x28xf32> to vector<4x28xf32>
    %cst_41 = arith.constant dense<0.000000e+00> : vector<4x64xf32>
    %39 = tpu.matmul %38, %36, %cst_41 {dimension_numbers = #tpu.dot_dimension_numbers<[1], [0], [0], [1], [0, 0, 1, 1], [], []>, precision = #tpu.contract_precision<fp32>} : vector<4x28xf32>, vector<28x64xf32>, vector<4x64xf32> -> vector<4x64xf32>
    %40 = arith.addf %34, %39 : vector<4x64xf32>
    %c0_42 = arith.constant 0 : index
    %c0_43 = arith.constant 0 : index
    %41 = vector.load %arg3[%c0_42, %c0_43] : memref<4x1xf32, #tpu.memory_space<vmem>>, vector<4x1xf32>
    %42 = vector.broadcast %41 : vector<4x1xf32> to vector<4x64xf32>
    %43 = arith.addf %40, %42 : vector<4x64xf32>
    %cst_44 = arith.constant 0.000000e+00 : f32
    %44 = vector.broadcast %cst_44 : f32 to vector<4x64xf32>
    %45 = arith.cmpf ogt, %43, %44 : vector<4x64xf32>
    %cst_45 = arith.constant 0.000000e+00 : f32
    %46 = vector.broadcast %cst_45 : f32 to vector<4x64xf32>
    %47 = arith.minimumf %43, %46 : vector<4x64xf32>
    %48 = math.exp %47 : vector<4x64xf32>
    %cst_46 = arith.constant 1.000000e+00 : f32
    %49 = vector.broadcast %cst_46 : f32 to vector<4x64xf32>
    %50 = arith.subf %48, %49 : vector<4x64xf32>
    %51 = arith.select %45, %43, %50 : vector<4x64xi1>, vector<4x64xf32>
    %c0_47 = arith.constant 0 : index
    %c0_48 = arith.constant 0 : index
    %c0_49 = arith.constant 0 : index
    %c0_50 = arith.constant 0 : index
    %52 = vector.load %arg5[%c0_47, %c0_48, %c0_49, %c0_50] : memref<1x4x4x64xf32, #tpu.memory_space<vmem>>, vector<1x1x4x64xf32>
    %53 = vector.shape_cast %52 : vector<1x1x4x64xf32> to vector<4x64xf32>
    %54 = vector.shape_cast %51 : vector<4x64xf32> to vector<1x1x4x64xf32>
    tpu.vector_store %arg5[%c0_47, %c0_48, %c0_49, %c0_50], %54 {strides = array<i32>} : memref<1x4x4x64xf32, #tpu.memory_space<vmem>>, vector<1x1x4x64xf32>,
    %c0_51 = arith.constant 0 : index
    %c0_52 = arith.constant 0 : index
    %c0_53 = arith.constant 0 : index
    %55 = vector.load %arg2[%c0_51, %c0_52, %c0_53] : memref<7x4x28xf32, #tpu.memory_space<vmem>>, vector<1x4x28xf32>
    %56 = vector.shape_cast %55 : vector<1x4x28xf32> to vector<4x28xf32>
    %c0_54 = arith.constant 0 : index
    %c1_55 = arith.constant 1 : index
    %c0_56 = arith.constant 0 : index
    %c0_57 = arith.constant 0 : index
    %57 = vector.load %arg1[%c0_54, %c1_55, %c0_56, %c0_57] : memref<1x4x28x112xf32, #tpu.memory_space<vmem>>, vector<1x1x28x64xf32>
    %58 = vector.shape_cast %57 : vector<1x1x28x64xf32> to vector<28x64xf32>
    %cst_58 = arith.constant dense<0.000000e+00> : vector<4x64xf32>
    %59 = tpu.matmul %56, %58, %cst_58 {dimension_numbers = #tpu.dot_dimension_numbers<[1], [0], [0], [1], [0, 0, 1, 1], [], []>, precision = #tpu.contract_precision<fp32>} : vector<4x28xf32>, vector<28x64xf32>, vector<4x64xf32> -> vector<4x64xf32>
    %c0_59 = arith.constant 0 : index
    %c1_60 = arith.constant 1 : index
    %c0_61 = arith.constant 0 : index
    %c8_62 = arith.constant 8 : index
    %60 = vector.load %arg1[%c0_59, %c1_60, %c0_61, %c8_62] : memref<1x4x28x112xf32, #tpu.memory_space<vmem>>, vector<1x1x28x64xf32>
    %61 = vector.shape_cast %60 : vector<1x1x28x64xf32> to vector<28x64xf32>
    %c1_63 = arith.constant 1 : index
    %c0_64 = arith.constant 0 : index
    %c0_65 = arith.constant 0 : index
    %62 = vector.load %arg2[%c1_63, %c0_64, %c0_65] : memref<7x4x28xf32, #tpu.memory_space<vmem>>, vector<1x4x28xf32>
    %63 = vector.shape_cast %62 : vector<1x4x28xf32> to vector<4x28xf32>
    %cst_66 = arith.constant dense<0.000000e+00> : vector<4x64xf32>
    %64 = tpu.matmul %63, %61, %cst_66 {dimension_numbers = #tpu.dot_dimension_numbers<[1], [0], [0], [1], [0, 0, 1, 1], [], []>, precision = #tpu.contract_precision<fp32>} : vector<4x28xf32>, vector<28x64xf32>, vector<4x64xf32> -> vector<4x64xf32>
    %65 = arith.addf %59, %64 : vector<4x64xf32>
    %c0_67 = arith.constant 0 : index
    %c1_68 = arith.constant 1 : index
    %c0_69 = arith.constant 0 : index
    %c16_70 = arith.constant 16 : index
    %66 = vector.load %arg1[%c0_67, %c1_68, %c0_69, %c16_70] : memref<1x4x28x112xf32, #tpu.memory_space<vmem>>, vector<1x1x28x64xf32>
    %67 = vector.shape_cast %66 : vector<1x1x28x64xf32> to vector<28x64xf32>
    %c2_71 = arith.constant 2 : index
    %c0_72 = arith.constant 0 : index
    %c0_73 = arith.constant 0 : index
    %68 = vector.load %arg2[%c2_71, %c0_72, %c0_73] : memref<7x4x28xf32, #tpu.memory_space<vmem>>, vector<1x4x28xf32>
    %69 = vector.shape_cast %68 : vector<1x4x28xf32> to vector<4x28xf32>
    %cst_74 = arith.constant dense<0.000000e+00> : vector<4x64xf32>
    %70 = tpu.matmul %69, %67, %cst_74 {dimension_numbers = #tpu.dot_dimension_numbers<[1], [0], [0], [1], [0, 0, 1, 1], [], []>, precision = #tpu.contract_precision<fp32>} : vector<4x28xf32>, vector<28x64xf32>, vector<4x64xf32> -> vector<4x64xf32>
    %71 = arith.addf %65, %70 : vector<4x64xf32>
    %c0_75 = arith.constant 0 : index
    %c1_76 = arith.constant 1 : index
    %c0_77 = arith.constant 0 : index
    %c24_78 = arith.constant 24 : index
    %72 = vector.load %arg1[%c0_75, %c1_76, %c0_77, %c24_78] : memref<1x4x28x112xf32, #tpu.memory_space<vmem>>, vector<1x1x28x64xf32>
    %73 = vector.shape_cast %72 : vector<1x1x28x64xf32> to vector<28x64xf32>
    %c3_79 = arith.constant 3 : index
    %c0_80 = arith.constant 0 : index
    %c0_81 = arith.constant 0 : index
    %74 = vector.load %arg2[%c3_79, %c0_80, %c0_81] : memref<7x4x28xf32, #tpu.memory_space<vmem>>, vector<1x4x28xf32>
    %75 = vector.shape_cast %74 : vector<1x4x28xf32> to vector<4x28xf32>
    %cst_82 = arith.constant dense<0.000000e+00> : vector<4x64xf32>
    %76 = tpu.matmul %75, %73, %cst_82 {dimension_numbers = #tpu.dot_dimension_numbers<[1], [0], [0], [1], [0, 0, 1, 1], [], []>, precision = #tpu.contract_precision<fp32>} : vector<4x28xf32>, vector<28x64xf32>, vector<4x64xf32> -> vector<4x64xf32>
    %77 = arith.addf %71, %76 : vector<4x64xf32>
    %c0_83 = arith.constant 0 : index
    %c1_84 = arith.constant 1 : index
    %c0_85 = arith.constant 0 : index
    %c32_86 = arith.constant 32 : index
    %78 = vector.load %arg1[%c0_83, %c1_84, %c0_85, %c32_86] : memref<1x4x28x112xf32, #tpu.memory_space<vmem>>, vector<1x1x28x64xf32>
    %79 = vector.shape_cast %78 : vector<1x1x28x64xf32> to vector<28x64xf32>
    %c4_87 = arith.constant 4 : index
    %c0_88 = arith.constant 0 : index
    %c0_89 = arith.constant 0 : index
    %80 = vector.load %arg2[%c4_87, %c0_88, %c0_89] : memref<7x4x28xf32, #tpu.memory_space<vmem>>, vector<1x4x28xf32>
    %81 = vector.shape_cast %80 : vector<1x4x28xf32> to vector<4x28xf32>
    %cst_90 = arith.constant dense<0.000000e+00> : vector<4x64xf32>
    %82 = tpu.matmul %81, %79, %cst_90 {dimension_numbers = #tpu.dot_dimension_numbers<[1], [0], [0], [1], [0, 0, 1, 1], [], []>, precision = #tpu.contract_precision<fp32>} : vector<4x28xf32>, vector<28x64xf32>, vector<4x64xf32> -> vector<4x64xf32>
    %83 = arith.addf %77, %82 : vector<4x64xf32>
    %c0_91 = arith.constant 0 : index
    %c1_92 = arith.constant 1 : index
    %c0_93 = arith.constant 0 : index
    %c40_94 = arith.constant 40 : index
    %84 = vector.load %arg1[%c0_91, %c1_92, %c0_93, %c40_94] : memref<1x4x28x112xf32, #tpu.memory_space<vmem>>, vector<1x1x28x64xf32>
    %85 = vector.shape_cast %84 : vector<1x1x28x64xf32> to vector<28x64xf32>
    %c5_95 = arith.constant 5 : index
    %c0_96 = arith.constant 0 : index
    %c0_97 = arith.constant 0 : index
    %86 = vector.load %arg2[%c5_95, %c0_96, %c0_97] : memref<7x4x28xf32, #tpu.memory_space<vmem>>, vector<1x4x28xf32>
    %87 = vector.shape_cast %86 : vector<1x4x28xf32> to vector<4x28xf32>
    %cst_98 = arith.constant dense<0.000000e+00> : vector<4x64xf32>
    %88 = tpu.matmul %87, %85, %cst_98 {dimension_numbers = #tpu.dot_dimension_numbers<[1], [0], [0], [1], [0, 0, 1, 1], [], []>, precision = #tpu.contract_precision<fp32>} : vector<4x28xf32>, vector<28x64xf32>, vector<4x64xf32> -> vector<4x64xf32>
    %89 = arith.addf %83, %88 : vector<4x64xf32>
    %c0_99 = arith.constant 0 : index
    %c1_100 = arith.constant 1 : index
    %c0_101 = arith.constant 0 : index
    %c48_102 = arith.constant 48 : index
    %90 = vector.load %arg1[%c0_99, %c1_100, %c0_101, %c48_102] : memref<1x4x28x112xf32, #tpu.memory_space<vmem>>, vector<1x1x28x64xf32>
    %91 = vector.shape_cast %90 : vector<1x1x28x64xf32> to vector<28x64xf32>
    %c6_103 = arith.constant 6 : index
    %c0_104 = arith.constant 0 : index
    %c0_105 = arith.constant 0 : index
    %92 = vector.load %arg2[%c6_103, %c0_104, %c0_105] : memref<7x4x28xf32, #tpu.memory_space<vmem>>, vector<1x4x28xf32>
    %93 = vector.shape_cast %92 : vector<1x4x28xf32> to vector<4x28xf32>
    %cst_106 = arith.constant dense<0.000000e+00> : vector<4x64xf32>
    %94 = tpu.matmul %93, %91, %cst_106 {dimension_numbers = #tpu.dot_dimension_numbers<[1], [0], [0], [1], [0, 0, 1, 1], [], []>, precision = #tpu.contract_precision<fp32>} : vector<4x28xf32>, vector<28x64xf32>, vector<4x64xf32> -> vector<4x64xf32>
    %95 = arith.addf %89, %94 : vector<4x64xf32>
    %c0_107 = arith.constant 0 : index
    %c0_108 = arith.constant 0 : index
    %96 = vector.load %arg3[%c0_107, %c0_108] : memref<4x1xf32, #tpu.memory_space<vmem>>, vector<4x1xf32>
    %97 = vector.broadcast %96 : vector<4x1xf32> to vector<4x64xf32>
    %98 = arith.addf %95, %97 : vector<4x64xf32>
    %cst_109 = arith.constant 0.000000e+00 : f32
    %99 = vector.broadcast %cst_109 : f32 to vector<4x64xf32>
    %100 = arith.cmpf ogt, %98, %99 : vector<4x64xf32>
    %cst_110 = arith.constant 0.000000e+00 : f32
    %101 = vector.broadcast %cst_110 : f32 to vector<4x64xf32>
    %102 = arith.minimumf %98, %101 : vector<4x64xf32>
    %103 = math.exp %102 : vector<4x64xf32>
    %cst_111 = arith.constant 1.000000e+00 : f32
    %104 = vector.broadcast %cst_111 : f32 to vector<4x64xf32>
    %105 = arith.subf %103, %104 : vector<4x64xf32>
    %106 = arith.select %100, %98, %105 : vector<4x64xi1>, vector<4x64xf32>
    %c0_112 = arith.constant 0 : index
    %c1_113 = arith.constant 1 : index
    %c0_114 = arith.constant 0 : index
    %c0_115 = arith.constant 0 : index
    %107 = vector.load %arg5[%c0_112, %c1_113, %c0_114, %c0_115] : memref<1x4x4x64xf32, #tpu.memory_space<vmem>>, vector<1x1x4x64xf32>
    %108 = vector.shape_cast %107 : vector<1x1x4x64xf32> to vector<4x64xf32>
    %109 = vector.shape_cast %106 : vector<4x64xf32> to vector<1x1x4x64xf32>
    tpu.vector_store %arg5[%c0_112, %c1_113, %c0_114, %c0_115], %109 {strides = array<i32>} : memref<1x4x4x64xf32, #tpu.memory_space<vmem>>, vector<1x1x4x64xf32>,
    %c0_116 = arith.constant 0 : index
    %c0_117 = arith.constant 0 : index
    %c0_118 = arith.constant 0 : index
    %110 = vector.load %arg2[%c0_116, %c0_117, %c0_118] : memref<7x4x28xf32, #tpu.memory_space<vmem>>, vector<1x4x28xf32>
    %111 = vector.shape_cast %110 : vector<1x4x28xf32> to vector<4x28xf32>
    %c0_119 = arith.constant 0 : index
    %c2_120 = arith.constant 2 : index
    %c0_121 = arith.constant 0 : index
    %c0_122 = arith.constant 0 : index
    %112 = vector.load %arg1[%c0_119, %c2_120, %c0_121, %c0_122] : memref<1x4x28x112xf32, #tpu.memory_space<vmem>>, vector<1x1x28x64xf32>
    %113 = vector.shape_cast %112 : vector<1x1x28x64xf32> to vector<28x64xf32>
    %cst_123 = arith.constant dense<0.000000e+00> : vector<4x64xf32>
    %114 = tpu.matmul %111, %113, %cst_123 {dimension_numbers = #tpu.dot_dimension_numbers<[1], [0], [0], [1], [0, 0, 1, 1], [], []>, precision = #tpu.contract_precision<fp32>} : vector<4x28xf32>, vector<28x64xf32>, vector<4x64xf32> -> vector<4x64xf32>
    %c0_124 = arith.constant 0 : index
    %c2_125 = arith.constant 2 : index
    %c0_126 = arith.constant 0 : index
    %c8_127 = arith.constant 8 : index
    %115 = vector.load %arg1[%c0_124, %c2_125, %c0_126, %c8_127] : memref<1x4x28x112xf32, #tpu.memory_space<vmem>>, vector<1x1x28x64xf32>
    %116 = vector.shape_cast %115 : vector<1x1x28x64xf32> to vector<28x64xf32>
    %c1_128 = arith.constant 1 : index
    %c0_129 = arith.constant 0 : index
    %c0_130 = arith.constant 0 : index
    %117 = vector.load %arg2[%c1_128, %c0_129, %c0_130] : memref<7x4x28xf32, #tpu.memory_space<vmem>>, vector<1x4x28xf32>
    %118 = vector.shape_cast %117 : vector<1x4x28xf32> to vector<4x28xf32>
    %cst_131 = arith.constant dense<0.000000e+00> : vector<4x64xf32>
    %119 = tpu.matmul %118, %116, %cst_131 {dimension_numbers = #tpu.dot_dimension_numbers<[1], [0], [0], [1], [0, 0, 1, 1], [], []>, precision = #tpu.contract_precision<fp32>} : vector<4x28xf32>, vector<28x64xf32>, vector<4x64xf32> -> vector<4x64xf32>
    %120 = arith.addf %114, %119 : vector<4x64xf32>
    %c0_132 = arith.constant 0 : index
    %c2_133 = arith.constant 2 : index
    %c0_134 = arith.constant 0 : index
    %c16_135 = arith.constant 16 : index
    %121 = vector.load %arg1[%c0_132, %c2_133, %c0_134, %c16_135] : memref<1x4x28x112xf32, #tpu.memory_space<vmem>>, vector<1x1x28x64xf32>
    %122 = vector.shape_cast %121 : vector<1x1x28x64xf32> to vector<28x64xf32>
    %c2_136 = arith.constant 2 : index
    %c0_137 = arith.constant 0 : index
    %c0_138 = arith.constant 0 : index
    %123 = vector.load %arg2[%c2_136, %c0_137, %c0_138] : memref<7x4x28xf32, #tpu.memory_space<vmem>>, vector<1x4x28xf32>
    %124 = vector.shape_cast %123 : vector<1x4x28xf32> to vector<4x28xf32>
    %cst_139 = arith.constant dense<0.000000e+00> : vector<4x64xf32>
    %125 = tpu.matmul %124, %122, %cst_139 {dimension_numbers = #tpu.dot_dimension_numbers<[1], [0], [0], [1], [0, 0, 1, 1], [], []>, precision = #tpu.contract_precision<fp32>} : vector<4x28xf32>, vector<28x64xf32>, vector<4x64xf32> -> vector<4x64xf32>
    %126 = arith.addf %120, %125 : vector<4x64xf32>
    %c0_140 = arith.constant 0 : index
    %c2_141 = arith.constant 2 : index
    %c0_142 = arith.constant 0 : index
    %c24_143 = arith.constant 24 : index
    %127 = vector.load %arg1[%c0_140, %c2_141, %c0_142, %c24_143] : memref<1x4x28x112xf32, #tpu.memory_space<vmem>>, vector<1x1x28x64xf32>
    %128 = vector.shape_cast %127 : vector<1x1x28x64xf32> to vector<28x64xf32>
    %c3_144 = arith.constant 3 : index
    %c0_145 = arith.constant 0 : index
    %c0_146 = arith.constant 0 : index
    %129 = vector.load %arg2[%c3_144, %c0_145, %c0_146] : memref<7x4x28xf32, #tpu.memory_space<vmem>>, vector<1x4x28xf32>
    %130 = vector.shape_cast %129 : vector<1x4x28xf32> to vector<4x28xf32>
    %cst_147 = arith.constant dense<0.000000e+00> : vector<4x64xf32>
    %131 = tpu.matmul %130, %128, %cst_147 {dimension_numbers = #tpu.dot_dimension_numbers<[1], [0], [0], [1], [0, 0, 1, 1], [], []>, precision = #tpu.contract_precision<fp32>} : vector<4x28xf32>, vector<28x64xf32>, vector<4x64xf32> -> vector<4x64xf32>
    %132 = arith.addf %126, %131 : vector<4x64xf32>
    %c0_148 = arith.constant 0 : index
    %c2_149 = arith.constant 2 : index
    %c0_150 = arith.constant 0 : index
    %c32_151 = arith.constant 32 : index
    %133 = vector.load %arg1[%c0_148, %c2_149, %c0_150, %c32_151] : memref<1x4x28x112xf32, #tpu.memory_space<vmem>>, vector<1x1x28x64xf32>
    %134 = vector.shape_cast %133 : vector<1x1x28x64xf32> to vector<28x64xf32>
    %c4_152 = arith.constant 4 : index
    %c0_153 = arith.constant 0 : index
    %c0_154 = arith.constant 0 : index
    %135 = vector.load %arg2[%c4_152, %c0_153, %c0_154] : memref<7x4x28xf32, #tpu.memory_space<vmem>>, vector<1x4x28xf32>
    %136 = vector.shape_cast %135 : vector<1x4x28xf32> to vector<4x28xf32>
    %cst_155 = arith.constant dense<0.000000e+00> : vector<4x64xf32>
    %137 = tpu.matmul %136, %134, %cst_155 {dimension_numbers = #tpu.dot_dimension_numbers<[1], [0], [0], [1], [0, 0, 1, 1], [], []>, precision = #tpu.contract_precision<fp32>} : vector<4x28xf32>, vector<28x64xf32>, vector<4x64xf32> -> vector<4x64xf32>
    %138 = arith.addf %132, %137 : vector<4x64xf32>
    %c0_156 = arith.constant 0 : index
    %c2_157 = arith.constant 2 : index
    %c0_158 = arith.constant 0 : index
    %c40_159 = arith.constant 40 : index
    %139 = vector.load %arg1[%c0_156, %c2_157, %c0_158, %c40_159] : memref<1x4x28x112xf32, #tpu.memory_space<vmem>>, vector<1x1x28x64xf32>
    %140 = vector.shape_cast %139 : vector<1x1x28x64xf32> to vector<28x64xf32>
    %c5_160 = arith.constant 5 : index
    %c0_161 = arith.constant 0 : index
    %c0_162 = arith.constant 0 : index
    %141 = vector.load %arg2[%c5_160, %c0_161, %c0_162] : memref<7x4x28xf32, #tpu.memory_space<vmem>>, vector<1x4x28xf32>
    %142 = vector.shape_cast %141 : vector<1x4x28xf32> to vector<4x28xf32>
    %cst_163 = arith.constant dense<0.000000e+00> : vector<4x64xf32>
    %143 = tpu.matmul %142, %140, %cst_163 {dimension_numbers = #tpu.dot_dimension_numbers<[1], [0], [0], [1], [0, 0, 1, 1], [], []>, precision = #tpu.contract_precision<fp32>} : vector<4x28xf32>, vector<28x64xf32>, vector<4x64xf32> -> vector<4x64xf32>
    %144 = arith.addf %138, %143 : vector<4x64xf32>
    %c0_164 = arith.constant 0 : index
    %c2_165 = arith.constant 2 : index
    %c0_166 = arith.constant 0 : index
    %c48_167 = arith.constant 48 : index
    %145 = vector.load %arg1[%c0_164, %c2_165, %c0_166, %c48_167] : memref<1x4x28x112xf32, #tpu.memory_space<vmem>>, vector<1x1x28x64xf32>
    %146 = vector.shape_cast %145 : vector<1x1x28x64xf32> to vector<28x64xf32>
    %c6_168 = arith.constant 6 : index
    %c0_169 = arith.constant 0 : index
    %c0_170 = arith.constant 0 : index
    %147 = vector.load %arg2[%c6_168, %c0_169, %c0_170] : memref<7x4x28xf32, #tpu.memory_space<vmem>>, vector<1x4x28xf32>
    %148 = vector.shape_cast %147 : vector<1x4x28xf32> to vector<4x28xf32>
    %cst_171 = arith.constant dense<0.000000e+00> : vector<4x64xf32>
    %149 = tpu.matmul %148, %146, %cst_171 {dimension_numbers = #tpu.dot_dimension_numbers<[1], [0], [0], [1], [0, 0, 1, 1], [], []>, precision = #tpu.contract_precision<fp32>} : vector<4x28xf32>, vector<28x64xf32>, vector<4x64xf32> -> vector<4x64xf32>
    %150 = arith.addf %144, %149 : vector<4x64xf32>
    %c0_172 = arith.constant 0 : index
    %c0_173 = arith.constant 0 : index
    %151 = vector.load %arg3[%c0_172, %c0_173] : memref<4x1xf32, #tpu.memory_space<vmem>>, vector<4x1xf32>
    %152 = vector.broadcast %151 : vector<4x1xf32> to vector<4x64xf32>
    %153 = arith.addf %150, %152 : vector<4x64xf32>
    %cst_174 = arith.constant 0.000000e+00 : f32
    %154 = vector.broadcast %cst_174 : f32 to vector<4x64xf32>
    %155 = arith.cmpf ogt, %153, %154 : vector<4x64xf32>
    %cst_175 = arith.constant 0.000000e+00 : f32
    %156 = vector.broadcast %cst_175 : f32 to vector<4x64xf32>
    %157 = arith.minimumf %153, %156 : vector<4x64xf32>
    %158 = math.exp %157 : vector<4x64xf32>
    %cst_176 = arith.constant 1.000000e+00 : f32
    %159 = vector.broadcast %cst_176 : f32 to vector<4x64xf32>
    %160 = arith.subf %158, %159 : vector<4x64xf32>
    %161 = arith.select %155, %153, %160 : vector<4x64xi1>, vector<4x64xf32>
    %c0_177 = arith.constant 0 : index
    %c2_178 = arith.constant 2 : index
    %c0_179 = arith.constant 0 : index
    %c0_180 = arith.constant 0 : index
    %162 = vector.load %arg5[%c0_177, %c2_178, %c0_179, %c0_180] : memref<1x4x4x64xf32, #tpu.memory_space<vmem>>, vector<1x1x4x64xf32>
    %163 = vector.shape_cast %162 : vector<1x1x4x64xf32> to vector<4x64xf32>
    %164 = vector.shape_cast %161 : vector<4x64xf32> to vector<1x1x4x64xf32>
    tpu.vector_store %arg5[%c0_177, %c2_178, %c0_179, %c0_180], %164 {strides = array<i32>} : memref<1x4x4x64xf32, #tpu.memory_space<vmem>>, vector<1x1x4x64xf32>,
    %c0_181 = arith.constant 0 : index
    %c0_182 = arith.constant 0 : index
    %c0_183 = arith.constant 0 : index
    %165 = vector.load %arg2[%c0_181, %c0_182, %c0_183] : memref<7x4x28xf32, #tpu.memory_space<vmem>>, vector<1x4x28xf32>
    %166 = vector.shape_cast %165 : vector<1x4x28xf32> to vector<4x28xf32>
    %c0_184 = arith.constant 0 : index
    %c3_185 = arith.constant 3 : index
    %c0_186 = arith.constant 0 : index
    %c0_187 = arith.constant 0 : index
    %167 = vector.load %arg1[%c0_184, %c3_185, %c0_186, %c0_187] : memref<1x4x28x112xf32, #tpu.memory_space<vmem>>, vector<1x1x28x64xf32>
    %168 = vector.shape_cast %167 : vector<1x1x28x64xf32> to vector<28x64xf32>
    %cst_188 = arith.constant dense<0.000000e+00> : vector<4x64xf32>
    %169 = tpu.matmul %166, %168, %cst_188 {dimension_numbers = #tpu.dot_dimension_numbers<[1], [0], [0], [1], [0, 0, 1, 1], [], []>, precision = #tpu.contract_precision<fp32>} : vector<4x28xf32>, vector<28x64xf32>, vector<4x64xf32> -> vector<4x64xf32>
    %c0_189 = arith.constant 0 : index
    %c3_190 = arith.constant 3 : index
    %c0_191 = arith.constant 0 : index
    %c8_192 = arith.constant 8 : index
    %170 = vector.load %arg1[%c0_189, %c3_190, %c0_191, %c8_192] : memref<1x4x28x112xf32, #tpu.memory_space<vmem>>, vector<1x1x28x64xf32>
    %171 = vector.shape_cast %170 : vector<1x1x28x64xf32> to vector<28x64xf32>
    %c1_193 = arith.constant 1 : index
    %c0_194 = arith.constant 0 : index
    %c0_195 = arith.constant 0 : index
    %172 = vector.load %arg2[%c1_193, %c0_194, %c0_195] : memref<7x4x28xf32, #tpu.memory_space<vmem>>, vector<1x4x28xf32>
    %173 = vector.shape_cast %172 : vector<1x4x28xf32> to vector<4x28xf32>
    %cst_196 = arith.constant dense<0.000000e+00> : vector<4x64xf32>
    %174 = tpu.matmul %173, %171, %cst_196 {dimension_numbers = #tpu.dot_dimension_numbers<[1], [0], [0], [1], [0, 0, 1, 1], [], []>, precision = #tpu.contract_precision<fp32>} : vector<4x28xf32>, vector<28x64xf32>, vector<4x64xf32> -> vector<4x64xf32>
    %175 = arith.addf %169, %174 : vector<4x64xf32>
    %c0_197 = arith.constant 0 : index
    %c3_198 = arith.constant 3 : index
    %c0_199 = arith.constant 0 : index
    %c16_200 = arith.constant 16 : index
    %176 = vector.load %arg1[%c0_197, %c3_198, %c0_199, %c16_200] : memref<1x4x28x112xf32, #tpu.memory_space<vmem>>, vector<1x1x28x64xf32>
    %177 = vector.shape_cast %176 : vector<1x1x28x64xf32> to vector<28x64xf32>
    %c2_201 = arith.constant 2 : index
    %c0_202 = arith.constant 0 : index
    %c0_203 = arith.constant 0 : index
    %178 = vector.load %arg2[%c2_201, %c0_202, %c0_203] : memref<7x4x28xf32, #tpu.memory_space<vmem>>, vector<1x4x28xf32>
    %179 = vector.shape_cast %178 : vector<1x4x28xf32> to vector<4x28xf32>
    %cst_204 = arith.constant dense<0.000000e+00> : vector<4x64xf32>
    %180 = tpu.matmul %179, %177, %cst_204 {dimension_numbers = #tpu.dot_dimension_numbers<[1], [0], [0], [1], [0, 0, 1, 1], [], []>, precision = #tpu.contract_precision<fp32>} : vector<4x28xf32>, vector<28x64xf32>, vector<4x64xf32> -> vector<4x64xf32>
    %181 = arith.addf %175, %180 : vector<4x64xf32>
    %c0_205 = arith.constant 0 : index
    %c3_206 = arith.constant 3 : index
    %c0_207 = arith.constant 0 : index
    %c24_208 = arith.constant 24 : index
    %182 = vector.load %arg1[%c0_205, %c3_206, %c0_207, %c24_208] : memref<1x4x28x112xf32, #tpu.memory_space<vmem>>, vector<1x1x28x64xf32>
    %183 = vector.shape_cast %182 : vector<1x1x28x64xf32> to vector<28x64xf32>
    %c3_209 = arith.constant 3 : index
    %c0_210 = arith.constant 0 : index
    %c0_211 = arith.constant 0 : index
    %184 = vector.load %arg2[%c3_209, %c0_210, %c0_211] : memref<7x4x28xf32, #tpu.memory_space<vmem>>, vector<1x4x28xf32>
    %185 = vector.shape_cast %184 : vector<1x4x28xf32> to vector<4x28xf32>
    %cst_212 = arith.constant dense<0.000000e+00> : vector<4x64xf32>
    %186 = tpu.matmul %185, %183, %cst_212 {dimension_numbers = #tpu.dot_dimension_numbers<[1], [0], [0], [1], [0, 0, 1, 1], [], []>, precision = #tpu.contract_precision<fp32>} : vector<4x28xf32>, vector<28x64xf32>, vector<4x64xf32> -> vector<4x64xf32>
    %187 = arith.addf %181, %186 : vector<4x64xf32>
    %c0_213 = arith.constant 0 : index
    %c3_214 = arith.constant 3 : index
    %c0_215 = arith.constant 0 : index
    %c32_216 = arith.constant 32 : index
    %188 = vector.load %arg1[%c0_213, %c3_214, %c0_215, %c32_216] : memref<1x4x28x112xf32, #tpu.memory_space<vmem>>, vector<1x1x28x64xf32>
    %189 = vector.shape_cast %188 : vector<1x1x28x64xf32> to vector<28x64xf32>
    %c4_217 = arith.constant 4 : index
    %c0_218 = arith.constant 0 : index
    %c0_219 = arith.constant 0 : index
    %190 = vector.load %arg2[%c4_217, %c0_218, %c0_219] : memref<7x4x28xf32, #tpu.memory_space<vmem>>, vector<1x4x28xf32>
    %191 = vector.shape_cast %190 : vector<1x4x28xf32> to vector<4x28xf32>
    %cst_220 = arith.constant dense<0.000000e+00> : vector<4x64xf32>
    %192 = tpu.matmul %191, %189, %cst_220 {dimension_numbers = #tpu.dot_dimension_numbers<[1], [0], [0], [1], [0, 0, 1, 1], [], []>, precision = #tpu.contract_precision<fp32>} : vector<4x28xf32>, vector<28x64xf32>, vector<4x64xf32> -> vector<4x64xf32>
    %193 = arith.addf %187, %192 : vector<4x64xf32>
    %c0_221 = arith.constant 0 : index
    %c3_222 = arith.constant 3 : index
    %c0_223 = arith.constant 0 : index
    %c40_224 = arith.constant 40 : index
    %194 = vector.load %arg1[%c0_221, %c3_222, %c0_223, %c40_224] : memref<1x4x28x112xf32, #tpu.memory_space<vmem>>, vector<1x1x28x64xf32>
    %195 = vector.shape_cast %194 : vector<1x1x28x64xf32> to vector<28x64xf32>
    %c5_225 = arith.constant 5 : index
    %c0_226 = arith.constant 0 : index
    %c0_227 = arith.constant 0 : index
    %196 = vector.load %arg2[%c5_225, %c0_226, %c0_227] : memref<7x4x28xf32, #tpu.memory_space<vmem>>, vector<1x4x28xf32>
    %197 = vector.shape_cast %196 : vector<1x4x28xf32> to vector<4x28xf32>
    %cst_228 = arith.constant dense<0.000000e+00> : vector<4x64xf32>
    %198 = tpu.matmul %197, %195, %cst_228 {dimension_numbers = #tpu.dot_dimension_numbers<[1], [0], [0], [1], [0, 0, 1, 1], [], []>, precision = #tpu.contract_precision<fp32>} : vector<4x28xf32>, vector<28x64xf32>, vector<4x64xf32> -> vector<4x64xf32>
    %199 = arith.addf %193, %198 : vector<4x64xf32>
    %c0_229 = arith.constant 0 : index
    %c3_230 = arith.constant 3 : index
    %c0_231 = arith.constant 0 : index
    %c48_232 = arith.constant 48 : index
    %200 = vector.load %arg1[%c0_229, %c3_230, %c0_231, %c48_232] : memref<1x4x28x112xf32, #tpu.memory_space<vmem>>, vector<1x1x28x64xf32>
    %201 = vector.shape_cast %200 : vector<1x1x28x64xf32> to vector<28x64xf32>
    %c6_233 = arith.constant 6 : index
    %c0_234 = arith.constant 0 : index
    %c0_235 = arith.constant 0 : index
    %202 = vector.load %arg2[%c6_233, %c0_234, %c0_235] : memref<7x4x28xf32, #tpu.memory_space<vmem>>, vector<1x4x28xf32>
    %203 = vector.shape_cast %202 : vector<1x4x28xf32> to vector<4x28xf32>
    %cst_236 = arith.constant dense<0.000000e+00> : vector<4x64xf32>
    %204 = tpu.matmul %203, %201, %cst_236 {dimension_numbers = #tpu.dot_dimension_numbers<[1], [0], [0], [1], [0, 0, 1, 1], [], []>, precision = #tpu.contract_precision<fp32>} : vector<4x28xf32>, vector<28x64xf32>, vector<4x64xf32> -> vector<4x64xf32>
    %205 = arith.addf %199, %204 : vector<4x64xf32>
    %c0_237 = arith.constant 0 : index
    %c0_238 = arith.constant 0 : index
    %206 = vector.load %arg3[%c0_237, %c0_238] : memref<4x1xf32, #tpu.memory_space<vmem>>, vector<4x1xf32>
    %207 = vector.broadcast %206 : vector<4x1xf32> to vector<4x64xf32>
    %208 = arith.addf %205, %207 : vector<4x64xf32>
    %cst_239 = arith.constant 0.000000e+00 : f32
    %209 = vector.broadcast %cst_239 : f32 to vector<4x64xf32>
    %210 = arith.cmpf ogt, %208, %209 : vector<4x64xf32>
    %cst_240 = arith.constant 0.000000e+00 : f32
    %211 = vector.broadcast %cst_240 : f32 to vector<4x64xf32>
    %212 = arith.minimumf %208, %211 : vector<4x64xf32>
    %213 = math.exp %212 : vector<4x64xf32>
    %cst_241 = arith.constant 1.000000e+00 : f32
    %214 = vector.broadcast %cst_241 : f32 to vector<4x64xf32>
    %215 = arith.subf %213, %214 : vector<4x64xf32>
    %216 = arith.select %210, %208, %215 : vector<4x64xi1>, vector<4x64xf32>
    %c0_242 = arith.constant 0 : index
    %c3_243 = arith.constant 3 : index
    %c0_244 = arith.constant 0 : index
    %c0_245 = arith.constant 0 : index
    %217 = vector.load %arg5[%c0_242, %c3_243, %c0_244, %c0_245] : memref<1x4x4x64xf32, #tpu.memory_space<vmem>>, vector<1x1x4x64xf32>
    %218 = vector.shape_cast %217 : vector<1x1x4x64xf32> to vector<4x64xf32>
    %219 = vector.shape_cast %216 : vector<4x64xf32> to vector<1x1x4x64xf32>
    tpu.vector_store %arg5[%c0_242, %c3_243, %c0_244, %c0_245], %219 {strides = array<i32>} : memref<1x4x4x64xf32, #tpu.memory_space<vmem>>, vector<1x1x4x64xf32>,
    %c0_246 = arith.constant 0 : index
    %c0_247 = arith.constant 0 : index
    %220 = vector.load %arg4[%c0_246, %c0_247] : memref<1x64xi32, #tpu.memory_space<vmem>>, vector<1x64xi32>
    %c0_i32 = arith.constant 0 : i32
    %221 = vector.broadcast %c0_i32 : i32 to vector<1x64xi32>
    %222 = arith.cmpi eq, %220, %221 : vector<1x64xi32>
    %223 = tpu.iota {dimensions = array<i32: 1>} : vector<1x64xi32>
    %c8_i32 = arith.constant 8 : i32
    %224 = vector.broadcast %c8_i32 : i32 to vector<1x64xi32>
    %225 = arith.cmpi slt, %223, %224 : vector<1x64xi32>
    %226 = arith.maximumf %51, %106 : vector<4x64xf32>
    %227 = arith.maximumf %161, %216 : vector<4x64xf32>
    %228 = arith.maximumf %226, %227 : vector<4x64xf32>
    %c1_i32 = arith.constant 1 : i32
    %229 = tpu.dynamic_rotate %106 by %c1_i32 dim 1 : vector<4x64xf32>, i32 -> vector<4x64xf32>
    %cst_248 = arith.constant 0xFF800000 : f32
    %230 = vector.shape_cast %222 : vector<1x64xi1> to vector<1x64xi1>
    %231 = vector.broadcast %230 : vector<1x64xi1> to vector<4x64xi1>
    %232 = vector.broadcast %cst_248 : f32 to vector<4x64xf32>
    %233 = arith.select %231, %232, %229 : vector<4x64xi1>, vector<4x64xf32>
    %234 = arith.maximumf %228, %233 : vector<4x64xf32>
    %c8_i32_249 = arith.constant 8 : i32
    %235 = tpu.dynamic_rotate %161 by %c8_i32_249 dim 1 : vector<4x64xf32>, i32 -> vector<4x64xf32>
    %cst_250 = arith.constant 0xFF800000 : f32
    %236 = vector.shape_cast %225 : vector<1x64xi1> to vector<1x64xi1>
    %237 = vector.broadcast %236 : vector<1x64xi1> to vector<4x64xi1>
    %238 = vector.broadcast %cst_250 : f32 to vector<4x64xf32>
    %239 = arith.select %237, %238, %235 : vector<4x64xi1>, vector<4x64xf32>
    %240 = arith.maximumf %234, %239 : vector<4x64xf32>
    %c1_i32_251 = arith.constant 1 : i32
    %241 = tpu.dynamic_rotate %216 by %c1_i32_251 dim 1 : vector<4x64xf32>, i32 -> vector<4x64xf32>
    %cst_252 = arith.constant 0xFF800000 : f32
    %242 = vector.shape_cast %222 : vector<1x64xi1> to vector<1x64xi1>
    %243 = vector.broadcast %242 : vector<1x64xi1> to vector<4x64xi1>
    %244 = vector.broadcast %cst_252 : f32 to vector<4x64xf32>
    %245 = arith.select %243, %244, %241 : vector<4x64xi1>, vector<4x64xf32>
    %246 = arith.maximumf %240, %245 : vector<4x64xf32>
    %c8_i32_253 = arith.constant 8 : i32
    %247 = tpu.dynamic_rotate %216 by %c8_i32_253 dim 1 : vector<4x64xf32>, i32 -> vector<4x64xf32>
    %cst_254 = arith.constant 0xFF800000 : f32
    %248 = vector.shape_cast %225 : vector<1x64xi1> to vector<1x64xi1>
    %249 = vector.broadcast %248 : vector<1x64xi1> to vector<4x64xi1>
    %250 = vector.broadcast %cst_254 : f32 to vector<4x64xf32>
    %251 = arith.select %249, %250, %247 : vector<4x64xi1>, vector<4x64xf32>
    %252 = arith.maximumf %246, %251 : vector<4x64xf32>
    %253 = arith.ori %225, %222 : vector<1x64xi1>
    %c9_i32 = arith.constant 9 : i32
    %254 = tpu.dynamic_rotate %216 by %c9_i32 dim 1 : vector<4x64xf32>, i32 -> vector<4x64xf32>
    %cst_255 = arith.constant 0xFF800000 : f32
    %255 = vector.shape_cast %253 : vector<1x64xi1> to vector<1x64xi1>
    %256 = vector.broadcast %255 : vector<1x64xi1> to vector<4x64xi1>
    %257 = vector.broadcast %cst_255 : f32 to vector<4x64xf32>
    %258 = arith.select %256, %257, %254 : vector<4x64xi1>, vector<4x64xf32>
    %259 = arith.maximumf %252, %258 : vector<4x64xf32>
    %c0_256 = arith.constant 0 : index
    %c0_257 = arith.constant 0 : index
    %c0_258 = arith.constant 0 : index
    %260 = vector.load %arg6[%c0_256, %c0_257, %c0_258] : memref<1x4x64xf32, #tpu.memory_space<vmem>>, vector<1x4x64xf32>
    %261 = vector.shape_cast %260 : vector<1x4x64xf32> to vector<4x64xf32>
    %262 = vector.shape_cast %259 : vector<4x64xf32> to vector<1x4x64xf32>
    tpu.vector_store %arg6[%c0_256, %c0_257, %c0_258], %262 {strides = array<i32>} : memref<1x4x64xf32, #tpu.memory_space<vmem>>, vector<1x4x64xf32>,
    return
  }
  func.func @transform_0(%arg0: i32) -> (i32, i32, i32, i32) {
    %c0_i32 = arith.constant 0 : i32
    %c0_i32_0 = arith.constant 0 : i32
    %c0_i32_1 = arith.constant 0 : i32
    %c0_i32_2 = arith.constant 0 : i32
    return %arg0, %c0_i32, %c0_i32_0, %c0_i32_1 : i32, i32, i32, i32
  }
  func.func @transform_1(%arg0: i32) -> (i32, i32, i32) {
    %c0_i32 = arith.constant 0 : i32
    %c0_i32_0 = arith.constant 0 : i32
    %c0_i32_1 = arith.constant 0 : i32
    %c0_i32_2 = arith.constant 0 : i32
    return %c0_i32, %c0_i32_0, %c0_i32_1 : i32, i32, i32
  }
  func.func @transform_2(%arg0: i32) -> (i32, i32) {
    %c0_i32 = arith.constant 0 : i32
    %c0_i32_0 = arith.constant 0 : i32
    %c0_i32_1 = arith.constant 0 : i32
    return %c0_i32, %c0_i32_0 : i32, i32
  }
  func.func @transform_3(%arg0: i32) -> (i32, i32) {
    %c0_i32 = arith.constant 0 : i32
    %c0_i32_0 = arith.constant 0 : i32
    %c0_i32_1 = arith.constant 0 : i32
    return %c0_i32, %c0_i32_0 : i32, i32
  }
  func.func @transform_4(%arg0: i32) -> (i32, i32, i32, i32) {
    %c0_i32 = arith.constant 0 : i32
    %c0_i32_0 = arith.constant 0 : i32
    %c0_i32_1 = arith.constant 0 : i32
    %c0_i32_2 = arith.constant 0 : i32
    return %arg0, %c0_i32, %c0_i32_0, %c0_i32_1 : i32, i32, i32, i32
  }
  func.func @transform_5(%arg0: i32) -> (i32, i32, i32) {
    %c0_i32 = arith.constant 0 : i32
    %c0_i32_0 = arith.constant 0 : i32
    %c0_i32_1 = arith.constant 0 : i32
    return %arg0, %c0_i32, %c0_i32_0 : i32, i32, i32
  }
}

</mosaic_0001>

<llo_original>
// kernel: tile.9
$region0: #{tile.9}
  %s0 = inlined_call_operand.vmem [shape: s32[8,8], index: 0, kind: input, shape index: {}]
  %s1 = inlined_call_operand.vmem [shape: s32[1,64], index: 1, kind: output, shape index: {}]
  $region1: #{tile.9} parent=0
    #allocation0 [shape = 'u8[4096]{0}', space=vmem, size = 0x1000, scoped, tag = 'scoped mem for output reshape']
    %v2 = vld [vmem:[%s0] sm:$0x1]
    %vm3 = vcmask 64512
    %4 = vst.msk [vmem:[#allocation0] sm:$0x1] %vm3, %v2
    %s5 = scalar_lea.vmem %s0, 7
    %v6 = vld [vmem:[%s5] sm:$0x1]
    %7 = vrot.lane.b32.xlu0 %v6, 56
    %v8 = vpop.permute.xlu0 %7
    %vm9 = vcmask 523712
    %10 = vst.msk [vmem:[#allocation0] sm:$0x1] %vm9, %v8
    %s11 = scalar_lea.vmem %s0, 6
    %v12 = vld [vmem:[%s11] sm:$0x1]
    %13 = vrot.lane.b32.xlu0 %v12, 48
    %v14 = vpop.permute.xlu0 %13
    %vm15 = vcmask 458112
    %16 = vst.msk [vmem:[#allocation0] sm:$0x1] %vm15, %v14
    %s17 = scalar_lea.vmem %s0, 5
    %v18 = vld [vmem:[%s17] sm:$0x1]
    %19 = vrot.lane.b32.xlu0 %v18, 40
    %v20 = vpop.permute.xlu0 %19
    %vm21 = vcmask 392512
    %22 = vst.msk [vmem:[#allocation0] sm:$0x1] %vm21, %v20
    %s23 = scalar_lea.vmem %s0, 4
    %v24 = vld [vmem:[%s23] sm:$0x1]
    %25 = vrot.lane.b32.xlu0 %v24, 32
    %v26 = vpop.permute.xlu0 %25
    %vm27 = vcmask 326912
    %28 = vst.msk [vmem:[#allocation0] sm:$0x1] %vm27, %v26
    %s29 = scalar_lea.vmem %s0, 3
    %v30 = vld [vmem:[%s29] sm:$0x1]
    %31 = vrot.lane.b32.xlu0 %v30, 24
    %v32 = vpop.permute.xlu0 %31
    %vm33 = vcmask 261312
    %34 = vst.msk [vmem:[#allocation0] sm:$0x1] %vm33, %v32
    %s35 = scalar_lea.vmem %s0, 2
    %v36 = vld [vmem:[%s35] sm:$0x1]
    %37 = vrot.lane.b32.xlu0 %v36, 16
    %v38 = vpop.permute.xlu0 %37
    %vm39 = vcmask 195712
    %40 = vst.msk [vmem:[#allocation0] sm:$0x1] %vm39, %v38
    %s41 = scalar_lea.vmem %s0, 1
    %v42 = vld [vmem:[%s41] sm:$0x1]
    %43 = vrot.lane.b32.xlu0 %v42, 8
    %v44 = vpop.permute.xlu0 %43
    %vm45 = vcmask 130112
    %46 = vst.msk [vmem:[#allocation0] sm:$0x1] %vm45, %v44
    %s48 = ssub.s32 2, 1
    %v49 = vld [vmem:[#allocation0] sm:%s48]
    %s51 = ssub.s32 2, 1
    %52 = vst [vmem:[%s1] sm:%s51] %v49

// kernel: l0sx_forward.1
$region0: #{l0sx_forward.1}
  #allocation0 [shape = 'u32[]', space=smem, size = 0x4, offset = 0x4, fixed_abs, tag = 'smem constant byte address 0x4 - core index']
  #allocation1 [shape = 'u32[72,128]{1,0:T(1,128)}', space=vmem, size = 0x9000, scoped, tag = 'internal scratch']
  %s0 = inlined_call_operand.vmem [shape: f32[2,4,28,112], index: 0, kind: input, shape index: {}]
  %s1 = inlined_call_operand.vmem [shape: f32[7,4,28], index: 1, kind: input, shape index: {}]
  %s2 = inlined_call_operand.vmem [shape: f32[4,1], index: 2, kind: input, shape index: {}]
  %s3 = inlined_call_operand.vmem [shape: s32[1,64], index: 3, kind: input, shape index: {}]
  %s4 = inlined_call_operand.vmem [shape: f32[2,4,4,64], index: 4, kind: output, shape index: {0}]
  %s5 = inlined_call_operand.vmem [shape: f32[2,4,64], index: 5, kind: output, shape index: {1}]
  %6 = xla_tuple %s4, %s5
  %s7 = sld [smem:[#allocation0]]
  $region57: #{l0sx_forward.1} parent=0
    _
  %s9 = ssub.s32 1, %s7
  %s10 = scalar_select 0, %s9, %s7
  loop: start=0, step=1, limit=4
  $region2: #{l0sx_forward.1} parent=0 // loop_pre_header
    _
  $region3: #{l0sx_forward.1} parent=0 // loop_header
    %s12 = sphi 0, %s16
    %p13 = scmp.ge.s32.totalorder %s12, 4
    %s22 = sphi 0, %s24
    %s25 = sphi 0, %s22
    %s26 = sphi 0, %s25
    %s42 = sphi 0, %s26
    %s46 = sphi 0, %s46
    %s48 = sphi 0, %s46
    %s49 = sphi 0, %s48
    %s63 = sphi 0, %s49
    %s67 = sphi 0, %s67
    %s69 = sphi 0, %s67
    %s70 = sphi 0, %s69
    %s84 = sphi 0, %s70
    %s88 = sphi 0, %s88
    %s90 = sphi 0, %s88
    %s91 = sphi 0, %s90
    %s105 = sphi 0, %s91
    %s111 = sphi 0, %s113
    %s114 = sphi 0, %s111
    %s115 = sphi 0, %s114
    %s131 = sphi 0, %s115
    %s137 = sphi 0, %s139
    %s140 = sphi 0, %s137
    %s141 = sphi 0, %s140
    %s157 = sphi 0, %s141
  $region4: #{l0sx_forward.1} parent=0 // loop_header_branch
    %15 = sbr.rel (%p13) target = $region8
  $region5: #{l0sx_forward.1} parent=0 // loop_body
    %s17 = ssub.s32 %s12, 1
    %s18 = ssub.s32 %s12, 2
    %s19 = sadd.s32 %s12, 1
    %s20 = ssub.s32 %s12, %s19
    %p21 = scmp.eq.s32.totalorder %s20, 0
    %s23 = sadd.s32 %s22, 1
    %s24 = scalar_select %p21, %s22, %s23
    %p27 = pneg %p21
    %p28 = scmp.eq.s32.totalorder %s12, 1
    %p29 = por %p27, %p28
    %p30 = scmp.ne.s32.totalorder %s22, %s25
    %p31 = scmp.eq.s32.totalorder %s12, 0
    %p32 = por %p30, %p31
    %p33 = scmp.ne.s32.totalorder %s22, %s25
    %p34 = scmp.eq.s32.totalorder %s17, 1
    %p35 = por %p33, %p34
    %p36 = scmp.ne.s32.totalorder %s25, %s26
    %p37 = scmp.eq.s32.totalorder %s17, 0
    %p38 = por %p36, %p37
    %p39 = scmp.ne.s32.totalorder %s25, %s26
    %p40 = scmp.eq.s32.totalorder %s18, 1
    %p41 = por %p39, %p40
    %p43 = scmp.ne.s32.totalorder %s26, %s42
    %p44 = scmp.eq.s32.totalorder %s18, 0
    %p45 = por %p43, %p44
    %s47 = sadd.s32 %s46, 1
    %p50 = scmp.eq.s32.totalorder %s12, 1
    %p51 = scmp.ne.s32.totalorder %s46, %s48
    %p52 = scmp.eq.s32.totalorder %s12, 0
    %p53 = por %p51, %p52
    %p54 = scmp.ne.s32.totalorder %s46, %s48
    %p55 = scmp.eq.s32.totalorder %s17, 1
    %p56 = por %p54, %p55
    %p57 = scmp.ne.s32.totalorder %s48, %s49
    %p58 = scmp.eq.s32.totalorder %s17, 0
    %p59 = por %p57, %p58
    %p60 = scmp.ne.s32.totalorder %s48, %s49
    %p61 = scmp.eq.s32.totalorder %s18, 1
    %p62 = por %p60, %p61
    %p64 = scmp.ne.s32.totalorder %s49, %s63
    %p65 = scmp.eq.s32.totalorder %s18, 0
    %p66 = por %p64, %p65
    %s68 = sadd.s32 %s67, 1
    %p71 = scmp.eq.s32.totalorder %s12, 1
    %p72 = scmp.ne.s32.totalorder %s67, %s69
    %p73 = scmp.eq.s32.totalorder %s12, 0
    %p74 = por %p72, %p73
    %p75 = scmp.ne.s32.totalorder %s67, %s69
    %p76 = scmp.eq.s32.totalorder %s17, 1
    %p77 = por %p75, %p76
    %p78 = scmp.ne.s32.totalorder %s69, %s70
    %p79 = scmp.eq.s32.totalorder %s17, 0
    %p80 = por %p78, %p79
    %p81 = scmp.ne.s32.totalorder %s69, %s70
    %p82 = scmp.eq.s32.totalorder %s18, 1
    %p83 = por %p81, %p82
    %p85 = scmp.ne.s32.totalorder %s70, %s84
    %p86 = scmp.eq.s32.totalorder %s18, 0
    %p87 = por %p85, %p86
    %s89 = sadd.s32 %s88, 1
    %p92 = scmp.eq.s32.totalorder %s12, 1
    %p93 = scmp.ne.s32.totalorder %s88, %s90
    %p94 = scmp.eq.s32.totalorder %s12, 0
    %p95 = por %p93, %p94
    %p96 = scmp.ne.s32.totalorder %s88, %s90
    %p97 = scmp.eq.s32.totalorder %s17, 1
    %p98 = por %p96, %p97
    %p99 = scmp.ne.s32.totalorder %s90, %s91
    %p100 = scmp.eq.s32.totalorder %s17, 0
    %p101 = por %p99, %p100
    %p102 = scmp.ne.s32.totalorder %s90, %s91
    %p103 = scmp.eq.s32.totalorder %s18, 1
    %p104 = por %p102, %p103
    %p106 = scmp.ne.s32.totalorder %s91, %s105
    %p107 = scmp.eq.s32.totalorder %s18, 0
    %p108 = por %p106, %p107
    %s109 = ssub.s32 %s12, %s19
    %p110 = scmp.eq.s32.totalorder %s109, 0
    %s112 = sadd.s32 %s111, 1
    %s113 = scalar_select %p110, %s111, %s112
    %p116 = pneg %p110
    %p117 = scmp.eq.s32.totalorder %s12, 1
    %p118 = por %p116, %p117
    %p119 = scmp.ne.s32.totalorder %s111, %s114
    %p120 = scmp.eq.s32.totalorder %s12, 0
    %p121 = por %p119, %p120
    %p122 = scmp.ne.s32.totalorder %s111, %s114
    %p123 = scmp.eq.s32.totalorder %s17, 1
    %p124 = por %p122, %p123
    %p125 = scmp.ne.s32.totalorder %s114, %s115
    %p126 = scmp.eq.s32.totalorder %s17, 0
    %p127 = por %p125, %p126
    %p128 = scmp.ne.s32.totalorder %s114, %s115
    %p129 = scmp.eq.s32.totalorder %s18, 1
    %p130 = por %p128, %p129
    %p132 = scmp.ne.s32.totalorder %s115, %s131
    %p133 = scmp.eq.s32.totalorder %s18, 0
    %p134 = por %p132, %p133
    %s135 = ssub.s32 %s12, %s19
    %p136 = scmp.eq.s32.totalorder %s135, 0
    %s138 = sadd.s32 %s137, 1
    %s139 = scalar_select %p136, %s137, %s138
    %p142 = pneg %p136
    %p143 = scmp.eq.s32.totalorder %s12, 1
    %p144 = por %p142, %p143
    %p145 = scmp.ne.s32.totalorder %s137, %s140
    %p146 = scmp.eq.s32.totalorder %s12, 0
    %p147 = por %p145, %p146
    %p148 = scmp.ne.s32.totalorder %s137, %s140
    %p149 = scmp.eq.s32.totalorder %s17, 1
    %p150 = por %p148, %p149
    %p151 = scmp.ne.s32.totalorder %s140, %s141
    %p152 = scmp.eq.s32.totalorder %s17, 0
    %p153 = por %p151, %p152
    %p154 = scmp.ne.s32.totalorder %s140, %s141
    %p155 = scmp.eq.s32.totalorder %s18, 1
    %p156 = por %p154, %p155
    %p158 = scmp.ne.s32.totalorder %s141, %s157
    %p159 = scmp.eq.s32.totalorder %s18, 0
    %p160 = por %p158, %p159
    %p161 = scmp.le.s32.totalorder 1, %s12
    %p162 = scmp.lt.s32.totalorder %s12, 3
    %p163 = pnand %p161, %p162
    %p164 = pneg %p163
    // Predicated region
    $region9: #{l0sx_forward.1} parent=5 // pred_check
      _
    $region10: #{l0sx_forward.1} parent=5 // pred_check_branch
      %166 = sbr.rel (%p163) target = $region12
    $region11: #{l0sx_forward.1} parent=5 // pred_region
      %s167 = ssub.s32 %s12, 1
      // Predicated region
      $region13: #{l0sx_forward.1} parent=11 // pred_check
        %p168 = pneg %p59
      $region14: #{l0sx_forward.1} parent=11 // pred_check_branch
        %170 = sbr.rel (%p168) target = $region16
      $region15: #{l0sx_forward.1} parent=11 // pred_region
        _
      $region16: #{l0sx_forward.1} parent=11 // pred_fallthru
        _
      // Predicated region
      $region17: #{l0sx_forward.1} parent=11 // pred_check
        %p171 = pneg %p80
      $region18: #{l0sx_forward.1} parent=11 // pred_check_branch
        %173 = sbr.rel (%p171) target = $region20
      $region19: #{l0sx_forward.1} parent=11 // pred_region
        _
      $region20: #{l0sx_forward.1} parent=11 // pred_fallthru
        _
      // Predicated region
      $region21: #{l0sx_forward.1} parent=11 // pred_check
        %p174 = pneg %p101
      $region22: #{l0sx_forward.1} parent=11 // pred_check_branch
        %176 = sbr.rel (%p174) target = $region24
      $region23: #{l0sx_forward.1} parent=11 // pred_region
        _
      $region24: #{l0sx_forward.1} parent=11 // pred_fallthru
        _
    $region12: #{l0sx_forward.1} parent=5 // pred_fallthru
      _
    %p177 = scmp.lt.s32.totalorder %s12, 2
    // Predicated region
    $region25: #{l0sx_forward.1} parent=5 // pred_check
      %p178 = pneg %p177
    $region26: #{l0sx_forward.1} parent=5 // pred_check_branch
      %180 = sbr.rel (%p178) target = $region28
    $region27: #{l0sx_forward.1} parent=5 // pred_region
      // Predicated region
      $region29: #{l0sx_forward.1} parent=27 // pred_check
        %p181 = pneg %p32
      $region30: #{l0sx_forward.1} parent=27 // pred_check_branch
        %183 = sbr.rel (%p181) target = $region32
      $region31: #{l0sx_forward.1} parent=27 // pred_region
        %p184 = scmp.lt.s32.totalorder %s12, 1
        %s185 = scalar_select %p184, %s12, 1
        %s186 = smul.addr %s185, 16
        %s187 = smul.addr %s186, 8
        %s188 = scalar_lea.vmem %s0, %s187
      $region32: #{l0sx_forward.1} parent=27 // pred_fallthru
        _
    $region28: #{l0sx_forward.1} parent=5 // pred_fallthru
      _
    %p189 = scmp.le.s32.totalorder 1, %s12
    %p190 = scmp.lt.s32.totalorder %s12, 3
    %p191 = pnand %p189, %p190
    %p192 = pneg %p191
    // Predicated region
    $region33: #{l0sx_forward.1} parent=5 // pred_check
      _
    $region34: #{l0sx_forward.1} parent=5 // pred_check_branch
      %194 = sbr.rel (%p191) target = $region36
    $region35: #{l0sx_forward.1} parent=5 // pred_region
      %s195 = ssub.s32 %s12, 1
      %p196 = scmp.lt.s32.totalorder %s17, 1
      %s197 = scalar_select %p196, %s17, 1
      %s198 = smul.addr %s197, 16
      %s199 = smul.addr %s198, 8
      %s200 = scalar_lea.vmem %s0, %s199
      %p201 = pneg %p38
      %p202 = pneg %p35
      %p203 = pneg %p59
      %p204 = pneg %p56
      %p205 = pneg %p80
      %p206 = pneg %p77
      %p207 = pneg %p101
      %p208 = pneg %p98
      %p209 = pneg %p127
      %p210 = pneg %p124
      %p211 = scmp.lt.s32.totalorder %s17, 1
      %s212 = scalar_select %p211, %s17, 1
      %s213 = smul.addr %s212, 4
      %s214 = smul.addr %s213, 4
      %s215 = scalar_lea.vmem %s4, %s214
      %p216 = pneg %p153
      %p217 = pneg %p150
      %p218 = scmp.lt.s32.totalorder %s17, 1
      %s219 = scalar_select %p218, %s17, 1
      %s220 = smul.addr %s219, 4
      %s221 = scalar_lea.vmem %s5, %s220
      %p222 = scmp.lt.s32.totalorder %s17, 1
      %s223 = scalar_select %p222, %s17, 1
      %s224 = smul.addr %s223, 16
      %s225 = smul.addr %s224, 8
      %s226 = scalar_lea.vmem %s0, %s225
      %p227 = scmp.lt.s32.totalorder %s17, 1
      %s228 = scalar_select %p227, %s17, 1
      %s229 = smul.addr %s228, 4
      %s230 = smul.addr %s229, 4
      %s231 = scalar_lea.vmem %s4, %s230
      %p232 = scmp.lt.s32.totalorder %s17, 1
      %s233 = scalar_select %p232, %s17, 1
      %s234 = smul.addr %s233, 4
      %s235 = scalar_lea.vmem %s5, %s234
      %v236 = vld [vmem:[%s1] sm:$0xf]
      %v237 = vld [vmem:[%s226] sm:$0xff]
      %v238 = vld [vmem:[%s226 + $0x8] sm:$0xff]
      %v239 = vld [vmem:[%s226 + $0x10] sm:$0xff]
      %v240 = vld [vmem:[%s226 + $0x18] sm:$0xf]
      %s241 = scalar_lea.vmem %s1, 4
      %v242 = vld [vmem:[%s241] sm:$0xf]
      %247 = vrot.lane.b32.xlu0 %v237, 120
      %v248 = vpop.permute.xlu0 %247
      %249 = vrot.lane.b32.xlu0 %v238, 120
      %v250 = vpop.permute.xlu0 %249
      %251 = vrot.lane.b32.xlu0 %v239, 120
      %v252 = vpop.permute.xlu0 %251
      %253 = vrot.lane.b32.xlu0 %v240, 120
      %v254 = vpop.permute.xlu0 %253
      %vm258 = vcmask 228352
      %v260 = vsel %vm258, %v242, 0
      %vm262 = vcmask 1043456
      %v263 = vsel %vm262, %v254, 0
      %265 = vmatpush.msra.mxu0 0.0
      %266 = vmatpush.msra.mxu0 0.0
      %267 = vmatpush.msra.mxu0 0.0
      %268 = vmatpush.msra.mxu0 0.0
      %269 = vmatpush.msra.mxu0 0.0
      %270 = vmatpush.msra.mxu0 0.0
      %271 = vmatpush.msra.mxu0 0.0
      %272 = vmatpush.msra.mxu0 0.0
      %273 = vmatpush.msra.mxu0 0.0
      %274 = vmatpush.msra.mxu0 0.0
      %275 = vmatpush.msra.mxu0 0.0
      %276 = vmatpush.msra.mxu0 0.0
      %v277 = vand.u32 %v263, 4294901760
      %278 = vmatpush.msra.mxu0 %v277
      %v279 = vand.u32 %v252, 4294901760
      %280 = vmatpush.msra.mxu0 %v279
      %v281 = vand.u32 %v250, 4294901760
      %282 = vmatpush.msra.mxu0 %v281
      %v283 = vand.u32 %v248, 4294901760
      %284 = vmatpush.msra.mxu0 %v283
      %v285 = vand.u32 %v260, 4294901760
      %v286 = vsub.f32 %v260, %v285
      %v287 = vand.u32 %v286, 4294901760
      %v288 = vsub.f32 %v286, %v287
      %v289 = vand.u32 %v288, 4294901760
      %290 = vmatmul.f32.gmra.mxu0 %v289
      %v291 = vpop.f32.mrf.mxu0
      %v292 = vadd.f32 0.0, %v291
      %293 = vdwg.mxu0
      %294 = vmatpush.msra.mxu0 0.0
      %295 = vmatpush.msra.mxu0 0.0
      %296 = vmatpush.msra.mxu0 0.0
      %297 = vmatpush.msra.mxu0 0.0
      %298 = vmatpush.msra.mxu0 0.0
      %299 = vmatpush.msra.mxu0 0.0
      %300 = vmatpush.msra.mxu0 0.0
      %301 = vmatpush.msra.mxu0 0.0
      %302 = vmatpush.msra.mxu0 0.0
      %303 = vmatpush.msra.mxu0 0.0
      %304 = vmatpush.msra.mxu0 0.0
      %305 = vmatpush.msra.mxu0 0.0
      %v306 = vand.u32 %v263, 4294901760
      %v307 = vsub.f32 %v263, %v306
      %v308 = vand.u32 %v307, 4294901760
      %v309 = vsub.f32 %v307, %v308
      %v310 = vand.u32 %v309, 4294901760
      %311 = vmatpush.msra.mxu0 %v310
      %v312 = vand.u32 %v252, 4294901760
      %v313 = vsub.f32 %v252, %v312
      %v314 = vand.u32 %v313, 4294901760
      %v315 = vsub.f32 %v313, %v314
      %v316 = vand.u32 %v315, 4294901760
      %317 = vmatpush.msra.mxu0 %v316
      %v318 = vand.u32 %v250, 4294901760
      %v319 = vsub.f32 %v250, %v318
      %v320 = vand.u32 %v319, 4294901760
      %v321 = vsub.f32 %v319, %v320
      %v322 = vand.u32 %v321, 4294901760
      %323 = vmatpush.msra.mxu0 %v322
      %v324 = vand.u32 %v248, 4294901760
      %v325 = vsub.f32 %v248, %v324
      %v326 = vand.u32 %v325, 4294901760
      %v327 = vsub.f32 %v325, %v326
      %v328 = vand.u32 %v327, 4294901760
      %329 = vmatpush.msra.mxu0 %v328
      %v330 = vand.u32 %v260, 4294901760
      %331 = vmatmul.f32.gmra.mxu0 %v330
      %v332 = vpop.f32.mrf.mxu0
      %v333 = vadd.f32 %v292, %v332
      %334 = vdwg.mxu0
      %335 = vmatpush.msra.mxu0 0.0
      %336 = vmatpush.msra.mxu0 0.0
      %337 = vmatpush.msra.mxu0 0.0
      %338 = vmatpush.msra.mxu0 0.0
      %339 = vmatpush.msra.mxu0 0.0
      %340 = vmatpush.msra.mxu0 0.0
      %341 = vmatpush.msra.mxu0 0.0
      %342 = vmatpush.msra.mxu0 0.0
      %343 = vmatpush.msra.mxu0 0.0
      %344 = vmatpush.msra.mxu0 0.0
      %345 = vmatpush.msra.mxu0 0.0
      %346 = vmatpush.msra.mxu0 0.0
      %v347 = vand.u32 %v263, 4294901760
      %v348 = vsub.f32 %v263, %v347
      %349 = vmatpush.msra.mxu0 %v348
      %v350 = vand.u32 %v252, 4294901760
      %v351 = vsub.f32 %v252, %v350
      %352 = vmatpush.msra.mxu0 %v351
      %v353 = vand.u32 %v250, 4294901760
      %v354 = vsub.f32 %v250, %v353
      %355 = vmatpush.msra.mxu0 %v354
      %v356 = vand.u32 %v248, 4294901760
      %v357 = vsub.f32 %v248, %v356
      %358 = vmatpush.msra.mxu0 %v357
      %v359 = vand.u32 %v260, 4294901760
      %v360 = vsub.f32 %v260, %v359
      %361 = vmatmul.f32.gmra.mxu0 %v360
      %v362 = vpop.f32.mrf.mxu0
      %v363 = vadd.f32 %v333, %v362
      %364 = vdwg.mxu0
      %365 = vmatpush.msra.mxu0 0.0
      %366 = vmatpush.msra.mxu0 0.0
      %367 = vmatpush.msra.mxu0 0.0
      %368 = vmatpush.msra.mxu0 0.0
      %369 = vmatpush.msra.mxu0 0.0
      %370 = vmatpush.msra.mxu0 0.0
      %371 = vmatpush.msra.mxu0 0.0
      %372 = vmatpush.msra.mxu0 0.0
      %373 = vmatpush.msra.mxu0 0.0
      %374 = vmatpush.msra.mxu0 0.0
      %375 = vmatpush.msra.mxu0 0.0
      %376 = vmatpush.msra.mxu0 0.0
      %v377 = vand.u32 %v263, 4294901760
      %378 = vmatpush.msra.mxu0 %v377
      %v379 = vand.u32 %v252, 4294901760
      %380 = vmatpush.msra.mxu0 %v379
      %v381 = vand.u32 %v250, 4294901760
      %382 = vmatpush.msra.mxu0 %v381
      %v383 = vand.u32 %v248, 4294901760
      %384 = vmatpush.msra.mxu0 %v383
      %v385 = vand.u32 %v260, 4294901760
      %v386 = vsub.f32 %v260, %v385
      %v387 = vand.u32 %v386, 4294901760
      %388 = vmatmul.f32.gmra.mxu0 %v387
      %v389 = vpop.f32.mrf.mxu0
      %v390 = vadd.f32 %v363, %v389
      %391 = vdwg.mxu0
      %392 = vmatpush.msra.mxu0 0.0
      %393 = vmatpush.msra.mxu0 0.0
      %394 = vmatpush.msra.mxu0 0.0
      %395 = vmatpush.msra.mxu0 0.0
      %396 = vmatpush.msra.mxu0 0.0
      %397 = vmatpush.msra.mxu0 0.0
      %398 = vmatpush.msra.mxu0 0.0
      %399 = vmatpush.msra.mxu0 0.0
      %400 = vmatpush.msra.mxu0 0.0
      %401 = vmatpush.msra.mxu0 0.0
      %402 = vmatpush.msra.mxu0 0.0
      %403 = vmatpush.msra.mxu0 0.0
      %v404 = vand.u32 %v263, 4294901760
      %v405 = vsub.f32 %v263, %v404
      %v406 = vand.u32 %v405, 4294901760
      %407 = vmatpush.msra.mxu0 %v406
      %v408 = vand.u32 %v252, 4294901760
      %v409 = vsub.f32 %v252, %v408
      %v410 = vand.u32 %v409, 4294901760
      %411 = vmatpush.msra.mxu0 %v410
      %v412 = vand.u32 %v250, 4294901760
      %v413 = vsub.f32 %v250, %v412
      %v414 = vand.u32 %v413, 4294901760
      %415 = vmatpush.msra.mxu0 %v414
      %v416 = vand.u32 %v248, 4294901760
      %v417 = vsub.f32 %v248, %v416
      %v418 = vand.u32 %v417, 4294901760
      %419 = vmatpush.msra.mxu0 %v418
      %v420 = vand.u32 %v260, 4294901760
      %421 = vmatmul.f32.gmra.mxu0 %v420
      %v422 = vpop.f32.mrf.mxu0
      %v423 = vadd.f32 %v390, %v422
      %424 = vdwg.mxu0
      %425 = vmatpush.msra.mxu0 0.0
      %426 = vmatpush.msra.mxu0 0.0
      %427 = vmatpush.msra.mxu0 0.0
      %428 = vmatpush.msra.mxu0 0.0
      %429 = vmatpush.msra.mxu0 0.0
      %430 = vmatpush.msra.mxu0 0.0
      %431 = vmatpush.msra.mxu0 0.0
      %432 = vmatpush.msra.mxu0 0.0
      %433 = vmatpush.msra.mxu0 0.0
      %434 = vmatpush.msra.mxu0 0.0
      %435 = vmatpush.msra.mxu0 0.0
      %436 = vmatpush.msra.mxu0 0.0
      %v437 = vand.u32 %v263, 4294901760
      %438 = vmatpush.msra.mxu0 %v437
      %v439 = vand.u32 %v252, 4294901760
      %440 = vmatpush.msra.mxu0 %v439
      %v441 = vand.u32 %v250, 4294901760
      %442 = vmatpush.msra.mxu0 %v441
      %v443 = vand.u32 %v248, 4294901760
      %444 = vmatpush.msra.mxu0 %v443
      %v445 = vand.u32 %v260, 4294901760
      %446 = vmatmul.f32.gmra.mxu0 %v445
      %v447 = vpop.f32.mrf.mxu0
      %v448 = vadd.f32 %v423, %v447
      %449 = vdwg.mxu0
      %v451 = vsel %vm258, %v236, 0
      %v453 = vsel %vm262, %v240, 0
      %455 = vmatpush.msra.mxu0 0.0
      %456 = vmatpush.msra.mxu0 0.0
      %457 = vmatpush.msra.mxu0 0.0
      %458 = vmatpush.msra.mxu0 0.0
      %459 = vmatpush.msra.mxu0 0.0
      %460 = vmatpush.msra.mxu0 0.0
      %461 = vmatpush.msra.mxu0 0.0
      %462 = vmatpush.msra.mxu0 0.0
      %463 = vmatpush.msra.mxu0 0.0
      %464 = vmatpush.msra.mxu0 0.0
      %465 = vmatpush.msra.mxu0 0.0
      %466 = vmatpush.msra.mxu0 0.0
      %v467 = vand.u32 %v453, 4294901760
      %468 = vmatpush.msra.mxu0 %v467
      %v469 = vand.u32 %v239, 4294901760
      %470 = vmatpush.msra.mxu0 %v469
      %v471 = vand.u32 %v238, 4294901760
      %472 = vmatpush.msra.mxu0 %v471
      %v473 = vand.u32 %v237, 4294901760
      %474 = vmatpush.msra.mxu0 %v473
      %v475 = vand.u32 %v451, 4294901760
      %v476 = vsub.f32 %v451, %v475
      %v477 = vand.u32 %v476, 4294901760
      %v478 = vsub.f32 %v476, %v477
      %v479 = vand.u32 %v478, 4294901760
      %480 = vmatmul.f32.gmra.mxu0 %v479
      %v481 = vpop.f32.mrf.mxu0
      %v482 = vadd.f32 %v448, %v481
      %483 = vdwg.mxu0
      %484 = vmatpush.msra.mxu0 0.0
      %485 = vmatpush.msra.mxu0 0.0
      %486 = vmatpush.msra.mxu0 0.0
      %487 = vmatpush.msra.mxu0 0.0
      %488 = vmatpush.msra.mxu0 0.0
      %489 = vmatpush.msra.mxu0 0.0
      %490 = vmatpush.msra.mxu0 0.0
      %491 = vmatpush.msra.mxu0 0.0
      %492 = vmatpush.msra.mxu0 0.0
      %493 = vmatpush.msra.mxu0 0.0
      %494 = vmatpush.msra.mxu0 0.0
      %495 = vmatpush.msra.mxu0 0.0
      %v496 = vand.u32 %v453, 4294901760
      %v497 = vsub.f32 %v453, %v496
      %v498 = vand.u32 %v497, 4294901760
      %v499 = vsub.f32 %v497, %v498
      %v500 = vand.u32 %v499, 4294901760
      %501 = vmatpush.msra.mxu0 %v500
      %v502 = vand.u32 %v239, 4294901760
      %v503 = vsub.f32 %v239, %v502
      %v504 = vand.u32 %v503, 4294901760
      %v505 = vsub.f32 %v503, %v504
      %v506 = vand.u32 %v505, 4294901760
      %507 = vmatpush.msra.mxu0 %v506
      %v508 = vand.u32 %v238, 4294901760
      %v509 = vsub.f32 %v238, %v508
      %v510 = vand.u32 %v509, 4294901760
      %v511 = vsub.f32 %v509, %v510
      %v512 = vand.u32 %v511, 4294901760
      %513 = vmatpush.msra.mxu0 %v512
      %v514 = vand.u32 %v237, 4294901760
      %v515 = vsub.f32 %v237, %v514
      %v516 = vand.u32 %v515, 4294901760
      %v517 = vsub.f32 %v515, %v516
      %v518 = vand.u32 %v517, 4294901760
      %519 = vmatpush.msra.mxu0 %v518
      %v520 = vand.u32 %v451, 4294901760
      %521 = vmatmul.f32.gmra.mxu0 %v520
      %v522 = vpop.f32.mrf.mxu0
      %v523 = vadd.f32 %v482, %v522
      %524 = vdwg.mxu0
      %525 = vmatpush.msra.mxu0 0.0
      %526 = vmatpush.msra.mxu0 0.0
      %527 = vmatpush.msra.mxu0 0.0
      %528 = vmatpush.msra.mxu0 0.0
      %529 = vmatpush.msra.mxu0 0.0
      %530 = vmatpush.msra.mxu0 0.0
      %531 = vmatpush.msra.mxu0 0.0
      %532 = vmatpush.msra.mxu0 0.0
      %533 = vmatpush.msra.mxu0 0.0
      %534 = vmatpush.msra.mxu0 0.0
      %535 = vmatpush.msra.mxu0 0.0
      %536 = vmatpush.msra.mxu0 0.0
      %v537 = vand.u32 %v453, 4294901760
      %v538 = vsub.f32 %v453, %v537
      %539 = vmatpush.msra.mxu0 %v538
      %v540 = vand.u32 %v239, 4294901760
      %v541 = vsub.f32 %v239, %v540
      %542 = vmatpush.msra.mxu0 %v541
      %v543 = vand.u32 %v238, 4294901760
      %v544 = vsub.f32 %v238, %v543
      %545 = vmatpush.msra.mxu0 %v544
      %v546 = vand.u32 %v237, 4294901760
      %v547 = vsub.f32 %v237, %v546
      %548 = vmatpush.msra.mxu0 %v547
      %v549 = vand.u32 %v451, 4294901760
      %v550 = vsub.f32 %v451, %v549
      %551 = vmatmul.f32.gmra.mxu0 %v550
      %v552 = vpop.f32.mrf.mxu0
      %v553 = vadd.f32 %v523, %v552
      %554 = vdwg.mxu0
      %555 = vmatpush.msra.mxu0 0.0
      %556 = vmatpush.msra.mxu0 0.0
      %557 = vmatpush.msra.mxu0 0.0
      %558 = vmatpush.msra.mxu0 0.0
      %559 = vmatpush.msra.mxu0 0.0
      %560 = vmatpush.msra.mxu0 0.0
      %561 = vmatpush.msra.mxu0 0.0
      %562 = vmatpush.msra.mxu0 0.0
      %563 = vmatpush.msra.mxu0 0.0
      %564 = vmatpush.msra.mxu0 0.0
      %565 = vmatpush.msra.mxu0 0.0
      %566 = vmatpush.msra.mxu0 0.0
      %v567 = vand.u32 %v453, 4294901760
      %568 = vmatpush.msra.mxu0 %v567
      %v569 = vand.u32 %v239, 4294901760
      %570 = vmatpush.msra.mxu0 %v569
      %v571 = vand.u32 %v238, 4294901760
      %572 = vmatpush.msra.mxu0 %v571
      %v573 = vand.u32 %v237, 4294901760
      %574 = vmatpush.msra.mxu0 %v573
      %v575 = vand.u32 %v451, 4294901760
      %v576 = vsub.f32 %v451, %v575
      %v577 = vand.u32 %v576, 4294901760
      %578 = vmatmul.f32.gmra.mxu0 %v577
      %v579 = vpop.f32.mrf.mxu0
      %v580 = vadd.f32 %v553, %v579
      %581 = vdwg.mxu0
      %582 = vmatpush.msra.mxu0 0.0
      %583 = vmatpush.msra.mxu0 0.0
      %584 = vmatpush.msra.mxu0 0.0
      %585 = vmatpush.msra.mxu0 0.0
      %586 = vmatpush.msra.mxu0 0.0
      %587 = vmatpush.msra.mxu0 0.0
      %588 = vmatpush.msra.mxu0 0.0
      %589 = vmatpush.msra.mxu0 0.0
      %590 = vmatpush.msra.mxu0 0.0
      %591 = vmatpush.msra.mxu0 0.0
      %592 = vmatpush.msra.mxu0 0.0
      %593 = vmatpush.msra.mxu0 0.0
      %v594 = vand.u32 %v453, 4294901760
      %v595 = vsub.f32 %v453, %v594
      %v596 = vand.u32 %v595, 4294901760
      %597 = vmatpush.msra.mxu0 %v596
      %v598 = vand.u32 %v239, 4294901760
      %v599 = vsub.f32 %v239, %v598
      %v600 = vand.u32 %v599, 4294901760
      %601 = vmatpush.msra.mxu0 %v600
      %v602 = vand.u32 %v238, 4294901760
      %v603 = vsub.f32 %v238, %v602
      %v604 = vand.u32 %v603, 4294901760
      %605 = vmatpush.msra.mxu0 %v604
      %v606 = vand.u32 %v237, 4294901760
      %v607 = vsub.f32 %v237, %v606
      %v608 = vand.u32 %v607, 4294901760
      %609 = vmatpush.msra.mxu0 %v608
      %v610 = vand.u32 %v451, 4294901760
      %611 = vmatmul.f32.gmra.mxu0 %v610
      %v612 = vpop.f32.mrf.mxu0
      %v613 = vadd.f32 %v580, %v612
      %614 = vdwg.mxu0
      %615 = vmatpush.msra.mxu0 0.0
      %616 = vmatpush.msra.mxu0 0.0
      %617 = vmatpush.msra.mxu0 0.0
      %618 = vmatpush.msra.mxu0 0.0
      %619 = vmatpush.msra.mxu0 0.0
      %620 = vmatpush.msra.mxu0 0.0
      %621 = vmatpush.msra.mxu0 0.0
      %622 = vmatpush.msra.mxu0 0.0
      %623 = vmatpush.msra.mxu0 0.0
      %624 = vmatpush.msra.mxu0 0.0
      %625 = vmatpush.msra.mxu0 0.0
      %626 = vmatpush.msra.mxu0 0.0
      %v627 = vand.u32 %v453, 4294901760
      %628 = vmatpush.msra.mxu0 %v627
      %v629 = vand.u32 %v239, 4294901760
      %630 = vmatpush.msra.mxu0 %v629
      %v631 = vand.u32 %v238, 4294901760
      %632 = vmatpush.msra.mxu0 %v631
      %v633 = vand.u32 %v237, 4294901760
      %634 = vmatpush.msra.mxu0 %v633
      %v635 = vand.u32 %v451, 4294901760
      %636 = vmatmul.f32.gmra.mxu0 %v635
      %v637 = vpop.f32.mrf.mxu0
      %v638 = vadd.f32 %v613, %v637
      %639 = vdwg.mxu0
      %s640 = scalar_lea.vmem %s1, 8
      %v641 = vld [vmem:[%s640] sm:$0xf]
      %642 = vrot.lane.b32.xlu0 %v237, 112
      %v643 = vpop.permute.xlu0 %642
      %644 = vrot.lane.b32.xlu0 %v238, 112
      %v645 = vpop.permute.xlu0 %644
      %646 = vrot.lane.b32.xlu0 %v239, 112
      %v647 = vpop.permute.xlu0 %646
      %648 = vrot.lane.b32.xlu0 %v240, 112
      %v649 = vpop.permute.xlu0 %648
      %v654 = vsel %vm258, %v641, 0
      %v656 = vsel %vm262, %v649, 0
      %658 = vmatpush.msra.mxu0 0.0
      %659 = vmatpush.msra.mxu0 0.0
      %660 = vmatpush.msra.mxu0 0.0
      %661 = vmatpush.msra.mxu0 0.0
      %662 = vmatpush.msra.mxu0 0.0
      %663 = vmatpush.msra.mxu0 0.0
      %664 = vmatpush.msra.mxu0 0.0
      %665 = vmatpush.msra.mxu0 0.0
      %666 = vmatpush.msra.mxu0 0.0
      %667 = vmatpush.msra.mxu0 0.0
      %668 = vmatpush.msra.mxu0 0.0
      %669 = vmatpush.msra.mxu0 0.0
      %v670 = vand.u32 %v656, 4294901760
      %671 = vmatpush.msra.mxu0 %v670
      %v672 = vand.u32 %v647, 4294901760
      %673 = vmatpush.msra.mxu0 %v672
      %v674 = vand.u32 %v645, 4294901760
      %675 = vmatpush.msra.mxu0 %v674
      %v676 = vand.u32 %v643, 4294901760
      %677 = vmatpush.msra.mxu0 %v676
      %v678 = vand.u32 %v654, 4294901760
      %v679 = vsub.f32 %v654, %v678
      %v680 = vand.u32 %v679, 4294901760
      %v681 = vsub.f32 %v679, %v680
      %v682 = vand.u32 %v681, 4294901760
      %683 = vmatmul.f32.gmra.mxu0 %v682
      %v684 = vpop.f32.mrf.mxu0
      %v685 = vadd.f32 0.0, %v684
      %686 = vdwg.mxu0
      %687 = vmatpush.msra.mxu0 0.0
      %688 = vmatpush.msra.mxu0 0.0
      %689 = vmatpush.msra.mxu0 0.0
      %690 = vmatpush.msra.mxu0 0.0
      %691 = vmatpush.msra.mxu0 0.0
      %692 = vmatpush.msra.mxu0 0.0
      %693 = vmatpush.msra.mxu0 0.0
      %694 = vmatpush.msra.mxu0 0.0
      %695 = vmatpush.msra.mxu0 0.0
      %696 = vmatpush.msra.mxu0 0.0
      %697 = vmatpush.msra.mxu0 0.0
      %698 = vmatpush.msra.mxu0 0.0
      %v699 = vand.u32 %v656, 4294901760
      %v700 = vsub.f32 %v656, %v699
      %v701 = vand.u32 %v700, 4294901760
      %v702 = vsub.f32 %v700, %v701
      %v703 = vand.u32 %v702, 4294901760
      %704 = vmatpush.msra.mxu0 %v703
      %v705 = vand.u32 %v647, 4294901760
      %v706 = vsub.f32 %v647, %v705
      %v707 = vand.u32 %v706, 4294901760
      %v708 = vsub.f32 %v706, %v707
      %v709 = vand.u32 %v708, 4294901760
      %710 = vmatpush.msra.mxu0 %v709
      %v711 = vand.u32 %v645, 4294901760
      %v712 = vsub.f32 %v645, %v711
      %v713 = vand.u32 %v712, 4294901760
      %v714 = vsub.f32 %v712, %v713
      %v715 = vand.u32 %v714, 4294901760
      %716 = vmatpush.msra.mxu0 %v715
      %v717 = vand.u32 %v643, 4294901760
      %v718 = vsub.f32 %v643, %v717
      %v719 = vand.u32 %v718, 4294901760
      %v720 = vsub.f32 %v718, %v719
      %v721 = vand.u32 %v720, 4294901760
      %722 = vmatpush.msra.mxu0 %v721
      %v723 = vand.u32 %v654, 4294901760
      %724 = vmatmul.f32.gmra.mxu0 %v723
      %v725 = vpop.f32.mrf.mxu0
      %v726 = vadd.f32 %v685, %v725
      %727 = vdwg.mxu0
      %728 = vmatpush.msra.mxu0 0.0
      %729 = vmatpush.msra.mxu0 0.0
      %730 = vmatpush.msra.mxu0 0.0
      %731 = vmatpush.msra.mxu0 0.0
      %732 = vmatpush.msra.mxu0 0.0
      %733 = vmatpush.msra.mxu0 0.0
      %734 = vmatpush.msra.mxu0 0.0
      %735 = vmatpush.msra.mxu0 0.0
      %736 = vmatpush.msra.mxu0 0.0
      %737 = vmatpush.msra.mxu0 0.0
      %738 = vmatpush.msra.mxu0 0.0
      %739 = vmatpush.msra.mxu0 0.0
      %v740 = vand.u32 %v656, 4294901760
      %v741 = vsub.f32 %v656, %v740
      %742 = vmatpush.msra.mxu0 %v741
      %v743 = vand.u32 %v647, 4294901760
      %v744 = vsub.f32 %v647, %v743
      %745 = vmatpush.msra.mxu0 %v744
      %v746 = vand.u32 %v645, 4294901760
      %v747 = vsub.f32 %v645, %v746
      %748 = vmatpush.msra.mxu0 %v747
      %v749 = vand.u32 %v643, 4294901760
      %v750 = vsub.f32 %v643, %v749
      %751 = vmatpush.msra.mxu0 %v750
      %v752 = vand.u32 %v654, 4294901760
      %v753 = vsub.f32 %v654, %v752
      %754 = vmatmul.f32.gmra.mxu0 %v753
      %v755 = vpop.f32.mrf.mxu0
      %v756 = vadd.f32 %v726, %v755
      %757 = vdwg.mxu0
      %758 = vmatpush.msra.mxu0 0.0
      %759 = vmatpush.msra.mxu0 0.0
      %760 = vmatpush.msra.mxu0 0.0
      %761 = vmatpush.msra.mxu0 0.0
      %762 = vmatpush.msra.mxu0 0.0
      %763 = vmatpush.msra.mxu0 0.0
      %764 = vmatpush.msra.mxu0 0.0
      %765 = vmatpush.msra.mxu0 0.0
      %766 = vmatpush.msra.mxu0 0.0
      %767 = vmatpush.msra.mxu0 0.0
      %768 = vmatpush.msra.mxu0 0.0
      %769 = vmatpush.msra.mxu0 0.0
      %v770 = vand.u32 %v656, 4294901760
      %771 = vmatpush.msra.mxu0 %v770
      %v772 = vand.u32 %v647, 4294901760
      %773 = vmatpush.msra.mxu0 %v772
      %v774 = vand.u32 %v645, 4294901760
      %775 = vmatpush.msra.mxu0 %v774
      %v776 = vand.u32 %v643, 4294901760
      %777 = vmatpush.msra.mxu0 %v776
      %v778 = vand.u32 %v654, 4294901760
      %v779 = vsub.f32 %v654, %v778
      %v780 = vand.u32 %v779, 4294901760
      %781 = vmatmul.f32.gmra.mxu0 %v780
      %v782 = vpop.f32.mrf.mxu0
      %v783 = vadd.f32 %v756, %v782
      %784 = vdwg.mxu0
      %785 = vmatpush.msra.mxu0 0.0
      %786 = vmatpush.msra.mxu0 0.0
      %787 = vmatpush.msra.mxu0 0.0
      %788 = vmatpush.msra.mxu0 0.0
      %789 = vmatpush.msra.mxu0 0.0
      %790 = vmatpush.msra.mxu0 0.0
      %791 = vmatpush.msra.mxu0 0.0
      %792 = vmatpush.msra.mxu0 0.0
      %793 = vmatpush.msra.mxu0 0.0
      %794 = vmatpush.msra.mxu0 0.0
      %795 = vmatpush.msra.mxu0 0.0
      %796 = vmatpush.msra.mxu0 0.0
      %v797 = vand.u32 %v656, 4294901760
      %v798 = vsub.f32 %v656, %v797
      %v799 = vand.u32 %v798, 4294901760
      %800 = vmatpush.msra.mxu0 %v799
      %v801 = vand.u32 %v647, 4294901760
      %v802 = vsub.f32 %v647, %v801
      %v803 = vand.u32 %v802, 4294901760
      %804 = vmatpush.msra.mxu0 %v803
      %v805 = vand.u32 %v645, 4294901760
      %v806 = vsub.f32 %v645, %v805
      %v807 = vand.u32 %v806, 4294901760
      %808 = vmatpush.msra.mxu0 %v807
      %v809 = vand.u32 %v643, 4294901760
      %v810 = vsub.f32 %v643, %v809
      %v811 = vand.u32 %v810, 4294901760
      %812 = vmatpush.msra.mxu0 %v811
      %v813 = vand.u32 %v654, 4294901760
      %814 = vmatmul.f32.gmra.mxu0 %v813
      %v815 = vpop.f32.mrf.mxu0
      %v816 = vadd.f32 %v783, %v815
      %817 = vdwg.mxu0
      %818 = vmatpush.msra.mxu0 0.0
      %819 = vmatpush.msra.mxu0 0.0
      %820 = vmatpush.msra.mxu0 0.0
      %821 = vmatpush.msra.mxu0 0.0
      %822 = vmatpush.msra.mxu0 0.0
      %823 = vmatpush.msra.mxu0 0.0
      %824 = vmatpush.msra.mxu0 0.0
      %825 = vmatpush.msra.mxu0 0.0
      %826 = vmatpush.msra.mxu0 0.0
      %827 = vmatpush.msra.mxu0 0.0
      %828 = vmatpush.msra.mxu0 0.0
      %829 = vmatpush.msra.mxu0 0.0
      %v830 = vand.u32 %v656, 4294901760
      %831 = vmatpush.msra.mxu0 %v830
      %v832 = vand.u32 %v647, 4294901760
      %833 = vmatpush.msra.mxu0 %v832
      %v834 = vand.u32 %v645, 4294901760
      %835 = vmatpush.msra.mxu0 %v834
      %v836 = vand.u32 %v643, 4294901760
      %837 = vmatpush.msra.mxu0 %v836
      %v838 = vand.u32 %v654, 4294901760
      %839 = vmatmul.f32.gmra.mxu0 %v838
      %v840 = vpop.f32.mrf.mxu0
      %v841 = vadd.f32 %v816, %v840
      %842 = vdwg.mxu0
      %v843 = vadd.f32 %v638, %v841
      %s844 = scalar_lea.vmem %s1, 12
      %v845 = vld [vmem:[%s844] sm:$0xf]
      %846 = vrot.lane.b32.xlu0 %v237, 104
      %v847 = vpop.permute.xlu0 %846
      %848 = vrot.lane.b32.xlu0 %v238, 104
      %v849 = vpop.permute.xlu0 %848
      %850 = vrot.lane.b32.xlu0 %v239, 104
      %v851 = vpop.permute.xlu0 %850
      %852 = vrot.lane.b32.xlu0 %v240, 104
      %v853 = vpop.permute.xlu0 %852
      %v858 = vsel %vm258, %v845, 0
      %v860 = vsel %vm262, %v853, 0
      %862 = vmatpush.msra.mxu0 0.0
      %863 = vmatpush.msra.mxu0 0.0
      %864 = vmatpush.msra.mxu0 0.0
      %865 = vmatpush.msra.mxu0 0.0
      %866 = vmatpush.msra.mxu0 0.0
      %867 = vmatpush.msra.mxu0 0.0
      %868 = vmatpush.msra.mxu0 0.0
      %869 = vmatpush.msra.mxu0 0.0
      %870 = vmatpush.msra.mxu0 0.0
      %871 = vmatpush.msra.mxu0 0.0
      %872 = vmatpush.msra.mxu0 0.0
      %873 = vmatpush.msra.mxu0 0.0
      %v874 = vand.u32 %v860, 4294901760
      %875 = vmatpush.msra.mxu0 %v874
      %v876 = vand.u32 %v851, 4294901760
      %877 = vmatpush.msra.mxu0 %v876
      %v878 = vand.u32 %v849, 4294901760
      %879 = vmatpush.msra.mxu0 %v878
      %v880 = vand.u32 %v847, 4294901760
      %881 = vmatpush.msra.mxu0 %v880
      %v882 = vand.u32 %v858, 4294901760
      %v883 = vsub.f32 %v858, %v882
      %v884 = vand.u32 %v883, 4294901760
      %v885 = vsub.f32 %v883, %v884
      %v886 = vand.u32 %v885, 4294901760
      %887 = vmatmul.f32.gmra.mxu0 %v886
      %v888 = vpop.f32.mrf.mxu0
      %v889 = vadd.f32 0.0, %v888
      %890 = vdwg.mxu0
      %891 = vmatpush.msra.mxu0 0.0
      %892 = vmatpush.msra.mxu0 0.0
      %893 = vmatpush.msra.mxu0 0.0
      %894 = vmatpush.msra.mxu0 0.0
      %895 = vmatpush.msra.mxu0 0.0
      %896 = vmatpush.msra.mxu0 0.0
      %897 = vmatpush.msra.mxu0 0.0
      %898 = vmatpush.msra.mxu0 0.0
      %899 = vmatpush.msra.mxu0 0.0
      %900 = vmatpush.msra.mxu0 0.0
      %901 = vmatpush.msra.mxu0 0.0
      %902 = vmatpush.msra.mxu0 0.0
      %v903 = vand.u32 %v860, 4294901760
      %v904 = vsub.f32 %v860, %v903
      %v905 = vand.u32 %v904, 4294901760
      %v906 = vsub.f32 %v904, %v905
      %v907 = vand.u32 %v906, 4294901760
      %908 = vmatpush.msra.mxu0 %v907
      %v909 = vand.u32 %v851, 4294901760
      %v910 = vsub.f32 %v851, %v909
      %v911 = vand.u32 %v910, 4294901760
      %v912 = vsub.f32 %v910, %v911
      %v913 = vand.u32 %v912, 4294901760
      %914 = vmatpush.msra.mxu0 %v913
      %v915 = vand.u32 %v849, 4294901760
      %v916 = vsub.f32 %v849, %v915
      %v917 = vand.u32 %v916, 4294901760
      %v918 = vsub.f32 %v916, %v917
      %v919 = vand.u32 %v918, 4294901760
      %920 = vmatpush.msra.mxu0 %v919
      %v921 = vand.u32 %v847, 4294901760
      %v922 = vsub.f32 %v847, %v921
      %v923 = vand.u32 %v922, 4294901760
      %v924 = vsub.f32 %v922, %v923
      %v925 = vand.u32 %v924, 4294901760
      %926 = vmatpush.msra.mxu0 %v925
      %v927 = vand.u32 %v858, 4294901760
      %928 = vmatmul.f32.gmra.mxu0 %v927
      %v929 = vpop.f32.mrf.mxu0
      %v930 = vadd.f32 %v889, %v929
      %931 = vdwg.mxu0
      %932 = vmatpush.msra.mxu0 0.0
      %933 = vmatpush.msra.mxu0 0.0
      %934 = vmatpush.msra.mxu0 0.0
      %935 = vmatpush.msra.mxu0 0.0
      %936 = vmatpush.msra.mxu0 0.0
      %937 = vmatpush.msra.mxu0 0.0
      %938 = vmatpush.msra.mxu0 0.0
      %939 = vmatpush.msra.mxu0 0.0
      %940 = vmatpush.msra.mxu0 0.0
      %941 = vmatpush.msra.mxu0 0.0
      %942 = vmatpush.msra.mxu0 0.0
      %943 = vmatpush.msra.mxu0 0.0
      %v944 = vand.u32 %v860, 4294901760
      %v945 = vsub.f32 %v860, %v944
      %946 = vmatpush.msra.mxu0 %v945
      %v947 = vand.u32 %v851, 4294901760
      %v948 = vsub.f32 %v851, %v947
      %949 = vmatpush.msra.mxu0 %v948
      %v950 = vand.u32 %v849, 4294901760
      %v951 = vsub.f32 %v849, %v950
      %952 = vmatpush.msra.mxu0 %v951
      %v953 = vand.u32 %v847, 4294901760
      %v954 = vsub.f32 %v847, %v953
      %955 = vmatpush.msra.mxu0 %v954
      %v956 = vand.u32 %v858, 4294901760
      %v957 = vsub.f32 %v858, %v956
      %958 = vmatmul.f32.gmra.mxu0 %v957
      %v959 = vpop.f32.mrf.mxu0
      %v960 = vadd.f32 %v930, %v959
      %961 = vdwg.mxu0
      %962 = vmatpush.msra.mxu0 0.0
      %963 = vmatpush.msra.mxu0 0.0
      %964 = vmatpush.msra.mxu0 0.0
      %965 = vmatpush.msra.mxu0 0.0
      %966 = vmatpush.msra.mxu0 0.0
      %967 = vmatpush.msra.mxu0 0.0
      %968 = vmatpush.msra.mxu0 0.0
      %969 = vmatpush.msra.mxu0 0.0
      %970 = vmatpush.msra.mxu0 0.0
      %971 = vmatpush.msra.mxu0 0.0
      %972 = vmatpush.msra.mxu0 0.0
      %973 = vmatpush.msra.mxu0 0.0
      %v974 = vand.u32 %v860, 4294901760
      %975 = vmatpush.msra.mxu0 %v974
      %v976 = vand.u32 %v851, 4294901760
      %977 = vmatpush.msra.mxu0 %v976
      %v978 = vand.u32 %v849, 4294901760
      %979 = vmatpush.msra.mxu0 %v978
      %v980 = vand.u32 %v847, 4294901760
      %981 = vmatpush.msra.mxu0 %v980
      %v982 = vand.u32 %v858, 4294901760
      %v983 = vsub.f32 %v858, %v982
      %v984 = vand.u32 %v983, 4294901760
      %985 = vmatmul.f32.gmra.mxu0 %v984
      %v986 = vpop.f32.mrf.mxu0
      %v987 = vadd.f32 %v960, %v986
      %988 = vdwg.mxu0
      %989 = vmatpush.msra.mxu0 0.0
      %990 = vmatpush.msra.mxu0 0.0
      %991 = vmatpush.msra.mxu0 0.0
      %992 = vmatpush.msra.mxu0 0.0
      %993 = vmatpush.msra.mxu0 0.0
      %994 = vmatpush.msra.mxu0 0.0
      %995 = vmatpush.msra.mxu0 0.0
      %996 = vmatpush.msra.mxu0 0.0
      %997 = vmatpush.msra.mxu0 0.0
      %998 = vmatpush.msra.mxu0 0.0
      %999 = vmatpush.msra.mxu0 0.0
      %1000 = vmatpush.msra.mxu0 0.0
      %v1001 = vand.u32 %v860, 4294901760
      %v1002 = vsub.f32 %v860, %v1001
      %v1003 = vand.u32 %v1002, 4294901760
      %1004 = vmatpush.msra.mxu0 %v1003
      %v1005 = vand.u32 %v851, 4294901760
      %v1006 = vsub.f32 %v851, %v1005
      %v1007 = vand.u32 %v1006, 4294901760
      %1008 = vmatpush.msra.mxu0 %v1007
      %v1009 = vand.u32 %v849, 4294901760
      %v1010 = vsub.f32 %v849, %v1009
      %v1011 = vand.u32 %v1010, 4294901760
      %1012 = vmatpush.msra.mxu0 %v1011
      %v1013 = vand.u32 %v847, 4294901760
      %v1014 = vsub.f32 %v847, %v1013
      %v1015 = vand.u32 %v1014, 4294901760
      %1016 = vmatpush.msra.mxu0 %v1015
      %v1017 = vand.u32 %v858, 4294901760
      %1018 = vmatmul.f32.gmra.mxu0 %v1017
      %v1019 = vpop.f32.mrf.mxu0
      %v1020 = vadd.f32 %v987, %v1019
      %1021 = vdwg.mxu0
      %1022 = vmatpush.msra.mxu0 0.0
      %1023 = vmatpush.msra.mxu0 0.0
      %1024 = vmatpush.msra.mxu0 0.0
      %1025 = vmatpush.msra.mxu0 0.0
      %1026 = vmatpush.msra.mxu0 0.0
      %1027 = vmatpush.msra.mxu0 0.0
      %1028 = vmatpush.msra.mxu0 0.0
      %1029 = vmatpush.msra.mxu0 0.0
      %1030 = vmatpush.msra.mxu0 0.0
      %1031 = vmatpush.msra.mxu0 0.0
      %1032 = vmatpush.msra.mxu0 0.0
      %1033 = vmatpush.msra.mxu0 0.0
      %v1034 = vand.u32 %v860, 4294901760
      %1035 = vmatpush.msra.mxu0 %v1034
      %v1036 = vand.u32 %v851, 4294901760
      %1037 = vmatpush.msra.mxu0 %v1036
      %v1038 = vand.u32 %v849, 4294901760
      %1039 = vmatpush.msra.mxu0 %v1038
      %v1040 = vand.u32 %v847, 4294901760
      %1041 = vmatpush.msra.mxu0 %v1040
      %v1042 = vand.u32 %v858, 4294901760
      %1043 = vmatmul.f32.gmra.mxu0 %v1042
      %v1044 = vpop.f32.mrf.mxu0
      %v1045 = vadd.f32 %v1020, %v1044
      %1046 = vdwg.mxu0
      %v1047 = vadd.f32 %v843, %v1045
      %s1048 = scalar_lea.vmem %s1, 16
      %v1049 = vld [vmem:[%s1048] sm:$0xf]
      %1050 = vrot.lane.b32.xlu0 %v237, 96
      %v1051 = vpop.permute.xlu0 %1050
      %1052 = vrot.lane.b32.xlu0 %v238, 96
      %v1053 = vpop.permute.xlu0 %1052
      %1054 = vrot.lane.b32.xlu0 %v239, 96
      %v1055 = vpop.permute.xlu0 %1054
      %1056 = vrot.lane.b32.xlu0 %v240, 96
      %v1057 = vpop.permute.xlu0 %1056
      %v1062 = vsel %vm258, %v1049, 0
      %v1064 = vsel %vm262, %v1057, 0
      %1066 = vmatpush.msra.mxu0 0.0
      %1067 = vmatpush.msra.mxu0 0.0
      %1068 = vmatpush.msra.mxu0 0.0
      %1069 = vmatpush.msra.mxu0 0.0
      %1070 = vmatpush.msra.mxu0 0.0
      %1071 = vmatpush.msra.mxu0 0.0
      %1072 = vmatpush.msra.mxu0 0.0
      %1073 = vmatpush.msra.mxu0 0.0
      %1074 = vmatpush.msra.mxu0 0.0
      %1075 = vmatpush.msra.mxu0 0.0
      %1076 = vmatpush.msra.mxu0 0.0
      %1077 = vmatpush.msra.mxu0 0.0
      %v1078 = vand.u32 %v1064, 4294901760
      %1079 = vmatpush.msra.mxu0 %v1078
      %v1080 = vand.u32 %v1055, 4294901760
      %1081 = vmatpush.msra.mxu0 %v1080
      %v1082 = vand.u32 %v1053, 4294901760
      %1083 = vmatpush.msra.mxu0 %v1082
      %v1084 = vand.u32 %v1051, 4294901760
      %1085 = vmatpush.msra.mxu0 %v1084
      %v1086 = vand.u32 %v1062, 4294901760
      %v1087 = vsub.f32 %v1062, %v1086
      %v1088 = vand.u32 %v1087, 4294901760
      %v1089 = vsub.f32 %v1087, %v1088
      %v1090 = vand.u32 %v1089, 4294901760
      %1091 = vmatmul.f32.gmra.mxu0 %v1090
      %v1092 = vpop.f32.mrf.mxu0
      %v1093 = vadd.f32 0.0, %v1092
      %1094 = vdwg.mxu0
      %1095 = vmatpush.msra.mxu0 0.0
      %1096 = vmatpush.msra.mxu0 0.0
      %1097 = vmatpush.msra.mxu0 0.0
      %1098 = vmatpush.msra.mxu0 0.0
      %1099 = vmatpush.msra.mxu0 0.0
      %1100 = vmatpush.msra.mxu0 0.0
      %1101 = vmatpush.msra.mxu0 0.0
      %1102 = vmatpush.msra.mxu0 0.0
      %1103 = vmatpush.msra.mxu0 0.0
      %1104 = vmatpush.msra.mxu0 0.0
      %1105 = vmatpush.msra.mxu0 0.0
      %1106 = vmatpush.msra.mxu0 0.0
      %v1107 = vand.u32 %v1064, 4294901760
      %v1108 = vsub.f32 %v1064, %v1107
      %v1109 = vand.u32 %v1108, 4294901760
      %v1110 = vsub.f32 %v1108, %v1109
      %v1111 = vand.u32 %v1110, 4294901760
      %1112 = vmatpush.msra.mxu0 %v1111
      %v1113 = vand.u32 %v1055, 4294901760
      %v1114 = vsub.f32 %v1055, %v1113
      %v1115 = vand.u32 %v1114, 4294901760
      %v1116 = vsub.f32 %v1114, %v1115
      %v1117 = vand.u32 %v1116, 4294901760
      %1118 = vmatpush.msra.mxu0 %v1117
      %v1119 = vand.u32 %v1053, 4294901760
      %v1120 = vsub.f32 %v1053, %v1119
      %v1121 = vand.u32 %v1120, 4294901760
      %v1122 = vsub.f32 %v1120, %v1121
      %v1123 = vand.u32 %v1122, 4294901760
      %1124 = vmatpush.msra.mxu0 %v1123
      %v1125 = vand.u32 %v1051, 4294901760
      %v1126 = vsub.f32 %v1051, %v1125
      %v1127 = vand.u32 %v1126, 4294901760
      %v1128 = vsub.f32 %v1126, %v1127
      %v1129 = vand.u32 %v1128, 4294901760
      %1130 = vmatpush.msra.mxu0 %v1129
      %v1131 = vand.u32 %v1062, 4294901760
      %1132 = vmatmul.f32.gmra.mxu0 %v1131
      %v1133 = vpop.f32.mrf.mxu0
      %v1134 = vadd.f32 %v1093, %v1133
      %1135 = vdwg.mxu0
      %1136 = vmatpush.msra.mxu0 0.0
      %1137 = vmatpush.msra.mxu0 0.0
      %1138 = vmatpush.msra.mxu0 0.0
      %1139 = vmatpush.msra.mxu0 0.0
      %1140 = vmatpush.msra.mxu0 0.0
      %1141 = vmatpush.msra.mxu0 0.0
      %1142 = vmatpush.msra.mxu0 0.0
      %1143 = vmatpush.msra.mxu0 0.0
      %1144 = vmatpush.msra.mxu0 0.0
      %1145 = vmatpush.msra.mxu0 0.0
      %1146 = vmatpush.msra.mxu0 0.0
      %1147 = vmatpush.msra.mxu0 0.0
      %v1148 = vand.u32 %v1064, 4294901760
      %v1149 = vsub.f32 %v1064, %v1148
      %1150 = vmatpush.msra.mxu0 %v1149
      %v1151 = vand.u32 %v1055, 4294901760
      %v1152 = vsub.f32 %v1055, %v1151
      %1153 = vmatpush.msra.mxu0 %v1152
      %v1154 = vand.u32 %v1053, 4294901760
      %v1155 = vsub.f32 %v1053, %v1154
      %1156 = vmatpush.msra.mxu0 %v1155
      %v1157 = vand.u32 %v1051, 4294901760
      %v1158 = vsub.f32 %v1051, %v1157
      %1159 = vmatpush.msra.mxu0 %v1158
      %v1160 = vand.u32 %v1062, 4294901760
      %v1161 = vsub.f32 %v1062, %v1160
      %1162 = vmatmul.f32.gmra.mxu0 %v1161
      %v1163 = vpop.f32.mrf.mxu0
      %v1164 = vadd.f32 %v1134, %v1163
      %1165 = vdwg.mxu0
      %1166 = vmatpush.msra.mxu0 0.0
      %1167 = vmatpush.msra.mxu0 0.0
      %1168 = vmatpush.msra.mxu0 0.0
      %1169 = vmatpush.msra.mxu0 0.0
      %1170 = vmatpush.msra.mxu0 0.0
      %1171 = vmatpush.msra.mxu0 0.0
      %1172 = vmatpush.msra.mxu0 0.0
      %1173 = vmatpush.msra.mxu0 0.0
      %1174 = vmatpush.msra.mxu0 0.0
      %1175 = vmatpush.msra.mxu0 0.0
      %1176 = vmatpush.msra.mxu0 0.0
      %1177 = vmatpush.msra.mxu0 0.0
      %v1178 = vand.u32 %v1064, 4294901760
      %1179 = vmatpush.msra.mxu0 %v1178
      %v1180 = vand.u32 %v1055, 4294901760
      %1181 = vmatpush.msra.mxu0 %v1180
      %v1182 = vand.u32 %v1053, 4294901760
      %1183 = vmatpush.msra.mxu0 %v1182
      %v1184 = vand.u32 %v1051, 4294901760
      %1185 = vmatpush.msra.mxu0 %v1184
      %v1186 = vand.u32 %v1062, 4294901760
      %v1187 = vsub.f32 %v1062, %v1186
      %v1188 = vand.u32 %v1187, 4294901760
      %1189 = vmatmul.f32.gmra.mxu0 %v1188
      %v1190 = vpop.f32.mrf.mxu0
      %v1191 = vadd.f32 %v1164, %v1190
      %1192 = vdwg.mxu0
      %1193 = vmatpush.msra.mxu0 0.0
      %1194 = vmatpush.msra.mxu0 0.0
      %1195 = vmatpush.msra.mxu0 0.0
      %1196 = vmatpush.msra.mxu0 0.0
      %1197 = vmatpush.msra.mxu0 0.0
      %1198 = vmatpush.msra.mxu0 0.0
      %1199 = vmatpush.msra.mxu0 0.0
      %1200 = vmatpush.msra.mxu0 0.0
      %1201 = vmatpush.msra.mxu0 0.0
      %1202 = vmatpush.msra.mxu0 0.0
      %1203 = vmatpush.msra.mxu0 0.0
      %1204 = vmatpush.msra.mxu0 0.0
      %v1205 = vand.u32 %v1064, 4294901760
      %v1206 = vsub.f32 %v1064, %v1205
      %v1207 = vand.u32 %v1206, 4294901760
      %1208 = vmatpush.msra.mxu0 %v1207
      %v1209 = vand.u32 %v1055, 4294901760
      %v1210 = vsub.f32 %v1055, %v1209
      %v1211 = vand.u32 %v1210, 4294901760
      %1212 = vmatpush.msra.mxu0 %v1211
      %v1213 = vand.u32 %v1053, 4294901760
      %v1214 = vsub.f32 %v1053, %v1213
      %v1215 = vand.u32 %v1214, 4294901760
      %1216 = vmatpush.msra.mxu0 %v1215
      %v1217 = vand.u32 %v1051, 4294901760
      %v1218 = vsub.f32 %v1051, %v1217
      %v1219 = vand.u32 %v1218, 4294901760
      %1220 = vmatpush.msra.mxu0 %v1219
      %v1221 = vand.u32 %v1062, 4294901760
      %1222 = vmatmul.f32.gmra.mxu0 %v1221
      %v1223 = vpop.f32.mrf.mxu0
      %v1224 = vadd.f32 %v1191, %v1223
      %1225 = vdwg.mxu0
      %1226 = vmatpush.msra.mxu0 0.0
      %1227 = vmatpush.msra.mxu0 0.0
      %1228 = vmatpush.msra.mxu0 0.0
      %1229 = vmatpush.msra.mxu0 0.0
      %1230 = vmatpush.msra.mxu0 0.0
      %1231 = vmatpush.msra.mxu0 0.0
      %1232 = vmatpush.msra.mxu0 0.0
      %1233 = vmatpush.msra.mxu0 0.0
      %1234 = vmatpush.msra.mxu0 0.0
      %1235 = vmatpush.msra.mxu0 0.0
      %1236 = vmatpush.msra.mxu0 0.0
      %1237 = vmatpush.msra.mxu0 0.0
      %v1238 = vand.u32 %v1064, 4294901760
      %1239 = vmatpush.msra.mxu0 %v1238
      %v1240 = vand.u32 %v1055, 4294901760
      %1241 = vmatpush.msra.mxu0 %v1240
      %v1242 = vand.u32 %v1053, 4294901760
      %1243 = vmatpush.msra.mxu0 %v1242
      %v1244 = vand.u32 %v1051, 4294901760
      %1245 = vmatpush.msra.mxu0 %v1244
      %v1246 = vand.u32 %v1062, 4294901760
      %1247 = vmatmul.f32.gmra.mxu0 %v1246
      %v1248 = vpop.f32.mrf.mxu0
      %v1249 = vadd.f32 %v1224, %v1248
      %1250 = vdwg.mxu0
      %v1251 = vadd.f32 %v1047, %v1249
      %s1252 = scalar_lea.vmem %s1, 20
      %v1253 = vld [vmem:[%s1252] sm:$0xf]
      %1254 = vrot.lane.b32.xlu0 %v237, 88
      %v1255 = vpop.permute.xlu0 %1254
      %1256 = vrot.lane.b32.xlu0 %v238, 88
      %v1257 = vpop.permute.xlu0 %1256
      %1258 = vrot.lane.b32.xlu0 %v239, 88
      %v1259 = vpop.permute.xlu0 %1258
      %1260 = vrot.lane.b32.xlu0 %v240, 88
      %v1261 = vpop.permute.xlu0 %1260
      %v1266 = vsel %vm258, %v1253, 0
      %v1268 = vsel %vm262, %v1261, 0
      %1270 = vmatpush.msra.mxu0 0.0
      %1271 = vmatpush.msra.mxu0 0.0
      %1272 = vmatpush.msra.mxu0 0.0
      %1273 = vmatpush.msra.mxu0 0.0
      %1274 = vmatpush.msra.mxu0 0.0
      %1275 = vmatpush.msra.mxu0 0.0
      %1276 = vmatpush.msra.mxu0 0.0
      %1277 = vmatpush.msra.mxu0 0.0
      %1278 = vmatpush.msra.mxu0 0.0
      %1279 = vmatpush.msra.mxu0 0.0
      %1280 = vmatpush.msra.mxu0 0.0
      %1281 = vmatpush.msra.mxu0 0.0
      %v1282 = vand.u32 %v1268, 4294901760
      %1283 = vmatpush.msra.mxu0 %v1282
      %v1284 = vand.u32 %v1259, 4294901760
      %1285 = vmatpush.msra.mxu0 %v1284
      %v1286 = vand.u32 %v1257, 4294901760
      %1287 = vmatpush.msra.mxu0 %v1286
      %v1288 = vand.u32 %v1255, 4294901760
      %1289 = vmatpush.msra.mxu0 %v1288
      %v1290 = vand.u32 %v1266, 4294901760
      %v1291 = vsub.f32 %v1266, %v1290
      %v1292 = vand.u32 %v1291, 4294901760
      %v1293 = vsub.f32 %v1291, %v1292
      %v1294 = vand.u32 %v1293, 4294901760
      %1295 = vmatmul.f32.gmra.mxu0 %v1294
      %v1296 = vpop.f32.mrf.mxu0
      %v1297 = vadd.f32 0.0, %v1296
      %1298 = vdwg.mxu0
      %1299 = vmatpush.msra.mxu0 0.0
      %1300 = vmatpush.msra.mxu0 0.0
      %1301 = vmatpush.msra.mxu0 0.0
      %1302 = vmatpush.msra.mxu0 0.0
      %1303 = vmatpush.msra.mxu0 0.0
      %1304 = vmatpush.msra.mxu0 0.0
      %1305 = vmatpush.msra.mxu0 0.0
      %1306 = vmatpush.msra.mxu0 0.0
      %1307 = vmatpush.msra.mxu0 0.0
      %1308 = vmatpush.msra.mxu0 0.0
      %1309 = vmatpush.msra.mxu0 0.0
      %1310 = vmatpush.msra.mxu0 0.0
      %v1311 = vand.u32 %v1268, 4294901760
      %v1312 = vsub.f32 %v1268, %v1311
      %v1313 = vand.u32 %v1312, 4294901760
      %v1314 = vsub.f32 %v1312, %v1313
      %v1315 = vand.u32 %v1314, 4294901760
      %1316 = vmatpush.msra.mxu0 %v1315
      %v1317 = vand.u32 %v1259, 4294901760
      %v1318 = vsub.f32 %v1259, %v1317
      %v1319 = vand.u32 %v1318, 4294901760
      %v1320 = vsub.f32 %v1318, %v1319
      %v1321 = vand.u32 %v1320, 4294901760
      %1322 = vmatpush.msra.mxu0 %v1321
      %v1323 = vand.u32 %v1257, 4294901760
      %v1324 = vsub.f32 %v1257, %v1323
      %v1325 = vand.u32 %v1324, 4294901760
      %v1326 = vsub.f32 %v1324, %v1325
      %v1327 = vand.u32 %v1326, 4294901760
      %1328 = vmatpush.msra.mxu0 %v1327
      %v1329 = vand.u32 %v1255, 4294901760
      %v1330 = vsub.f32 %v1255, %v1329
      %v1331 = vand.u32 %v1330, 4294901760
      %v1332 = vsub.f32 %v1330, %v1331
      %v1333 = vand.u32 %v1332, 4294901760
      %1334 = vmatpush.msra.mxu0 %v1333
      %v1335 = vand.u32 %v1266, 4294901760
      %1336 = vmatmul.f32.gmra.mxu0 %v1335
      %v1337 = vpop.f32.mrf.mxu0
      %v1338 = vadd.f32 %v1297, %v1337
      %1339 = vdwg.mxu0
      %1340 = vmatpush.msra.mxu0 0.0
      %1341 = vmatpush.msra.mxu0 0.0
      %1342 = vmatpush.msra.mxu0 0.0
      %1343 = vmatpush.msra.mxu0 0.0
      %1344 = vmatpush.msra.mxu0 0.0
      %1345 = vmatpush.msra.mxu0 0.0
      %1346 = vmatpush.msra.mxu0 0.0
      %1347 = vmatpush.msra.mxu0 0.0
      %1348 = vmatpush.msra.mxu0 0.0
      %1349 = vmatpush.msra.mxu0 0.0
      %1350 = vmatpush.msra.mxu0 0.0
      %1351 = vmatpush.msra.mxu0 0.0
      %v1352 = vand.u32 %v1268, 4294901760
      %v1353 = vsub.f32 %v1268, %v1352
      %1354 = vmatpush.msra.mxu0 %v1353
      %v1355 = vand.u32 %v1259, 4294901760
      %v1356 = vsub.f32 %v1259, %v1355
      %1357 = vmatpush.msra.mxu0 %v1356
      %v1358 = vand.u32 %v1257, 4294901760
      %v1359 = vsub.f32 %v1257, %v1358
      %1360 = vmatpush.msra.mxu0 %v1359
      %v1361 = vand.u32 %v1255, 4294901760
      %v1362 = vsub.f32 %v1255, %v1361
      %1363 = vmatpush.msra.mxu0 %v1362
      %v1364 = vand.u32 %v1266, 4294901760
      %v1365 = vsub.f32 %v1266, %v1364
      %1366 = vmatmul.f32.gmra.mxu0 %v1365
      %v1367 = vpop.f32.mrf.mxu0
      %v1368 = vadd.f32 %v1338, %v1367
      %1369 = vdwg.mxu0
      %1370 = vmatpush.msra.mxu0 0.0
      %1371 = vmatpush.msra.mxu0 0.0
      %1372 = vmatpush.msra.mxu0 0.0
      %1373 = vmatpush.msra.mxu0 0.0
      %1374 = vmatpush.msra.mxu0 0.0
      %1375 = vmatpush.msra.mxu0 0.0
      %1376 = vmatpush.msra.mxu0 0.0
      %1377 = vmatpush.msra.mxu0 0.0
      %1378 = vmatpush.msra.mxu0 0.0
      %1379 = vmatpush.msra.mxu0 0.0
      %1380 = vmatpush.msra.mxu0 0.0
      %1381 = vmatpush.msra.mxu0 0.0
      %v1382 = vand.u32 %v1268, 4294901760
      %1383 = vmatpush.msra.mxu0 %v1382
      %v1384 = vand.u32 %v1259, 4294901760
      %1385 = vmatpush.msra.mxu0 %v1384
      %v1386 = vand.u32 %v1257, 4294901760
      %1387 = vmatpush.msra.mxu0 %v1386
      %v1388 = vand.u32 %v1255, 4294901760
      %1389 = vmatpush.msra.mxu0 %v1388
      %v1390 = vand.u32 %v1266, 4294901760
      %v1391 = vsub.f32 %v1266, %v1390
      %v1392 = vand.u32 %v1391, 4294901760
      %1393 = vmatmul.f32.gmra.mxu0 %v1392
      %v1394 = vpop.f32.mrf.mxu0
      %v1395 = vadd.f32 %v1368, %v1394
      %1396 = vdwg.mxu0
      %1397 = vmatpush.msra.mxu0 0.0
      %1398 = vmatpush.msra.mxu0 0.0
      %1399 = vmatpush.msra.mxu0 0.0
      %1400 = vmatpush.msra.mxu0 0.0
      %1401 = vmatpush.msra.mxu0 0.0
      %1402 = vmatpush.msra.mxu0 0.0
      %1403 = vmatpush.msra.mxu0 0.0
      %1404 = vmatpush.msra.mxu0 0.0
      %1405 = vmatpush.msra.mxu0 0.0
      %1406 = vmatpush.msra.mxu0 0.0
      %1407 = vmatpush.msra.mxu0 0.0
      %1408 = vmatpush.msra.mxu0 0.0
      %v1409 = vand.u32 %v1268, 4294901760
      %v1410 = vsub.f32 %v1268, %v1409
      %v1411 = vand.u32 %v1410, 4294901760
      %1412 = vmatpush.msra.mxu0 %v1411
      %v1413 = vand.u32 %v1259, 4294901760
      %v1414 = vsub.f32 %v1259, %v1413
      %v1415 = vand.u32 %v1414, 4294901760
      %1416 = vmatpush.msra.mxu0 %v1415
      %v1417 = vand.u32 %v1257, 4294901760
      %v1418 = vsub.f32 %v1257, %v1417
      %v1419 = vand.u32 %v1418, 4294901760
      %1420 = vmatpush.msra.mxu0 %v1419
      %v1421 = vand.u32 %v1255, 4294901760
      %v1422 = vsub.f32 %v1255, %v1421
      %v1423 = vand.u32 %v1422, 4294901760
      %1424 = vmatpush.msra.mxu0 %v1423
      %v1425 = vand.u32 %v1266, 4294901760
      %1426 = vmatmul.f32.gmra.mxu0 %v1425
      %v1427 = vpop.f32.mrf.mxu0
      %v1428 = vadd.f32 %v1395, %v1427
      %1429 = vdwg.mxu0
      %1430 = vmatpush.msra.mxu0 0.0
      %1431 = vmatpush.msra.mxu0 0.0
      %1432 = vmatpush.msra.mxu0 0.0
      %1433 = vmatpush.msra.mxu0 0.0
      %1434 = vmatpush.msra.mxu0 0.0
      %1435 = vmatpush.msra.mxu0 0.0
      %1436 = vmatpush.msra.mxu0 0.0
      %1437 = vmatpush.msra.mxu0 0.0
      %1438 = vmatpush.msra.mxu0 0.0
      %1439 = vmatpush.msra.mxu0 0.0
      %1440 = vmatpush.msra.mxu0 0.0
      %1441 = vmatpush.msra.mxu0 0.0
      %v1442 = vand.u32 %v1268, 4294901760
      %1443 = vmatpush.msra.mxu0 %v1442
      %v1444 = vand.u32 %v1259, 4294901760
      %1445 = vmatpush.msra.mxu0 %v1444
      %v1446 = vand.u32 %v1257, 4294901760
      %1447 = vmatpush.msra.mxu0 %v1446
      %v1448 = vand.u32 %v1255, 4294901760
      %1449 = vmatpush.msra.mxu0 %v1448
      %v1450 = vand.u32 %v1266, 4294901760
      %1451 = vmatmul.f32.gmra.mxu0 %v1450
      %v1452 = vpop.f32.mrf.mxu0
      %v1453 = vadd.f32 %v1428, %v1452
      %1454 = vdwg.mxu0
      %v1455 = vadd.f32 %v1251, %v1453
      %s1456 = scalar_lea.vmem %s1, 24
      %v1457 = vld [vmem:[%s1456] sm:$0xf]
      %1458 = vrot.lane.b32.xlu0 %v237, 80
      %v1459 = vpop.permute.xlu0 %1458
      %1460 = vrot.lane.b32.xlu0 %v238, 80
      %v1461 = vpop.permute.xlu0 %1460
      %1462 = vrot.lane.b32.xlu0 %v239, 80
      %v1463 = vpop.permute.xlu0 %1462
      %1464 = vrot.lane.b32.xlu0 %v240, 80
      %v1465 = vpop.permute.xlu0 %1464
      %v1470 = vsel %vm258, %v1457, 0
      %v1472 = vsel %vm262, %v1465, 0
      %1474 = vmatpush.msra.mxu0 0.0
      %1475 = vmatpush.msra.mxu0 0.0
      %1476 = vmatpush.msra.mxu0 0.0
      %1477 = vmatpush.msra.mxu0 0.0
      %1478 = vmatpush.msra.mxu0 0.0
      %1479 = vmatpush.msra.mxu0 0.0
      %1480 = vmatpush.msra.mxu0 0.0
      %1481 = vmatpush.msra.mxu0 0.0
      %1482 = vmatpush.msra.mxu0 0.0
      %1483 = vmatpush.msra.mxu0 0.0
      %1484 = vmatpush.msra.mxu0 0.0
      %1485 = vmatpush.msra.mxu0 0.0
      %v1486 = vand.u32 %v1472, 4294901760
      %1487 = vmatpush.msra.mxu0 %v1486
      %v1488 = vand.u32 %v1463, 4294901760
      %1489 = vmatpush.msra.mxu0 %v1488
      %v1490 = vand.u32 %v1461, 4294901760
      %1491 = vmatpush.msra.mxu0 %v1490
      %v1492 = vand.u32 %v1459, 4294901760
      %1493 = vmatpush.msra.mxu0 %v1492
      %v1494 = vand.u32 %v1470, 4294901760
      %v1495 = vsub.f32 %v1470, %v1494
      %v1496 = vand.u32 %v1495, 4294901760
      %v1497 = vsub.f32 %v1495, %v1496
      %v1498 = vand.u32 %v1497, 4294901760
      %1499 = vmatmul.f32.gmra.mxu0 %v1498
      %v1500 = vpop.f32.mrf.mxu0
      %v1501 = vadd.f32 0.0, %v1500
      %1502 = vdwg.mxu0
      %1503 = vmatpush.msra.mxu0 0.0
      %1504 = vmatpush.msra.mxu0 0.0
      %1505 = vmatpush.msra.mxu0 0.0
      %1506 = vmatpush.msra.mxu0 0.0
      %1507 = vmatpush.msra.mxu0 0.0
      %1508 = vmatpush.msra.mxu0 0.0
      %1509 = vmatpush.msra.mxu0 0.0
      %1510 = vmatpush.msra.mxu0 0.0
      %1511 = vmatpush.msra.mxu0 0.0
      %1512 = vmatpush.msra.mxu0 0.0
      %1513 = vmatpush.msra.mxu0 0.0
      %1514 = vmatpush.msra.mxu0 0.0
      %v1515 = vand.u32 %v1472, 4294901760
      %v1516 = vsub.f32 %v1472, %v1515
      %v1517 = vand.u32 %v1516, 4294901760
      %v1518 = vsub.f32 %v1516, %v1517
      %v1519 = vand.u32 %v1518, 4294901760
      %1520 = vmatpush.msra.mxu0 %v1519
      %v1521 = vand.u32 %v1463, 4294901760
      %v1522 = vsub.f32 %v1463, %v1521
      %v1523 = vand.u32 %v1522, 4294901760
      %v1524 = vsub.f32 %v1522, %v1523
      %v1525 = vand.u32 %v1524, 4294901760
      %1526 = vmatpush.msra.mxu0 %v1525
      %v1527 = vand.u32 %v1461, 4294901760
      %v1528 = vsub.f32 %v1461, %v1527
      %v1529 = vand.u32 %v1528, 4294901760
      %v1530 = vsub.f32 %v1528, %v1529
      %v1531 = vand.u32 %v1530, 4294901760
      %1532 = vmatpush.msra.mxu0 %v1531
      %v1533 = vand.u32 %v1459, 4294901760
      %v1534 = vsub.f32 %v1459, %v1533
      %v1535 = vand.u32 %v1534, 4294901760
      %v1536 = vsub.f32 %v1534, %v1535
      %v1537 = vand.u32 %v1536, 4294901760
      %1538 = vmatpush.msra.mxu0 %v1537
      %v1539 = vand.u32 %v1470, 4294901760
      %1540 = vmatmul.f32.gmra.mxu0 %v1539
      %v1541 = vpop.f32.mrf.mxu0
      %v1542 = vadd.f32 %v1501, %v1541
      %1543 = vdwg.mxu0
      %1544 = vmatpush.msra.mxu0 0.0
      %1545 = vmatpush.msra.mxu0 0.0
      %1546 = vmatpush.msra.mxu0 0.0
      %1547 = vmatpush.msra.mxu0 0.0
      %1548 = vmatpush.msra.mxu0 0.0
      %1549 = vmatpush.msra.mxu0 0.0
      %1550 = vmatpush.msra.mxu0 0.0
      %1551 = vmatpush.msra.mxu0 0.0
      %1552 = vmatpush.msra.mxu0 0.0
      %1553 = vmatpush.msra.mxu0 0.0
      %1554 = vmatpush.msra.mxu0 0.0
      %1555 = vmatpush.msra.mxu0 0.0
      %v1556 = vand.u32 %v1472, 4294901760
      %v1557 = vsub.f32 %v1472, %v1556
      %1558 = vmatpush.msra.mxu0 %v1557
      %v1559 = vand.u32 %v1463, 4294901760
      %v1560 = vsub.f32 %v1463, %v1559
      %1561 = vmatpush.msra.mxu0 %v1560
      %v1562 = vand.u32 %v1461, 4294901760
      %v1563 = vsub.f32 %v1461, %v1562
      %1564 = vmatpush.msra.mxu0 %v1563
      %v1565 = vand.u32 %v1459, 4294901760
      %v1566 = vsub.f32 %v1459, %v1565
      %1567 = vmatpush.msra.mxu0 %v1566
      %v1568 = vand.u32 %v1470, 4294901760
      %v1569 = vsub.f32 %v1470, %v1568
      %1570 = vmatmul.f32.gmra.mxu0 %v1569
      %v1571 = vpop.f32.mrf.mxu0
      %v1572 = vadd.f32 %v1542, %v1571
      %1573 = vdwg.mxu0
      %1574 = vmatpush.msra.mxu0 0.0
      %1575 = vmatpush.msra.mxu0 0.0
      %1576 = vmatpush.msra.mxu0 0.0
      %1577 = vmatpush.msra.mxu0 0.0
      %1578 = vmatpush.msra.mxu0 0.0
      %1579 = vmatpush.msra.mxu0 0.0
      %1580 = vmatpush.msra.mxu0 0.0
      %1581 = vmatpush.msra.mxu0 0.0
      %1582 = vmatpush.msra.mxu0 0.0
      %1583 = vmatpush.msra.mxu0 0.0
      %1584 = vmatpush.msra.mxu0 0.0
      %1585 = vmatpush.msra.mxu0 0.0
      %v1586 = vand.u32 %v1472, 4294901760
      %1587 = vmatpush.msra.mxu0 %v1586
      %v1588 = vand.u32 %v1463, 4294901760
      %1589 = vmatpush.msra.mxu0 %v1588
      %v1590 = vand.u32 %v1461, 4294901760
      %1591 = vmatpush.msra.mxu0 %v1590
      %v1592 = vand.u32 %v1459, 4294901760
      %1593 = vmatpush.msra.mxu0 %v1592
      %v1594 = vand.u32 %v1470, 4294901760
      %v1595 = vsub.f32 %v1470, %v1594
      %v1596 = vand.u32 %v1595, 4294901760
      %1597 = vmatmul.f32.gmra.mxu0 %v1596
      %v1598 = vpop.f32.mrf.mxu0
      %v1599 = vadd.f32 %v1572, %v1598
      %1600 = vdwg.mxu0
      %1601 = vmatpush.msra.mxu0 0.0
      %1602 = vmatpush.msra.mxu0 0.0
      %1603 = vmatpush.msra.mxu0 0.0
      %1604 = vmatpush.msra.mxu0 0.0
      %1605 = vmatpush.msra.mxu0 0.0
      %1606 = vmatpush.msra.mxu0 0.0
      %1607 = vmatpush.msra.mxu0 0.0
      %1608 = vmatpush.msra.mxu0 0.0
      %1609 = vmatpush.msra.mxu0 0.0
      %1610 = vmatpush.msra.mxu0 0.0
      %1611 = vmatpush.msra.mxu0 0.0
      %1612 = vmatpush.msra.mxu0 0.0
      %v1613 = vand.u32 %v1472, 4294901760
      %v1614 = vsub.f32 %v1472, %v1613
      %v1615 = vand.u32 %v1614, 4294901760
      %1616 = vmatpush.msra.mxu0 %v1615
      %v1617 = vand.u32 %v1463, 4294901760
      %v1618 = vsub.f32 %v1463, %v1617
      %v1619 = vand.u32 %v1618, 4294901760
      %1620 = vmatpush.msra.mxu0 %v1619
      %v1621 = vand.u32 %v1461, 4294901760
      %v1622 = vsub.f32 %v1461, %v1621
      %v1623 = vand.u32 %v1622, 4294901760
      %1624 = vmatpush.msra.mxu0 %v1623
      %v1625 = vand.u32 %v1459, 4294901760
      %v1626 = vsub.f32 %v1459, %v1625
      %v1627 = vand.u32 %v1626, 4294901760
      %1628 = vmatpush.msra.mxu0 %v1627
      %v1629 = vand.u32 %v1470, 4294901760
      %1630 = vmatmul.f32.gmra.mxu0 %v1629
      %v1631 = vpop.f32.mrf.mxu0
      %v1632 = vadd.f32 %v1599, %v1631
      %1633 = vdwg.mxu0
      %1634 = vmatpush.msra.mxu0 0.0
      %1635 = vmatpush.msra.mxu0 0.0
      %1636 = vmatpush.msra.mxu0 0.0
      %1637 = vmatpush.msra.mxu0 0.0
      %1638 = vmatpush.msra.mxu0 0.0
      %1639 = vmatpush.msra.mxu0 0.0
      %1640 = vmatpush.msra.mxu0 0.0
      %1641 = vmatpush.msra.mxu0 0.0
      %1642 = vmatpush.msra.mxu0 0.0
      %1643 = vmatpush.msra.mxu0 0.0
      %1644 = vmatpush.msra.mxu0 0.0
      %1645 = vmatpush.msra.mxu0 0.0
      %v1646 = vand.u32 %v1472, 4294901760
      %1647 = vmatpush.msra.mxu0 %v1646
      %v1648 = vand.u32 %v1463, 4294901760
      %1649 = vmatpush.msra.mxu0 %v1648
      %v1650 = vand.u32 %v1461, 4294901760
      %1651 = vmatpush.msra.mxu0 %v1650
      %v1652 = vand.u32 %v1459, 4294901760
      %1653 = vmatpush.msra.mxu0 %v1652
      %v1654 = vand.u32 %v1470, 4294901760
      %1655 = vmatmul.f32.gmra.mxu0 %v1654
      %v1656 = vpop.f32.mrf.mxu0
      %v1657 = vadd.f32 %v1632, %v1656
      %1658 = vdwg.mxu0
      %v1659 = vadd.f32 %v1455, %v1657
      %v1660 = vld [vmem:[%s2] sm:$0xf]
      %1662 = vset.pattern.permute.xlu0 0
      %1663 = vperm.xlu0 %1662, %v1660
      %v1664 = vpop.permute.xlu0 %1663
      %v1666 = vadd.f32 %v1659, %v1664
      %vm1667 = vcmp.gt.f32.partialorder %v1666, 0.0
      %v1668 = vmin.f32 %v1666, 0.0
      %v1669 = vmul.f32 %v1668, 1.442695
      %v1670 = vpow.pop %v1669
      %v1671 = vsub.f32 %v1670, 1.0
      %v1672 = vsel %vm1667, %v1666, %v1671
      %vm1673 = vcmask 519168
      %1674 = vst.msk [vmem:[%s231] sm:$0xf] %vm1673, %v1672
      %v1675 = vld [vmem:[%s1] sm:$0xf]
      %s1676 = scalar_lea.vmem %s226, 32
      %v1677 = vld [vmem:[%s1676] sm:$0xff]
      %v1678 = vld [vmem:[%s1676 + $0x8] sm:$0xff]
      %v1679 = vld [vmem:[%s1676 + $0x10] sm:$0xff]
      %v1680 = vld [vmem:[%s1676 + $0x18] sm:$0xf]
      %v1681 = vld [vmem:[%s241] sm:$0xf]
      %1686 = vrot.lane.b32.xlu0 %v1677, 120
      %v1687 = vpop.permute.xlu0 %1686
      %1688 = vrot.lane.b32.xlu0 %v1678, 120
      %v1689 = vpop.permute.xlu0 %1688
      %1690 = vrot.lane.b32.xlu0 %v1679, 120
      %v1691 = vpop.permute.xlu0 %1690
      %1692 = vrot.lane.b32.xlu0 %v1680, 120
      %v1693 = vpop.permute.xlu0 %1692
      %v1698 = vsel %vm258, %v1681, 0
      %v1700 = vsel %vm262, %v1693, 0
      %1702 = vmatpush.msra.mxu0 0.0
      %1703 = vmatpush.msra.mxu0 0.0
      %1704 = vmatpush.msra.mxu0 0.0
      %1705 = vmatpush.msra.mxu0 0.0
      %1706 = vmatpush.msra.mxu0 0.0
      %1707 = vmatpush.msra.mxu0 0.0
      %1708 = vmatpush.msra.mxu0 0.0
      %1709 = vmatpush.msra.mxu0 0.0
      %1710 = vmatpush.msra.mxu0 0.0
      %1711 = vmatpush.msra.mxu0 0.0
      %1712 = vmatpush.msra.mxu0 0.0
      %1713 = vmatpush.msra.mxu0 0.0
      %v1714 = vand.u32 %v1700, 4294901760
      %1715 = vmatpush.msra.mxu0 %v1714
      %v1716 = vand.u32 %v1691, 4294901760
      %1717 = vmatpush.msra.mxu0 %v1716
      %v1718 = vand.u32 %v1689, 4294901760
      %1719 = vmatpush.msra.mxu0 %v1718
      %v1720 = vand.u32 %v1687, 4294901760
      %1721 = vmatpush.msra.mxu0 %v1720
      %v1722 = vand.u32 %v1698, 4294901760
      %v1723 = vsub.f32 %v1698, %v1722
      %v1724 = vand.u32 %v1723, 4294901760
      %v1725 = vsub.f32 %v1723, %v1724
      %v1726 = vand.u32 %v1725, 4294901760
      %1727 = vmatmul.f32.gmra.mxu0 %v1726
      %v1728 = vpop.f32.mrf.mxu0
      %v1729 = vadd.f32 0.0, %v1728
      %1730 = vdwg.mxu0
      %1731 = vmatpush.msra.mxu0 0.0
      %1732 = vmatpush.msra.mxu0 0.0
      %1733 = vmatpush.msra.mxu0 0.0
      %1734 = vmatpush.msra.mxu0 0.0
      %1735 = vmatpush.msra.mxu0 0.0
      %1736 = vmatpush.msra.mxu0 0.0
      %1737 = vmatpush.msra.mxu0 0.0
      %1738 = vmatpush.msra.mxu0 0.0
      %1739 = vmatpush.msra.mxu0 0.0
      %1740 = vmatpush.msra.mxu0 0.0
      %1741 = vmatpush.msra.mxu0 0.0
      %1742 = vmatpush.msra.mxu0 0.0
      %v1743 = vand.u32 %v1700, 4294901760
      %v1744 = vsub.f32 %v1700, %v1743
      %v1745 = vand.u32 %v1744, 4294901760
      %v1746 = vsub.f32 %v1744, %v1745
      %v1747 = vand.u32 %v1746, 4294901760
      %1748 = vmatpush.msra.mxu0 %v1747
      %v1749 = vand.u32 %v1691, 4294901760
      %v1750 = vsub.f32 %v1691, %v1749
      %v1751 = vand.u32 %v1750, 4294901760
      %v1752 = vsub.f32 %v1750, %v1751
      %v1753 = vand.u32 %v1752, 4294901760
      %1754 = vmatpush.msra.mxu0 %v1753
      %v1755 = vand.u32 %v1689, 4294901760
      %v1756 = vsub.f32 %v1689, %v1755
      %v1757 = vand.u32 %v1756, 4294901760
      %v1758 = vsub.f32 %v1756, %v1757
      %v1759 = vand.u32 %v1758, 4294901760
      %1760 = vmatpush.msra.mxu0 %v1759
      %v1761 = vand.u32 %v1687, 4294901760
      %v1762 = vsub.f32 %v1687, %v1761
      %v1763 = vand.u32 %v1762, 4294901760
      %v1764 = vsub.f32 %v1762, %v1763
      %v1765 = vand.u32 %v1764, 4294901760
      %1766 = vmatpush.msra.mxu0 %v1765
      %v1767 = vand.u32 %v1698, 4294901760
      %1768 = vmatmul.f32.gmra.mxu0 %v1767
      %v1769 = vpop.f32.mrf.mxu0
      %v1770 = vadd.f32 %v1729, %v1769
      %1771 = vdwg.mxu0
      %1772 = vmatpush.msra.mxu0 0.0
      %1773 = vmatpush.msra.mxu0 0.0
      %1774 = vmatpush.msra.mxu0 0.0
      %1775 = vmatpush.msra.mxu0 0.0
      %1776 = vmatpush.msra.mxu0 0.0
      %1777 = vmatpush.msra.mxu0 0.0
      %1778 = vmatpush.msra.mxu0 0.0
      %1779 = vmatpush.msra.mxu0 0.0
      %1780 = vmatpush.msra.mxu0 0.0
      %1781 = vmatpush.msra.mxu0 0.0
      %1782 = vmatpush.msra.mxu0 0.0
      %1783 = vmatpush.msra.mxu0 0.0
      %v1784 = vand.u32 %v1700, 4294901760
      %v1785 = vsub.f32 %v1700, %v1784
      %1786 = vmatpush.msra.mxu0 %v1785
      %v1787 = vand.u32 %v1691, 4294901760
      %v1788 = vsub.f32 %v1691, %v1787
      %1789 = vmatpush.msra.mxu0 %v1788
      %v1790 = vand.u32 %v1689, 4294901760
      %v1791 = vsub.f32 %v1689, %v1790
      %1792 = vmatpush.msra.mxu0 %v1791
      %v1793 = vand.u32 %v1687, 4294901760
      %v1794 = vsub.f32 %v1687, %v1793
      %1795 = vmatpush.msra.mxu0 %v1794
      %v1796 = vand.u32 %v1698, 4294901760
      %v1797 = vsub.f32 %v1698, %v1796
      %1798 = vmatmul.f32.gmra.mxu0 %v1797
      %v1799 = vpop.f32.mrf.mxu0
      %v1800 = vadd.f32 %v1770, %v1799
      %1801 = vdwg.mxu0
      %1802 = vmatpush.msra.mxu0 0.0
      %1803 = vmatpush.msra.mxu0 0.0
      %1804 = vmatpush.msra.mxu0 0.0
      %1805 = vmatpush.msra.mxu0 0.0
      %1806 = vmatpush.msra.mxu0 0.0
      %1807 = vmatpush.msra.mxu0 0.0
      %1808 = vmatpush.msra.mxu0 0.0
      %1809 = vmatpush.msra.mxu0 0.0
      %1810 = vmatpush.msra.mxu0 0.0
      %1811 = vmatpush.msra.mxu0 0.0
      %1812 = vmatpush.msra.mxu0 0.0
      %1813 = vmatpush.msra.mxu0 0.0
      %v1814 = vand.u32 %v1700, 4294901760
      %1815 = vmatpush.msra.mxu0 %v1814
      %v1816 = vand.u32 %v1691, 4294901760
      %1817 = vmatpush.msra.mxu0 %v1816
      %v1818 = vand.u32 %v1689, 4294901760
      %1819 = vmatpush.msra.mxu0 %v1818
      %v1820 = vand.u32 %v1687, 4294901760
      %1821 = vmatpush.msra.mxu0 %v1820
      %v1822 = vand.u32 %v1698, 4294901760
      %v1823 = vsub.f32 %v1698, %v1822
      %v1824 = vand.u32 %v1823, 4294901760
      %1825 = vmatmul.f32.gmra.mxu0 %v1824
      %v1826 = vpop.f32.mrf.mxu0
      %v1827 = vadd.f32 %v1800, %v1826
      %1828 = vdwg.mxu0
      %1829 = vmatpush.msra.mxu0 0.0
      %1830 = vmatpush.msra.mxu0 0.0
      %1831 = vmatpush.msra.mxu0 0.0
      %1832 = vmatpush.msra.mxu0 0.0
      %1833 = vmatpush.msra.mxu0 0.0
      %1834 = vmatpush.msra.mxu0 0.0
      %1835 = vmatpush.msra.mxu0 0.0
      %1836 = vmatpush.msra.mxu0 0.0
      %1837 = vmatpush.msra.mxu0 0.0
      %1838 = vmatpush.msra.mxu0 0.0
      %1839 = vmatpush.msra.mxu0 0.0
      %1840 = vmatpush.msra.mxu0 0.0
      %v1841 = vand.u32 %v1700, 4294901760
      %v1842 = vsub.f32 %v1700, %v1841
      %v1843 = vand.u32 %v1842, 4294901760
      %1844 = vmatpush.msra.mxu0 %v1843
      %v1845 = vand.u32 %v1691, 4294901760
      %v1846 = vsub.f32 %v1691, %v1845
      %v1847 = vand.u32 %v1846, 4294901760
      %1848 = vmatpush.msra.mxu0 %v1847
      %v1849 = vand.u32 %v1689, 4294901760
      %v1850 = vsub.f32 %v1689, %v1849
      %v1851 = vand.u32 %v1850, 4294901760
      %1852 = vmatpush.msra.mxu0 %v1851
      %v1853 = vand.u32 %v1687, 4294901760
      %v1854 = vsub.f32 %v1687, %v1853
      %v1855 = vand.u32 %v1854, 4294901760
      %1856 = vmatpush.msra.mxu0 %v1855
      %v1857 = vand.u32 %v1698, 4294901760
      %1858 = vmatmul.f32.gmra.mxu0 %v1857
      %v1859 = vpop.f32.mrf.mxu0
      %v1860 = vadd.f32 %v1827, %v1859
      %1861 = vdwg.mxu0
      %1862 = vmatpush.msra.mxu0 0.0
      %1863 = vmatpush.msra.mxu0 0.0
      %1864 = vmatpush.msra.mxu0 0.0
      %1865 = vmatpush.msra.mxu0 0.0
      %1866 = vmatpush.msra.mxu0 0.0
      %1867 = vmatpush.msra.mxu0 0.0
      %1868 = vmatpush.msra.mxu0 0.0
      %1869 = vmatpush.msra.mxu0 0.0
      %1870 = vmatpush.msra.mxu0 0.0
      %1871 = vmatpush.msra.mxu0 0.0
      %1872 = vmatpush.msra.mxu0 0.0
      %1873 = vmatpush.msra.mxu0 0.0
      %v1874 = vand.u32 %v1700, 4294901760
      %1875 = vmatpush.msra.mxu0 %v1874
      %v1876 = vand.u32 %v1691, 4294901760
      %1877 = vmatpush.msra.mxu0 %v1876
      %v1878 = vand.u32 %v1689, 4294901760
      %1879 = vmatpush.msra.mxu0 %v1878
      %v1880 = vand.u32 %v1687, 4294901760
      %1881 = vmatpush.msra.mxu0 %v1880
      %v1882 = vand.u32 %v1698, 4294901760
      %1883 = vmatmul.f32.gmra.mxu0 %v1882
      %v1884 = vpop.f32.mrf.mxu0
      %v1885 = vadd.f32 %v1860, %v1884
      %1886 = vdwg.mxu0
      %v1888 = vsel %vm258, %v1675, 0
      %v1890 = vsel %vm262, %v1680, 0
      %1892 = vmatpush.msra.mxu0 0.0
      %1893 = vmatpush.msra.mxu0 0.0
      %1894 = vmatpush.msra.mxu0 0.0
      %1895 = vmatpush.msra.mxu0 0.0
      %1896 = vmatpush.msra.mxu0 0.0
      %1897 = vmatpush.msra.mxu0 0.0
      %1898 = vmatpush.msra.mxu0 0.0
      %1899 = vmatpush.msra.mxu0 0.0
      %1900 = vmatpush.msra.mxu0 0.0
      %1901 = vmatpush.msra.mxu0 0.0
      %1902 = vmatpush.msra.mxu0 0.0
      %1903 = vmatpush.msra.mxu0 0.0
      %v1904 = vand.u32 %v1890, 4294901760
      %1905 = vmatpush.msra.mxu0 %v1904
      %v1906 = vand.u32 %v1679, 4294901760
      %1907 = vmatpush.msra.mxu0 %v1906
      %v1908 = vand.u32 %v1678, 4294901760
      %1909 = vmatpush.msra.mxu0 %v1908
      %v1910 = vand.u32 %v1677, 4294901760
      %1911 = vmatpush.msra.mxu0 %v1910
      %v1912 = vand.u32 %v1888, 4294901760
      %v1913 = vsub.f32 %v1888, %v1912
      %v1914 = vand.u32 %v1913, 4294901760
      %v1915 = vsub.f32 %v1913, %v1914
      %v1916 = vand.u32 %v1915, 4294901760
      %1917 = vmatmul.f32.gmra.mxu0 %v1916
      %v1918 = vpop.f32.mrf.mxu0
      %v1919 = vadd.f32 %v1885, %v1918
      %1920 = vdwg.mxu0
      %1921 = vmatpush.msra.mxu0 0.0
      %1922 = vmatpush.msra.mxu0 0.0
      %1923 = vmatpush.msra.mxu0 0.0
      %1924 = vmatpush.msra.mxu0 0.0
      %1925 = vmatpush.msra.mxu0 0.0
      %1926 = vmatpush.msra.mxu0 0.0
      %1927 = vmatpush.msra.mxu0 0.0
      %1928 = vmatpush.msra.mxu0 0.0
      %1929 = vmatpush.msra.mxu0 0.0
      %1930 = vmatpush.msra.mxu0 0.0
      %1931 = vmatpush.msra.mxu0 0.0
      %1932 = vmatpush.msra.mxu0 0.0
      %v1933 = vand.u32 %v1890, 4294901760
      %v1934 = vsub.f32 %v1890, %v1933
      %v1935 = vand.u32 %v1934, 4294901760
      %v1936 = vsub.f32 %v1934, %v1935
      %v1937 = vand.u32 %v1936, 4294901760
      %1938 = vmatpush.msra.mxu0 %v1937
      %v1939 = vand.u32 %v1679, 4294901760
      %v1940 = vsub.f32 %v1679, %v1939
      %v1941 = vand.u32 %v1940, 4294901760
      %v1942 = vsub.f32 %v1940, %v1941
      %v1943 = vand.u32 %v1942, 4294901760
      %1944 = vmatpush.msra.mxu0 %v1943
      %v1945 = vand.u32 %v1678, 4294901760
      %v1946 = vsub.f32 %v1678, %v1945
      %v1947 = vand.u32 %v1946, 4294901760
      %v1948 = vsub.f32 %v1946, %v1947
      %v1949 = vand.u32 %v1948, 4294901760
      %1950 = vmatpush.msra.mxu0 %v1949
      %v1951 = vand.u32 %v1677, 4294901760
      %v1952 = vsub.f32 %v1677, %v1951
      %v1953 = vand.u32 %v1952, 4294901760
      %v1954 = vsub.f32 %v1952, %v1953
      %v1955 = vand.u32 %v1954, 4294901760
      %1956 = vmatpush.msra.mxu0 %v1955
      %v1957 = vand.u32 %v1888, 4294901760
      %1958 = vmatmul.f32.gmra.mxu0 %v1957
      %v1959 = vpop.f32.mrf.mxu0
      %v1960 = vadd.f32 %v1919, %v1959
      %1961 = vdwg.mxu0
      %1962 = vmatpush.msra.mxu0 0.0
      %1963 = vmatpush.msra.mxu0 0.0
      %1964 = vmatpush.msra.mxu0 0.0
      %1965 = vmatpush.msra.mxu0 0.0
      %1966 = vmatpush.msra.mxu0 0.0
      %1967 = vmatpush.msra.mxu0 0.0
      %1968 = vmatpush.msra.mxu0 0.0
      %1969 = vmatpush.msra.mxu0 0.0
      %1970 = vmatpush.msra.mxu0 0.0
      %1971 = vmatpush.msra.mxu0 0.0
      %1972 = vmatpush.msra.mxu0 0.0
      %1973 = vmatpush.msra.mxu0 0.0
      %v1974 = vand.u32 %v1890, 4294901760
      %v1975 = vsub.f32 %v1890, %v1974
      %1976 = vmatpush.msra.mxu0 %v1975
      %v1977 = vand.u32 %v1679, 4294901760
      %v1978 = vsub.f32 %v1679, %v1977
      %1979 = vmatpush.msra.mxu0 %v1978
      %v1980 = vand.u32 %v1678, 4294901760
      %v1981 = vsub.f32 %v1678, %v1980
      %1982 = vmatpush.msra.mxu0 %v1981
      %v1983 = vand.u32 %v1677, 4294901760
      %v1984 = vsub.f32 %v1677, %v1983
      %1985 = vmatpush.msra.mxu0 %v1984
      %v1986 = vand.u32 %v1888, 4294901760
      %v1987 = vsub.f32 %v1888, %v1986
      %1988 = vmatmul.f32.gmra.mxu0 %v1987
      %v1989 = vpop.f32.mrf.mxu0
      %v1990 = vadd.f32 %v1960, %v1989
      %1991 = vdwg.mxu0
      %1992 = vmatpush.msra.mxu0 0.0
      %1993 = vmatpush.msra.mxu0 0.0
      %1994 = vmatpush.msra.mxu0 0.0
      %1995 = vmatpush.msra.mxu0 0.0
      %1996 = vmatpush.msra.mxu0 0.0
      %1997 = vmatpush.msra.mxu0 0.0
      %1998 = vmatpush.msra.mxu0 0.0
      %1999 = vmatpush.msra.mxu0 0.0
      %2000 = vmatpush.msra.mxu0 0.0
      %2001 = vmatpush.msra.mxu0 0.0
      %2002 = vmatpush.msra.mxu0 0.0
      %2003 = vmatpush.msra.mxu0 0.0
      %v2004 = vand.u32 %v1890, 4294901760
      %2005 = vmatpush.msra.mxu0 %v2004
      %v2006 = vand.u32 %v1679, 4294901760
      %2007 = vmatpush.msra.mxu0 %v2006
      %v2008 = vand.u32 %v1678, 4294901760
      %2009 = vmatpush.msra.mxu0 %v2008
      %v2010 = vand.u32 %v1677, 4294901760
      %2011 = vmatpush.msra.mxu0 %v2010
      %v2012 = vand.u32 %v1888, 4294901760
      %v2013 = vsub.f32 %v1888, %v2012
      %v2014 = vand.u32 %v2013, 4294901760
      %2015 = vmatmul.f32.gmra.mxu0 %v2014
      %v2016 = vpop.f32.mrf.mxu0
      %v2017 = vadd.f32 %v1990, %v2016
      %2018 = vdwg.mxu0
      %2019 = vmatpush.msra.mxu0 0.0
      %2020 = vmatpush.msra.mxu0 0.0
      %2021 = vmatpush.msra.mxu0 0.0
      %2022 = vmatpush.msra.mxu0 0.0
      %2023 = vmatpush.msra.mxu0 0.0
      %2024 = vmatpush.msra.mxu0 0.0
      %2025 = vmatpush.msra.mxu0 0.0
      %2026 = vmatpush.msra.mxu0 0.0
      %2027 = vmatpush.msra.mxu0 0.0
      %2028 = vmatpush.msra.mxu0 0.0
      %2029 = vmatpush.msra.mxu0 0.0
      %2030 = vmatpush.msra.mxu0 0.0
      %v2031 = vand.u32 %v1890, 4294901760
      %v2032 = vsub.f32 %v1890, %v2031
      %v2033 = vand.u32 %v2032, 4294901760
      %2034 = vmatpush.msra.mxu0 %v2033
      %v2035 = vand.u32 %v1679, 4294901760
      %v2036 = vsub.f32 %v1679, %v2035
      %v2037 = vand.u32 %v2036, 4294901760
      %2038 = vmatpush.msra.mxu0 %v2037
      %v2039 = vand.u32 %v1678, 4294901760
      %v2040 = vsub.f32 %v1678, %v2039
      %v2041 = vand.u32 %v2040, 4294901760
      %2042 = vmatpush.msra.mxu0 %v2041
      %v2043 = vand.u32 %v1677, 4294901760
      %v2044 = vsub.f32 %v1677, %v2043
      %v2045 = vand.u32 %v2044, 4294901760
      %2046 = vmatpush.msra.mxu0 %v2045
      %v2047 = vand.u32 %v1888, 4294901760
      %2048 = vmatmul.f32.gmra.mxu0 %v2047
      %v2049 = vpop.f32.mrf.mxu0
      %v2050 = vadd.f32 %v2017, %v2049
      %2051 = vdwg.mxu0
      %2052 = vmatpush.msra.mxu0 0.0
      %2053 = vmatpush.msra.mxu0 0.0
      %2054 = vmatpush.msra.mxu0 0.0
      %2055 = vmatpush.msra.mxu0 0.0
      %2056 = vmatpush.msra.mxu0 0.0
      %2057 = vmatpush.msra.mxu0 0.0
      %2058 = vmatpush.msra.mxu0 0.0
      %2059 = vmatpush.msra.mxu0 0.0
      %2060 = vmatpush.msra.mxu0 0.0
      %2061 = vmatpush.msra.mxu0 0.0
      %2062 = vmatpush.msra.mxu0 0.0
      %2063 = vmatpush.msra.mxu0 0.0
      %v2064 = vand.u32 %v1890, 4294901760
      %2065 = vmatpush.msra.mxu0 %v2064
      %v2066 = vand.u32 %v1679, 4294901760
      %2067 = vmatpush.msra.mxu0 %v2066
      %v2068 = vand.u32 %v1678, 4294901760
      %2069 = vmatpush.msra.mxu0 %v2068
      %v2070 = vand.u32 %v1677, 4294901760
      %2071 = vmatpush.msra.mxu0 %v2070
      %v2072 = vand.u32 %v1888, 4294901760
      %2073 = vmatmul.f32.gmra.mxu0 %v2072
      %v2074 = vpop.f32.mrf.mxu0
      %v2075 = vadd.f32 %v2050, %v2074
      %2076 = vdwg.mxu0
      %v2077 = vld [vmem:[%s640] sm:$0xf]
      %2078 = vrot.lane.b32.xlu0 %v1677, 112
      %v2079 = vpop.permute.xlu0 %2078
      %2080 = vrot.lane.b32.xlu0 %v1678, 112
      %v2081 = vpop.permute.xlu0 %2080
      %2082 = vrot.lane.b32.xlu0 %v1679, 112
      %v2083 = vpop.permute.xlu0 %2082
      %2084 = vrot.lane.b32.xlu0 %v1680, 112
      %v2085 = vpop.permute.xlu0 %2084
      %v2090 = vsel %vm258, %v2077, 0
      %v2092 = vsel %vm262, %v2085, 0
      %2094 = vmatpush.msra.mxu0 0.0
      %2095 = vmatpush.msra.mxu0 0.0
      %2096 = vmatpush.msra.mxu0 0.0
      %2097 = vmatpush.msra.mxu0 0.0
      %2098 = vmatpush.msra.mxu0 0.0
      %2099 = vmatpush.msra.mxu0 0.0
      %2100 = vmatpush.msra.mxu0 0.0
      %2101 = vmatpush.msra.mxu0 0.0
      %2102 = vmatpush.msra.mxu0 0.0
      %2103 = vmatpush.msra.mxu0 0.0
      %2104 = vmatpush.msra.mxu0 0.0
      %2105 = vmatpush.msra.mxu0 0.0
      %v2106 = vand.u32 %v2092, 4294901760
      %2107 = vmatpush.msra.mxu0 %v2106
      %v2108 = vand.u32 %v2083, 4294901760
      %2109 = vmatpush.msra.mxu0 %v2108
      %v2110 = vand.u32 %v2081, 4294901760
      %2111 = vmatpush.msra.mxu0 %v2110
      %v2112 = vand.u32 %v2079, 4294901760
      %2113 = vmatpush.msra.mxu0 %v2112
      %v2114 = vand.u32 %v2090, 4294901760
      %v2115 = vsub.f32 %v2090, %v2114
      %v2116 = vand.u32 %v2115, 4294901760
      %v2117 = vsub.f32 %v2115, %v2116
      %v2118 = vand.u32 %v2117, 4294901760
      %2119 = vmatmul.f32.gmra.mxu0 %v2118
      %v2120 = vpop.f32.mrf.mxu0
      %v2121 = vadd.f32 0.0, %v2120
      %2122 = vdwg.mxu0
      %2123 = vmatpush.msra.mxu0 0.0
      %2124 = vmatpush.msra.mxu0 0.0
      %2125 = vmatpush.msra.mxu0 0.0
      %2126 = vmatpush.msra.mxu0 0.0
      %2127 = vmatpush.msra.mxu0 0.0
      %2128 = vmatpush.msra.mxu0 0.0
      %2129 = vmatpush.msra.mxu0 0.0
      %2130 = vmatpush.msra.mxu0 0.0
      %2131 = vmatpush.msra.mxu0 0.0
      %2132 = vmatpush.msra.mxu0 0.0
      %2133 = vmatpush.msra.mxu0 0.0
      %2134 = vmatpush.msra.mxu0 0.0
      %v2135 = vand.u32 %v2092, 4294901760
      %v2136 = vsub.f32 %v2092, %v2135
      %v2137 = vand.u32 %v2136, 4294901760
      %v2138 = vsub.f32 %v2136, %v2137
      %v2139 = vand.u32 %v2138, 4294901760
      %2140 = vmatpush.msra.mxu0 %v2139
      %v2141 = vand.u32 %v2083, 4294901760
      %v2142 = vsub.f32 %v2083, %v2141
      %v2143 = vand.u32 %v2142, 4294901760
      %v2144 = vsub.f32 %v2142, %v2143
      %v2145 = vand.u32 %v2144, 4294901760
      %2146 = vmatpush.msra.mxu0 %v2145
      %v2147 = vand.u32 %v2081, 4294901760
      %v2148 = vsub.f32 %v2081, %v2147
      %v2149 = vand.u32 %v2148, 4294901760
      %v2150 = vsub.f32 %v2148, %v2149
      %v2151 = vand.u32 %v2150, 4294901760
      %2152 = vmatpush.msra.mxu0 %v2151
      %v2153 = vand.u32 %v2079, 4294901760
      %v2154 = vsub.f32 %v2079, %v2153
      %v2155 = vand.u32 %v2154, 4294901760
      %v2156 = vsub.f32 %v2154, %v2155
      %v2157 = vand.u32 %v2156, 4294901760
      %2158 = vmatpush.msra.mxu0 %v2157
      %v2159 = vand.u32 %v2090, 4294901760
      %2160 = vmatmul.f32.gmra.mxu0 %v2159
      %v2161 = vpop.f32.mrf.mxu0
      %v2162 = vadd.f32 %v2121, %v2161
      %2163 = vdwg.mxu0
      %2164 = vmatpush.msra.mxu0 0.0
      %2165 = vmatpush.msra.mxu0 0.0
      %2166 = vmatpush.msra.mxu0 0.0
      %2167 = vmatpush.msra.mxu0 0.0
      %2168 = vmatpush.msra.mxu0 0.0
      %2169 = vmatpush.msra.mxu0 0.0
      %2170 = vmatpush.msra.mxu0 0.0
      %2171 = vmatpush.msra.mxu0 0.0
      %2172 = vmatpush.msra.mxu0 0.0
      %2173 = vmatpush.msra.mxu0 0.0
      %2174 = vmatpush.msra.mxu0 0.0
      %2175 = vmatpush.msra.mxu0 0.0
      %v2176 = vand.u32 %v2092, 4294901760
      %v2177 = vsub.f32 %v2092, %v2176
      %2178 = vmatpush.msra.mxu0 %v2177
      %v2179 = vand.u32 %v2083, 4294901760
      %v2180 = vsub.f32 %v2083, %v2179
      %2181 = vmatpush.msra.mxu0 %v2180
      %v2182 = vand.u32 %v2081, 4294901760
      %v2183 = vsub.f32 %v2081, %v2182
      %2184 = vmatpush.msra.mxu0 %v2183
      %v2185 = vand.u32 %v2079, 4294901760
      %v2186 = vsub.f32 %v2079, %v2185
      %2187 = vmatpush.msra.mxu0 %v2186
      %v2188 = vand.u32 %v2090, 4294901760
      %v2189 = vsub.f32 %v2090, %v2188
      %2190 = vmatmul.f32.gmra.mxu0 %v2189
      %v2191 = vpop.f32.mrf.mxu0
      %v2192 = vadd.f32 %v2162, %v2191
      %2193 = vdwg.mxu0
      %2194 = vmatpush.msra.mxu0 0.0
      %2195 = vmatpush.msra.mxu0 0.0
      %2196 = vmatpush.msra.mxu0 0.0
      %2197 = vmatpush.msra.mxu0 0.0
      %2198 = vmatpush.msra.mxu0 0.0
      %2199 = vmatpush.msra.mxu0 0.0
      %2200 = vmatpush.msra.mxu0 0.0
      %2201 = vmatpush.msra.mxu0 0.0
      %2202 = vmatpush.msra.mxu0 0.0
      %2203 = vmatpush.msra.mxu0 0.0
      %2204 = vmatpush.msra.mxu0 0.0
      %2205 = vmatpush.msra.mxu0 0.0
      %v2206 = vand.u32 %v2092, 4294901760
      %2207 = vmatpush.msra.mxu0 %v2206
      %v2208 = vand.u32 %v2083, 4294901760
      %2209 = vmatpush.msra.mxu0 %v2208
      %v2210 = vand.u32 %v2081, 4294901760
      %2211 = vmatpush.msra.mxu0 %v2210
      %v2212 = vand.u32 %v2079, 4294901760
      %2213 = vmatpush.msra.mxu0 %v2212
      %v2214 = vand.u32 %v2090, 4294901760
      %v2215 = vsub.f32 %v2090, %v2214
      %v2216 = vand.u32 %v2215, 4294901760
      %2217 = vmatmul.f32.gmra.mxu0 %v2216
      %v2218 = vpop.f32.mrf.mxu0
      %v2219 = vadd.f32 %v2192, %v2218
      %2220 = vdwg.mxu0
      %2221 = vmatpush.msra.mxu0 0.0
      %2222 = vmatpush.msra.mxu0 0.0
      %2223 = vmatpush.msra.mxu0 0.0
      %2224 = vmatpush.msra.mxu0 0.0
      %2225 = vmatpush.msra.mxu0 0.0
      %2226 = vmatpush.msra.mxu0 0.0
      %2227 = vmatpush.msra.mxu0 0.0
      %2228 = vmatpush.msra.mxu0 0.0
      %2229 = vmatpush.msra.mxu0 0.0
      %2230 = vmatpush.msra.mxu0 0.0
      %2231 = vmatpush.msra.mxu0 0.0
      %2232 = vmatpush.msra.mxu0 0.0
      %v2233 = vand.u32 %v2092, 4294901760
      %v2234 = vsub.f32 %v2092, %v2233
      %v2235 = vand.u32 %v2234, 4294901760
      %2236 = vmatpush.msra.mxu0 %v2235
      %v2237 = vand.u32 %v2083, 4294901760
      %v2238 = vsub.f32 %v2083, %v2237
      %v2239 = vand.u32 %v2238, 4294901760
      %2240 = vmatpush.msra.mxu0 %v2239
      %v2241 = vand.u32 %v2081, 4294901760
      %v2242 = vsub.f32 %v2081, %v2241
      %v2243 = vand.u32 %v2242, 4294901760
      %2244 = vmatpush.msra.mxu0 %v2243
      %v2245 = vand.u32 %v2079, 4294901760
      %v2246 = vsub.f32 %v2079, %v2245
      %v2247 = vand.u32 %v2246, 4294901760
      %2248 = vmatpush.msra.mxu0 %v2247
      %v2249 = vand.u32 %v2090, 4294901760
      %2250 = vmatmul.f32.gmra.mxu0 %v2249
      %v2251 = vpop.f32.mrf.mxu0
      %v2252 = vadd.f32 %v2219, %v2251
      %2253 = vdwg.mxu0
      %2254 = vmatpush.msra.mxu0 0.0
      %2255 = vmatpush.msra.mxu0 0.0
      %2256 = vmatpush.msra.mxu0 0.0
      %2257 = vmatpush.msra.mxu0 0.0
      %2258 = vmatpush.msra.mxu0 0.0
      %2259 = vmatpush.msra.mxu0 0.0
      %2260 = vmatpush.msra.mxu0 0.0
      %2261 = vmatpush.msra.mxu0 0.0
      %2262 = vmatpush.msra.mxu0 0.0
      %2263 = vmatpush.msra.mxu0 0.0
      %2264 = vmatpush.msra.mxu0 0.0
      %2265 = vmatpush.msra.mxu0 0.0
      %v2266 = vand.u32 %v2092, 4294901760
      %2267 = vmatpush.msra.mxu0 %v2266
      %v2268 = vand.u32 %v2083, 4294901760
      %2269 = vmatpush.msra.mxu0 %v2268
      %v2270 = vand.u32 %v2081, 4294901760
      %2271 = vmatpush.msra.mxu0 %v2270
      %v2272 = vand.u32 %v2079, 4294901760
      %2273 = vmatpush.msra.mxu0 %v2272
      %v2274 = vand.u32 %v2090, 4294901760
      %2275 = vmatmul.f32.gmra.mxu0 %v2274
      %v2276 = vpop.f32.mrf.mxu0
      %v2277 = vadd.f32 %v2252, %v2276
      %2278 = vdwg.mxu0
      %v2279 = vadd.f32 %v2075, %v2277
      %v2280 = vld [vmem:[%s844] sm:$0xf]
      %2281 = vrot.lane.b32.xlu0 %v1677, 104
      %v2282 = vpop.permute.xlu0 %2281
      %2283 = vrot.lane.b32.xlu0 %v1678, 104
      %v2284 = vpop.permute.xlu0 %2283
      %2285 = vrot.lane.b32.xlu0 %v1679, 104
      %v2286 = vpop.permute.xlu0 %2285
      %2287 = vrot.lane.b32.xlu0 %v1680, 104
      %v2288 = vpop.permute.xlu0 %2287
      %v2293 = vsel %vm258, %v2280, 0
      %v2295 = vsel %vm262, %v2288, 0
      %2297 = vmatpush.msra.mxu0 0.0
      %2298 = vmatpush.msra.mxu0 0.0
      %2299 = vmatpush.msra.mxu0 0.0
      %2300 = vmatpush.msra.mxu0 0.0
      %2301 = vmatpush.msra.mxu0 0.0
      %2302 = vmatpush.msra.mxu0 0.0
      %2303 = vmatpush.msra.mxu0 0.0
      %2304 = vmatpush.msra.mxu0 0.0
      %2305 = vmatpush.msra.mxu0 0.0
      %2306 = vmatpush.msra.mxu0 0.0
      %2307 = vmatpush.msra.mxu0 0.0
      %2308 = vmatpush.msra.mxu0 0.0
      %v2309 = vand.u32 %v2295, 4294901760
      %2310 = vmatpush.msra.mxu0 %v2309
      %v2311 = vand.u32 %v2286, 4294901760
      %2312 = vmatpush.msra.mxu0 %v2311
      %v2313 = vand.u32 %v2284, 4294901760
      %2314 = vmatpush.msra.mxu0 %v2313
      %v2315 = vand.u32 %v2282, 4294901760
      %2316 = vmatpush.msra.mxu0 %v2315
      %v2317 = vand.u32 %v2293, 4294901760
      %v2318 = vsub.f32 %v2293, %v2317
      %v2319 = vand.u32 %v2318, 4294901760
      %v2320 = vsub.f32 %v2318, %v2319
      %v2321 = vand.u32 %v2320, 4294901760
      %2322 = vmatmul.f32.gmra.mxu0 %v2321
      %v2323 = vpop.f32.mrf.mxu0
      %v2324 = vadd.f32 0.0, %v2323
      %2325 = vdwg.mxu0
      %2326 = vmatpush.msra.mxu0 0.0
      %2327 = vmatpush.msra.mxu0 0.0
      %2328 = vmatpush.msra.mxu0 0.0
      %2329 = vmatpush.msra.mxu0 0.0
      %2330 = vmatpush.msra.mxu0 0.0
      %2331 = vmatpush.msra.mxu0 0.0
      %2332 = vmatpush.msra.mxu0 0.0
      %2333 = vmatpush.msra.mxu0 0.0
      %2334 = vmatpush.msra.mxu0 0.0
      %2335 = vmatpush.msra.mxu0 0.0
      %2336 = vmatpush.msra.mxu0 0.0
      %2337 = vmatpush.msra.mxu0 0.0
      %v2338 = vand.u32 %v2295, 4294901760
      %v2339 = vsub.f32 %v2295, %v2338
      %v2340 = vand.u32 %v2339, 4294901760
      %v2341 = vsub.f32 %v2339, %v2340
      %v2342 = vand.u32 %v2341, 4294901760
      %2343 = vmatpush.msra.mxu0 %v2342
      %v2344 = vand.u32 %v2286, 4294901760
      %v2345 = vsub.f32 %v2286, %v2344
      %v2346 = vand.u32 %v2345, 4294901760
      %v2347 = vsub.f32 %v2345, %v2346
      %v2348 = vand.u32 %v2347, 4294901760
      %2349 = vmatpush.msra.mxu0 %v2348
      %v2350 = vand.u32 %v2284, 4294901760
      %v2351 = vsub.f32 %v2284, %v2350
      %v2352 = vand.u32 %v2351, 4294901760
      %v2353 = vsub.f32 %v2351, %v2352
      %v2354 = vand.u32 %v2353, 4294901760
      %2355 = vmatpush.msra.mxu0 %v2354
      %v2356 = vand.u32 %v2282, 4294901760
      %v2357 = vsub.f32 %v2282, %v2356
      %v2358 = vand.u32 %v2357, 4294901760
      %v2359 = vsub.f32 %v2357, %v2358
      %v2360 = vand.u32 %v2359, 4294901760
      %2361 = vmatpush.msra.mxu0 %v2360
      %v2362 = vand.u32 %v2293, 4294901760
      %2363 = vmatmul.f32.gmra.mxu0 %v2362
      %v2364 = vpop.f32.mrf.mxu0
      %v2365 = vadd.f32 %v2324, %v2364
      %2366 = vdwg.mxu0
      %2367 = vmatpush.msra.mxu0 0.0
      %2368 = vmatpush.msra.mxu0 0.0
      %2369 = vmatpush.msra.mxu0 0.0
      %2370 = vmatpush.msra.mxu0 0.0
      %2371 = vmatpush.msra.mxu0 0.0
      %2372 = vmatpush.msra.mxu0 0.0
      %2373 = vmatpush.msra.mxu0 0.0
      %2374 = vmatpush.msra.mxu0 0.0
      %2375 = vmatpush.msra.mxu0 0.0
      %2376 = vmatpush.msra.mxu0 0.0
      %2377 = vmatpush.msra.mxu0 0.0
      %2378 = vmatpush.msra.mxu0 0.0
      %v2379 = vand.u32 %v2295, 4294901760
      %v2380 = vsub.f32 %v2295, %v2379
      %2381 = vmatpush.msra.mxu0 %v2380
      %v2382 = vand.u32 %v2286, 4294901760
      %v2383 = vsub.f32 %v2286, %v2382
      %2384 = vmatpush.msra.mxu0 %v2383
      %v2385 = vand.u32 %v2284, 4294901760
      %v2386 = vsub.f32 %v2284, %v2385
      %2387 = vmatpush.msra.mxu0 %v2386
      %v2388 = vand.u32 %v2282, 4294901760
      %v2389 = vsub.f32 %v2282, %v2388
      %2390 = vmatpush.msra.mxu0 %v2389
      %v2391 = vand.u32 %v2293, 4294901760
      %v2392 = vsub.f32 %v2293, %v2391
      %2393 = vmatmul.f32.gmra.mxu0 %v2392
      %v2394 = vpop.f32.mrf.mxu0
      %v2395 = vadd.f32 %v2365, %v2394
      %2396 = vdwg.mxu0
      %2397 = vmatpush.msra.mxu0 0.0
      %2398 = vmatpush.msra.mxu0 0.0
      %2399 = vmatpush.msra.mxu0 0.0
      %2400 = vmatpush.msra.mxu0 0.0
      %2401 = vmatpush.msra.mxu0 0.0
      %2402 = vmatpush.msra.mxu0 0.0
      %2403 = vmatpush.msra.mxu0 0.0
      %2404 = vmatpush.msra.mxu0 0.0
      %2405 = vmatpush.msra.mxu0 0.0
      %2406 = vmatpush.msra.mxu0 0.0
      %2407 = vmatpush.msra.mxu0 0.0
      %2408 = vmatpush.msra.mxu0 0.0
      %v2409 = vand.u32 %v2295, 4294901760
      %2410 = vmatpush.msra.mxu0 %v2409
      %v2411 = vand.u32 %v2286, 4294901760
      %2412 = vmatpush.msra.mxu0 %v2411
      %v2413 = vand.u32 %v2284, 4294901760
      %2414 = vmatpush.msra.mxu0 %v2413
      %v2415 = vand.u32 %v2282, 4294901760
      %2416 = vmatpush.msra.mxu0 %v2415
      %v2417 = vand.u32 %v2293, 4294901760
      %v2418 = vsub.f32 %v2293, %v2417
      %v2419 = vand.u32 %v2418, 4294901760
      %2420 = vmatmul.f32.gmra.mxu0 %v2419
      %v2421 = vpop.f32.mrf.mxu0
      %v2422 = vadd.f32 %v2395, %v2421
      %2423 = vdwg.mxu0
      %2424 = vmatpush.msra.mxu0 0.0
      %2425 = vmatpush.msra.mxu0 0.0
      %2426 = vmatpush.msra.mxu0 0.0
      %2427 = vmatpush.msra.mxu0 0.0
      %2428 = vmatpush.msra.mxu0 0.0
      %2429 = vmatpush.msra.mxu0 0.0
      %2430 = vmatpush.msra.mxu0 0.0
      %2431 = vmatpush.msra.mxu0 0.0
      %2432 = vmatpush.msra.mxu0 0.0
      %2433 = vmatpush.msra.mxu0 0.0
      %2434 = vmatpush.msra.mxu0 0.0
      %2435 = vmatpush.msra.mxu0 0.0
      %v2436 = vand.u32 %v2295, 4294901760
      %v2437 = vsub.f32 %v2295, %v2436
      %v2438 = vand.u32 %v2437, 4294901760
      %2439 = vmatpush.msra.mxu0 %v2438
      %v2440 = vand.u32 %v2286, 4294901760
      %v2441 = vsub.f32 %v2286, %v2440
      %v2442 = vand.u32 %v2441, 4294901760
      %2443 = vmatpush.msra.mxu0 %v2442
      %v2444 = vand.u32 %v2284, 4294901760
      %v2445 = vsub.f32 %v2284, %v2444
      %v2446 = vand.u32 %v2445, 4294901760
      %2447 = vmatpush.msra.mxu0 %v2446
      %v2448 = vand.u32 %v2282, 4294901760
      %v2449 = vsub.f32 %v2282, %v2448
      %v2450 = vand.u32 %v2449, 4294901760
      %2451 = vmatpush.msra.mxu0 %v2450
      %v2452 = vand.u32 %v2293, 4294901760
      %2453 = vmatmul.f32.gmra.mxu0 %v2452
      %v2454 = vpop.f32.mrf.mxu0
      %v2455 = vadd.f32 %v2422, %v2454
      %2456 = vdwg.mxu0
      %2457 = vmatpush.msra.mxu0 0.0
      %2458 = vmatpush.msra.mxu0 0.0
      %2459 = vmatpush.msra.mxu0 0.0
      %2460 = vmatpush.msra.mxu0 0.0
      %2461 = vmatpush.msra.mxu0 0.0
      %2462 = vmatpush.msra.mxu0 0.0
      %2463 = vmatpush.msra.mxu0 0.0
      %2464 = vmatpush.msra.mxu0 0.0
      %2465 = vmatpush.msra.mxu0 0.0
      %2466 = vmatpush.msra.mxu0 0.0
      %2467 = vmatpush.msra.mxu0 0.0
      %2468 = vmatpush.msra.mxu0 0.0
      %v2469 = vand.u32 %v2295, 4294901760
      %2470 = vmatpush.msra.mxu0 %v2469
      %v2471 = vand.u32 %v2286, 4294901760
      %2472 = vmatpush.msra.mxu0 %v2471
      %v2473 = vand.u32 %v2284, 4294901760
      %2474 = vmatpush.msra.mxu0 %v2473
      %v2475 = vand.u32 %v2282, 4294901760
      %2476 = vmatpush.msra.mxu0 %v2475
      %v2477 = vand.u32 %v2293, 4294901760
      %2478 = vmatmul.f32.gmra.mxu0 %v2477
      %v2479 = vpop.f32.mrf.mxu0
      %v2480 = vadd.f32 %v2455, %v2479
      %2481 = vdwg.mxu0
      %v2482 = vadd.f32 %v2279, %v2480
      %v2483 = vld [vmem:[%s1048] sm:$0xf]
      %2484 = vrot.lane.b32.xlu0 %v1677, 96
      %v2485 = vpop.permute.xlu0 %2484
      %2486 = vrot.lane.b32.xlu0 %v1678, 96
      %v2487 = vpop.permute.xlu0 %2486
      %2488 = vrot.lane.b32.xlu0 %v1679, 96
      %v2489 = vpop.permute.xlu0 %2488
      %2490 = vrot.lane.b32.xlu0 %v1680, 96
      %v2491 = vpop.permute.xlu0 %2490
      %v2496 = vsel %vm258, %v2483, 0
      %v2498 = vsel %vm262, %v2491, 0
      %2500 = vmatpush.msra.mxu0 0.0
      %2501 = vmatpush.msra.mxu0 0.0
      %2502 = vmatpush.msra.mxu0 0.0
      %2503 = vmatpush.msra.mxu0 0.0
      %2504 = vmatpush.msra.mxu0 0.0
      %2505 = vmatpush.msra.mxu0 0.0
      %2506 = vmatpush.msra.mxu0 0.0
      %2507 = vmatpush.msra.mxu0 0.0
      %2508 = vmatpush.msra.mxu0 0.0
      %2509 = vmatpush.msra.mxu0 0.0
      %2510 = vmatpush.msra.mxu0 0.0
      %2511 = vmatpush.msra.mxu0 0.0
      %v2512 = vand.u32 %v2498, 4294901760
      %2513 = vmatpush.msra.mxu0 %v2512
      %v2514 = vand.u32 %v2489, 4294901760
      %2515 = vmatpush.msra.mxu0 %v2514
      %v2516 = vand.u32 %v2487, 4294901760
      %2517 = vmatpush.msra.mxu0 %v2516
      %v2518 = vand.u32 %v2485, 4294901760
      %2519 = vmatpush.msra.mxu0 %v2518
      %v2520 = vand.u32 %v2496, 4294901760
      %v2521 = vsub.f32 %v2496, %v2520
      %v2522 = vand.u32 %v2521, 4294901760
      %v2523 = vsub.f32 %v2521, %v2522
      %v2524 = vand.u32 %v2523, 4294901760
      %2525 = vmatmul.f32.gmra.mxu0 %v2524
      %v2526 = vpop.f32.mrf.mxu0
      %v2527 = vadd.f32 0.0, %v2526
      %2528 = vdwg.mxu0
      %2529 = vmatpush.msra.mxu0 0.0
      %2530 = vmatpush.msra.mxu0 0.0
      %2531 = vmatpush.msra.mxu0 0.0
      %2532 = vmatpush.msra.mxu0 0.0
      %2533 = vmatpush.msra.mxu0 0.0
      %2534 = vmatpush.msra.mxu0 0.0
      %2535 = vmatpush.msra.mxu0 0.0
      %2536 = vmatpush.msra.mxu0 0.0
      %2537 = vmatpush.msra.mxu0 0.0
      %2538 = vmatpush.msra.mxu0 0.0
      %2539 = vmatpush.msra.mxu0 0.0
      %2540 = vmatpush.msra.mxu0 0.0
      %v2541 = vand.u32 %v2498, 4294901760
      %v2542 = vsub.f32 %v2498, %v2541
      %v2543 = vand.u32 %v2542, 4294901760
      %v2544 = vsub.f32 %v2542, %v2543
      %v2545 = vand.u32 %v2544, 4294901760
      %2546 = vmatpush.msra.mxu0 %v2545
      %v2547 = vand.u32 %v2489, 4294901760
      %v2548 = vsub.f32 %v2489, %v2547
      %v2549 = vand.u32 %v2548, 4294901760
      %v2550 = vsub.f32 %v2548, %v2549
      %v2551 = vand.u32 %v2550, 4294901760
      %2552 = vmatpush.msra.mxu0 %v2551
      %v2553 = vand.u32 %v2487, 4294901760
      %v2554 = vsub.f32 %v2487, %v2553
      %v2555 = vand.u32 %v2554, 4294901760
      %v2556 = vsub.f32 %v2554, %v2555
      %v2557 = vand.u32 %v2556, 4294901760
      %2558 = vmatpush.msra.mxu0 %v2557
      %v2559 = vand.u32 %v2485, 4294901760
      %v2560 = vsub.f32 %v2485, %v2559
      %v2561 = vand.u32 %v2560, 4294901760
      %v2562 = vsub.f32 %v2560, %v2561
      %v2563 = vand.u32 %v2562, 4294901760
      %2564 = vmatpush.msra.mxu0 %v2563
      %v2565 = vand.u32 %v2496, 4294901760
      %2566 = vmatmul.f32.gmra.mxu0 %v2565
      %v2567 = vpop.f32.mrf.mxu0
      %v2568 = vadd.f32 %v2527, %v2567
      %2569 = vdwg.mxu0
      %2570 = vmatpush.msra.mxu0 0.0
      %2571 = vmatpush.msra.mxu0 0.0
      %2572 = vmatpush.msra.mxu0 0.0
      %2573 = vmatpush.msra.mxu0 0.0
      %2574 = vmatpush.msra.mxu0 0.0
      %2575 = vmatpush.msra.mxu0 0.0
      %2576 = vmatpush.msra.mxu0 0.0
      %2577 = vmatpush.msra.mxu0 0.0
      %2578 = vmatpush.msra.mxu0 0.0
      %2579 = vmatpush.msra.mxu0 0.0
      %2580 = vmatpush.msra.mxu0 0.0
      %2581 = vmatpush.msra.mxu0 0.0
      %v2582 = vand.u32 %v2498, 4294901760
      %v2583 = vsub.f32 %v2498, %v2582
      %2584 = vmatpush.msra.mxu0 %v2583
      %v2585 = vand.u32 %v2489, 4294901760
      %v2586 = vsub.f32 %v2489, %v2585
      %2587 = vmatpush.msra.mxu0 %v2586
      %v2588 = vand.u32 %v2487, 4294901760
      %v2589 = vsub.f32 %v2487, %v2588
      %2590 = vmatpush.msra.mxu0 %v2589
      %v2591 = vand.u32 %v2485, 4294901760
      %v2592 = vsub.f32 %v2485, %v2591
      %2593 = vmatpush.msra.mxu0 %v2592
      %v2594 = vand.u32 %v2496, 4294901760
      %v2595 = vsub.f32 %v2496, %v2594
      %2596 = vmatmul.f32.gmra.mxu0 %v2595
      %v2597 = vpop.f32.mrf.mxu0
      %v2598 = vadd.f32 %v2568, %v2597
      %2599 = vdwg.mxu0
      %2600 = vmatpush.msra.mxu0 0.0
      %2601 = vmatpush.msra.mxu0 0.0
      %2602 = vmatpush.msra.mxu0 0.0
      %2603 = vmatpush.msra.mxu0 0.0
      %2604 = vmatpush.msra.mxu0 0.0
      %2605 = vmatpush.msra.mxu0 0.0
      %2606 = vmatpush.msra.mxu0 0.0
      %2607 = vmatpush.msra.mxu0 0.0
      %2608 = vmatpush.msra.mxu0 0.0
      %2609 = vmatpush.msra.mxu0 0.0
      %2610 = vmatpush.msra.mxu0 0.0
      %2611 = vmatpush.msra.mxu0 0.0
      %v2612 = vand.u32 %v2498, 4294901760
      %2613 = vmatpush.msra.mxu0 %v2612
      %v2614 = vand.u32 %v2489, 4294901760
      %2615 = vmatpush.msra.mxu0 %v2614
      %v2616 = vand.u32 %v2487, 4294901760
      %2617 = vmatpush.msra.mxu0 %v2616
      %v2618 = vand.u32 %v2485, 4294901760
      %2619 = vmatpush.msra.mxu0 %v2618
      %v2620 = vand.u32 %v2496, 4294901760
      %v2621 = vsub.f32 %v2496, %v2620
      %v2622 = vand.u32 %v2621, 4294901760
      %2623 = vmatmul.f32.gmra.mxu0 %v2622
      %v2624 = vpop.f32.mrf.mxu0
      %v2625 = vadd.f32 %v2598, %v2624
      %2626 = vdwg.mxu0
      %2627 = vmatpush.msra.mxu0 0.0
      %2628 = vmatpush.msra.mxu0 0.0
      %2629 = vmatpush.msra.mxu0 0.0
      %2630 = vmatpush.msra.mxu0 0.0
      %2631 = vmatpush.msra.mxu0 0.0
      %2632 = vmatpush.msra.mxu0 0.0
      %2633 = vmatpush.msra.mxu0 0.0
      %2634 = vmatpush.msra.mxu0 0.0
      %2635 = vmatpush.msra.mxu0 0.0
      %2636 = vmatpush.msra.mxu0 0.0
      %2637 = vmatpush.msra.mxu0 0.0
      %2638 = vmatpush.msra.mxu0 0.0
      %v2639 = vand.u32 %v2498, 4294901760
      %v2640 = vsub.f32 %v2498, %v2639
      %v2641 = vand.u32 %v2640, 4294901760
      %2642 = vmatpush.msra.mxu0 %v2641
      %v2643 = vand.u32 %v2489, 4294901760
      %v2644 = vsub.f32 %v2489, %v2643
      %v2645 = vand.u32 %v2644, 4294901760
      %2646 = vmatpush.msra.mxu0 %v2645
      %v2647 = vand.u32 %v2487, 4294901760
      %v2648 = vsub.f32 %v2487, %v2647
      %v2649 = vand.u32 %v2648, 4294901760
      %2650 = vmatpush.msra.mxu0 %v2649
      %v2651 = vand.u32 %v2485, 4294901760
      %v2652 = vsub.f32 %v2485, %v2651
      %v2653 = vand.u32 %v2652, 4294901760
      %2654 = vmatpush.msra.mxu0 %v2653
      %v2655 = vand.u32 %v2496, 4294901760
      %2656 = vmatmul.f32.gmra.mxu0 %v2655
      %v2657 = vpop.f32.mrf.mxu0
      %v2658 = vadd.f32 %v2625, %v2657
      %2659 = vdwg.mxu0
      %2660 = vmatpush.msra.mxu0 0.0
      %2661 = vmatpush.msra.mxu0 0.0
      %2662 = vmatpush.msra.mxu0 0.0
      %2663 = vmatpush.msra.mxu0 0.0
      %2664 = vmatpush.msra.mxu0 0.0
      %2665 = vmatpush.msra.mxu0 0.0
      %2666 = vmatpush.msra.mxu0 0.0
      %2667 = vmatpush.msra.mxu0 0.0
      %2668 = vmatpush.msra.mxu0 0.0
      %2669 = vmatpush.msra.mxu0 0.0
      %2670 = vmatpush.msra.mxu0 0.0
      %2671 = vmatpush.msra.mxu0 0.0
      %v2672 = vand.u32 %v2498, 4294901760
      %2673 = vmatpush.msra.mxu0 %v2672
      %v2674 = vand.u32 %v2489, 4294901760
      %2675 = vmatpush.msra.mxu0 %v2674
      %v2676 = vand.u32 %v2487, 4294901760
      %2677 = vmatpush.msra.mxu0 %v2676
      %v2678 = vand.u32 %v2485, 4294901760
      %2679 = vmatpush.msra.mxu0 %v2678
      %v2680 = vand.u32 %v2496, 4294901760
      %2681 = vmatmul.f32.gmra.mxu0 %v2680
      %v2682 = vpop.f32.mrf.mxu0
      %v2683 = vadd.f32 %v2658, %v2682
      %2684 = vdwg.mxu0
      %v2685 = vadd.f32 %v2482, %v2683
      %v2686 = vld [vmem:[%s1252] sm:$0xf]
      %2687 = vrot.lane.b32.xlu0 %v1677, 88
      %v2688 = vpop.permute.xlu0 %2687
      %2689 = vrot.lane.b32.xlu0 %v1678, 88
      %v2690 = vpop.permute.xlu0 %2689
      %2691 = vrot.lane.b32.xlu0 %v1679, 88
      %v2692 = vpop.permute.xlu0 %2691
      %2693 = vrot.lane.b32.xlu0 %v1680, 88
      %v2694 = vpop.permute.xlu0 %2693
      %v2699 = vsel %vm258, %v2686, 0
      %v2701 = vsel %vm262, %v2694, 0
      %2703 = vmatpush.msra.mxu0 0.0
      %2704 = vmatpush.msra.mxu0 0.0
      %2705 = vmatpush.msra.mxu0 0.0
      %2706 = vmatpush.msra.mxu0 0.0
      %2707 = vmatpush.msra.mxu0 0.0
      %2708 = vmatpush.msra.mxu0 0.0
      %2709 = vmatpush.msra.mxu0 0.0
      %2710 = vmatpush.msra.mxu0 0.0
      %2711 = vmatpush.msra.mxu0 0.0
      %2712 = vmatpush.msra.mxu0 0.0
      %2713 = vmatpush.msra.mxu0 0.0
      %2714 = vmatpush.msra.mxu0 0.0
      %v2715 = vand.u32 %v2701, 4294901760
      %2716 = vmatpush.msra.mxu0 %v2715
      %v2717 = vand.u32 %v2692, 4294901760
      %2718 = vmatpush.msra.mxu0 %v2717
      %v2719 = vand.u32 %v2690, 4294901760
      %2720 = vmatpush.msra.mxu0 %v2719
      %v2721 = vand.u32 %v2688, 4294901760
      %2722 = vmatpush.msra.mxu0 %v2721
      %v2723 = vand.u32 %v2699, 4294901760
      %v2724 = vsub.f32 %v2699, %v2723
      %v2725 = vand.u32 %v2724, 4294901760
      %v2726 = vsub.f32 %v2724, %v2725
      %v2727 = vand.u32 %v2726, 4294901760
      %2728 = vmatmul.f32.gmra.mxu0 %v2727
      %v2729 = vpop.f32.mrf.mxu0
      %v2730 = vadd.f32 0.0, %v2729
      %2731 = vdwg.mxu0
      %2732 = vmatpush.msra.mxu0 0.0
      %2733 = vmatpush.msra.mxu0 0.0
      %2734 = vmatpush.msra.mxu0 0.0
      %2735 = vmatpush.msra.mxu0 0.0
      %2736 = vmatpush.msra.mxu0 0.0
      %2737 = vmatpush.msra.mxu0 0.0
      %2738 = vmatpush.msra.mxu0 0.0
      %2739 = vmatpush.msra.mxu0 0.0
      %2740 = vmatpush.msra.mxu0 0.0
      %2741 = vmatpush.msra.mxu0 0.0
      %2742 = vmatpush.msra.mxu0 0.0
      %2743 = vmatpush.msra.mxu0 0.0
      %v2744 = vand.u32 %v2701, 4294901760
      %v2745 = vsub.f32 %v2701, %v2744
      %v2746 = vand.u32 %v2745, 4294901760
      %v2747 = vsub.f32 %v2745, %v2746
      %v2748 = vand.u32 %v2747, 4294901760
      %2749 = vmatpush.msra.mxu0 %v2748
      %v2750 = vand.u32 %v2692, 4294901760
      %v2751 = vsub.f32 %v2692, %v2750
      %v2752 = vand.u32 %v2751, 4294901760
      %v2753 = vsub.f32 %v2751, %v2752
      %v2754 = vand.u32 %v2753, 4294901760
      %2755 = vmatpush.msra.mxu0 %v2754
      %v2756 = vand.u32 %v2690, 4294901760
      %v2757 = vsub.f32 %v2690, %v2756
      %v2758 = vand.u32 %v2757, 4294901760
      %v2759 = vsub.f32 %v2757, %v2758
      %v2760 = vand.u32 %v2759, 4294901760
      %2761 = vmatpush.msra.mxu0 %v2760
      %v2762 = vand.u32 %v2688, 4294901760
      %v2763 = vsub.f32 %v2688, %v2762
      %v2764 = vand.u32 %v2763, 4294901760
      %v2765 = vsub.f32 %v2763, %v2764
      %v2766 = vand.u32 %v2765, 4294901760
      %2767 = vmatpush.msra.mxu0 %v2766
      %v2768 = vand.u32 %v2699, 4294901760
      %2769 = vmatmul.f32.gmra.mxu0 %v2768
      %v2770 = vpop.f32.mrf.mxu0
      %v2771 = vadd.f32 %v2730, %v2770
      %2772 = vdwg.mxu0
      %2773 = vmatpush.msra.mxu0 0.0
      %2774 = vmatpush.msra.mxu0 0.0
      %2775 = vmatpush.msra.mxu0 0.0
      %2776 = vmatpush.msra.mxu0 0.0
      %2777 = vmatpush.msra.mxu0 0.0
      %2778 = vmatpush.msra.mxu0 0.0
      %2779 = vmatpush.msra.mxu0 0.0
      %2780 = vmatpush.msra.mxu0 0.0
      %2781 = vmatpush.msra.mxu0 0.0
      %2782 = vmatpush.msra.mxu0 0.0
      %2783 = vmatpush.msra.mxu0 0.0
      %2784 = vmatpush.msra.mxu0 0.0
      %v2785 = vand.u32 %v2701, 4294901760
      %v2786 = vsub.f32 %v2701, %v2785
      %2787 = vmatpush.msra.mxu0 %v2786
      %v2788 = vand.u32 %v2692, 4294901760
      %v2789 = vsub.f32 %v2692, %v2788
      %2790 = vmatpush.msra.mxu0 %v2789
      %v2791 = vand.u32 %v2690, 4294901760
      %v2792 = vsub.f32 %v2690, %v2791
      %2793 = vmatpush.msra.mxu0 %v2792
      %v2794 = vand.u32 %v2688, 4294901760
      %v2795 = vsub.f32 %v2688, %v2794
      %2796 = vmatpush.msra.mxu0 %v2795
      %v2797 = vand.u32 %v2699, 4294901760
      %v2798 = vsub.f32 %v2699, %v2797
      %2799 = vmatmul.f32.gmra.mxu0 %v2798
      %v2800 = vpop.f32.mrf.mxu0
      %v2801 = vadd.f32 %v2771, %v2800
      %2802 = vdwg.mxu0
      %2803 = vmatpush.msra.mxu0 0.0
      %2804 = vmatpush.msra.mxu0 0.0
      %2805 = vmatpush.msra.mxu0 0.0
      %2806 = vmatpush.msra.mxu0 0.0
      %2807 = vmatpush.msra.mxu0 0.0
      %2808 = vmatpush.msra.mxu0 0.0
      %2809 = vmatpush.msra.mxu0 0.0
      %2810 = vmatpush.msra.mxu0 0.0
      %2811 = vmatpush.msra.mxu0 0.0
      %2812 = vmatpush.msra.mxu0 0.0
      %2813 = vmatpush.msra.mxu0 0.0
      %2814 = vmatpush.msra.mxu0 0.0
      %v2815 = vand.u32 %v2701, 4294901760
      %2816 = vmatpush.msra.mxu0 %v2815
      %v2817 = vand.u32 %v2692, 4294901760
      %2818 = vmatpush.msra.mxu0 %v2817
      %v2819 = vand.u32 %v2690, 4294901760
      %2820 = vmatpush.msra.mxu0 %v2819
      %v2821 = vand.u32 %v2688, 4294901760
      %2822 = vmatpush.msra.mxu0 %v2821
      %v2823 = vand.u32 %v2699, 4294901760
      %v2824 = vsub.f32 %v2699, %v2823
      %v2825 = vand.u32 %v2824, 4294901760
      %2826 = vmatmul.f32.gmra.mxu0 %v2825
      %v2827 = vpop.f32.mrf.mxu0
      %v2828 = vadd.f32 %v2801, %v2827
      %2829 = vdwg.mxu0
      %2830 = vmatpush.msra.mxu0 0.0
      %2831 = vmatpush.msra.mxu0 0.0
      %2832 = vmatpush.msra.mxu0 0.0
      %2833 = vmatpush.msra.mxu0 0.0
      %2834 = vmatpush.msra.mxu0 0.0
      %2835 = vmatpush.msra.mxu0 0.0
      %2836 = vmatpush.msra.mxu0 0.0
      %2837 = vmatpush.msra.mxu0 0.0
      %2838 = vmatpush.msra.mxu0 0.0
      %2839 = vmatpush.msra.mxu0 0.0
      %2840 = vmatpush.msra.mxu0 0.0
      %2841 = vmatpush.msra.mxu0 0.0
      %v2842 = vand.u32 %v2701, 4294901760
      %v2843 = vsub.f32 %v2701, %v2842
      %v2844 = vand.u32 %v2843, 4294901760
      %2845 = vmatpush.msra.mxu0 %v2844
      %v2846 = vand.u32 %v2692, 4294901760
      %v2847 = vsub.f32 %v2692, %v2846
      %v2848 = vand.u32 %v2847, 4294901760
      %2849 = vmatpush.msra.mxu0 %v2848
      %v2850 = vand.u32 %v2690, 4294901760
      %v2851 = vsub.f32 %v2690, %v2850
      %v2852 = vand.u32 %v2851, 4294901760
      %2853 = vmatpush.msra.mxu0 %v2852
      %v2854 = vand.u32 %v2688, 4294901760
      %v2855 = vsub.f32 %v2688, %v2854
      %v2856 = vand.u32 %v2855, 4294901760
      %2857 = vmatpush.msra.mxu0 %v2856
      %v2858 = vand.u32 %v2699, 4294901760
      %2859 = vmatmul.f32.gmra.mxu0 %v2858
      %v2860 = vpop.f32.mrf.mxu0
      %v2861 = vadd.f32 %v2828, %v2860
      %2862 = vdwg.mxu0
      %2863 = vmatpush.msra.mxu0 0.0
      %2864 = vmatpush.msra.mxu0 0.0
      %2865 = vmatpush.msra.mxu0 0.0
      %2866 = vmatpush.msra.mxu0 0.0
      %2867 = vmatpush.msra.mxu0 0.0
      %2868 = vmatpush.msra.mxu0 0.0
      %2869 = vmatpush.msra.mxu0 0.0
      %2870 = vmatpush.msra.mxu0 0.0
      %2871 = vmatpush.msra.mxu0 0.0
      %2872 = vmatpush.msra.mxu0 0.0
      %2873 = vmatpush.msra.mxu0 0.0
      %2874 = vmatpush.msra.mxu0 0.0
      %v2875 = vand.u32 %v2701, 4294901760
      %2876 = vmatpush.msra.mxu0 %v2875
      %v2877 = vand.u32 %v2692, 4294901760
      %2878 = vmatpush.msra.mxu0 %v2877
      %v2879 = vand.u32 %v2690, 4294901760
      %2880 = vmatpush.msra.mxu0 %v2879
      %v2881 = vand.u32 %v2688, 4294901760
      %2882 = vmatpush.msra.mxu0 %v2881
      %v2883 = vand.u32 %v2699, 4294901760
      %2884 = vmatmul.f32.gmra.mxu0 %v2883
      %v2885 = vpop.f32.mrf.mxu0
      %v2886 = vadd.f32 %v2861, %v2885
      %2887 = vdwg.mxu0
      %v2888 = vadd.f32 %v2685, %v2886
      %v2889 = vld [vmem:[%s1456] sm:$0xf]
      %2890 = vrot.lane.b32.xlu0 %v1677, 80
      %v2891 = vpop.permute.xlu0 %2890
      %2892 = vrot.lane.b32.xlu0 %v1678, 80
      %v2893 = vpop.permute.xlu0 %2892
      %2894 = vrot.lane.b32.xlu0 %v1679, 80
      %v2895 = vpop.permute.xlu0 %2894
      %2896 = vrot.lane.b32.xlu0 %v1680, 80
      %v2897 = vpop.permute.xlu0 %2896
      %v2902 = vsel %vm258, %v2889, 0
      %v2904 = vsel %vm262, %v2897, 0
      %2906 = vmatpush.msra.mxu0 0.0
      %2907 = vmatpush.msra.mxu0 0.0
      %2908 = vmatpush.msra.mxu0 0.0
      %2909 = vmatpush.msra.mxu0 0.0
      %2910 = vmatpush.msra.mxu0 0.0
      %2911 = vmatpush.msra.mxu0 0.0
      %2912 = vmatpush.msra.mxu0 0.0
      %2913 = vmatpush.msra.mxu0 0.0
      %2914 = vmatpush.msra.mxu0 0.0
      %2915 = vmatpush.msra.mxu0 0.0
      %2916 = vmatpush.msra.mxu0 0.0
      %2917 = vmatpush.msra.mxu0 0.0
      %v2918 = vand.u32 %v2904, 4294901760
      %2919 = vmatpush.msra.mxu0 %v2918
      %v2920 = vand.u32 %v2895, 4294901760
      %2921 = vmatpush.msra.mxu0 %v2920
      %v2922 = vand.u32 %v2893, 4294901760
      %2923 = vmatpush.msra.mxu0 %v2922
      %v2924 = vand.u32 %v2891, 4294901760
      %2925 = vmatpush.msra.mxu0 %v2924
      %v2926 = vand.u32 %v2902, 4294901760
      %v2927 = vsub.f32 %v2902, %v2926
      %v2928 = vand.u32 %v2927, 4294901760
      %v2929 = vsub.f32 %v2927, %v2928
      %v2930 = vand.u32 %v2929, 4294901760
      %2931 = vmatmul.f32.gmra.mxu0 %v2930
      %v2932 = vpop.f32.mrf.mxu0
      %v2933 = vadd.f32 0.0, %v2932
      %2934 = vdwg.mxu0
      %2935 = vmatpush.msra.mxu0 0.0
      %2936 = vmatpush.msra.mxu0 0.0
      %2937 = vmatpush.msra.mxu0 0.0
      %2938 = vmatpush.msra.mxu0 0.0
      %2939 = vmatpush.msra.mxu0 0.0
      %2940 = vmatpush.msra.mxu0 0.0
      %2941 = vmatpush.msra.mxu0 0.0
      %2942 = vmatpush.msra.mxu0 0.0
      %2943 = vmatpush.msra.mxu0 0.0
      %2944 = vmatpush.msra.mxu0 0.0
      %2945 = vmatpush.msra.mxu0 0.0
      %2946 = vmatpush.msra.mxu0 0.0
      %v2947 = vand.u32 %v2904, 4294901760
      %v2948 = vsub.f32 %v2904, %v2947
      %v2949 = vand.u32 %v2948, 4294901760
      %v2950 = vsub.f32 %v2948, %v2949
      %v2951 = vand.u32 %v2950, 4294901760
      %2952 = vmatpush.msra.mxu0 %v2951
      %v2953 = vand.u32 %v2895, 4294901760
      %v2954 = vsub.f32 %v2895, %v2953
      %v2955 = vand.u32 %v2954, 4294901760
      %v2956 = vsub.f32 %v2954, %v2955
      %v2957 = vand.u32 %v2956, 4294901760
      %2958 = vmatpush.msra.mxu0 %v2957
      %v2959 = vand.u32 %v2893, 4294901760
      %v2960 = vsub.f32 %v2893, %v2959
      %v2961 = vand.u32 %v2960, 4294901760
      %v2962 = vsub.f32 %v2960, %v2961
      %v2963 = vand.u32 %v2962, 4294901760
      %2964 = vmatpush.msra.mxu0 %v2963
      %v2965 = vand.u32 %v2891, 4294901760
      %v2966 = vsub.f32 %v2891, %v2965
      %v2967 = vand.u32 %v2966, 4294901760
      %v2968 = vsub.f32 %v2966, %v2967
      %v2969 = vand.u32 %v2968, 4294901760
      %2970 = vmatpush.msra.mxu0 %v2969
      %v2971 = vand.u32 %v2902, 4294901760
      %2972 = vmatmul.f32.gmra.mxu0 %v2971
      %v2973 = vpop.f32.mrf.mxu0
      %v2974 = vadd.f32 %v2933, %v2973
      %2975 = vdwg.mxu0
      %2976 = vmatpush.msra.mxu0 0.0
      %2977 = vmatpush.msra.mxu0 0.0
      %2978 = vmatpush.msra.mxu0 0.0
      %2979 = vmatpush.msra.mxu0 0.0
      %2980 = vmatpush.msra.mxu0 0.0
      %2981 = vmatpush.msra.mxu0 0.0
      %2982 = vmatpush.msra.mxu0 0.0
      %2983 = vmatpush.msra.mxu0 0.0
      %2984 = vmatpush.msra.mxu0 0.0
      %2985 = vmatpush.msra.mxu0 0.0
      %2986 = vmatpush.msra.mxu0 0.0
      %2987 = vmatpush.msra.mxu0 0.0
      %v2988 = vand.u32 %v2904, 4294901760
      %v2989 = vsub.f32 %v2904, %v2988
      %2990 = vmatpush.msra.mxu0 %v2989
      %v2991 = vand.u32 %v2895, 4294901760
      %v2992 = vsub.f32 %v2895, %v2991
      %2993 = vmatpush.msra.mxu0 %v2992
      %v2994 = vand.u32 %v2893, 4294901760
      %v2995 = vsub.f32 %v2893, %v2994
      %2996 = vmatpush.msra.mxu0 %v2995
      %v2997 = vand.u32 %v2891, 4294901760
      %v2998 = vsub.f32 %v2891, %v2997
      %2999 = vmatpush.msra.mxu0 %v2998
      %v3000 = vand.u32 %v2902, 4294901760
      %v3001 = vsub.f32 %v2902, %v3000
      %3002 = vmatmul.f32.gmra.mxu0 %v3001
      %v3003 = vpop.f32.mrf.mxu0
      %v3004 = vadd.f32 %v2974, %v3003
      %3005 = vdwg.mxu0
      %3006 = vmatpush.msra.mxu0 0.0
      %3007 = vmatpush.msra.mxu0 0.0
      %3008 = vmatpush.msra.mxu0 0.0
      %3009 = vmatpush.msra.mxu0 0.0
      %3010 = vmatpush.msra.mxu0 0.0
      %3011 = vmatpush.msra.mxu0 0.0
      %3012 = vmatpush.msra.mxu0 0.0
      %3013 = vmatpush.msra.mxu0 0.0
      %3014 = vmatpush.msra.mxu0 0.0
      %3015 = vmatpush.msra.mxu0 0.0
      %3016 = vmatpush.msra.mxu0 0.0
      %3017 = vmatpush.msra.mxu0 0.0
      %v3018 = vand.u32 %v2904, 4294901760
      %3019 = vmatpush.msra.mxu0 %v3018
      %v3020 = vand.u32 %v2895, 4294901760
      %3021 = vmatpush.msra.mxu0 %v3020
      %v3022 = vand.u32 %v2893, 4294901760
      %3023 = vmatpush.msra.mxu0 %v3022
      %v3024 = vand.u32 %v2891, 4294901760
      %3025 = vmatpush.msra.mxu0 %v3024
      %v3026 = vand.u32 %v2902, 4294901760
      %v3027 = vsub.f32 %v2902, %v3026
      %v3028 = vand.u32 %v3027, 4294901760
      %3029 = vmatmul.f32.gmra.mxu0 %v3028
      %v3030 = vpop.f32.mrf.mxu0
      %v3031 = vadd.f32 %v3004, %v3030
      %3032 = vdwg.mxu0
      %3033 = vmatpush.msra.mxu0 0.0
      %3034 = vmatpush.msra.mxu0 0.0
      %3035 = vmatpush.msra.mxu0 0.0
      %3036 = vmatpush.msra.mxu0 0.0
      %3037 = vmatpush.msra.mxu0 0.0
      %3038 = vmatpush.msra.mxu0 0.0
      %3039 = vmatpush.msra.mxu0 0.0
      %3040 = vmatpush.msra.mxu0 0.0
      %3041 = vmatpush.msra.mxu0 0.0
      %3042 = vmatpush.msra.mxu0 0.0
      %3043 = vmatpush.msra.mxu0 0.0
      %3044 = vmatpush.msra.mxu0 0.0
      %v3045 = vand.u32 %v2904, 4294901760
      %v3046 = vsub.f32 %v2904, %v3045
      %v3047 = vand.u32 %v3046, 4294901760
      %3048 = vmatpush.msra.mxu0 %v3047
      %v3049 = vand.u32 %v2895, 4294901760
      %v3050 = vsub.f32 %v2895, %v3049
      %v3051 = vand.u32 %v3050, 4294901760
      %3052 = vmatpush.msra.mxu0 %v3051
      %v3053 = vand.u32 %v2893, 4294901760
      %v3054 = vsub.f32 %v2893, %v3053
      %v3055 = vand.u32 %v3054, 4294901760
      %3056 = vmatpush.msra.mxu0 %v3055
      %v3057 = vand.u32 %v2891, 4294901760
      %v3058 = vsub.f32 %v2891, %v3057
      %v3059 = vand.u32 %v3058, 4294901760
      %3060 = vmatpush.msra.mxu0 %v3059
      %v3061 = vand.u32 %v2902, 4294901760
      %3062 = vmatmul.f32.gmra.mxu0 %v3061
      %v3063 = vpop.f32.mrf.mxu0
      %v3064 = vadd.f32 %v3031, %v3063
      %3065 = vdwg.mxu0
      %3066 = vmatpush.msra.mxu0 0.0
      %3067 = vmatpush.msra.mxu0 0.0
      %3068 = vmatpush.msra.mxu0 0.0
      %3069 = vmatpush.msra.mxu0 0.0
      %3070 = vmatpush.msra.mxu0 0.0
      %3071 = vmatpush.msra.mxu0 0.0
      %3072 = vmatpush.msra.mxu0 0.0
      %3073 = vmatpush.msra.mxu0 0.0
      %3074 = vmatpush.msra.mxu0 0.0
      %3075 = vmatpush.msra.mxu0 0.0
      %3076 = vmatpush.msra.mxu0 0.0
      %3077 = vmatpush.msra.mxu0 0.0
      %v3078 = vand.u32 %v2904, 4294901760
      %3079 = vmatpush.msra.mxu0 %v3078
      %v3080 = vand.u32 %v2895, 4294901760
      %3081 = vmatpush.msra.mxu0 %v3080
      %v3082 = vand.u32 %v2893, 4294901760
      %3083 = vmatpush.msra.mxu0 %v3082
      %v3084 = vand.u32 %v2891, 4294901760
      %3085 = vmatpush.msra.mxu0 %v3084
      %v3086 = vand.u32 %v2902, 4294901760
      %3087 = vmatmul.f32.gmra.mxu0 %v3086
      %v3088 = vpop.f32.mrf.mxu0
      %v3089 = vadd.f32 %v3064, %v3088
      %3090 = vdwg.mxu0
      %v3091 = vadd.f32 %v2888, %v3089
      %v3092 = vld [vmem:[%s2] sm:$0xf]
      %3094 = vset.pattern.permute.xlu0 0
      %3095 = vperm.xlu0 %3094, %v3092
      %v3096 = vpop.permute.xlu0 %3095
      %v3098 = vadd.f32 %v3091, %v3096
      %vm3099 = vcmp.gt.f32.partialorder %v3098, 0.0
      %v3100 = vmin.f32 %v3098, 0.0
      %v3101 = vmul.f32 %v3100, 1.442695
      %v3102 = vpow.pop %v3101
      %v3103 = vsub.f32 %v3102, 1.0
      %v3104 = vsel %vm3099, %v3098, %v3103
      %s3105 = scalar_lea.vmem %s231, 4
      %3106 = vst.msk [vmem:[%s3105] sm:$0xf] %vm1673, %v3104
      %v3107 = vld [vmem:[%s1] sm:$0xf]
      %s3108 = scalar_lea.vmem %s226, 64
      %v3109 = vld [vmem:[%s3108] sm:$0xff]
      %v3110 = vld [vmem:[%s3108 + $0x8] sm:$0xff]
      %v3111 = vld [vmem:[%s3108 + $0x10] sm:$0xff]
      %v3112 = vld [vmem:[%s3108 + $0x18] sm:$0xf]
      %v3113 = vld [vmem:[%s241] sm:$0xf]
      %3118 = vrot.lane.b32.xlu0 %v3109, 120
      %v3119 = vpop.permute.xlu0 %3118
      %3120 = vrot.lane.b32.xlu0 %v3110, 120
      %v3121 = vpop.permute.xlu0 %3120
      %3122 = vrot.lane.b32.xlu0 %v3111, 120
      %v3123 = vpop.permute.xlu0 %3122
      %3124 = vrot.lane.b32.xlu0 %v3112, 120
      %v3125 = vpop.permute.xlu0 %3124
      %v3130 = vsel %vm258, %v3113, 0
      %v3132 = vsel %vm262, %v3125, 0
      %3134 = vmatpush.msra.mxu0 0.0
      %3135 = vmatpush.msra.mxu0 0.0
      %3136 = vmatpush.msra.mxu0 0.0
      %3137 = vmatpush.msra.mxu0 0.0
      %3138 = vmatpush.msra.mxu0 0.0
      %3139 = vmatpush.msra.mxu0 0.0
      %3140 = vmatpush.msra.mxu0 0.0
      %3141 = vmatpush.msra.mxu0 0.0
      %3142 = vmatpush.msra.mxu0 0.0
      %3143 = vmatpush.msra.mxu0 0.0
      %3144 = vmatpush.msra.mxu0 0.0
      %3145 = vmatpush.msra.mxu0 0.0
      %v3146 = vand.u32 %v3132, 4294901760
      %3147 = vmatpush.msra.mxu0 %v3146
      %v3148 = vand.u32 %v3123, 4294901760
      %3149 = vmatpush.msra.mxu0 %v3148
      %v3150 = vand.u32 %v3121, 4294901760
      %3151 = vmatpush.msra.mxu0 %v3150
      %v3152 = vand.u32 %v3119, 4294901760
      %3153 = vmatpush.msra.mxu0 %v3152
      %v3154 = vand.u32 %v3130, 4294901760
      %v3155 = vsub.f32 %v3130, %v3154
      %v3156 = vand.u32 %v3155, 4294901760
      %v3157 = vsub.f32 %v3155, %v3156
      %v3158 = vand.u32 %v3157, 4294901760
      %3159 = vmatmul.f32.gmra.mxu0 %v3158
      %v3160 = vpop.f32.mrf.mxu0
      %v3161 = vadd.f32 0.0, %v3160
      %3162 = vdwg.mxu0
      %3163 = vmatpush.msra.mxu0 0.0
      %3164 = vmatpush.msra.mxu0 0.0
      %3165 = vmatpush.msra.mxu0 0.0
      %3166 = vmatpush.msra.mxu0 0.0
      %3167 = vmatpush.msra.mxu0 0.0
      %3168 = vmatpush.msra.mxu0 0.0
      %3169 = vmatpush.msra.mxu0 0.0
      %3170 = vmatpush.msra.mxu0 0.0
      %3171 = vmatpush.msra.mxu0 0.0
      %3172 = vmatpush.msra.mxu0 0.0
      %3173 = vmatpush.msra.mxu0 0.0
      %3174 = vmatpush.msra.mxu0 0.0
      %v3175 = vand.u32 %v3132, 4294901760
      %v3176 = vsub.f32 %v3132, %v3175
      %v3177 = vand.u32 %v3176, 4294901760
      %v3178 = vsub.f32 %v3176, %v3177
      %v3179 = vand.u32 %v3178, 4294901760
      %3180 = vmatpush.msra.mxu0 %v3179
      %v3181 = vand.u32 %v3123, 4294901760
      %v3182 = vsub.f32 %v3123, %v3181
      %v3183 = vand.u32 %v3182, 4294901760
      %v3184 = vsub.f32 %v3182, %v3183
      %v3185 = vand.u32 %v3184, 4294901760
      %3186 = vmatpush.msra.mxu0 %v3185
      %v3187 = vand.u32 %v3121, 4294901760
      %v3188 = vsub.f32 %v3121, %v3187
      %v3189 = vand.u32 %v3188, 4294901760
      %v3190 = vsub.f32 %v3188, %v3189
      %v3191 = vand.u32 %v3190, 4294901760
      %3192 = vmatpush.msra.mxu0 %v3191
      %v3193 = vand.u32 %v3119, 4294901760
      %v3194 = vsub.f32 %v3119, %v3193
      %v3195 = vand.u32 %v3194, 4294901760
      %v3196 = vsub.f32 %v3194, %v3195
      %v3197 = vand.u32 %v3196, 4294901760
      %3198 = vmatpush.msra.mxu0 %v3197
      %v3199 = vand.u32 %v3130, 4294901760
      %3200 = vmatmul.f32.gmra.mxu0 %v3199
      %v3201 = vpop.f32.mrf.mxu0
      %v3202 = vadd.f32 %v3161, %v3201
      %3203 = vdwg.mxu0
      %3204 = vmatpush.msra.mxu0 0.0
      %3205 = vmatpush.msra.mxu0 0.0
      %3206 = vmatpush.msra.mxu0 0.0
      %3207 = vmatpush.msra.mxu0 0.0
      %3208 = vmatpush.msra.mxu0 0.0
      %3209 = vmatpush.msra.mxu0 0.0
      %3210 = vmatpush.msra.mxu0 0.0
      %3211 = vmatpush.msra.mxu0 0.0
      %3212 = vmatpush.msra.mxu0 0.0
      %3213 = vmatpush.msra.mxu0 0.0
      %3214 = vmatpush.msra.mxu0 0.0
      %3215 = vmatpush.msra.mxu0 0.0
      %v3216 = vand.u32 %v3132, 4294901760
      %v3217 = vsub.f32 %v3132, %v3216
      %3218 = vmatpush.msra.mxu0 %v3217
      %v3219 = vand.u32 %v3123, 4294901760
      %v3220 = vsub.f32 %v3123, %v3219
      %3221 = vmatpush.msra.mxu0 %v3220
      %v3222 = vand.u32 %v3121, 4294901760
      %v3223 = vsub.f32 %v3121, %v3222
      %3224 = vmatpush.msra.mxu0 %v3223
      %v3225 = vand.u32 %v3119, 4294901760
      %v3226 = vsub.f32 %v3119, %v3225
      %3227 = vmatpush.msra.mxu0 %v3226
      %v3228 = vand.u32 %v3130, 4294901760
      %v3229 = vsub.f32 %v3130, %v3228
      %3230 = vmatmul.f32.gmra.mxu0 %v3229
      %v3231 = vpop.f32.mrf.mxu0
      %v3232 = vadd.f32 %v3202, %v3231
      %3233 = vdwg.mxu0
      %3234 = vmatpush.msra.mxu0 0.0
      %3235 = vmatpush.msra.mxu0 0.0
      %3236 = vmatpush.msra.mxu0 0.0
      %3237 = vmatpush.msra.mxu0 0.0
      %3238 = vmatpush.msra.mxu0 0.0
      %3239 = vmatpush.msra.mxu0 0.0
      %3240 = vmatpush.msra.mxu0 0.0
      %3241 = vmatpush.msra.mxu0 0.0
      %3242 = vmatpush.msra.mxu0 0.0
      %3243 = vmatpush.msra.mxu0 0.0
      %3244 = vmatpush.msra.mxu0 0.0
      %3245 = vmatpush.msra.mxu0 0.0
      %v3246 = vand.u32 %v3132, 4294901760
      %3247 = vmatpush.msra.mxu0 %v3246
      %v3248 = vand.u32 %v3123, 4294901760
      %3249 = vmatpush.msra.mxu0 %v3248
      %v3250 = vand.u32 %v3121, 4294901760
      %3251 = vmatpush.msra.mxu0 %v3250
      %v3252 = vand.u32 %v3119, 4294901760
      %3253 = vmatpush.msra.mxu0 %v3252
      %v3254 = vand.u32 %v3130, 4294901760
      %v3255 = vsub.f32 %v3130, %v3254
      %v3256 = vand.u32 %v3255, 4294901760
      %3257 = vmatmul.f32.gmra.mxu0 %v3256
      %v3258 = vpop.f32.mrf.mxu0
      %v3259 = vadd.f32 %v3232, %v3258
      %3260 = vdwg.mxu0
      %3261 = vmatpush.msra.mxu0 0.0
      %3262 = vmatpush.msra.mxu0 0.0
      %3263 = vmatpush.msra.mxu0 0.0
      %3264 = vmatpush.msra.mxu0 0.0
      %3265 = vmatpush.msra.mxu0 0.0
      %3266 = vmatpush.msra.mxu0 0.0
      %3267 = vmatpush.msra.mxu0 0.0
      %3268 = vmatpush.msra.mxu0 0.0
      %3269 = vmatpush.msra.mxu0 0.0
      %3270 = vmatpush.msra.mxu0 0.0
      %3271 = vmatpush.msra.mxu0 0.0
      %3272 = vmatpush.msra.mxu0 0.0
      %v3273 = vand.u32 %v3132, 4294901760
      %v3274 = vsub.f32 %v3132, %v3273
      %v3275 = vand.u32 %v3274, 4294901760
      %3276 = vmatpush.msra.mxu0 %v3275
      %v3277 = vand.u32 %v3123, 4294901760
      %v3278 = vsub.f32 %v3123, %v3277
      %v3279 = vand.u32 %v3278, 4294901760
      %3280 = vmatpush.msra.mxu0 %v3279
      %v3281 = vand.u32 %v3121, 4294901760
      %v3282 = vsub.f32 %v3121, %v3281
      %v3283 = vand.u32 %v3282, 4294901760
      %3284 = vmatpush.msra.mxu0 %v3283
      %v3285 = vand.u32 %v3119, 4294901760
      %v3286 = vsub.f32 %v3119, %v3285
      %v3287 = vand.u32 %v3286, 4294901760
      %3288 = vmatpush.msra.mxu0 %v3287
      %v3289 = vand.u32 %v3130, 4294901760
      %3290 = vmatmul.f32.gmra.mxu0 %v3289
      %v3291 = vpop.f32.mrf.mxu0
      %v3292 = vadd.f32 %v3259, %v3291
      %3293 = vdwg.mxu0
      %3294 = vmatpush.msra.mxu0 0.0
      %3295 = vmatpush.msra.mxu0 0.0
      %3296 = vmatpush.msra.mxu0 0.0
      %3297 = vmatpush.msra.mxu0 0.0
      %3298 = vmatpush.msra.mxu0 0.0
      %3299 = vmatpush.msra.mxu0 0.0
      %3300 = vmatpush.msra.mxu0 0.0
      %3301 = vmatpush.msra.mxu0 0.0
      %3302 = vmatpush.msra.mxu0 0.0
      %3303 = vmatpush.msra.mxu0 0.0
      %3304 = vmatpush.msra.mxu0 0.0
      %3305 = vmatpush.msra.mxu0 0.0
      %v3306 = vand.u32 %v3132, 4294901760
      %3307 = vmatpush.msra.mxu0 %v3306
      %v3308 = vand.u32 %v3123, 4294901760
      %3309 = vmatpush.msra.mxu0 %v3308
      %v3310 = vand.u32 %v3121, 4294901760
      %3311 = vmatpush.msra.mxu0 %v3310
      %v3312 = vand.u32 %v3119, 4294901760
      %3313 = vmatpush.msra.mxu0 %v3312
      %v3314 = vand.u32 %v3130, 4294901760
      %3315 = vmatmul.f32.gmra.mxu0 %v3314
      %v3316 = vpop.f32.mrf.mxu0
      %v3317 = vadd.f32 %v3292, %v3316
      %3318 = vdwg.mxu0
      %v3320 = vsel %vm258, %v3107, 0
      %v3322 = vsel %vm262, %v3112, 0
      %3324 = vmatpush.msra.mxu0 0.0
      %3325 = vmatpush.msra.mxu0 0.0
      %3326 = vmatpush.msra.mxu0 0.0
      %3327 = vmatpush.msra.mxu0 0.0
      %3328 = vmatpush.msra.mxu0 0.0
      %3329 = vmatpush.msra.mxu0 0.0
      %3330 = vmatpush.msra.mxu0 0.0
      %3331 = vmatpush.msra.mxu0 0.0
      %3332 = vmatpush.msra.mxu0 0.0
      %3333 = vmatpush.msra.mxu0 0.0
      %3334 = vmatpush.msra.mxu0 0.0
      %3335 = vmatpush.msra.mxu0 0.0
      %v3336 = vand.u32 %v3322, 4294901760
      %3337 = vmatpush.msra.mxu0 %v3336
      %v3338 = vand.u32 %v3111, 4294901760
      %3339 = vmatpush.msra.mxu0 %v3338
      %v3340 = vand.u32 %v3110, 4294901760
      %3341 = vmatpush.msra.mxu0 %v3340
      %v3342 = vand.u32 %v3109, 4294901760
      %3343 = vmatpush.msra.mxu0 %v3342
      %v3344 = vand.u32 %v3320, 4294901760
      %v3345 = vsub.f32 %v3320, %v3344
      %v3346 = vand.u32 %v3345, 4294901760
      %v3347 = vsub.f32 %v3345, %v3346
      %v3348 = vand.u32 %v3347, 4294901760
      %3349 = vmatmul.f32.gmra.mxu0 %v3348
      %v3350 = vpop.f32.mrf.mxu0
      %v3351 = vadd.f32 %v3317, %v3350
      %3352 = vdwg.mxu0
      %3353 = vmatpush.msra.mxu0 0.0
      %3354 = vmatpush.msra.mxu0 0.0
      %3355 = vmatpush.msra.mxu0 0.0
      %3356 = vmatpush.msra.mxu0 0.0
      %3357 = vmatpush.msra.mxu0 0.0
      %3358 = vmatpush.msra.mxu0 0.0
      %3359 = vmatpush.msra.mxu0 0.0
      %3360 = vmatpush.msra.mxu0 0.0
      %3361 = vmatpush.msra.mxu0 0.0
      %3362 = vmatpush.msra.mxu0 0.0
      %3363 = vmatpush.msra.mxu0 0.0
      %3364 = vmatpush.msra.mxu0 0.0
      %v3365 = vand.u32 %v3322, 4294901760
      %v3366 = vsub.f32 %v3322, %v3365
      %v3367 = vand.u32 %v3366, 4294901760
      %v3368 = vsub.f32 %v3366, %v3367
      %v3369 = vand.u32 %v3368, 4294901760
      %3370 = vmatpush.msra.mxu0 %v3369
      %v3371 = vand.u32 %v3111, 4294901760
      %v3372 = vsub.f32 %v3111, %v3371
      %v3373 = vand.u32 %v3372, 4294901760
      %v3374 = vsub.f32 %v3372, %v3373
      %v3375 = vand.u32 %v3374, 4294901760
      %3376 = vmatpush.msra.mxu0 %v3375
      %v3377 = vand.u32 %v3110, 4294901760
      %v3378 = vsub.f32 %v3110, %v3377
      %v3379 = vand.u32 %v3378, 4294901760
      %v3380 = vsub.f32 %v3378, %v3379
      %v3381 = vand.u32 %v3380, 4294901760
      %3382 = vmatpush.msra.mxu0 %v3381
      %v3383 = vand.u32 %v3109, 4294901760
      %v3384 = vsub.f32 %v3109, %v3383
      %v3385 = vand.u32 %v3384, 4294901760
      %v3386 = vsub.f32 %v3384, %v3385
      %v3387 = vand.u32 %v3386, 4294901760
      %3388 = vmatpush.msra.mxu0 %v3387
      %v3389 = vand.u32 %v3320, 4294901760
      %3390 = vmatmul.f32.gmra.mxu0 %v3389
      %v3391 = vpop.f32.mrf.mxu0
      %v3392 = vadd.f32 %v3351, %v3391
      %3393 = vdwg.mxu0
      %3394 = vmatpush.msra.mxu0 0.0
      %3395 = vmatpush.msra.mxu0 0.0
      %3396 = vmatpush.msra.mxu0 0.0
      %3397 = vmatpush.msra.mxu0 0.0
      %3398 = vmatpush.msra.mxu0 0.0
      %3399 = vmatpush.msra.mxu0 0.0
      %3400 = vmatpush.msra.mxu0 0.0
      %3401 = vmatpush.msra.mxu0 0.0
      %3402 = vmatpush.msra.mxu0 0.0
      %3403 = vmatpush.msra.mxu0 0.0
      %3404 = vmatpush.msra.mxu0 0.0
      %3405 = vmatpush.msra.mxu0 0.0
      %v3406 = vand.u32 %v3322, 4294901760
      %v3407 = vsub.f32 %v3322, %v3406
      %3408 = vmatpush.msra.mxu0 %v3407
      %v3409 = vand.u32 %v3111, 4294901760
      %v3410 = vsub.f32 %v3111, %v3409
      %3411 = vmatpush.msra.mxu0 %v3410
      %v3412 = vand.u32 %v3110, 4294901760
      %v3413 = vsub.f32 %v3110, %v3412
      %3414 = vmatpush.msra.mxu0 %v3413
      %v3415 = vand.u32 %v3109, 4294901760
      %v3416 = vsub.f32 %v3109, %v3415
      %3417 = vmatpush.msra.mxu0 %v3416
      %v3418 = vand.u32 %v3320, 4294901760
      %v3419 = vsub.f32 %v3320, %v3418
      %3420 = vmatmul.f32.gmra.mxu0 %v3419
      %v3421 = vpop.f32.mrf.mxu0
      %v3422 = vadd.f32 %v3392, %v3421
      %3423 = vdwg.mxu0
      %3424 = vmatpush.msra.mxu0 0.0
      %3425 = vmatpush.msra.mxu0 0.0
      %3426 = vmatpush.msra.mxu0 0.0
      %3427 = vmatpush.msra.mxu0 0.0
      %3428 = vmatpush.msra.mxu0 0.0
      %3429 = vmatpush.msra.mxu0 0.0
      %3430 = vmatpush.msra.mxu0 0.0
      %3431 = vmatpush.msra.mxu0 0.0
      %3432 = vmatpush.msra.mxu0 0.0
      %3433 = vmatpush.msra.mxu0 0.0
      %3434 = vmatpush.msra.mxu0 0.0
      %3435 = vmatpush.msra.mxu0 0.0
      %v3436 = vand.u32 %v3322, 4294901760
      %3437 = vmatpush.msra.mxu0 %v3436
      %v3438 = vand.u32 %v3111, 4294901760
      %3439 = vmatpush.msra.mxu0 %v3438
      %v3440 = vand.u32 %v3110, 4294901760
      %3441 = vmatpush.msra.mxu0 %v3440
      %v3442 = vand.u32 %v3109, 4294901760
      %3443 = vmatpush.msra.mxu0 %v3442
      %v3444 = vand.u32 %v3320, 4294901760
      %v3445 = vsub.f32 %v3320, %v3444
      %v3446 = vand.u32 %v3445, 4294901760
      %3447 = vmatmul.f32.gmra.mxu0 %v3446
      %v3448 = vpop.f32.mrf.mxu0
      %v3449 = vadd.f32 %v3422, %v3448
      %3450 = vdwg.mxu0
      %3451 = vmatpush.msra.mxu0 0.0
      %3452 = vmatpush.msra.mxu0 0.0
      %3453 = vmatpush.msra.mxu0 0.0
      %3454 = vmatpush.msra.mxu0 0.0
      %3455 = vmatpush.msra.mxu0 0.0
      %3456 = vmatpush.msra.mxu0 0.0
      %3457 = vmatpush.msra.mxu0 0.0
      %3458 = vmatpush.msra.mxu0 0.0
      %3459 = vmatpush.msra.mxu0 0.0
      %3460 = vmatpush.msra.mxu0 0.0
      %3461 = vmatpush.msra.mxu0 0.0
      %3462 = vmatpush.msra.mxu0 0.0
      %v3463 = vand.u32 %v3322, 4294901760
      %v3464 = vsub.f32 %v3322, %v3463
      %v3465 = vand.u32 %v3464, 4294901760
      %3466 = vmatpush.msra.mxu0 %v3465
      %v3467 = vand.u32 %v3111, 4294901760
      %v3468 = vsub.f32 %v3111, %v3467
      %v3469 = vand.u32 %v3468, 4294901760
      %3470 = vmatpush.msra.mxu0 %v3469
      %v3471 = vand.u32 %v3110, 4294901760
      %v3472 = vsub.f32 %v3110, %v3471
      %v3473 = vand.u32 %v3472, 4294901760
      %3474 = vmatpush.msra.mxu0 %v3473
      %v3475 = vand.u32 %v3109, 4294901760
      %v3476 = vsub.f32 %v3109, %v3475
      %v3477 = vand.u32 %v3476, 4294901760
      %3478 = vmatpush.msra.mxu0 %v3477
      %v3479 = vand.u32 %v3320, 4294901760
      %3480 = vmatmul.f32.gmra.mxu0 %v3479
      %v3481 = vpop.f32.mrf.mxu0
      %v3482 = vadd.f32 %v3449, %v3481
      %3483 = vdwg.mxu0
      %3484 = vmatpush.msra.mxu0 0.0
      %3485 = vmatpush.msra.mxu0 0.0
      %3486 = vmatpush.msra.mxu0 0.0
      %3487 = vmatpush.msra.mxu0 0.0
      %3488 = vmatpush.msra.mxu0 0.0
      %3489 = vmatpush.msra.mxu0 0.0
      %3490 = vmatpush.msra.mxu0 0.0
      %3491 = vmatpush.msra.mxu0 0.0
      %3492 = vmatpush.msra.mxu0 0.0
      %3493 = vmatpush.msra.mxu0 0.0
      %3494 = vmatpush.msra.mxu0 0.0
      %3495 = vmatpush.msra.mxu0 0.0
      %v3496 = vand.u32 %v3322, 4294901760
      %3497 = vmatpush.msra.mxu0 %v3496
      %v3498 = vand.u32 %v3111, 4294901760
      %3499 = vmatpush.msra.mxu0 %v3498
      %v3500 = vand.u32 %v3110, 4294901760
      %3501 = vmatpush.msra.mxu0 %v3500
      %v3502 = vand.u32 %v3109, 4294901760
      %3503 = vmatpush.msra.mxu0 %v3502
      %v3504 = vand.u32 %v3320, 4294901760
      %3505 = vmatmul.f32.gmra.mxu0 %v3504
      %v3506 = vpop.f32.mrf.mxu0
      %v3507 = vadd.f32 %v3482, %v3506
      %3508 = vdwg.mxu0
      %v3509 = vld [vmem:[%s640] sm:$0xf]
      %3510 = vrot.lane.b32.xlu0 %v3109, 112
      %v3511 = vpop.permute.xlu0 %3510
      %3512 = vrot.lane.b32.xlu0 %v3110, 112
      %v3513 = vpop.permute.xlu0 %3512
      %3514 = vrot.lane.b32.xlu0 %v3111, 112
      %v3515 = vpop.permute.xlu0 %3514
      %3516 = vrot.lane.b32.xlu0 %v3112, 112
      %v3517 = vpop.permute.xlu0 %3516
      %v3522 = vsel %vm258, %v3509, 0
      %v3524 = vsel %vm262, %v3517, 0
      %3526 = vmatpush.msra.mxu0 0.0
      %3527 = vmatpush.msra.mxu0 0.0
      %3528 = vmatpush.msra.mxu0 0.0
      %3529 = vmatpush.msra.mxu0 0.0
      %3530 = vmatpush.msra.mxu0 0.0
      %3531 = vmatpush.msra.mxu0 0.0
      %3532 = vmatpush.msra.mxu0 0.0
      %3533 = vmatpush.msra.mxu0 0.0
      %3534 = vmatpush.msra.mxu0 0.0
      %3535 = vmatpush.msra.mxu0 0.0
      %3536 = vmatpush.msra.mxu0 0.0
      %3537 = vmatpush.msra.mxu0 0.0
      %v3538 = vand.u32 %v3524, 4294901760
      %3539 = vmatpush.msra.mxu0 %v3538
      %v3540 = vand.u32 %v3515, 4294901760
      %3541 = vmatpush.msra.mxu0 %v3540
      %v3542 = vand.u32 %v3513, 4294901760
      %3543 = vmatpush.msra.mxu0 %v3542
      %v3544 = vand.u32 %v3511, 4294901760
      %3545 = vmatpush.msra.mxu0 %v3544
      %v3546 = vand.u32 %v3522, 4294901760
      %v3547 = vsub.f32 %v3522, %v3546
      %v3548 = vand.u32 %v3547, 4294901760
      %v3549 = vsub.f32 %v3547, %v3548
      %v3550 = vand.u32 %v3549, 4294901760
      %3551 = vmatmul.f32.gmra.mxu0 %v3550
      %v3552 = vpop.f32.mrf.mxu0
      %v3553 = vadd.f32 0.0, %v3552
      %3554 = vdwg.mxu0
      %3555 = vmatpush.msra.mxu0 0.0
      %3556 = vmatpush.msra.mxu0 0.0
      %3557 = vmatpush.msra.mxu0 0.0
      %3558 = vmatpush.msra.mxu0 0.0
      %3559 = vmatpush.msra.mxu0 0.0
      %3560 = vmatpush.msra.mxu0 0.0
      %3561 = vmatpush.msra.mxu0 0.0
      %3562 = vmatpush.msra.mxu0 0.0
      %3563 = vmatpush.msra.mxu0 0.0
      %3564 = vmatpush.msra.mxu0 0.0
      %3565 = vmatpush.msra.mxu0 0.0
      %3566 = vmatpush.msra.mxu0 0.0
      %v3567 = vand.u32 %v3524, 4294901760
      %v3568 = vsub.f32 %v3524, %v3567
      %v3569 = vand.u32 %v3568, 4294901760
      %v3570 = vsub.f32 %v3568, %v3569
      %v3571 = vand.u32 %v3570, 4294901760
      %3572 = vmatpush.msra.mxu0 %v3571
      %v3573 = vand.u32 %v3515, 4294901760
      %v3574 = vsub.f32 %v3515, %v3573
      %v3575 = vand.u32 %v3574, 4294901760
      %v3576 = vsub.f32 %v3574, %v3575
      %v3577 = vand.u32 %v3576, 4294901760
      %3578 = vmatpush.msra.mxu0 %v3577
      %v3579 = vand.u32 %v3513, 4294901760
      %v3580 = vsub.f32 %v3513, %v3579
      %v3581 = vand.u32 %v3580, 4294901760
      %v3582 = vsub.f32 %v3580, %v3581
      %v3583 = vand.u32 %v3582, 4294901760
      %3584 = vmatpush.msra.mxu0 %v3583
      %v3585 = vand.u32 %v3511, 4294901760
      %v3586 = vsub.f32 %v3511, %v3585
      %v3587 = vand.u32 %v3586, 4294901760
      %v3588 = vsub.f32 %v3586, %v3587
      %v3589 = vand.u32 %v3588, 4294901760
      %3590 = vmatpush.msra.mxu0 %v3589
      %v3591 = vand.u32 %v3522, 4294901760
      %3592 = vmatmul.f32.gmra.mxu0 %v3591
      %v3593 = vpop.f32.mrf.mxu0
      %v3594 = vadd.f32 %v3553, %v3593
      %3595 = vdwg.mxu0
      %3596 = vmatpush.msra.mxu0 0.0
      %3597 = vmatpush.msra.mxu0 0.0
      %3598 = vmatpush.msra.mxu0 0.0
      %3599 = vmatpush.msra.mxu0 0.0
      %3600 = vmatpush.msra.mxu0 0.0
      %3601 = vmatpush.msra.mxu0 0.0
      %3602 = vmatpush.msra.mxu0 0.0
      %3603 = vmatpush.msra.mxu0 0.0
      %3604 = vmatpush.msra.mxu0 0.0
      %3605 = vmatpush.msra.mxu0 0.0
      %3606 = vmatpush.msra.mxu0 0.0
      %3607 = vmatpush.msra.mxu0 0.0
      %v3608 = vand.u32 %v3524, 4294901760
      %v3609 = vsub.f32 %v3524, %v3608
      %3610 = vmatpush.msra.mxu0 %v3609
      %v3611 = vand.u32 %v3515, 4294901760
      %v3612 = vsub.f32 %v3515, %v3611
      %3613 = vmatpush.msra.mxu0 %v3612
      %v3614 = vand.u32 %v3513, 4294901760
      %v3615 = vsub.f32 %v3513, %v3614
      %3616 = vmatpush.msra.mxu0 %v3615
      %v3617 = vand.u32 %v3511, 4294901760
      %v3618 = vsub.f32 %v3511, %v3617
      %3619 = vmatpush.msra.mxu0 %v3618
      %v3620 = vand.u32 %v3522, 4294901760
      %v3621 = vsub.f32 %v3522, %v3620
      %3622 = vmatmul.f32.gmra.mxu0 %v3621
      %v3623 = vpop.f32.mrf.mxu0
      %v3624 = vadd.f32 %v3594, %v3623
      %3625 = vdwg.mxu0
      %3626 = vmatpush.msra.mxu0 0.0
      %3627 = vmatpush.msra.mxu0 0.0
      %3628 = vmatpush.msra.mxu0 0.0
      %3629 = vmatpush.msra.mxu0 0.0
      %3630 = vmatpush.msra.mxu0 0.0
      %3631 = vmatpush.msra.mxu0 0.0
      %3632 = vmatpush.msra.mxu0 0.0
      %3633 = vmatpush.msra.mxu0 0.0
      %3634 = vmatpush.msra.mxu0 0.0
      %3635 = vmatpush.msra.mxu0 0.0
      %3636 = vmatpush.msra.mxu0 0.0
      %3637 = vmatpush.msra.mxu0 0.0
      %v3638 = vand.u32 %v3524, 4294901760
      %3639 = vmatpush.msra.mxu0 %v3638
      %v3640 = vand.u32 %v3515, 4294901760
      %3641 = vmatpush.msra.mxu0 %v3640
      %v3642 = vand.u32 %v3513, 4294901760
      %3643 = vmatpush.msra.mxu0 %v3642
      %v3644 = vand.u32 %v3511, 4294901760
      %3645 = vmatpush.msra.mxu0 %v3644
      %v3646 = vand.u32 %v3522, 4294901760
      %v3647 = vsub.f32 %v3522, %v3646
      %v3648 = vand.u32 %v3647, 4294901760
      %3649 = vmatmul.f32.gmra.mxu0 %v3648
      %v3650 = vpop.f32.mrf.mxu0
      %v3651 = vadd.f32 %v3624, %v3650
      %3652 = vdwg.mxu0
      %3653 = vmatpush.msra.mxu0 0.0
      %3654 = vmatpush.msra.mxu0 0.0
      %3655 = vmatpush.msra.mxu0 0.0
      %3656 = vmatpush.msra.mxu0 0.0
      %3657 = vmatpush.msra.mxu0 0.0
      %3658 = vmatpush.msra.mxu0 0.0
      %3659 = vmatpush.msra.mxu0 0.0
      %3660 = vmatpush.msra.mxu0 0.0
      %3661 = vmatpush.msra.mxu0 0.0
      %3662 = vmatpush.msra.mxu0 0.0
      %3663 = vmatpush.msra.mxu0 0.0
      %3664 = vmatpush.msra.mxu0 0.0
      %v3665 = vand.u32 %v3524, 4294901760
      %v3666 = vsub.f32 %v3524, %v3665
      %v3667 = vand.u32 %v3666, 4294901760
      %3668 = vmatpush.msra.mxu0 %v3667
      %v3669 = vand.u32 %v3515, 4294901760
      %v3670 = vsub.f32 %v3515, %v3669
      %v3671 = vand.u32 %v3670, 4294901760
      %3672 = vmatpush.msra.mxu0 %v3671
      %v3673 = vand.u32 %v3513, 4294901760
      %v3674 = vsub.f32 %v3513, %v3673
      %v3675 = vand.u32 %v3674, 4294901760
      %3676 = vmatpush.msra.mxu0 %v3675
      %v3677 = vand.u32 %v3511, 4294901760
      %v3678 = vsub.f32 %v3511, %v3677
      %v3679 = vand.u32 %v3678, 4294901760
      %3680 = vmatpush.msra.mxu0 %v3679
      %v3681 = vand.u32 %v3522, 4294901760
      %3682 = vmatmul.f32.gmra.mxu0 %v3681
      %v3683 = vpop.f32.mrf.mxu0
      %v3684 = vadd.f32 %v3651, %v3683
      %3685 = vdwg.mxu0
      %3686 = vmatpush.msra.mxu0 0.0
      %3687 = vmatpush.msra.mxu0 0.0
      %3688 = vmatpush.msra.mxu0 0.0
      %3689 = vmatpush.msra.mxu0 0.0
      %3690 = vmatpush.msra.mxu0 0.0
      %3691 = vmatpush.msra.mxu0 0.0
      %3692 = vmatpush.msra.mxu0 0.0
      %3693 = vmatpush.msra.mxu0 0.0
      %3694 = vmatpush.msra.mxu0 0.0
      %3695 = vmatpush.msra.mxu0 0.0
      %3696 = vmatpush.msra.mxu0 0.0
      %3697 = vmatpush.msra.mxu0 0.0
      %v3698 = vand.u32 %v3524, 4294901760
      %3699 = vmatpush.msra.mxu0 %v3698
      %v3700 = vand.u32 %v3515, 4294901760
      %3701 = vmatpush.msra.mxu0 %v3700
      %v3702 = vand.u32 %v3513, 4294901760
      %3703 = vmatpush.msra.mxu0 %v3702
      %v3704 = vand.u32 %v3511, 4294901760
      %3705 = vmatpush.msra.mxu0 %v3704
      %v3706 = vand.u32 %v3522, 4294901760
      %3707 = vmatmul.f32.gmra.mxu0 %v3706
      %v3708 = vpop.f32.mrf.mxu0
      %v3709 = vadd.f32 %v3684, %v3708
      %3710 = vdwg.mxu0
      %v3711 = vadd.f32 %v3507, %v3709
      %v3712 = vld [vmem:[%s844] sm:$0xf]
      %3713 = vrot.lane.b32.xlu0 %v3109, 104
      %v3714 = vpop.permute.xlu0 %3713
      %3715 = vrot.lane.b32.xlu0 %v3110, 104
      %v3716 = vpop.permute.xlu0 %3715
      %3717 = vrot.lane.b32.xlu0 %v3111, 104
      %v3718 = vpop.permute.xlu0 %3717
      %3719 = vrot.lane.b32.xlu0 %v3112, 104
      %v3720 = vpop.permute.xlu0 %3719
      %v3725 = vsel %vm258, %v3712, 0
      %v3727 = vsel %vm262, %v3720, 0
      %3729 = vmatpush.msra.mxu0 0.0
      %3730 = vmatpush.msra.mxu0 0.0
      %3731 = vmatpush.msra.mxu0 0.0
      %3732 = vmatpush.msra.mxu0 0.0
      %3733 = vmatpush.msra.mxu0 0.0
      %3734 = vmatpush.msra.mxu0 0.0
      %3735 = vmatpush.msra.mxu0 0.0
      %3736 = vmatpush.msra.mxu0 0.0
      %3737 = vmatpush.msra.mxu0 0.0
      %3738 = vmatpush.msra.mxu0 0.0
      %3739 = vmatpush.msra.mxu0 0.0
      %3740 = vmatpush.msra.mxu0 0.0
      %v3741 = vand.u32 %v3727, 4294901760
      %3742 = vmatpush.msra.mxu0 %v3741
      %v3743 = vand.u32 %v3718, 4294901760
      %3744 = vmatpush.msra.mxu0 %v3743
      %v3745 = vand.u32 %v3716, 4294901760
      %3746 = vmatpush.msra.mxu0 %v3745
      %v3747 = vand.u32 %v3714, 4294901760
      %3748 = vmatpush.msra.mxu0 %v3747
      %v3749 = vand.u32 %v3725, 4294901760
      %v3750 = vsub.f32 %v3725, %v3749
      %v3751 = vand.u32 %v3750, 4294901760
      %v3752 = vsub.f32 %v3750, %v3751
      %v3753 = vand.u32 %v3752, 4294901760
      %3754 = vmatmul.f32.gmra.mxu0 %v3753
      %v3755 = vpop.f32.mrf.mxu0
      %v3756 = vadd.f32 0.0, %v3755
      %3757 = vdwg.mxu0
      %3758 = vmatpush.msra.mxu0 0.0
      %3759 = vmatpush.msra.mxu0 0.0
      %3760 = vmatpush.msra.mxu0 0.0
      %3761 = vmatpush.msra.mxu0 0.0
      %3762 = vmatpush.msra.mxu0 0.0
      %3763 = vmatpush.msra.mxu0 0.0
      %3764 = vmatpush.msra.mxu0 0.0
      %3765 = vmatpush.msra.mxu0 0.0
      %3766 = vmatpush.msra.mxu0 0.0
      %3767 = vmatpush.msra.mxu0 0.0
      %3768 = vmatpush.msra.mxu0 0.0
      %3769 = vmatpush.msra.mxu0 0.0
      %v3770 = vand.u32 %v3727, 4294901760
      %v3771 = vsub.f32 %v3727, %v3770
      %v3772 = vand.u32 %v3771, 4294901760
      %v3773 = vsub.f32 %v3771, %v3772
      %v3774 = vand.u32 %v3773, 4294901760
      %3775 = vmatpush.msra.mxu0 %v3774
      %v3776 = vand.u32 %v3718, 4294901760
      %v3777 = vsub.f32 %v3718, %v3776
      %v3778 = vand.u32 %v3777, 4294901760
      %v3779 = vsub.f32 %v3777, %v3778
      %v3780 = vand.u32 %v3779, 4294901760
      %3781 = vmatpush.msra.mxu0 %v3780
      %v3782 = vand.u32 %v3716, 4294901760
      %v3783 = vsub.f32 %v3716, %v3782
      %v3784 = vand.u32 %v3783, 4294901760
      %v3785 = vsub.f32 %v3783, %v3784
      %v3786 = vand.u32 %v3785, 4294901760
      %3787 = vmatpush.msra.mxu0 %v3786
      %v3788 = vand.u32 %v3714, 4294901760
      %v3789 = vsub.f32 %v3714, %v3788
      %v3790 = vand.u32 %v3789, 4294901760
      %v3791 = vsub.f32 %v3789, %v3790
      %v3792 = vand.u32 %v3791, 4294901760
      %3793 = vmatpush.msra.mxu0 %v3792
      %v3794 = vand.u32 %v3725, 4294901760
      %3795 = vmatmul.f32.gmra.mxu0 %v3794
      %v3796 = vpop.f32.mrf.mxu0
      %v3797 = vadd.f32 %v3756, %v3796
      %3798 = vdwg.mxu0
      %3799 = vmatpush.msra.mxu0 0.0
      %3800 = vmatpush.msra.mxu0 0.0
      %3801 = vmatpush.msra.mxu0 0.0
      %3802 = vmatpush.msra.mxu0 0.0
      %3803 = vmatpush.msra.mxu0 0.0
      %3804 = vmatpush.msra.mxu0 0.0
      %3805 = vmatpush.msra.mxu0 0.0
      %3806 = vmatpush.msra.mxu0 0.0
      %3807 = vmatpush.msra.mxu0 0.0
      %3808 = vmatpush.msra.mxu0 0.0
      %3809 = vmatpush.msra.mxu0 0.0
      %3810 = vmatpush.msra.mxu0 0.0
      %v3811 = vand.u32 %v3727, 4294901760
      %v3812 = vsub.f32 %v3727, %v3811
      %3813 = vmatpush.msra.mxu0 %v3812
      %v3814 = vand.u32 %v3718, 4294901760
      %v3815 = vsub.f32 %v3718, %v3814
      %3816 = vmatpush.msra.mxu0 %v3815
      %v3817 = vand.u32 %v3716, 4294901760
      %v3818 = vsub.f32 %v3716, %v3817
      %3819 = vmatpush.msra.mxu0 %v3818
      %v3820 = vand.u32 %v3714, 4294901760
      %v3821 = vsub.f32 %v3714, %v3820
      %3822 = vmatpush.msra.mxu0 %v3821
      %v3823 = vand.u32 %v3725, 4294901760
      %v3824 = vsub.f32 %v3725, %v3823
      %3825 = vmatmul.f32.gmra.mxu0 %v3824
      %v3826 = vpop.f32.mrf.mxu0
      %v3827 = vadd.f32 %v3797, %v3826
      %3828 = vdwg.mxu0
      %3829 = vmatpush.msra.mxu0 0.0
      %3830 = vmatpush.msra.mxu0 0.0
      %3831 = vmatpush.msra.mxu0 0.0
      %3832 = vmatpush.msra.mxu0 0.0
      %3833 = vmatpush.msra.mxu0 0.0
      %3834 = vmatpush.msra.mxu0 0.0
      %3835 = vmatpush.msra.mxu0 0.0
      %3836 = vmatpush.msra.mxu0 0.0
      %3837 = vmatpush.msra.mxu0 0.0
      %3838 = vmatpush.msra.mxu0 0.0
      %3839 = vmatpush.msra.mxu0 0.0
      %3840 = vmatpush.msra.mxu0 0.0
      %v3841 = vand.u32 %v3727, 4294901760
      %3842 = vmatpush.msra.mxu0 %v3841
      %v3843 = vand.u32 %v3718, 4294901760
      %3844 = vmatpush.msra.mxu0 %v3843
      %v3845 = vand.u32 %v3716, 4294901760
      %3846 = vmatpush.msra.mxu0 %v3845
      %v3847 = vand.u32 %v3714, 4294901760
      %3848 = vmatpush.msra.mxu0 %v3847
      %v3849 = vand.u32 %v3725, 4294901760
      %v3850 = vsub.f32 %v3725, %v3849
      %v3851 = vand.u32 %v3850, 4294901760
      %3852 = vmatmul.f32.gmra.mxu0 %v3851
      %v3853 = vpop.f32.mrf.mxu0
      %v3854 = vadd.f32 %v3827, %v3853
      %3855 = vdwg.mxu0
      %3856 = vmatpush.msra.mxu0 0.0
      %3857 = vmatpush.msra.mxu0 0.0
      %3858 = vmatpush.msra.mxu0 0.0
      %3859 = vmatpush.msra.mxu0 0.0
      %3860 = vmatpush.msra.mxu0 0.0
      %3861 = vmatpush.msra.mxu0 0.0
      %3862 = vmatpush.msra.mxu0 0.0
      %3863 = vmatpush.msra.mxu0 0.0
      %3864 = vmatpush.msra.mxu0 0.0
      %3865 = vmatpush.msra.mxu0 0.0
      %3866 = vmatpush.msra.mxu0 0.0
      %3867 = vmatpush.msra.mxu0 0.0
      %v3868 = vand.u32 %v3727, 4294901760
      %v3869 = vsub.f32 %v3727, %v3868
      %v3870 = vand.u32 %v3869, 4294901760
      %3871 = vmatpush.msra.mxu0 %v3870
      %v3872 = vand.u32 %v3718, 4294901760
      %v3873 = vsub.f32 %v3718, %v3872
      %v3874 = vand.u32 %v3873, 4294901760
      %3875 = vmatpush.msra.mxu0 %v3874
      %v3876 = vand.u32 %v3716, 4294901760
      %v3877 = vsub.f32 %v3716, %v3876
      %v3878 = vand.u32 %v3877, 4294901760
      %3879 = vmatpush.msra.mxu0 %v3878
      %v3880 = vand.u32 %v3714, 4294901760
      %v3881 = vsub.f32 %v3714, %v3880
      %v3882 = vand.u32 %v3881, 4294901760
      %3883 = vmatpush.msra.mxu0 %v3882
      %v3884 = vand.u32 %v3725, 4294901760
      %3885 = vmatmul.f32.gmra.mxu0 %v3884
      %v3886 = vpop.f32.mrf.mxu0
      %v3887 = vadd.f32 %v3854, %v3886
      %3888 = vdwg.mxu0
      %3889 = vmatpush.msra.mxu0 0.0
      %3890 = vmatpush.msra.mxu0 0.0
      %3891 = vmatpush.msra.mxu0 0.0
      %3892 = vmatpush.msra.mxu0 0.0
      %3893 = vmatpush.msra.mxu0 0.0
      %3894 = vmatpush.msra.mxu0 0.0
      %3895 = vmatpush.msra.mxu0 0.0
      %3896 = vmatpush.msra.mxu0 0.0
      %3897 = vmatpush.msra.mxu0 0.0
      %3898 = vmatpush.msra.mxu0 0.0
      %3899 = vmatpush.msra.mxu0 0.0
      %3900 = vmatpush.msra.mxu0 0.0
      %v3901 = vand.u32 %v3727, 4294901760
      %3902 = vmatpush.msra.mxu0 %v3901
      %v3903 = vand.u32 %v3718, 4294901760
      %3904 = vmatpush.msra.mxu0 %v3903
      %v3905 = vand.u32 %v3716, 4294901760
      %3906 = vmatpush.msra.mxu0 %v3905
      %v3907 = vand.u32 %v3714, 4294901760
      %3908 = vmatpush.msra.mxu0 %v3907
      %v3909 = vand.u32 %v3725, 4294901760
      %3910 = vmatmul.f32.gmra.mxu0 %v3909
      %v3911 = vpop.f32.mrf.mxu0
      %v3912 = vadd.f32 %v3887, %v3911
      %3913 = vdwg.mxu0
      %v3914 = vadd.f32 %v3711, %v3912
      %v3915 = vld [vmem:[%s1048] sm:$0xf]
      %3916 = vrot.lane.b32.xlu0 %v3109, 96
      %v3917 = vpop.permute.xlu0 %3916
      %3918 = vrot.lane.b32.xlu0 %v3110, 96
      %v3919 = vpop.permute.xlu0 %3918
      %3920 = vrot.lane.b32.xlu0 %v3111, 96
      %v3921 = vpop.permute.xlu0 %3920
      %3922 = vrot.lane.b32.xlu0 %v3112, 96
      %v3923 = vpop.permute.xlu0 %3922
      %v3928 = vsel %vm258, %v3915, 0
      %v3930 = vsel %vm262, %v3923, 0
      %3932 = vmatpush.msra.mxu0 0.0
      %3933 = vmatpush.msra.mxu0 0.0
      %3934 = vmatpush.msra.mxu0 0.0
      %3935 = vmatpush.msra.mxu0 0.0
      %3936 = vmatpush.msra.mxu0 0.0
      %3937 = vmatpush.msra.mxu0 0.0
      %3938 = vmatpush.msra.mxu0 0.0
      %3939 = vmatpush.msra.mxu0 0.0
      %3940 = vmatpush.msra.mxu0 0.0
      %3941 = vmatpush.msra.mxu0 0.0
      %3942 = vmatpush.msra.mxu0 0.0
      %3943 = vmatpush.msra.mxu0 0.0
      %v3944 = vand.u32 %v3930, 4294901760
      %3945 = vmatpush.msra.mxu0 %v3944
      %v3946 = vand.u32 %v3921, 4294901760
      %3947 = vmatpush.msra.mxu0 %v3946
      %v3948 = vand.u32 %v3919, 4294901760
      %3949 = vmatpush.msra.mxu0 %v3948
      %v3950 = vand.u32 %v3917, 4294901760
      %3951 = vmatpush.msra.mxu0 %v3950
      %v3952 = vand.u32 %v3928, 4294901760
      %v3953 = vsub.f32 %v3928, %v3952
      %v3954 = vand.u32 %v3953, 4294901760
      %v3955 = vsub.f32 %v3953, %v3954
      %v3956 = vand.u32 %v3955, 4294901760
      %3957 = vmatmul.f32.gmra.mxu0 %v3956
      %v3958 = vpop.f32.mrf.mxu0
      %v3959 = vadd.f32 0.0, %v3958
      %3960 = vdwg.mxu0
      %3961 = vmatpush.msra.mxu0 0.0
      %3962 = vmatpush.msra.mxu0 0.0
      %3963 = vmatpush.msra.mxu0 0.0
      %3964 = vmatpush.msra.mxu0 0.0
      %3965 = vmatpush.msra.mxu0 0.0
      %3966 = vmatpush.msra.mxu0 0.0
      %3967 = vmatpush.msra.mxu0 0.0
      %3968 = vmatpush.msra.mxu0 0.0
      %3969 = vmatpush.msra.mxu0 0.0
      %3970 = vmatpush.msra.mxu0 0.0
      %3971 = vmatpush.msra.mxu0 0.0
      %3972 = vmatpush.msra.mxu0 0.0
      %v3973 = vand.u32 %v3930, 4294901760
      %v3974 = vsub.f32 %v3930, %v3973
      %v3975 = vand.u32 %v3974, 4294901760
      %v3976 = vsub.f32 %v3974, %v3975
      %v3977 = vand.u32 %v3976, 4294901760
      %3978 = vmatpush.msra.mxu0 %v3977
      %v3979 = vand.u32 %v3921, 4294901760
      %v3980 = vsub.f32 %v3921, %v3979
      %v3981 = vand.u32 %v3980, 4294901760
      %v3982 = vsub.f32 %v3980, %v3981
      %v3983 = vand.u32 %v3982, 4294901760
      %3984 = vmatpush.msra.mxu0 %v3983
      %v3985 = vand.u32 %v3919, 4294901760
      %v3986 = vsub.f32 %v3919, %v3985
      %v3987 = vand.u32 %v3986, 4294901760
      %v3988 = vsub.f32 %v3986, %v3987
      %v3989 = vand.u32 %v3988, 4294901760
      %3990 = vmatpush.msra.mxu0 %v3989
      %v3991 = vand.u32 %v3917, 4294901760
      %v3992 = vsub.f32 %v3917, %v3991
      %v3993 = vand.u32 %v3992, 4294901760
      %v3994 = vsub.f32 %v3992, %v3993
      %v3995 = vand.u32 %v3994, 4294901760
      %3996 = vmatpush.msra.mxu0 %v3995
      %v3997 = vand.u32 %v3928, 4294901760
      %3998 = vmatmul.f32.gmra.mxu0 %v3997
      %v3999 = vpop.f32.mrf.mxu0
      %v4000 = vadd.f32 %v3959, %v3999
      %4001 = vdwg.mxu0
      %4002 = vmatpush.msra.mxu0 0.0
      %4003 = vmatpush.msra.mxu0 0.0
      %4004 = vmatpush.msra.mxu0 0.0
      %4005 = vmatpush.msra.mxu0 0.0
      %4006 = vmatpush.msra.mxu0 0.0
      %4007 = vmatpush.msra.mxu0 0.0
      %4008 = vmatpush.msra.mxu0 0.0
      %4009 = vmatpush.msra.mxu0 0.0
      %4010 = vmatpush.msra.mxu0 0.0
      %4011 = vmatpush.msra.mxu0 0.0
      %4012 = vmatpush.msra.mxu0 0.0
      %4013 = vmatpush.msra.mxu0 0.0
      %v4014 = vand.u32 %v3930, 4294901760
      %v4015 = vsub.f32 %v3930, %v4014
      %4016 = vmatpush.msra.mxu0 %v4015
      %v4017 = vand.u32 %v3921, 4294901760
      %v4018 = vsub.f32 %v3921, %v4017
      %4019 = vmatpush.msra.mxu0 %v4018
      %v4020 = vand.u32 %v3919, 4294901760
      %v4021 = vsub.f32 %v3919, %v4020
      %4022 = vmatpush.msra.mxu0 %v4021
      %v4023 = vand.u32 %v3917, 4294901760
      %v4024 = vsub.f32 %v3917, %v4023
      %4025 = vmatpush.msra.mxu0 %v4024
      %v4026 = vand.u32 %v3928, 4294901760
      %v4027 = vsub.f32 %v3928, %v4026
      %4028 = vmatmul.f32.gmra.mxu0 %v4027
      %v4029 = vpop.f32.mrf.mxu0
      %v4030 = vadd.f32 %v4000, %v4029
      %4031 = vdwg.mxu0
      %4032 = vmatpush.msra.mxu0 0.0
      %4033 = vmatpush.msra.mxu0 0.0
      %4034 = vmatpush.msra.mxu0 0.0
      %4035 = vmatpush.msra.mxu0 0.0
      %4036 = vmatpush.msra.mxu0 0.0
      %4037 = vmatpush.msra.mxu0 0.0
      %4038 = vmatpush.msra.mxu0 0.0
      %4039 = vmatpush.msra.mxu0 0.0
      %4040 = vmatpush.msra.mxu0 0.0
      %4041 = vmatpush.msra.mxu0 0.0
      %4042 = vmatpush.msra.mxu0 0.0
      %4043 = vmatpush.msra.mxu0 0.0
      %v4044 = vand.u32 %v3930, 4294901760
      %4045 = vmatpush.msra.mxu0 %v4044
      %v4046 = vand.u32 %v3921, 4294901760
      %4047 = vmatpush.msra.mxu0 %v4046
      %v4048 = vand.u32 %v3919, 4294901760
      %4049 = vmatpush.msra.mxu0 %v4048
      %v4050 = vand.u32 %v3917, 4294901760
      %4051 = vmatpush.msra.mxu0 %v4050
      %v4052 = vand.u32 %v3928, 4294901760
      %v4053 = vsub.f32 %v3928, %v4052
      %v4054 = vand.u32 %v4053, 4294901760
      %4055 = vmatmul.f32.gmra.mxu0 %v4054
      %v4056 = vpop.f32.mrf.mxu0
      %v4057 = vadd.f32 %v4030, %v4056
      %4058 = vdwg.mxu0
      %4059 = vmatpush.msra.mxu0 0.0
      %4060 = vmatpush.msra.mxu0 0.0
      %4061 = vmatpush.msra.mxu0 0.0
      %4062 = vmatpush.msra.mxu0 0.0
      %4063 = vmatpush.msra.mxu0 0.0
      %4064 = vmatpush.msra.mxu0 0.0
      %4065 = vmatpush.msra.mxu0 0.0
      %4066 = vmatpush.msra.mxu0 0.0
      %4067 = vmatpush.msra.mxu0 0.0
      %4068 = vmatpush.msra.mxu0 0.0
      %4069 = vmatpush.msra.mxu0 0.0
      %4070 = vmatpush.msra.mxu0 0.0
      %v4071 = vand.u32 %v3930, 4294901760
      %v4072 = vsub.f32 %v3930, %v4071
      %v4073 = vand.u32 %v4072, 4294901760
      %4074 = vmatpush.msra.mxu0 %v4073
      %v4075 = vand.u32 %v3921, 4294901760
      %v4076 = vsub.f32 %v3921, %v4075
      %v4077 = vand.u32 %v4076, 4294901760
      %4078 = vmatpush.msra.mxu0 %v4077
      %v4079 = vand.u32 %v3919, 4294901760
      %v4080 = vsub.f32 %v3919, %v4079
      %v4081 = vand.u32 %v4080, 4294901760
      %4082 = vmatpush.msra.mxu0 %v4081
      %v4083 = vand.u32 %v3917, 4294901760
      %v4084 = vsub.f32 %v3917, %v4083
      %v4085 = vand.u32 %v4084, 4294901760
      %4086 = vmatpush.msra.mxu0 %v4085
      %v4087 = vand.u32 %v3928, 4294901760
      %4088 = vmatmul.f32.gmra.mxu0 %v4087
      %v4089 = vpop.f32.mrf.mxu0
      %v4090 = vadd.f32 %v4057, %v4089
      %4091 = vdwg.mxu0
      %4092 = vmatpush.msra.mxu0 0.0
      %4093 = vmatpush.msra.mxu0 0.0
      %4094 = vmatpush.msra.mxu0 0.0
      %4095 = vmatpush.msra.mxu0 0.0
      %4096 = vmatpush.msra.mxu0 0.0
      %4097 = vmatpush.msra.mxu0 0.0
      %4098 = vmatpush.msra.mxu0 0.0
      %4099 = vmatpush.msra.mxu0 0.0
      %4100 = vmatpush.msra.mxu0 0.0
      %4101 = vmatpush.msra.mxu0 0.0
      %4102 = vmatpush.msra.mxu0 0.0
      %4103 = vmatpush.msra.mxu0 0.0
      %v4104 = vand.u32 %v3930, 4294901760
      %4105 = vmatpush.msra.mxu0 %v4104
      %v4106 = vand.u32 %v3921, 4294901760
      %4107 = vmatpush.msra.mxu0 %v4106
      %v4108 = vand.u32 %v3919, 4294901760
      %4109 = vmatpush.msra.mxu0 %v4108
      %v4110 = vand.u32 %v3917, 4294901760
      %4111 = vmatpush.msra.mxu0 %v4110
      %v4112 = vand.u32 %v3928, 4294901760
      %4113 = vmatmul.f32.gmra.mxu0 %v4112
      %v4114 = vpop.f32.mrf.mxu0
      %v4115 = vadd.f32 %v4090, %v4114
      %4116 = vdwg.mxu0
      %v4117 = vadd.f32 %v3914, %v4115
      %v4118 = vld [vmem:[%s1252] sm:$0xf]
      %4119 = vrot.lane.b32.xlu0 %v3109, 88
      %v4120 = vpop.permute.xlu0 %4119
      %4121 = vrot.lane.b32.xlu0 %v3110, 88
      %v4122 = vpop.permute.xlu0 %4121
      %4123 = vrot.lane.b32.xlu0 %v3111, 88
      %v4124 = vpop.permute.xlu0 %4123
      %4125 = vrot.lane.b32.xlu0 %v3112, 88
      %v4126 = vpop.permute.xlu0 %4125
      %v4131 = vsel %vm258, %v4118, 0
      %v4133 = vsel %vm262, %v4126, 0
      %4135 = vmatpush.msra.mxu0 0.0
      %4136 = vmatpush.msra.mxu0 0.0
      %4137 = vmatpush.msra.mxu0 0.0
      %4138 = vmatpush.msra.mxu0 0.0
      %4139 = vmatpush.msra.mxu0 0.0
      %4140 = vmatpush.msra.mxu0 0.0
      %4141 = vmatpush.msra.mxu0 0.0
      %4142 = vmatpush.msra.mxu0 0.0
      %4143 = vmatpush.msra.mxu0 0.0
      %4144 = vmatpush.msra.mxu0 0.0
      %4145 = vmatpush.msra.mxu0 0.0
      %4146 = vmatpush.msra.mxu0 0.0
      %v4147 = vand.u32 %v4133, 4294901760
      %4148 = vmatpush.msra.mxu0 %v4147
      %v4149 = vand.u32 %v4124, 4294901760
      %4150 = vmatpush.msra.mxu0 %v4149
      %v4151 = vand.u32 %v4122, 4294901760
      %4152 = vmatpush.msra.mxu0 %v4151
      %v4153 = vand.u32 %v4120, 4294901760
      %4154 = vmatpush.msra.mxu0 %v4153
      %v4155 = vand.u32 %v4131, 4294901760
      %v4156 = vsub.f32 %v4131, %v4155
      %v4157 = vand.u32 %v4156, 4294901760
      %v4158 = vsub.f32 %v4156, %v4157
      %v4159 = vand.u32 %v4158, 4294901760
      %4160 = vmatmul.f32.gmra.mxu0 %v4159
      %v4161 = vpop.f32.mrf.mxu0
      %v4162 = vadd.f32 0.0, %v4161
      %4163 = vdwg.mxu0
      %4164 = vmatpush.msra.mxu0 0.0
      %4165 = vmatpush.msra.mxu0 0.0
      %4166 = vmatpush.msra.mxu0 0.0
      %4167 = vmatpush.msra.mxu0 0.0
      %4168 = vmatpush.msra.mxu0 0.0
      %4169 = vmatpush.msra.mxu0 0.0
      %4170 = vmatpush.msra.mxu0 0.0
      %4171 = vmatpush.msra.mxu0 0.0
      %4172 = vmatpush.msra.mxu0 0.0
      %4173 = vmatpush.msra.mxu0 0.0
      %4174 = vmatpush.msra.mxu0 0.0
      %4175 = vmatpush.msra.mxu0 0.0
      %v4176 = vand.u32 %v4133, 4294901760
      %v4177 = vsub.f32 %v4133, %v4176
      %v4178 = vand.u32 %v4177, 4294901760
      %v4179 = vsub.f32 %v4177, %v4178
      %v4180 = vand.u32 %v4179, 4294901760
      %4181 = vmatpush.msra.mxu0 %v4180
      %v4182 = vand.u32 %v4124, 4294901760
      %v4183 = vsub.f32 %v4124, %v4182
      %v4184 = vand.u32 %v4183, 4294901760
      %v4185 = vsub.f32 %v4183, %v4184
      %v4186 = vand.u32 %v4185, 4294901760
      %4187 = vmatpush.msra.mxu0 %v4186
      %v4188 = vand.u32 %v4122, 4294901760
      %v4189 = vsub.f32 %v4122, %v4188
      %v4190 = vand.u32 %v4189, 4294901760
      %v4191 = vsub.f32 %v4189, %v4190
      %v4192 = vand.u32 %v4191, 4294901760
      %4193 = vmatpush.msra.mxu0 %v4192
      %v4194 = vand.u32 %v4120, 4294901760
      %v4195 = vsub.f32 %v4120, %v4194
      %v4196 = vand.u32 %v4195, 4294901760
      %v4197 = vsub.f32 %v4195, %v4196
      %v4198 = vand.u32 %v4197, 4294901760
      %4199 = vmatpush.msra.mxu0 %v4198
      %v4200 = vand.u32 %v4131, 4294901760
      %4201 = vmatmul.f32.gmra.mxu0 %v4200
      %v4202 = vpop.f32.mrf.mxu0
      %v4203 = vadd.f32 %v4162, %v4202
      %4204 = vdwg.mxu0
      %4205 = vmatpush.msra.mxu0 0.0
      %4206 = vmatpush.msra.mxu0 0.0
      %4207 = vmatpush.msra.mxu0 0.0
      %4208 = vmatpush.msra.mxu0 0.0
      %4209 = vmatpush.msra.mxu0 0.0
      %4210 = vmatpush.msra.mxu0 0.0
      %4211 = vmatpush.msra.mxu0 0.0
      %4212 = vmatpush.msra.mxu0 0.0
      %4213 = vmatpush.msra.mxu0 0.0
      %4214 = vmatpush.msra.mxu0 0.0
      %4215 = vmatpush.msra.mxu0 0.0
      %4216 = vmatpush.msra.mxu0 0.0
      %v4217 = vand.u32 %v4133, 4294901760
      %v4218 = vsub.f32 %v4133, %v4217
      %4219 = vmatpush.msra.mxu0 %v4218
      %v4220 = vand.u32 %v4124, 4294901760
      %v4221 = vsub.f32 %v4124, %v4220
      %4222 = vmatpush.msra.mxu0 %v4221
      %v4223 = vand.u32 %v4122, 4294901760
      %v4224 = vsub.f32 %v4122, %v4223
      %4225 = vmatpush.msra.mxu0 %v4224
      %v4226 = vand.u32 %v4120, 4294901760
      %v4227 = vsub.f32 %v4120, %v4226
      %4228 = vmatpush.msra.mxu0 %v4227
      %v4229 = vand.u32 %v4131, 4294901760
      %v4230 = vsub.f32 %v4131, %v4229
      %4231 = vmatmul.f32.gmra.mxu0 %v4230
      %v4232 = vpop.f32.mrf.mxu0
      %v4233 = vadd.f32 %v4203, %v4232
      %4234 = vdwg.mxu0
      %4235 = vmatpush.msra.mxu0 0.0
      %4236 = vmatpush.msra.mxu0 0.0
      %4237 = vmatpush.msra.mxu0 0.0
      %4238 = vmatpush.msra.mxu0 0.0
      %4239 = vmatpush.msra.mxu0 0.0
      %4240 = vmatpush.msra.mxu0 0.0
      %4241 = vmatpush.msra.mxu0 0.0
      %4242 = vmatpush.msra.mxu0 0.0
      %4243 = vmatpush.msra.mxu0 0.0
      %4244 = vmatpush.msra.mxu0 0.0
      %4245 = vmatpush.msra.mxu0 0.0
      %4246 = vmatpush.msra.mxu0 0.0
      %v4247 = vand.u32 %v4133, 4294901760
      %4248 = vmatpush.msra.mxu0 %v4247
      %v4249 = vand.u32 %v4124, 4294901760
      %4250 = vmatpush.msra.mxu0 %v4249
      %v4251 = vand.u32 %v4122, 4294901760
      %4252 = vmatpush.msra.mxu0 %v4251
      %v4253 = vand.u32 %v4120, 4294901760
      %4254 = vmatpush.msra.mxu0 %v4253
      %v4255 = vand.u32 %v4131, 4294901760
      %v4256 = vsub.f32 %v4131, %v4255
      %v4257 = vand.u32 %v4256, 4294901760
      %4258 = vmatmul.f32.gmra.mxu0 %v4257
      %v4259 = vpop.f32.mrf.mxu0
      %v4260 = vadd.f32 %v4233, %v4259
      %4261 = vdwg.mxu0
      %4262 = vmatpush.msra.mxu0 0.0
      %4263 = vmatpush.msra.mxu0 0.0
      %4264 = vmatpush.msra.mxu0 0.0
      %4265 = vmatpush.msra.mxu0 0.0
      %4266 = vmatpush.msra.mxu0 0.0
      %4267 = vmatpush.msra.mxu0 0.0
      %4268 = vmatpush.msra.mxu0 0.0
      %4269 = vmatpush.msra.mxu0 0.0
      %4270 = vmatpush.msra.mxu0 0.0
      %4271 = vmatpush.msra.mxu0 0.0
      %4272 = vmatpush.msra.mxu0 0.0
      %4273 = vmatpush.msra.mxu0 0.0
      %v4274 = vand.u32 %v4133, 4294901760
      %v4275 = vsub.f32 %v4133, %v4274
      %v4276 = vand.u32 %v4275, 4294901760
      %4277 = vmatpush.msra.mxu0 %v4276
      %v4278 = vand.u32 %v4124, 4294901760
      %v4279 = vsub.f32 %v4124, %v4278
      %v4280 = vand.u32 %v4279, 4294901760
      %4281 = vmatpush.msra.mxu0 %v4280
      %v4282 = vand.u32 %v4122, 4294901760
      %v4283 = vsub.f32 %v4122, %v4282
      %v4284 = vand.u32 %v4283, 4294901760
      %4285 = vmatpush.msra.mxu0 %v4284
      %v4286 = vand.u32 %v4120, 4294901760
      %v4287 = vsub.f32 %v4120, %v4286
      %v4288 = vand.u32 %v4287, 4294901760
      %4289 = vmatpush.msra.mxu0 %v4288
      %v4290 = vand.u32 %v4131, 4294901760
      %4291 = vmatmul.f32.gmra.mxu0 %v4290
      %v4292 = vpop.f32.mrf.mxu0
      %v4293 = vadd.f32 %v4260, %v4292
      %4294 = vdwg.mxu0
      %4295 = vmatpush.msra.mxu0 0.0
      %4296 = vmatpush.msra.mxu0 0.0
      %4297 = vmatpush.msra.mxu0 0.0
      %4298 = vmatpush.msra.mxu0 0.0
      %4299 = vmatpush.msra.mxu0 0.0
      %4300 = vmatpush.msra.mxu0 0.0
      %4301 = vmatpush.msra.mxu0 0.0
      %4302 = vmatpush.msra.mxu0 0.0
      %4303 = vmatpush.msra.mxu0 0.0
      %4304 = vmatpush.msra.mxu0 0.0
      %4305 = vmatpush.msra.mxu0 0.0
      %4306 = vmatpush.msra.mxu0 0.0
      %v4307 = vand.u32 %v4133, 4294901760
      %4308 = vmatpush.msra.mxu0 %v4307
      %v4309 = vand.u32 %v4124, 4294901760
      %4310 = vmatpush.msra.mxu0 %v4309
      %v4311 = vand.u32 %v4122, 4294901760
      %4312 = vmatpush.msra.mxu0 %v4311
      %v4313 = vand.u32 %v4120, 4294901760
      %4314 = vmatpush.msra.mxu0 %v4313
      %v4315 = vand.u32 %v4131, 4294901760
      %4316 = vmatmul.f32.gmra.mxu0 %v4315
      %v4317 = vpop.f32.mrf.mxu0
      %v4318 = vadd.f32 %v4293, %v4317
      %4319 = vdwg.mxu0
      %v4320 = vadd.f32 %v4117, %v4318
      %v4321 = vld [vmem:[%s1456] sm:$0xf]
      %4322 = vrot.lane.b32.xlu0 %v3109, 80
      %v4323 = vpop.permute.xlu0 %4322
      %4324 = vrot.lane.b32.xlu0 %v3110, 80
      %v4325 = vpop.permute.xlu0 %4324
      %4326 = vrot.lane.b32.xlu0 %v3111, 80
      %v4327 = vpop.permute.xlu0 %4326
      %4328 = vrot.lane.b32.xlu0 %v3112, 80
      %v4329 = vpop.permute.xlu0 %4328
      %v4334 = vsel %vm258, %v4321, 0
      %v4336 = vsel %vm262, %v4329, 0
      %4338 = vmatpush.msra.mxu0 0.0
      %4339 = vmatpush.msra.mxu0 0.0
      %4340 = vmatpush.msra.mxu0 0.0
      %4341 = vmatpush.msra.mxu0 0.0
      %4342 = vmatpush.msra.mxu0 0.0
      %4343 = vmatpush.msra.mxu0 0.0
      %4344 = vmatpush.msra.mxu0 0.0
      %4345 = vmatpush.msra.mxu0 0.0
      %4346 = vmatpush.msra.mxu0 0.0
      %4347 = vmatpush.msra.mxu0 0.0
      %4348 = vmatpush.msra.mxu0 0.0
      %4349 = vmatpush.msra.mxu0 0.0
      %v4350 = vand.u32 %v4336, 4294901760
      %4351 = vmatpush.msra.mxu0 %v4350
      %v4352 = vand.u32 %v4327, 4294901760
      %4353 = vmatpush.msra.mxu0 %v4352
      %v4354 = vand.u32 %v4325, 4294901760
      %4355 = vmatpush.msra.mxu0 %v4354
      %v4356 = vand.u32 %v4323, 4294901760
      %4357 = vmatpush.msra.mxu0 %v4356
      %v4358 = vand.u32 %v4334, 4294901760
      %v4359 = vsub.f32 %v4334, %v4358
      %v4360 = vand.u32 %v4359, 4294901760
      %v4361 = vsub.f32 %v4359, %v4360
      %v4362 = vand.u32 %v4361, 4294901760
      %4363 = vmatmul.f32.gmra.mxu0 %v4362
      %v4364 = vpop.f32.mrf.mxu0
      %v4365 = vadd.f32 0.0, %v4364
      %4366 = vdwg.mxu0
      %4367 = vmatpush.msra.mxu0 0.0
      %4368 = vmatpush.msra.mxu0 0.0
      %4369 = vmatpush.msra.mxu0 0.0
      %4370 = vmatpush.msra.mxu0 0.0
      %4371 = vmatpush.msra.mxu0 0.0
      %4372 = vmatpush.msra.mxu0 0.0
      %4373 = vmatpush.msra.mxu0 0.0
      %4374 = vmatpush.msra.mxu0 0.0
      %4375 = vmatpush.msra.mxu0 0.0
      %4376 = vmatpush.msra.mxu0 0.0
      %4377 = vmatpush.msra.mxu0 0.0
      %4378 = vmatpush.msra.mxu0 0.0
      %v4379 = vand.u32 %v4336, 4294901760
      %v4380 = vsub.f32 %v4336, %v4379
      %v4381 = vand.u32 %v4380, 4294901760
      %v4382 = vsub.f32 %v4380, %v4381
      %v4383 = vand.u32 %v4382, 4294901760
      %4384 = vmatpush.msra.mxu0 %v4383
      %v4385 = vand.u32 %v4327, 4294901760
      %v4386 = vsub.f32 %v4327, %v4385
      %v4387 = vand.u32 %v4386, 4294901760
      %v4388 = vsub.f32 %v4386, %v4387
      %v4389 = vand.u32 %v4388, 4294901760
      %4390 = vmatpush.msra.mxu0 %v4389
      %v4391 = vand.u32 %v4325, 4294901760
      %v4392 = vsub.f32 %v4325, %v4391
      %v4393 = vand.u32 %v4392, 4294901760
      %v4394 = vsub.f32 %v4392, %v4393
      %v4395 = vand.u32 %v4394, 4294901760
      %4396 = vmatpush.msra.mxu0 %v4395
      %v4397 = vand.u32 %v4323, 4294901760
      %v4398 = vsub.f32 %v4323, %v4397
      %v4399 = vand.u32 %v4398, 4294901760
      %v4400 = vsub.f32 %v4398, %v4399
      %v4401 = vand.u32 %v4400, 4294901760
      %4402 = vmatpush.msra.mxu0 %v4401
      %v4403 = vand.u32 %v4334, 4294901760
      %4404 = vmatmul.f32.gmra.mxu0 %v4403
      %v4405 = vpop.f32.mrf.mxu0
      %v4406 = vadd.f32 %v4365, %v4405
      %4407 = vdwg.mxu0
      %4408 = vmatpush.msra.mxu0 0.0
      %4409 = vmatpush.msra.mxu0 0.0
      %4410 = vmatpush.msra.mxu0 0.0
      %4411 = vmatpush.msra.mxu0 0.0
      %4412 = vmatpush.msra.mxu0 0.0
      %4413 = vmatpush.msra.mxu0 0.0
      %4414 = vmatpush.msra.mxu0 0.0
      %4415 = vmatpush.msra.mxu0 0.0
      %4416 = vmatpush.msra.mxu0 0.0
      %4417 = vmatpush.msra.mxu0 0.0
      %4418 = vmatpush.msra.mxu0 0.0
      %4419 = vmatpush.msra.mxu0 0.0
      %v4420 = vand.u32 %v4336, 4294901760
      %v4421 = vsub.f32 %v4336, %v4420
      %4422 = vmatpush.msra.mxu0 %v4421
      %v4423 = vand.u32 %v4327, 4294901760
      %v4424 = vsub.f32 %v4327, %v4423
      %4425 = vmatpush.msra.mxu0 %v4424
      %v4426 = vand.u32 %v4325, 4294901760
      %v4427 = vsub.f32 %v4325, %v4426
      %4428 = vmatpush.msra.mxu0 %v4427
      %v4429 = vand.u32 %v4323, 4294901760
      %v4430 = vsub.f32 %v4323, %v4429
      %4431 = vmatpush.msra.mxu0 %v4430
      %v4432 = vand.u32 %v4334, 4294901760
      %v4433 = vsub.f32 %v4334, %v4432
      %4434 = vmatmul.f32.gmra.mxu0 %v4433
      %v4435 = vpop.f32.mrf.mxu0
      %v4436 = vadd.f32 %v4406, %v4435
      %4437 = vdwg.mxu0
      %4438 = vmatpush.msra.mxu0 0.0
      %4439 = vmatpush.msra.mxu0 0.0
      %4440 = vmatpush.msra.mxu0 0.0
      %4441 = vmatpush.msra.mxu0 0.0
      %4442 = vmatpush.msra.mxu0 0.0
      %4443 = vmatpush.msra.mxu0 0.0
      %4444 = vmatpush.msra.mxu0 0.0
      %4445 = vmatpush.msra.mxu0 0.0
      %4446 = vmatpush.msra.mxu0 0.0
      %4447 = vmatpush.msra.mxu0 0.0
      %4448 = vmatpush.msra.mxu0 0.0
      %4449 = vmatpush.msra.mxu0 0.0
      %v4450 = vand.u32 %v4336, 4294901760
      %4451 = vmatpush.msra.mxu0 %v4450
      %v4452 = vand.u32 %v4327, 4294901760
      %4453 = vmatpush.msra.mxu0 %v4452
      %v4454 = vand.u32 %v4325, 4294901760
      %4455 = vmatpush.msra.mxu0 %v4454
      %v4456 = vand.u32 %v4323, 4294901760
      %4457 = vmatpush.msra.mxu0 %v4456
      %v4458 = vand.u32 %v4334, 4294901760
      %v4459 = vsub.f32 %v4334, %v4458
      %v4460 = vand.u32 %v4459, 4294901760
      %4461 = vmatmul.f32.gmra.mxu0 %v4460
      %v4462 = vpop.f32.mrf.mxu0
      %v4463 = vadd.f32 %v4436, %v4462
      %4464 = vdwg.mxu0
      %4465 = vmatpush.msra.mxu0 0.0
      %4466 = vmatpush.msra.mxu0 0.0
      %4467 = vmatpush.msra.mxu0 0.0
      %4468 = vmatpush.msra.mxu0 0.0
      %4469 = vmatpush.msra.mxu0 0.0
      %4470 = vmatpush.msra.mxu0 0.0
      %4471 = vmatpush.msra.mxu0 0.0
      %4472 = vmatpush.msra.mxu0 0.0
      %4473 = vmatpush.msra.mxu0 0.0
      %4474 = vmatpush.msra.mxu0 0.0
      %4475 = vmatpush.msra.mxu0 0.0
      %4476 = vmatpush.msra.mxu0 0.0
      %v4477 = vand.u32 %v4336, 4294901760
      %v4478 = vsub.f32 %v4336, %v4477
      %v4479 = vand.u32 %v4478, 4294901760
      %4480 = vmatpush.msra.mxu0 %v4479
      %v4481 = vand.u32 %v4327, 4294901760
      %v4482 = vsub.f32 %v4327, %v4481
      %v4483 = vand.u32 %v4482, 4294901760
      %4484 = vmatpush.msra.mxu0 %v4483
      %v4485 = vand.u32 %v4325, 4294901760
      %v4486 = vsub.f32 %v4325, %v4485
      %v4487 = vand.u32 %v4486, 4294901760
      %4488 = vmatpush.msra.mxu0 %v4487
      %v4489 = vand.u32 %v4323, 4294901760
      %v4490 = vsub.f32 %v4323, %v4489
      %v4491 = vand.u32 %v4490, 4294901760
      %4492 = vmatpush.msra.mxu0 %v4491
      %v4493 = vand.u32 %v4334, 4294901760
      %4494 = vmatmul.f32.gmra.mxu0 %v4493
      %v4495 = vpop.f32.mrf.mxu0
      %v4496 = vadd.f32 %v4463, %v4495
      %4497 = vdwg.mxu0
      %4498 = vmatpush.msra.mxu0 0.0
      %4499 = vmatpush.msra.mxu0 0.0
      %4500 = vmatpush.msra.mxu0 0.0
      %4501 = vmatpush.msra.mxu0 0.0
      %4502 = vmatpush.msra.mxu0 0.0
      %4503 = vmatpush.msra.mxu0 0.0
      %4504 = vmatpush.msra.mxu0 0.0
      %4505 = vmatpush.msra.mxu0 0.0
      %4506 = vmatpush.msra.mxu0 0.0
      %4507 = vmatpush.msra.mxu0 0.0
      %4508 = vmatpush.msra.mxu0 0.0
      %4509 = vmatpush.msra.mxu0 0.0
      %v4510 = vand.u32 %v4336, 4294901760
      %4511 = vmatpush.msra.mxu0 %v4510
      %v4512 = vand.u32 %v4327, 4294901760
      %4513 = vmatpush.msra.mxu0 %v4512
      %v4514 = vand.u32 %v4325, 4294901760
      %4515 = vmatpush.msra.mxu0 %v4514
      %v4516 = vand.u32 %v4323, 4294901760
      %4517 = vmatpush.msra.mxu0 %v4516
      %v4518 = vand.u32 %v4334, 4294901760
      %4519 = vmatmul.f32.gmra.mxu0 %v4518
      %v4520 = vpop.f32.mrf.mxu0
      %v4521 = vadd.f32 %v4496, %v4520
      %4522 = vdwg.mxu0
      %v4523 = vadd.f32 %v4320, %v4521
      %v4524 = vld [vmem:[%s2] sm:$0xf]
      %4526 = vset.pattern.permute.xlu0 0
      %4527 = vperm.xlu0 %4526, %v4524
      %v4528 = vpop.permute.xlu0 %4527
      %v4530 = vadd.f32 %v4523, %v4528
      %vm4531 = vcmp.gt.f32.partialorder %v4530, 0.0
      %v4532 = vmin.f32 %v4530, 0.0
      %v4533 = vmul.f32 %v4532, 1.442695
      %v4534 = vpow.pop %v4533
      %v4535 = vsub.f32 %v4534, 1.0
      %v4536 = vsel %vm4531, %v4530, %v4535
      %s4537 = scalar_lea.vmem %s231, 8
      %4538 = vst.msk [vmem:[%s4537] sm:$0xf] %vm1673, %v4536
      %v4539 = vld [vmem:[%s1] sm:$0xf]
      %s4540 = scalar_lea.vmem %s226, 96
      %v4541 = vld [vmem:[%s4540] sm:$0xff]
      %v4542 = vld [vmem:[%s4540 + $0x8] sm:$0xff]
      %v4543 = vld [vmem:[%s4540 + $0x10] sm:$0xff]
      %v4544 = vld [vmem:[%s4540 + $0x18] sm:$0xf]
      %v4545 = vld [vmem:[%s241] sm:$0xf]
      %4550 = vrot.lane.b32.xlu0 %v4541, 120
      %v4551 = vpop.permute.xlu0 %4550
      %4552 = vrot.lane.b32.xlu0 %v4542, 120
      %v4553 = vpop.permute.xlu0 %4552
      %4554 = vrot.lane.b32.xlu0 %v4543, 120
      %v4555 = vpop.permute.xlu0 %4554
      %4556 = vrot.lane.b32.xlu0 %v4544, 120
      %v4557 = vpop.permute.xlu0 %4556
      %v4562 = vsel %vm258, %v4545, 0
      %v4564 = vsel %vm262, %v4557, 0
      %4566 = vmatpush.msra.mxu0 0.0
      %4567 = vmatpush.msra.mxu0 0.0
      %4568 = vmatpush.msra.mxu0 0.0
      %4569 = vmatpush.msra.mxu0 0.0
      %4570 = vmatpush.msra.mxu0 0.0
      %4571 = vmatpush.msra.mxu0 0.0
      %4572 = vmatpush.msra.mxu0 0.0
      %4573 = vmatpush.msra.mxu0 0.0
      %4574 = vmatpush.msra.mxu0 0.0
      %4575 = vmatpush.msra.mxu0 0.0
      %4576 = vmatpush.msra.mxu0 0.0
      %4577 = vmatpush.msra.mxu0 0.0
      %v4578 = vand.u32 %v4564, 4294901760
      %4579 = vmatpush.msra.mxu0 %v4578
      %v4580 = vand.u32 %v4555, 4294901760
      %4581 = vmatpush.msra.mxu0 %v4580
      %v4582 = vand.u32 %v4553, 4294901760
      %4583 = vmatpush.msra.mxu0 %v4582
      %v4584 = vand.u32 %v4551, 4294901760
      %4585 = vmatpush.msra.mxu0 %v4584
      %v4586 = vand.u32 %v4562, 4294901760
      %v4587 = vsub.f32 %v4562, %v4586
      %v4588 = vand.u32 %v4587, 4294901760
      %v4589 = vsub.f32 %v4587, %v4588
      %v4590 = vand.u32 %v4589, 4294901760
      %4591 = vmatmul.f32.gmra.mxu0 %v4590
      %v4592 = vpop.f32.mrf.mxu0
      %v4593 = vadd.f32 0.0, %v4592
      %4594 = vdwg.mxu0
      %4595 = vmatpush.msra.mxu0 0.0
      %4596 = vmatpush.msra.mxu0 0.0
      %4597 = vmatpush.msra.mxu0 0.0
      %4598 = vmatpush.msra.mxu0 0.0
      %4599 = vmatpush.msra.mxu0 0.0
      %4600 = vmatpush.msra.mxu0 0.0
      %4601 = vmatpush.msra.mxu0 0.0
      %4602 = vmatpush.msra.mxu0 0.0
      %4603 = vmatpush.msra.mxu0 0.0
      %4604 = vmatpush.msra.mxu0 0.0
      %4605 = vmatpush.msra.mxu0 0.0
      %4606 = vmatpush.msra.mxu0 0.0
      %v4607 = vand.u32 %v4564, 4294901760
      %v4608 = vsub.f32 %v4564, %v4607
      %v4609 = vand.u32 %v4608, 4294901760
      %v4610 = vsub.f32 %v4608, %v4609
      %v4611 = vand.u32 %v4610, 4294901760
      %4612 = vmatpush.msra.mxu0 %v4611
      %v4613 = vand.u32 %v4555, 4294901760
      %v4614 = vsub.f32 %v4555, %v4613
      %v4615 = vand.u32 %v4614, 4294901760
      %v4616 = vsub.f32 %v4614, %v4615
      %v4617 = vand.u32 %v4616, 4294901760
      %4618 = vmatpush.msra.mxu0 %v4617
      %v4619 = vand.u32 %v4553, 4294901760
      %v4620 = vsub.f32 %v4553, %v4619
      %v4621 = vand.u32 %v4620, 4294901760
      %v4622 = vsub.f32 %v4620, %v4621
      %v4623 = vand.u32 %v4622, 4294901760
      %4624 = vmatpush.msra.mxu0 %v4623
      %v4625 = vand.u32 %v4551, 4294901760
      %v4626 = vsub.f32 %v4551, %v4625
      %v4627 = vand.u32 %v4626, 4294901760
      %v4628 = vsub.f32 %v4626, %v4627
      %v4629 = vand.u32 %v4628, 4294901760
      %4630 = vmatpush.msra.mxu0 %v4629
      %v4631 = vand.u32 %v4562, 4294901760
      %4632 = vmatmul.f32.gmra.mxu0 %v4631
      %v4633 = vpop.f32.mrf.mxu0
      %v4634 = vadd.f32 %v4593, %v4633
      %4635 = vdwg.mxu0
      %4636 = vmatpush.msra.mxu0 0.0
      %4637 = vmatpush.msra.mxu0 0.0
      %4638 = vmatpush.msra.mxu0 0.0
      %4639 = vmatpush.msra.mxu0 0.0
      %4640 = vmatpush.msra.mxu0 0.0
      %4641 = vmatpush.msra.mxu0 0.0
      %4642 = vmatpush.msra.mxu0 0.0
      %4643 = vmatpush.msra.mxu0 0.0
      %4644 = vmatpush.msra.mxu0 0.0
      %4645 = vmatpush.msra.mxu0 0.0
      %4646 = vmatpush.msra.mxu0 0.0
      %4647 = vmatpush.msra.mxu0 0.0
      %v4648 = vand.u32 %v4564, 4294901760
      %v4649 = vsub.f32 %v4564, %v4648
      %4650 = vmatpush.msra.mxu0 %v4649
      %v4651 = vand.u32 %v4555, 4294901760
      %v4652 = vsub.f32 %v4555, %v4651
      %4653 = vmatpush.msra.mxu0 %v4652
      %v4654 = vand.u32 %v4553, 4294901760
      %v4655 = vsub.f32 %v4553, %v4654
      %4656 = vmatpush.msra.mxu0 %v4655
      %v4657 = vand.u32 %v4551, 4294901760
      %v4658 = vsub.f32 %v4551, %v4657
      %4659 = vmatpush.msra.mxu0 %v4658
      %v4660 = vand.u32 %v4562, 4294901760
      %v4661 = vsub.f32 %v4562, %v4660
      %4662 = vmatmul.f32.gmra.mxu0 %v4661
      %v4663 = vpop.f32.mrf.mxu0
      %v4664 = vadd.f32 %v4634, %v4663
      %4665 = vdwg.mxu0
      %4666 = vmatpush.msra.mxu0 0.0
      %4667 = vmatpush.msra.mxu0 0.0
      %4668 = vmatpush.msra.mxu0 0.0
      %4669 = vmatpush.msra.mxu0 0.0
      %4670 = vmatpush.msra.mxu0 0.0
      %4671 = vmatpush.msra.mxu0 0.0
      %4672 = vmatpush.msra.mxu0 0.0
      %4673 = vmatpush.msra.mxu0 0.0
      %4674 = vmatpush.msra.mxu0 0.0
      %4675 = vmatpush.msra.mxu0 0.0
      %4676 = vmatpush.msra.mxu0 0.0
      %4677 = vmatpush.msra.mxu0 0.0
      %v4678 = vand.u32 %v4564, 4294901760
      %4679 = vmatpush.msra.mxu0 %v4678
      %v4680 = vand.u32 %v4555, 4294901760
      %4681 = vmatpush.msra.mxu0 %v4680
      %v4682 = vand.u32 %v4553, 4294901760
      %4683 = vmatpush.msra.mxu0 %v4682
      %v4684 = vand.u32 %v4551, 4294901760
      %4685 = vmatpush.msra.mxu0 %v4684
      %v4686 = vand.u32 %v4562, 4294901760
      %v4687 = vsub.f32 %v4562, %v4686
      %v4688 = vand.u32 %v4687, 4294901760
      %4689 = vmatmul.f32.gmra.mxu0 %v4688
      %v4690 = vpop.f32.mrf.mxu0
      %v4691 = vadd.f32 %v4664, %v4690
      %4692 = vdwg.mxu0
      %4693 = vmatpush.msra.mxu0 0.0
      %4694 = vmatpush.msra.mxu0 0.0
      %4695 = vmatpush.msra.mxu0 0.0
      %4696 = vmatpush.msra.mxu0 0.0
      %4697 = vmatpush.msra.mxu0 0.0
      %4698 = vmatpush.msra.mxu0 0.0
      %4699 = vmatpush.msra.mxu0 0.0
      %4700 = vmatpush.msra.mxu0 0.0
      %4701 = vmatpush.msra.mxu0 0.0
      %4702 = vmatpush.msra.mxu0 0.0
      %4703 = vmatpush.msra.mxu0 0.0
      %4704 = vmatpush.msra.mxu0 0.0
      %v4705 = vand.u32 %v4564, 4294901760
      %v4706 = vsub.f32 %v4564, %v4705
      %v4707 = vand.u32 %v4706, 4294901760
      %4708 = vmatpush.msra.mxu0 %v4707
      %v4709 = vand.u32 %v4555, 4294901760
      %v4710 = vsub.f32 %v4555, %v4709
      %v4711 = vand.u32 %v4710, 4294901760
      %4712 = vmatpush.msra.mxu0 %v4711
      %v4713 = vand.u32 %v4553, 4294901760
      %v4714 = vsub.f32 %v4553, %v4713
      %v4715 = vand.u32 %v4714, 4294901760
      %4716 = vmatpush.msra.mxu0 %v4715
      %v4717 = vand.u32 %v4551, 4294901760
      %v4718 = vsub.f32 %v4551, %v4717
      %v4719 = vand.u32 %v4718, 4294901760
      %4720 = vmatpush.msra.mxu0 %v4719
      %v4721 = vand.u32 %v4562, 4294901760
      %4722 = vmatmul.f32.gmra.mxu0 %v4721
      %v4723 = vpop.f32.mrf.mxu0
      %v4724 = vadd.f32 %v4691, %v4723
      %4725 = vdwg.mxu0
      %4726 = vmatpush.msra.mxu0 0.0
      %4727 = vmatpush.msra.mxu0 0.0
      %4728 = vmatpush.msra.mxu0 0.0
      %4729 = vmatpush.msra.mxu0 0.0
      %4730 = vmatpush.msra.mxu0 0.0
      %4731 = vmatpush.msra.mxu0 0.0
      %4732 = vmatpush.msra.mxu0 0.0
      %4733 = vmatpush.msra.mxu0 0.0
      %4734 = vmatpush.msra.mxu0 0.0
      %4735 = vmatpush.msra.mxu0 0.0
      %4736 = vmatpush.msra.mxu0 0.0
      %4737 = vmatpush.msra.mxu0 0.0
      %v4738 = vand.u32 %v4564, 4294901760
      %4739 = vmatpush.msra.mxu0 %v4738
      %v4740 = vand.u32 %v4555, 4294901760
      %4741 = vmatpush.msra.mxu0 %v4740
      %v4742 = vand.u32 %v4553, 4294901760
      %4743 = vmatpush.msra.mxu0 %v4742
      %v4744 = vand.u32 %v4551, 4294901760
      %4745 = vmatpush.msra.mxu0 %v4744
      %v4746 = vand.u32 %v4562, 4294901760
      %4747 = vmatmul.f32.gmra.mxu0 %v4746
      %v4748 = vpop.f32.mrf.mxu0
      %v4749 = vadd.f32 %v4724, %v4748
      %4750 = vdwg.mxu0
      %v4752 = vsel %vm258, %v4539, 0
      %v4754 = vsel %vm262, %v4544, 0
      %4756 = vmatpush.msra.mxu0 0.0
      %4757 = vmatpush.msra.mxu0 0.0
      %4758 = vmatpush.msra.mxu0 0.0
      %4759 = vmatpush.msra.mxu0 0.0
      %4760 = vmatpush.msra.mxu0 0.0
      %4761 = vmatpush.msra.mxu0 0.0
      %4762 = vmatpush.msra.mxu0 0.0
      %4763 = vmatpush.msra.mxu0 0.0
      %4764 = vmatpush.msra.mxu0 0.0
      %4765 = vmatpush.msra.mxu0 0.0
      %4766 = vmatpush.msra.mxu0 0.0
      %4767 = vmatpush.msra.mxu0 0.0
      %v4768 = vand.u32 %v4754, 4294901760
      %4769 = vmatpush.msra.mxu0 %v4768
      %v4770 = vand.u32 %v4543, 4294901760
      %4771 = vmatpush.msra.mxu0 %v4770
      %v4772 = vand.u32 %v4542, 4294901760
      %4773 = vmatpush.msra.mxu0 %v4772
      %v4774 = vand.u32 %v4541, 4294901760
      %4775 = vmatpush.msra.mxu0 %v4774
      %v4776 = vand.u32 %v4752, 4294901760
      %v4777 = vsub.f32 %v4752, %v4776
      %v4778 = vand.u32 %v4777, 4294901760
      %v4779 = vsub.f32 %v4777, %v4778
      %v4780 = vand.u32 %v4779, 4294901760
      %4781 = vmatmul.f32.gmra.mxu0 %v4780
      %v4782 = vpop.f32.mrf.mxu0
      %v4783 = vadd.f32 %v4749, %v4782
      %4784 = vdwg.mxu0
      %4785 = vmatpush.msra.mxu0 0.0
      %4786 = vmatpush.msra.mxu0 0.0
      %4787 = vmatpush.msra.mxu0 0.0
      %4788 = vmatpush.msra.mxu0 0.0
      %4789 = vmatpush.msra.mxu0 0.0
      %4790 = vmatpush.msra.mxu0 0.0
      %4791 = vmatpush.msra.mxu0 0.0
      %4792 = vmatpush.msra.mxu0 0.0
      %4793 = vmatpush.msra.mxu0 0.0
      %4794 = vmatpush.msra.mxu0 0.0
      %4795 = vmatpush.msra.mxu0 0.0
      %4796 = vmatpush.msra.mxu0 0.0
      %v4797 = vand.u32 %v4754, 4294901760
      %v4798 = vsub.f32 %v4754, %v4797
      %v4799 = vand.u32 %v4798, 4294901760
      %v4800 = vsub.f32 %v4798, %v4799
      %v4801 = vand.u32 %v4800, 4294901760
      %4802 = vmatpush.msra.mxu0 %v4801
      %v4803 = vand.u32 %v4543, 4294901760
      %v4804 = vsub.f32 %v4543, %v4803
      %v4805 = vand.u32 %v4804, 4294901760
      %v4806 = vsub.f32 %v4804, %v4805
      %v4807 = vand.u32 %v4806, 4294901760
      %4808 = vmatpush.msra.mxu0 %v4807
      %v4809 = vand.u32 %v4542, 4294901760
      %v4810 = vsub.f32 %v4542, %v4809
      %v4811 = vand.u32 %v4810, 4294901760
      %v4812 = vsub.f32 %v4810, %v4811
      %v4813 = vand.u32 %v4812, 4294901760
      %4814 = vmatpush.msra.mxu0 %v4813
      %v4815 = vand.u32 %v4541, 4294901760
      %v4816 = vsub.f32 %v4541, %v4815
      %v4817 = vand.u32 %v4816, 4294901760
      %v4818 = vsub.f32 %v4816, %v4817
      %v4819 = vand.u32 %v4818, 4294901760
      %4820 = vmatpush.msra.mxu0 %v4819
      %v4821 = vand.u32 %v4752, 4294901760
      %4822 = vmatmul.f32.gmra.mxu0 %v4821
      %v4823 = vpop.f32.mrf.mxu0
      %v4824 = vadd.f32 %v4783, %v4823
      %4825 = vdwg.mxu0
      %4826 = vmatpush.msra.mxu0 0.0
      %4827 = vmatpush.msra.mxu0 0.0
      %4828 = vmatpush.msra.mxu0 0.0
      %4829 = vmatpush.msra.mxu0 0.0
      %4830 = vmatpush.msra.mxu0 0.0
      %4831 = vmatpush.msra.mxu0 0.0
      %4832 = vmatpush.msra.mxu0 0.0
      %4833 = vmatpush.msra.mxu0 0.0
      %4834 = vmatpush.msra.mxu0 0.0
      %4835 = vmatpush.msra.mxu0 0.0
      %4836 = vmatpush.msra.mxu0 0.0
      %4837 = vmatpush.msra.mxu0 0.0
      %v4838 = vand.u32 %v4754, 4294901760
      %v4839 = vsub.f32 %v4754, %v4838
      %4840 = vmatpush.msra.mxu0 %v4839
      %v4841 = vand.u32 %v4543, 4294901760
      %v4842 = vsub.f32 %v4543, %v4841
      %4843 = vmatpush.msra.mxu0 %v4842
      %v4844 = vand.u32 %v4542, 4294901760
      %v4845 = vsub.f32 %v4542, %v4844
      %4846 = vmatpush.msra.mxu0 %v4845
      %v4847 = vand.u32 %v4541, 4294901760
      %v4848 = vsub.f32 %v4541, %v4847
      %4849 = vmatpush.msra.mxu0 %v4848
      %v4850 = vand.u32 %v4752, 4294901760
      %v4851 = vsub.f32 %v4752, %v4850
      %4852 = vmatmul.f32.gmra.mxu0 %v4851
      %v4853 = vpop.f32.mrf.mxu0
      %v4854 = vadd.f32 %v4824, %v4853
      %4855 = vdwg.mxu0
      %4856 = vmatpush.msra.mxu0 0.0
      %4857 = vmatpush.msra.mxu0 0.0
      %4858 = vmatpush.msra.mxu0 0.0
      %4859 = vmatpush.msra.mxu0 0.0
      %4860 = vmatpush.msra.mxu0 0.0
      %4861 = vmatpush.msra.mxu0 0.0
      %4862 = vmatpush.msra.mxu0 0.0
      %4863 = vmatpush.msra.mxu0 0.0
      %4864 = vmatpush.msra.mxu0 0.0
      %4865 = vmatpush.msra.mxu0 0.0
      %4866 = vmatpush.msra.mxu0 0.0
      %4867 = vmatpush.msra.mxu0 0.0
      %v4868 = vand.u32 %v4754, 4294901760
      %4869 = vmatpush.msra.mxu0 %v4868
      %v4870 = vand.u32 %v4543, 4294901760
      %4871 = vmatpush.msra.mxu0 %v4870
      %v4872 = vand.u32 %v4542, 4294901760
      %4873 = vmatpush.msra.mxu0 %v4872
      %v4874 = vand.u32 %v4541, 4294901760
      %4875 = vmatpush.msra.mxu0 %v4874
      %v4876 = vand.u32 %v4752, 4294901760
      %v4877 = vsub.f32 %v4752, %v4876
      %v4878 = vand.u32 %v4877, 4294901760
      %4879 = vmatmul.f32.gmra.mxu0 %v4878
      %v4880 = vpop.f32.mrf.mxu0
      %v4881 = vadd.f32 %v4854, %v4880
      %4882 = vdwg.mxu0
      %4883 = vmatpush.msra.mxu0 0.0
      %4884 = vmatpush.msra.mxu0 0.0
      %4885 = vmatpush.msra.mxu0 0.0
      %4886 = vmatpush.msra.mxu0 0.0
      %4887 = vmatpush.msra.mxu0 0.0
      %4888 = vmatpush.msra.mxu0 0.0
      %4889 = vmatpush.msra.mxu0 0.0
      %4890 = vmatpush.msra.mxu0 0.0
      %4891 = vmatpush.msra.mxu0 0.0
      %4892 = vmatpush.msra.mxu0 0.0
      %4893 = vmatpush.msra.mxu0 0.0
      %4894 = vmatpush.msra.mxu0 0.0
      %v4895 = vand.u32 %v4754, 4294901760
      %v4896 = vsub.f32 %v4754, %v4895
      %v4897 = vand.u32 %v4896, 4294901760
      %4898 = vmatpush.msra.mxu0 %v4897
      %v4899 = vand.u32 %v4543, 4294901760
      %v4900 = vsub.f32 %v4543, %v4899
      %v4901 = vand.u32 %v4900, 4294901760
      %4902 = vmatpush.msra.mxu0 %v4901
      %v4903 = vand.u32 %v4542, 4294901760
      %v4904 = vsub.f32 %v4542, %v4903
      %v4905 = vand.u32 %v4904, 4294901760
      %4906 = vmatpush.msra.mxu0 %v4905
      %v4907 = vand.u32 %v4541, 4294901760
      %v4908 = vsub.f32 %v4541, %v4907
      %v4909 = vand.u32 %v4908, 4294901760
      %4910 = vmatpush.msra.mxu0 %v4909
      %v4911 = vand.u32 %v4752, 4294901760
      %4912 = vmatmul.f32.gmra.mxu0 %v4911
      %v4913 = vpop.f32.mrf.mxu0
      %v4914 = vadd.f32 %v4881, %v4913
      %4915 = vdwg.mxu0
      %4916 = vmatpush.msra.mxu0 0.0
      %4917 = vmatpush.msra.mxu0 0.0
      %4918 = vmatpush.msra.mxu0 0.0
      %4919 = vmatpush.msra.mxu0 0.0
      %4920 = vmatpush.msra.mxu0 0.0
      %4921 = vmatpush.msra.mxu0 0.0
      %4922 = vmatpush.msra.mxu0 0.0
      %4923 = vmatpush.msra.mxu0 0.0
      %4924 = vmatpush.msra.mxu0 0.0
      %4925 = vmatpush.msra.mxu0 0.0
      %4926 = vmatpush.msra.mxu0 0.0
      %4927 = vmatpush.msra.mxu0 0.0
      %v4928 = vand.u32 %v4754, 4294901760
      %4929 = vmatpush.msra.mxu0 %v4928
      %v4930 = vand.u32 %v4543, 4294901760
      %4931 = vmatpush.msra.mxu0 %v4930
      %v4932 = vand.u32 %v4542, 4294901760
      %4933 = vmatpush.msra.mxu0 %v4932
      %v4934 = vand.u32 %v4541, 4294901760
      %4935 = vmatpush.msra.mxu0 %v4934
      %v4936 = vand.u32 %v4752, 4294901760
      %4937 = vmatmul.f32.gmra.mxu0 %v4936
      %v4938 = vpop.f32.mrf.mxu0
      %v4939 = vadd.f32 %v4914, %v4938
      %4940 = vdwg.mxu0
      %v4941 = vld [vmem:[%s640] sm:$0xf]
      %4942 = vrot.lane.b32.xlu0 %v4541, 112
      %v4943 = vpop.permute.xlu0 %4942
      %4944 = vrot.lane.b32.xlu0 %v4542, 112
      %v4945 = vpop.permute.xlu0 %4944
      %4946 = vrot.lane.b32.xlu0 %v4543, 112
      %v4947 = vpop.permute.xlu0 %4946
      %4948 = vrot.lane.b32.xlu0 %v4544, 112
      %v4949 = vpop.permute.xlu0 %4948
      %v4954 = vsel %vm258, %v4941, 0
      %v4956 = vsel %vm262, %v4949, 0
      %4958 = vmatpush.msra.mxu0 0.0
      %4959 = vmatpush.msra.mxu0 0.0
      %4960 = vmatpush.msra.mxu0 0.0
      %4961 = vmatpush.msra.mxu0 0.0
      %4962 = vmatpush.msra.mxu0 0.0
      %4963 = vmatpush.msra.mxu0 0.0
      %4964 = vmatpush.msra.mxu0 0.0
      %4965 = vmatpush.msra.mxu0 0.0
      %4966 = vmatpush.msra.mxu0 0.0
      %4967 = vmatpush.msra.mxu0 0.0
      %4968 = vmatpush.msra.mxu0 0.0
      %4969 = vmatpush.msra.mxu0 0.0
      %v4970 = vand.u32 %v4956, 4294901760
      %4971 = vmatpush.msra.mxu0 %v4970
      %v4972 = vand.u32 %v4947, 4294901760
      %4973 = vmatpush.msra.mxu0 %v4972
      %v4974 = vand.u32 %v4945, 4294901760
      %4975 = vmatpush.msra.mxu0 %v4974
      %v4976 = vand.u32 %v4943, 4294901760
      %4977 = vmatpush.msra.mxu0 %v4976
      %v4978 = vand.u32 %v4954, 4294901760
      %v4979 = vsub.f32 %v4954, %v4978
      %v4980 = vand.u32 %v4979, 4294901760
      %v4981 = vsub.f32 %v4979, %v4980
      %v4982 = vand.u32 %v4981, 4294901760
      %4983 = vmatmul.f32.gmra.mxu0 %v4982
      %v4984 = vpop.f32.mrf.mxu0
      %v4985 = vadd.f32 0.0, %v4984
      %4986 = vdwg.mxu0
      %4987 = vmatpush.msra.mxu0 0.0
      %4988 = vmatpush.msra.mxu0 0.0
      %4989 = vmatpush.msra.mxu0 0.0
      %4990 = vmatpush.msra.mxu0 0.0
      %4991 = vmatpush.msra.mxu0 0.0
      %4992 = vmatpush.msra.mxu0 0.0
      %4993 = vmatpush.msra.mxu0 0.0
      %4994 = vmatpush.msra.mxu0 0.0
      %4995 = vmatpush.msra.mxu0 0.0
      %4996 = vmatpush.msra.mxu0 0.0
      %4997 = vmatpush.msra.mxu0 0.0
      %4998 = vmatpush.msra.mxu0 0.0
      %v4999 = vand.u32 %v4956, 4294901760
      %v5000 = vsub.f32 %v4956, %v4999
      %v5001 = vand.u32 %v5000, 4294901760
      %v5002 = vsub.f32 %v5000, %v5001
      %v5003 = vand.u32 %v5002, 4294901760
      %5004 = vmatpush.msra.mxu0 %v5003
      %v5005 = vand.u32 %v4947, 4294901760
      %v5006 = vsub.f32 %v4947, %v5005
      %v5007 = vand.u32 %v5006, 4294901760
      %v5008 = vsub.f32 %v5006, %v5007
      %v5009 = vand.u32 %v5008, 4294901760
      %5010 = vmatpush.msra.mxu0 %v5009
      %v5011 = vand.u32 %v4945, 4294901760
      %v5012 = vsub.f32 %v4945, %v5011
      %v5013 = vand.u32 %v5012, 4294901760
      %v5014 = vsub.f32 %v5012, %v5013
      %v5015 = vand.u32 %v5014, 4294901760
      %5016 = vmatpush.msra.mxu0 %v5015
      %v5017 = vand.u32 %v4943, 4294901760
      %v5018 = vsub.f32 %v4943, %v5017
      %v5019 = vand.u32 %v5018, 4294901760
      %v5020 = vsub.f32 %v5018, %v5019
      %v5021 = vand.u32 %v5020, 4294901760
      %5022 = vmatpush.msra.mxu0 %v5021
      %v5023 = vand.u32 %v4954, 4294901760
      %5024 = vmatmul.f32.gmra.mxu0 %v5023
      %v5025 = vpop.f32.mrf.mxu0
      %v5026 = vadd.f32 %v4985, %v5025
      %5027 = vdwg.mxu0
      %5028 = vmatpush.msra.mxu0 0.0
      %5029 = vmatpush.msra.mxu0 0.0
      %5030 = vmatpush.msra.mxu0 0.0
      %5031 = vmatpush.msra.mxu0 0.0
      %5032 = vmatpush.msra.mxu0 0.0
      %5033 = vmatpush.msra.mxu0 0.0
      %5034 = vmatpush.msra.mxu0 0.0
      %5035 = vmatpush.msra.mxu0 0.0
      %5036 = vmatpush.msra.mxu0 0.0
      %5037 = vmatpush.msra.mxu0 0.0
      %5038 = vmatpush.msra.mxu0 0.0
      %5039 = vmatpush.msra.mxu0 0.0
      %v5040 = vand.u32 %v4956, 4294901760
      %v5041 = vsub.f32 %v4956, %v5040
      %5042 = vmatpush.msra.mxu0 %v5041
      %v5043 = vand.u32 %v4947, 4294901760
      %v5044 = vsub.f32 %v4947, %v5043
      %5045 = vmatpush.msra.mxu0 %v5044
      %v5046 = vand.u32 %v4945, 4294901760
      %v5047 = vsub.f32 %v4945, %v5046
      %5048 = vmatpush.msra.mxu0 %v5047
      %v5049 = vand.u32 %v4943, 4294901760
      %v5050 = vsub.f32 %v4943, %v5049
      %5051 = vmatpush.msra.mxu0 %v5050
      %v5052 = vand.u32 %v4954, 4294901760
      %v5053 = vsub.f32 %v4954, %v5052
      %5054 = vmatmul.f32.gmra.mxu0 %v5053
      %v5055 = vpop.f32.mrf.mxu0
      %v5056 = vadd.f32 %v5026, %v5055
      %5057 = vdwg.mxu0
      %5058 = vmatpush.msra.mxu0 0.0
      %5059 = vmatpush.msra.mxu0 0.0
      %5060 = vmatpush.msra.mxu0 0.0
      %5061 = vmatpush.msra.mxu0 0.0
      %5062 = vmatpush.msra.mxu0 0.0
      %5063 = vmatpush.msra.mxu0 0.0
      %5064 = vmatpush.msra.mxu0 0.0
      %5065 = vmatpush.msra.mxu0 0.0
      %5066 = vmatpush.msra.mxu0 0.0
      %5067 = vmatpush.msra.mxu0 0.0
      %5068 = vmatpush.msra.mxu0 0.0
      %5069 = vmatpush.msra.mxu0 0.0
      %v5070 = vand.u32 %v4956, 4294901760
      %5071 = vmatpush.msra.mxu0 %v5070
      %v5072 = vand.u32 %v4947, 4294901760
      %5073 = vmatpush.msra.mxu0 %v5072
      %v5074 = vand.u32 %v4945, 4294901760
      %5075 = vmatpush.msra.mxu0 %v5074
      %v5076 = vand.u32 %v4943, 4294901760
      %5077 = vmatpush.msra.mxu0 %v5076
      %v5078 = vand.u32 %v4954, 4294901760
      %v5079 = vsub.f32 %v4954, %v5078
      %v5080 = vand.u32 %v5079, 4294901760
      %5081 = vmatmul.f32.gmra.mxu0 %v5080
      %v5082 = vpop.f32.mrf.mxu0
      %v5083 = vadd.f32 %v5056, %v5082
      %5084 = vdwg.mxu0
      %5085 = vmatpush.msra.mxu0 0.0
      %5086 = vmatpush.msra.mxu0 0.0
      %5087 = vmatpush.msra.mxu0 0.0
      %5088 = vmatpush.msra.mxu0 0.0
      %5089 = vmatpush.msra.mxu0 0.0
      %5090 = vmatpush.msra.mxu0 0.0
      %5091 = vmatpush.msra.mxu0 0.0
      %5092 = vmatpush.msra.mxu0 0.0
      %5093 = vmatpush.msra.mxu0 0.0
      %5094 = vmatpush.msra.mxu0 0.0
      %5095 = vmatpush.msra.mxu0 0.0
      %5096 = vmatpush.msra.mxu0 0.0
      %v5097 = vand.u32 %v4956, 4294901760
      %v5098 = vsub.f32 %v4956, %v5097
      %v5099 = vand.u32 %v5098, 4294901760
      %5100 = vmatpush.msra.mxu0 %v5099
      %v5101 = vand.u32 %v4947, 4294901760
      %v5102 = vsub.f32 %v4947, %v5101
      %v5103 = vand.u32 %v5102, 4294901760
      %5104 = vmatpush.msra.mxu0 %v5103
      %v5105 = vand.u32 %v4945, 4294901760
      %v5106 = vsub.f32 %v4945, %v5105
      %v5107 = vand.u32 %v5106, 4294901760
      %5108 = vmatpush.msra.mxu0 %v5107
      %v5109 = vand.u32 %v4943, 4294901760
      %v5110 = vsub.f32 %v4943, %v5109
      %v5111 = vand.u32 %v5110, 4294901760
      %5112 = vmatpush.msra.mxu0 %v5111
      %v5113 = vand.u32 %v4954, 4294901760
      %5114 = vmatmul.f32.gmra.mxu0 %v5113
      %v5115 = vpop.f32.mrf.mxu0
      %v5116 = vadd.f32 %v5083, %v5115
      %5117 = vdwg.mxu0
      %5118 = vmatpush.msra.mxu0 0.0
      %5119 = vmatpush.msra.mxu0 0.0
      %5120 = vmatpush.msra.mxu0 0.0
      %5121 = vmatpush.msra.mxu0 0.0
      %5122 = vmatpush.msra.mxu0 0.0
      %5123 = vmatpush.msra.mxu0 0.0
      %5124 = vmatpush.msra.mxu0 0.0
      %5125 = vmatpush.msra.mxu0 0.0
      %5126 = vmatpush.msra.mxu0 0.0
      %5127 = vmatpush.msra.mxu0 0.0
      %5128 = vmatpush.msra.mxu0 0.0
      %5129 = vmatpush.msra.mxu0 0.0
      %v5130 = vand.u32 %v4956, 4294901760
      %5131 = vmatpush.msra.mxu0 %v5130
      %v5132 = vand.u32 %v4947, 4294901760
      %5133 = vmatpush.msra.mxu0 %v5132
      %v5134 = vand.u32 %v4945, 4294901760
      %5135 = vmatpush.msra.mxu0 %v5134
      %v5136 = vand.u32 %v4943, 4294901760
      %5137 = vmatpush.msra.mxu0 %v5136
      %v5138 = vand.u32 %v4954, 4294901760
      %5139 = vmatmul.f32.gmra.mxu0 %v5138
      %v5140 = vpop.f32.mrf.mxu0
      %v5141 = vadd.f32 %v5116, %v5140
      %5142 = vdwg.mxu0
      %v5143 = vadd.f32 %v4939, %v5141
      %v5144 = vld [vmem:[%s844] sm:$0xf]
      %5145 = vrot.lane.b32.xlu0 %v4541, 104
      %v5146 = vpop.permute.xlu0 %5145
      %5147 = vrot.lane.b32.xlu0 %v4542, 104
      %v5148 = vpop.permute.xlu0 %5147
      %5149 = vrot.lane.b32.xlu0 %v4543, 104
      %v5150 = vpop.permute.xlu0 %5149
      %5151 = vrot.lane.b32.xlu0 %v4544, 104
      %v5152 = vpop.permute.xlu0 %5151
      %v5157 = vsel %vm258, %v5144, 0
      %v5159 = vsel %vm262, %v5152, 0
      %5161 = vmatpush.msra.mxu0 0.0
      %5162 = vmatpush.msra.mxu0 0.0
      %5163 = vmatpush.msra.mxu0 0.0
      %5164 = vmatpush.msra.mxu0 0.0
      %5165 = vmatpush.msra.mxu0 0.0
      %5166 = vmatpush.msra.mxu0 0.0
      %5167 = vmatpush.msra.mxu0 0.0
      %5168 = vmatpush.msra.mxu0 0.0
      %5169 = vmatpush.msra.mxu0 0.0
      %5170 = vmatpush.msra.mxu0 0.0
      %5171 = vmatpush.msra.mxu0 0.0
      %5172 = vmatpush.msra.mxu0 0.0
      %v5173 = vand.u32 %v5159, 4294901760
      %5174 = vmatpush.msra.mxu0 %v5173
      %v5175 = vand.u32 %v5150, 4294901760
      %5176 = vmatpush.msra.mxu0 %v5175
      %v5177 = vand.u32 %v5148, 4294901760
      %5178 = vmatpush.msra.mxu0 %v5177
      %v5179 = vand.u32 %v5146, 4294901760
      %5180 = vmatpush.msra.mxu0 %v5179
      %v5181 = vand.u32 %v5157, 4294901760
      %v5182 = vsub.f32 %v5157, %v5181
      %v5183 = vand.u32 %v5182, 4294901760
      %v5184 = vsub.f32 %v5182, %v5183
      %v5185 = vand.u32 %v5184, 4294901760
      %5186 = vmatmul.f32.gmra.mxu0 %v5185
      %v5187 = vpop.f32.mrf.mxu0
      %v5188 = vadd.f32 0.0, %v5187
      %5189 = vdwg.mxu0
      %5190 = vmatpush.msra.mxu0 0.0
      %5191 = vmatpush.msra.mxu0 0.0
      %5192 = vmatpush.msra.mxu0 0.0
      %5193 = vmatpush.msra.mxu0 0.0
      %5194 = vmatpush.msra.mxu0 0.0
      %5195 = vmatpush.msra.mxu0 0.0
      %5196 = vmatpush.msra.mxu0 0.0
      %5197 = vmatpush.msra.mxu0 0.0
      %5198 = vmatpush.msra.mxu0 0.0
      %5199 = vmatpush.msra.mxu0 0.0
      %5200 = vmatpush.msra.mxu0 0.0
      %5201 = vmatpush.msra.mxu0 0.0
      %v5202 = vand.u32 %v5159, 4294901760
      %v5203 = vsub.f32 %v5159, %v5202
      %v5204 = vand.u32 %v5203, 4294901760
      %v5205 = vsub.f32 %v5203, %v5204
      %v5206 = vand.u32 %v5205, 4294901760
      %5207 = vmatpush.msra.mxu0 %v5206
      %v5208 = vand.u32 %v5150, 4294901760
      %v5209 = vsub.f32 %v5150, %v5208
      %v5210 = vand.u32 %v5209, 4294901760
      %v5211 = vsub.f32 %v5209, %v5210
      %v5212 = vand.u32 %v5211, 4294901760
      %5213 = vmatpush.msra.mxu0 %v5212
      %v5214 = vand.u32 %v5148, 4294901760
      %v5215 = vsub.f32 %v5148, %v5214
      %v5216 = vand.u32 %v5215, 4294901760
      %v5217 = vsub.f32 %v5215, %v5216
      %v5218 = vand.u32 %v5217, 4294901760
      %5219 = vmatpush.msra.mxu0 %v5218
      %v5220 = vand.u32 %v5146, 4294901760
      %v5221 = vsub.f32 %v5146, %v5220
      %v5222 = vand.u32 %v5221, 4294901760
      %v5223 = vsub.f32 %v5221, %v5222
      %v5224 = vand.u32 %v5223, 4294901760
      %5225 = vmatpush.msra.mxu0 %v5224
      %v5226 = vand.u32 %v5157, 4294901760
      %5227 = vmatmul.f32.gmra.mxu0 %v5226
      %v5228 = vpop.f32.mrf.mxu0
      %v5229 = vadd.f32 %v5188, %v5228
      %5230 = vdwg.mxu0
      %5231 = vmatpush.msra.mxu0 0.0
      %5232 = vmatpush.msra.mxu0 0.0
      %5233 = vmatpush.msra.mxu0 0.0
      %5234 = vmatpush.msra.mxu0 0.0
      %5235 = vmatpush.msra.mxu0 0.0
      %5236 = vmatpush.msra.mxu0 0.0
      %5237 = vmatpush.msra.mxu0 0.0
      %5238 = vmatpush.msra.mxu0 0.0
      %5239 = vmatpush.msra.mxu0 0.0
      %5240 = vmatpush.msra.mxu0 0.0
      %5241 = vmatpush.msra.mxu0 0.0
      %5242 = vmatpush.msra.mxu0 0.0
      %v5243 = vand.u32 %v5159, 4294901760
      %v5244 = vsub.f32 %v5159, %v5243
      %5245 = vmatpush.msra.mxu0 %v5244
      %v5246 = vand.u32 %v5150, 4294901760
      %v5247 = vsub.f32 %v5150, %v5246
      %5248 = vmatpush.msra.mxu0 %v5247
      %v5249 = vand.u32 %v5148, 4294901760
      %v5250 = vsub.f32 %v5148, %v5249
      %5251 = vmatpush.msra.mxu0 %v5250
      %v5252 = vand.u32 %v5146, 4294901760
      %v5253 = vsub.f32 %v5146, %v5252
      %5254 = vmatpush.msra.mxu0 %v5253
      %v5255 = vand.u32 %v5157, 4294901760
      %v5256 = vsub.f32 %v5157, %v5255
      %5257 = vmatmul.f32.gmra.mxu0 %v5256
      %v5258 = vpop.f32.mrf.mxu0
      %v5259 = vadd.f32 %v5229, %v5258
      %5260 = vdwg.mxu0
      %5261 = vmatpush.msra.mxu0 0.0
      %5262 = vmatpush.msra.mxu0 0.0
      %5263 = vmatpush.msra.mxu0 0.0
      %5264 = vmatpush.msra.mxu0 0.0
      %5265 = vmatpush.msra.mxu0 0.0
      %5266 = vmatpush.msra.mxu0 0.0
      %5267 = vmatpush.msra.mxu0 0.0
      %5268 = vmatpush.msra.mxu0 0.0
      %5269 = vmatpush.msra.mxu0 0.0
      %5270 = vmatpush.msra.mxu0 0.0
      %5271 = vmatpush.msra.mxu0 0.0
      %5272 = vmatpush.msra.mxu0 0.0
      %v5273 = vand.u32 %v5159, 4294901760
      %5274 = vmatpush.msra.mxu0 %v5273
      %v5275 = vand.u32 %v5150, 4294901760
      %5276 = vmatpush.msra.mxu0 %v5275
      %v5277 = vand.u32 %v5148, 4294901760
      %5278 = vmatpush.msra.mxu0 %v5277
      %v5279 = vand.u32 %v5146, 4294901760
      %5280 = vmatpush.msra.mxu0 %v5279
      %v5281 = vand.u32 %v5157, 4294901760
      %v5282 = vsub.f32 %v5157, %v5281
      %v5283 = vand.u32 %v5282, 4294901760
      %5284 = vmatmul.f32.gmra.mxu0 %v5283
      %v5285 = vpop.f32.mrf.mxu0
      %v5286 = vadd.f32 %v5259, %v5285
      %5287 = vdwg.mxu0
      %5288 = vmatpush.msra.mxu0 0.0
      %5289 = vmatpush.msra.mxu0 0.0
      %5290 = vmatpush.msra.mxu0 0.0
      %5291 = vmatpush.msra.mxu0 0.0
      %5292 = vmatpush.msra.mxu0 0.0
      %5293 = vmatpush.msra.mxu0 0.0
      %5294 = vmatpush.msra.mxu0 0.0
      %5295 = vmatpush.msra.mxu0 0.0
      %5296 = vmatpush.msra.mxu0 0.0
      %5297 = vmatpush.msra.mxu0 0.0
      %5298 = vmatpush.msra.mxu0 0.0
      %5299 = vmatpush.msra.mxu0 0.0
      %v5300 = vand.u32 %v5159, 4294901760
      %v5301 = vsub.f32 %v5159, %v5300
      %v5302 = vand.u32 %v5301, 4294901760
      %5303 = vmatpush.msra.mxu0 %v5302
      %v5304 = vand.u32 %v5150, 4294901760
      %v5305 = vsub.f32 %v5150, %v5304
      %v5306 = vand.u32 %v5305, 4294901760
      %5307 = vmatpush.msra.mxu0 %v5306
      %v5308 = vand.u32 %v5148, 4294901760
      %v5309 = vsub.f32 %v5148, %v5308
      %v5310 = vand.u32 %v5309, 4294901760
      %5311 = vmatpush.msra.mxu0 %v5310
      %v5312 = vand.u32 %v5146, 4294901760
      %v5313 = vsub.f32 %v5146, %v5312
      %v5314 = vand.u32 %v5313, 4294901760
      %5315 = vmatpush.msra.mxu0 %v5314
      %v5316 = vand.u32 %v5157, 4294901760
      %5317 = vmatmul.f32.gmra.mxu0 %v5316
      %v5318 = vpop.f32.mrf.mxu0
      %v5319 = vadd.f32 %v5286, %v5318
      %5320 = vdwg.mxu0
      %5321 = vmatpush.msra.mxu0 0.0
      %5322 = vmatpush.msra.mxu0 0.0
      %5323 = vmatpush.msra.mxu0 0.0
      %5324 = vmatpush.msra.mxu0 0.0
      %5325 = vmatpush.msra.mxu0 0.0
      %5326 = vmatpush.msra.mxu0 0.0
      %5327 = vmatpush.msra.mxu0 0.0
      %5328 = vmatpush.msra.mxu0 0.0
      %5329 = vmatpush.msra.mxu0 0.0
      %5330 = vmatpush.msra.mxu0 0.0
      %5331 = vmatpush.msra.mxu0 0.0
      %5332 = vmatpush.msra.mxu0 0.0
      %v5333 = vand.u32 %v5159, 4294901760
      %5334 = vmatpush.msra.mxu0 %v5333
      %v5335 = vand.u32 %v5150, 4294901760
      %5336 = vmatpush.msra.mxu0 %v5335
      %v5337 = vand.u32 %v5148, 4294901760
      %5338 = vmatpush.msra.mxu0 %v5337
      %v5339 = vand.u32 %v5146, 4294901760
      %5340 = vmatpush.msra.mxu0 %v5339
      %v5341 = vand.u32 %v5157, 4294901760
      %5342 = vmatmul.f32.gmra.mxu0 %v5341
      %v5343 = vpop.f32.mrf.mxu0
      %v5344 = vadd.f32 %v5319, %v5343
      %5345 = vdwg.mxu0
      %v5346 = vadd.f32 %v5143, %v5344
      %v5347 = vld [vmem:[%s1048] sm:$0xf]
      %5348 = vrot.lane.b32.xlu0 %v4541, 96
      %v5349 = vpop.permute.xlu0 %5348
      %5350 = vrot.lane.b32.xlu0 %v4542, 96
      %v5351 = vpop.permute.xlu0 %5350
      %5352 = vrot.lane.b32.xlu0 %v4543, 96
      %v5353 = vpop.permute.xlu0 %5352
      %5354 = vrot.lane.b32.xlu0 %v4544, 96
      %v5355 = vpop.permute.xlu0 %5354
      %v5360 = vsel %vm258, %v5347, 0
      %v5362 = vsel %vm262, %v5355, 0
      %5364 = vmatpush.msra.mxu0 0.0
      %5365 = vmatpush.msra.mxu0 0.0
      %5366 = vmatpush.msra.mxu0 0.0
      %5367 = vmatpush.msra.mxu0 0.0
      %5368 = vmatpush.msra.mxu0 0.0
      %5369 = vmatpush.msra.mxu0 0.0
      %5370 = vmatpush.msra.mxu0 0.0
      %5371 = vmatpush.msra.mxu0 0.0
      %5372 = vmatpush.msra.mxu0 0.0
      %5373 = vmatpush.msra.mxu0 0.0
      %5374 = vmatpush.msra.mxu0 0.0
      %5375 = vmatpush.msra.mxu0 0.0
      %v5376 = vand.u32 %v5362, 4294901760
      %5377 = vmatpush.msra.mxu0 %v5376
      %v5378 = vand.u32 %v5353, 4294901760
      %5379 = vmatpush.msra.mxu0 %v5378
      %v5380 = vand.u32 %v5351, 4294901760
      %5381 = vmatpush.msra.mxu0 %v5380
      %v5382 = vand.u32 %v5349, 4294901760
      %5383 = vmatpush.msra.mxu0 %v5382
      %v5384 = vand.u32 %v5360, 4294901760
      %v5385 = vsub.f32 %v5360, %v5384
      %v5386 = vand.u32 %v5385, 4294901760
      %v5387 = vsub.f32 %v5385, %v5386
      %v5388 = vand.u32 %v5387, 4294901760
      %5389 = vmatmul.f32.gmra.mxu0 %v5388
      %v5390 = vpop.f32.mrf.mxu0
      %v5391 = vadd.f32 0.0, %v5390
      %5392 = vdwg.mxu0
      %5393 = vmatpush.msra.mxu0 0.0
      %5394 = vmatpush.msra.mxu0 0.0
      %5395 = vmatpush.msra.mxu0 0.0
      %5396 = vmatpush.msra.mxu0 0.0
      %5397 = vmatpush.msra.mxu0 0.0
      %5398 = vmatpush.msra.mxu0 0.0
      %5399 = vmatpush.msra.mxu0 0.0
      %5400 = vmatpush.msra.mxu0 0.0
      %5401 = vmatpush.msra.mxu0 0.0
      %5402 = vmatpush.msra.mxu0 0.0
      %5403 = vmatpush.msra.mxu0 0.0
      %5404 = vmatpush.msra.mxu0 0.0
      %v5405 = vand.u32 %v5362, 4294901760
      %v5406 = vsub.f32 %v5362, %v5405
      %v5407 = vand.u32 %v5406, 4294901760
      %v5408 = vsub.f32 %v5406, %v5407
      %v5409 = vand.u32 %v5408, 4294901760
      %5410 = vmatpush.msra.mxu0 %v5409
      %v5411 = vand.u32 %v5353, 4294901760
      %v5412 = vsub.f32 %v5353, %v5411
      %v5413 = vand.u32 %v5412, 4294901760
      %v5414 = vsub.f32 %v5412, %v5413
      %v5415 = vand.u32 %v5414, 4294901760
      %5416 = vmatpush.msra.mxu0 %v5415
      %v5417 = vand.u32 %v5351, 4294901760
      %v5418 = vsub.f32 %v5351, %v5417
      %v5419 = vand.u32 %v5418, 4294901760
      %v5420 = vsub.f32 %v5418, %v5419
      %v5421 = vand.u32 %v5420, 4294901760
      %5422 = vmatpush.msra.mxu0 %v5421
      %v5423 = vand.u32 %v5349, 4294901760
      %v5424 = vsub.f32 %v5349, %v5423
      %v5425 = vand.u32 %v5424, 4294901760
      %v5426 = vsub.f32 %v5424, %v5425
      %v5427 = vand.u32 %v5426, 4294901760
      %5428 = vmatpush.msra.mxu0 %v5427
      %v5429 = vand.u32 %v5360, 4294901760
      %5430 = vmatmul.f32.gmra.mxu0 %v5429
      %v5431 = vpop.f32.mrf.mxu0
      %v5432 = vadd.f32 %v5391, %v5431
      %5433 = vdwg.mxu0
      %5434 = vmatpush.msra.mxu0 0.0
      %5435 = vmatpush.msra.mxu0 0.0
      %5436 = vmatpush.msra.mxu0 0.0
      %5437 = vmatpush.msra.mxu0 0.0
      %5438 = vmatpush.msra.mxu0 0.0
      %5439 = vmatpush.msra.mxu0 0.0
      %5440 = vmatpush.msra.mxu0 0.0
      %5441 = vmatpush.msra.mxu0 0.0
      %5442 = vmatpush.msra.mxu0 0.0
      %5443 = vmatpush.msra.mxu0 0.0
      %5444 = vmatpush.msra.mxu0 0.0
      %5445 = vmatpush.msra.mxu0 0.0
      %v5446 = vand.u32 %v5362, 4294901760
      %v5447 = vsub.f32 %v5362, %v5446
      %5448 = vmatpush.msra.mxu0 %v5447
      %v5449 = vand.u32 %v5353, 4294901760
      %v5450 = vsub.f32 %v5353, %v5449
      %5451 = vmatpush.msra.mxu0 %v5450
      %v5452 = vand.u32 %v5351, 4294901760
      %v5453 = vsub.f32 %v5351, %v5452
      %5454 = vmatpush.msra.mxu0 %v5453
      %v5455 = vand.u32 %v5349, 4294901760
      %v5456 = vsub.f32 %v5349, %v5455
      %5457 = vmatpush.msra.mxu0 %v5456
      %v5458 = vand.u32 %v5360, 4294901760
      %v5459 = vsub.f32 %v5360, %v5458
      %5460 = vmatmul.f32.gmra.mxu0 %v5459
      %v5461 = vpop.f32.mrf.mxu0
      %v5462 = vadd.f32 %v5432, %v5461
      %5463 = vdwg.mxu0
      %5464 = vmatpush.msra.mxu0 0.0
      %5465 = vmatpush.msra.mxu0 0.0
      %5466 = vmatpush.msra.mxu0 0.0
      %5467 = vmatpush.msra.mxu0 0.0
      %5468 = vmatpush.msra.mxu0 0.0
      %5469 = vmatpush.msra.mxu0 0.0
      %5470 = vmatpush.msra.mxu0 0.0
      %5471 = vmatpush.msra.mxu0 0.0
      %5472 = vmatpush.msra.mxu0 0.0
      %5473 = vmatpush.msra.mxu0 0.0
      %5474 = vmatpush.msra.mxu0 0.0
      %5475 = vmatpush.msra.mxu0 0.0
      %v5476 = vand.u32 %v5362, 4294901760
      %5477 = vmatpush.msra.mxu0 %v5476
      %v5478 = vand.u32 %v5353, 4294901760
      %5479 = vmatpush.msra.mxu0 %v5478
      %v5480 = vand.u32 %v5351, 4294901760
      %5481 = vmatpush.msra.mxu0 %v5480
      %v5482 = vand.u32 %v5349, 4294901760
      %5483 = vmatpush.msra.mxu0 %v5482
      %v5484 = vand.u32 %v5360, 4294901760
      %v5485 = vsub.f32 %v5360, %v5484
      %v5486 = vand.u32 %v5485, 4294901760
      %5487 = vmatmul.f32.gmra.mxu0 %v5486
      %v5488 = vpop.f32.mrf.mxu0
      %v5489 = vadd.f32 %v5462, %v5488
      %5490 = vdwg.mxu0
      %5491 = vmatpush.msra.mxu0 0.0
      %5492 = vmatpush.msra.mxu0 0.0
      %5493 = vmatpush.msra.mxu0 0.0
      %5494 = vmatpush.msra.mxu0 0.0
      %5495 = vmatpush.msra.mxu0 0.0
      %5496 = vmatpush.msra.mxu0 0.0
      %5497 = vmatpush.msra.mxu0 0.0
      %5498 = vmatpush.msra.mxu0 0.0
      %5499 = vmatpush.msra.mxu0 0.0
      %5500 = vmatpush.msra.mxu0 0.0
      %5501 = vmatpush.msra.mxu0 0.0
      %5502 = vmatpush.msra.mxu0 0.0
      %v5503 = vand.u32 %v5362, 4294901760
      %v5504 = vsub.f32 %v5362, %v5503
      %v5505 = vand.u32 %v5504, 4294901760
      %5506 = vmatpush.msra.mxu0 %v5505
      %v5507 = vand.u32 %v5353, 4294901760
      %v5508 = vsub.f32 %v5353, %v5507
      %v5509 = vand.u32 %v5508, 4294901760
      %5510 = vmatpush.msra.mxu0 %v5509
      %v5511 = vand.u32 %v5351, 4294901760
      %v5512 = vsub.f32 %v5351, %v5511
      %v5513 = vand.u32 %v5512, 4294901760
      %5514 = vmatpush.msra.mxu0 %v5513
      %v5515 = vand.u32 %v5349, 4294901760
      %v5516 = vsub.f32 %v5349, %v5515
      %v5517 = vand.u32 %v5516, 4294901760
      %5518 = vmatpush.msra.mxu0 %v5517
      %v5519 = vand.u32 %v5360, 4294901760
      %5520 = vmatmul.f32.gmra.mxu0 %v5519
      %v5521 = vpop.f32.mrf.mxu0
      %v5522 = vadd.f32 %v5489, %v5521
      %5523 = vdwg.mxu0
      %5524 = vmatpush.msra.mxu0 0.0
      %5525 = vmatpush.msra.mxu0 0.0
      %5526 = vmatpush.msra.mxu0 0.0
      %5527 = vmatpush.msra.mxu0 0.0
      %5528 = vmatpush.msra.mxu0 0.0
      %5529 = vmatpush.msra.mxu0 0.0
      %5530 = vmatpush.msra.mxu0 0.0
      %5531 = vmatpush.msra.mxu0 0.0
      %5532 = vmatpush.msra.mxu0 0.0
      %5533 = vmatpush.msra.mxu0 0.0
      %5534 = vmatpush.msra.mxu0 0.0
      %5535 = vmatpush.msra.mxu0 0.0
      %v5536 = vand.u32 %v5362, 4294901760
      %5537 = vmatpush.msra.mxu0 %v5536
      %v5538 = vand.u32 %v5353, 4294901760
      %5539 = vmatpush.msra.mxu0 %v5538
      %v5540 = vand.u32 %v5351, 4294901760
      %5541 = vmatpush.msra.mxu0 %v5540
      %v5542 = vand.u32 %v5349, 4294901760
      %5543 = vmatpush.msra.mxu0 %v5542
      %v5544 = vand.u32 %v5360, 4294901760
      %5545 = vmatmul.f32.gmra.mxu0 %v5544
      %v5546 = vpop.f32.mrf.mxu0
      %v5547 = vadd.f32 %v5522, %v5546
      %5548 = vdwg.mxu0
      %v5549 = vadd.f32 %v5346, %v5547
      %v5550 = vld [vmem:[%s1252] sm:$0xf]
      %5551 = vrot.lane.b32.xlu0 %v4541, 88
      %v5552 = vpop.permute.xlu0 %5551
      %5553 = vrot.lane.b32.xlu0 %v4542, 88
      %v5554 = vpop.permute.xlu0 %5553
      %5555 = vrot.lane.b32.xlu0 %v4543, 88
      %v5556 = vpop.permute.xlu0 %5555
      %5557 = vrot.lane.b32.xlu0 %v4544, 88
      %v5558 = vpop.permute.xlu0 %5557
      %v5563 = vsel %vm258, %v5550, 0
      %v5565 = vsel %vm262, %v5558, 0
      %5567 = vmatpush.msra.mxu0 0.0
      %5568 = vmatpush.msra.mxu0 0.0
      %5569 = vmatpush.msra.mxu0 0.0
      %5570 = vmatpush.msra.mxu0 0.0
      %5571 = vmatpush.msra.mxu0 0.0
      %5572 = vmatpush.msra.mxu0 0.0
      %5573 = vmatpush.msra.mxu0 0.0
      %5574 = vmatpush.msra.mxu0 0.0
      %5575 = vmatpush.msra.mxu0 0.0
      %5576 = vmatpush.msra.mxu0 0.0
      %5577 = vmatpush.msra.mxu0 0.0
      %5578 = vmatpush.msra.mxu0 0.0
      %v5579 = vand.u32 %v5565, 4294901760
      %5580 = vmatpush.msra.mxu0 %v5579
      %v5581 = vand.u32 %v5556, 4294901760
      %5582 = vmatpush.msra.mxu0 %v5581
      %v5583 = vand.u32 %v5554, 4294901760
      %5584 = vmatpush.msra.mxu0 %v5583
      %v5585 = vand.u32 %v5552, 4294901760
      %5586 = vmatpush.msra.mxu0 %v5585
      %v5587 = vand.u32 %v5563, 4294901760
      %v5588 = vsub.f32 %v5563, %v5587
      %v5589 = vand.u32 %v5588, 4294901760
      %v5590 = vsub.f32 %v5588, %v5589
      %v5591 = vand.u32 %v5590, 4294901760
      %5592 = vmatmul.f32.gmra.mxu0 %v5591
      %v5593 = vpop.f32.mrf.mxu0
      %v5594 = vadd.f32 0.0, %v5593
      %5595 = vdwg.mxu0
      %5596 = vmatpush.msra.mxu0 0.0
      %5597 = vmatpush.msra.mxu0 0.0
      %5598 = vmatpush.msra.mxu0 0.0
      %5599 = vmatpush.msra.mxu0 0.0
      %5600 = vmatpush.msra.mxu0 0.0
      %5601 = vmatpush.msra.mxu0 0.0
      %5602 = vmatpush.msra.mxu0 0.0
      %5603 = vmatpush.msra.mxu0 0.0
      %5604 = vmatpush.msra.mxu0 0.0
      %5605 = vmatpush.msra.mxu0 0.0
      %5606 = vmatpush.msra.mxu0 0.0
      %5607 = vmatpush.msra.mxu0 0.0
      %v5608 = vand.u32 %v5565, 4294901760
      %v5609 = vsub.f32 %v5565, %v5608
      %v5610 = vand.u32 %v5609, 4294901760
      %v5611 = vsub.f32 %v5609, %v5610
      %v5612 = vand.u32 %v5611, 4294901760
      %5613 = vmatpush.msra.mxu0 %v5612
      %v5614 = vand.u32 %v5556, 4294901760
      %v5615 = vsub.f32 %v5556, %v5614
      %v5616 = vand.u32 %v5615, 4294901760
      %v5617 = vsub.f32 %v5615, %v5616
      %v5618 = vand.u32 %v5617, 4294901760
      %5619 = vmatpush.msra.mxu0 %v5618
      %v5620 = vand.u32 %v5554, 4294901760
      %v5621 = vsub.f32 %v5554, %v5620
      %v5622 = vand.u32 %v5621, 4294901760
      %v5623 = vsub.f32 %v5621, %v5622
      %v5624 = vand.u32 %v5623, 4294901760
      %5625 = vmatpush.msra.mxu0 %v5624
      %v5626 = vand.u32 %v5552, 4294901760
      %v5627 = vsub.f32 %v5552, %v5626
      %v5628 = vand.u32 %v5627, 4294901760
      %v5629 = vsub.f32 %v5627, %v5628
      %v5630 = vand.u32 %v5629, 4294901760
      %5631 = vmatpush.msra.mxu0 %v5630
      %v5632 = vand.u32 %v5563, 4294901760
      %5633 = vmatmul.f32.gmra.mxu0 %v5632
      %v5634 = vpop.f32.mrf.mxu0
      %v5635 = vadd.f32 %v5594, %v5634
      %5636 = vdwg.mxu0
      %5637 = vmatpush.msra.mxu0 0.0
      %5638 = vmatpush.msra.mxu0 0.0
      %5639 = vmatpush.msra.mxu0 0.0
      %5640 = vmatpush.msra.mxu0 0.0
      %5641 = vmatpush.msra.mxu0 0.0
      %5642 = vmatpush.msra.mxu0 0.0
      %5643 = vmatpush.msra.mxu0 0.0
      %5644 = vmatpush.msra.mxu0 0.0
      %5645 = vmatpush.msra.mxu0 0.0
      %5646 = vmatpush.msra.mxu0 0.0
      %5647 = vmatpush.msra.mxu0 0.0
      %5648 = vmatpush.msra.mxu0 0.0
      %v5649 = vand.u32 %v5565, 4294901760
      %v5650 = vsub.f32 %v5565, %v5649
      %5651 = vmatpush.msra.mxu0 %v5650
      %v5652 = vand.u32 %v5556, 4294901760
      %v5653 = vsub.f32 %v5556, %v5652
      %5654 = vmatpush.msra.mxu0 %v5653
      %v5655 = vand.u32 %v5554, 4294901760
      %v5656 = vsub.f32 %v5554, %v5655
      %5657 = vmatpush.msra.mxu0 %v5656
      %v5658 = vand.u32 %v5552, 4294901760
      %v5659 = vsub.f32 %v5552, %v5658
      %5660 = vmatpush.msra.mxu0 %v5659
      %v5661 = vand.u32 %v5563, 4294901760
      %v5662 = vsub.f32 %v5563, %v5661
      %5663 = vmatmul.f32.gmra.mxu0 %v5662
      %v5664 = vpop.f32.mrf.mxu0
      %v5665 = vadd.f32 %v5635, %v5664
      %5666 = vdwg.mxu0
      %5667 = vmatpush.msra.mxu0 0.0
      %5668 = vmatpush.msra.mxu0 0.0
      %5669 = vmatpush.msra.mxu0 0.0
      %5670 = vmatpush.msra.mxu0 0.0
      %5671 = vmatpush.msra.mxu0 0.0
      %5672 = vmatpush.msra.mxu0 0.0
      %5673 = vmatpush.msra.mxu0 0.0
      %5674 = vmatpush.msra.mxu0 0.0
      %5675 = vmatpush.msra.mxu0 0.0
      %5676 = vmatpush.msra.mxu0 0.0
      %5677 = vmatpush.msra.mxu0 0.0
      %5678 = vmatpush.msra.mxu0 0.0
      %v5679 = vand.u32 %v5565, 4294901760
      %5680 = vmatpush.msra.mxu0 %v5679
      %v5681 = vand.u32 %v5556, 4294901760
      %5682 = vmatpush.msra.mxu0 %v5681
      %v5683 = vand.u32 %v5554, 4294901760
      %5684 = vmatpush.msra.mxu0 %v5683
      %v5685 = vand.u32 %v5552, 4294901760
      %5686 = vmatpush.msra.mxu0 %v5685
      %v5687 = vand.u32 %v5563, 4294901760
      %v5688 = vsub.f32 %v5563, %v5687
      %v5689 = vand.u32 %v5688, 4294901760
      %5690 = vmatmul.f32.gmra.mxu0 %v5689
      %v5691 = vpop.f32.mrf.mxu0
      %v5692 = vadd.f32 %v5665, %v5691
      %5693 = vdwg.mxu0
      %5694 = vmatpush.msra.mxu0 0.0
      %5695 = vmatpush.msra.mxu0 0.0
      %5696 = vmatpush.msra.mxu0 0.0
      %5697 = vmatpush.msra.mxu0 0.0
      %5698 = vmatpush.msra.mxu0 0.0
      %5699 = vmatpush.msra.mxu0 0.0
      %5700 = vmatpush.msra.mxu0 0.0
      %5701 = vmatpush.msra.mxu0 0.0
      %5702 = vmatpush.msra.mxu0 0.0
      %5703 = vmatpush.msra.mxu0 0.0
      %5704 = vmatpush.msra.mxu0 0.0
      %5705 = vmatpush.msra.mxu0 0.0
      %v5706 = vand.u32 %v5565, 4294901760
      %v5707 = vsub.f32 %v5565, %v5706
      %v5708 = vand.u32 %v5707, 4294901760
      %5709 = vmatpush.msra.mxu0 %v5708
      %v5710 = vand.u32 %v5556, 4294901760
      %v5711 = vsub.f32 %v5556, %v5710
      %v5712 = vand.u32 %v5711, 4294901760
      %5713 = vmatpush.msra.mxu0 %v5712
      %v5714 = vand.u32 %v5554, 4294901760
      %v5715 = vsub.f32 %v5554, %v5714
      %v5716 = vand.u32 %v5715, 4294901760
      %5717 = vmatpush.msra.mxu0 %v5716
      %v5718 = vand.u32 %v5552, 4294901760
      %v5719 = vsub.f32 %v5552, %v5718
      %v5720 = vand.u32 %v5719, 4294901760
      %5721 = vmatpush.msra.mxu0 %v5720
      %v5722 = vand.u32 %v5563, 4294901760
      %5723 = vmatmul.f32.gmra.mxu0 %v5722
      %v5724 = vpop.f32.mrf.mxu0
      %v5725 = vadd.f32 %v5692, %v5724
      %5726 = vdwg.mxu0
      %5727 = vmatpush.msra.mxu0 0.0
      %5728 = vmatpush.msra.mxu0 0.0
      %5729 = vmatpush.msra.mxu0 0.0
      %5730 = vmatpush.msra.mxu0 0.0
      %5731 = vmatpush.msra.mxu0 0.0
      %5732 = vmatpush.msra.mxu0 0.0
      %5733 = vmatpush.msra.mxu0 0.0
      %5734 = vmatpush.msra.mxu0 0.0
      %5735 = vmatpush.msra.mxu0 0.0
      %5736 = vmatpush.msra.mxu0 0.0
      %5737 = vmatpush.msra.mxu0 0.0
      %5738 = vmatpush.msra.mxu0 0.0
      %v5739 = vand.u32 %v5565, 4294901760
      %5740 = vmatpush.msra.mxu0 %v5739
      %v5741 = vand.u32 %v5556, 4294901760
      %5742 = vmatpush.msra.mxu0 %v5741
      %v5743 = vand.u32 %v5554, 4294901760
      %5744 = vmatpush.msra.mxu0 %v5743
      %v5745 = vand.u32 %v5552, 4294901760
      %5746 = vmatpush.msra.mxu0 %v5745
      %v5747 = vand.u32 %v5563, 4294901760
      %5748 = vmatmul.f32.gmra.mxu0 %v5747
      %v5749 = vpop.f32.mrf.mxu0
      %v5750 = vadd.f32 %v5725, %v5749
      %5751 = vdwg.mxu0
      %v5752 = vadd.f32 %v5549, %v5750
      %v5753 = vld [vmem:[%s1456] sm:$0xf]
      %5754 = vrot.lane.b32.xlu0 %v4541, 80
      %v5755 = vpop.permute.xlu0 %5754
      %5756 = vrot.lane.b32.xlu0 %v4542, 80
      %v5757 = vpop.permute.xlu0 %5756
      %5758 = vrot.lane.b32.xlu0 %v4543, 80
      %v5759 = vpop.permute.xlu0 %5758
      %5760 = vrot.lane.b32.xlu0 %v4544, 80
      %v5761 = vpop.permute.xlu0 %5760
      %v5766 = vsel %vm258, %v5753, 0
      %v5768 = vsel %vm262, %v5761, 0
      %5770 = vmatpush.msra.mxu0 0.0
      %5771 = vmatpush.msra.mxu0 0.0
      %5772 = vmatpush.msra.mxu0 0.0
      %5773 = vmatpush.msra.mxu0 0.0
      %5774 = vmatpush.msra.mxu0 0.0
      %5775 = vmatpush.msra.mxu0 0.0
      %5776 = vmatpush.msra.mxu0 0.0
      %5777 = vmatpush.msra.mxu0 0.0
      %5778 = vmatpush.msra.mxu0 0.0
      %5779 = vmatpush.msra.mxu0 0.0
      %5780 = vmatpush.msra.mxu0 0.0
      %5781 = vmatpush.msra.mxu0 0.0
      %v5782 = vand.u32 %v5768, 4294901760
      %5783 = vmatpush.msra.mxu0 %v5782
      %v5784 = vand.u32 %v5759, 4294901760
      %5785 = vmatpush.msra.mxu0 %v5784
      %v5786 = vand.u32 %v5757, 4294901760
      %5787 = vmatpush.msra.mxu0 %v5786
      %v5788 = vand.u32 %v5755, 4294901760
      %5789 = vmatpush.msra.mxu0 %v5788
      %v5790 = vand.u32 %v5766, 4294901760
      %v5791 = vsub.f32 %v5766, %v5790
      %v5792 = vand.u32 %v5791, 4294901760
      %v5793 = vsub.f32 %v5791, %v5792
      %v5794 = vand.u32 %v5793, 4294901760
      %5795 = vmatmul.f32.gmra.mxu0 %v5794
      %v5796 = vpop.f32.mrf.mxu0
      %v5797 = vadd.f32 0.0, %v5796
      %5798 = vdwg.mxu0
      %5799 = vmatpush.msra.mxu0 0.0
      %5800 = vmatpush.msra.mxu0 0.0
      %5801 = vmatpush.msra.mxu0 0.0
      %5802 = vmatpush.msra.mxu0 0.0
      %5803 = vmatpush.msra.mxu0 0.0
      %5804 = vmatpush.msra.mxu0 0.0
      %5805 = vmatpush.msra.mxu0 0.0
      %5806 = vmatpush.msra.mxu0 0.0
      %5807 = vmatpush.msra.mxu0 0.0
      %5808 = vmatpush.msra.mxu0 0.0
      %5809 = vmatpush.msra.mxu0 0.0
      %5810 = vmatpush.msra.mxu0 0.0
      %v5811 = vand.u32 %v5768, 4294901760
      %v5812 = vsub.f32 %v5768, %v5811
      %v5813 = vand.u32 %v5812, 4294901760
      %v5814 = vsub.f32 %v5812, %v5813
      %v5815 = vand.u32 %v5814, 4294901760
      %5816 = vmatpush.msra.mxu0 %v5815
      %v5817 = vand.u32 %v5759, 4294901760
      %v5818 = vsub.f32 %v5759, %v5817
      %v5819 = vand.u32 %v5818, 4294901760
      %v5820 = vsub.f32 %v5818, %v5819
      %v5821 = vand.u32 %v5820, 4294901760
      %5822 = vmatpush.msra.mxu0 %v5821
      %v5823 = vand.u32 %v5757, 4294901760
      %v5824 = vsub.f32 %v5757, %v5823
      %v5825 = vand.u32 %v5824, 4294901760
      %v5826 = vsub.f32 %v5824, %v5825
      %v5827 = vand.u32 %v5826, 4294901760
      %5828 = vmatpush.msra.mxu0 %v5827
      %v5829 = vand.u32 %v5755, 4294901760
      %v5830 = vsub.f32 %v5755, %v5829
      %v5831 = vand.u32 %v5830, 4294901760
      %v5832 = vsub.f32 %v5830, %v5831
      %v5833 = vand.u32 %v5832, 4294901760
      %5834 = vmatpush.msra.mxu0 %v5833
      %v5835 = vand.u32 %v5766, 4294901760
      %5836 = vmatmul.f32.gmra.mxu0 %v5835
      %v5837 = vpop.f32.mrf.mxu0
      %v5838 = vadd.f32 %v5797, %v5837
      %5839 = vdwg.mxu0
      %5840 = vmatpush.msra.mxu0 0.0
      %5841 = vmatpush.msra.mxu0 0.0
      %5842 = vmatpush.msra.mxu0 0.0
      %5843 = vmatpush.msra.mxu0 0.0
      %5844 = vmatpush.msra.mxu0 0.0
      %5845 = vmatpush.msra.mxu0 0.0
      %5846 = vmatpush.msra.mxu0 0.0
      %5847 = vmatpush.msra.mxu0 0.0
      %5848 = vmatpush.msra.mxu0 0.0
      %5849 = vmatpush.msra.mxu0 0.0
      %5850 = vmatpush.msra.mxu0 0.0
      %5851 = vmatpush.msra.mxu0 0.0
      %v5852 = vand.u32 %v5768, 4294901760
      %v5853 = vsub.f32 %v5768, %v5852
      %5854 = vmatpush.msra.mxu0 %v5853
      %v5855 = vand.u32 %v5759, 4294901760
      %v5856 = vsub.f32 %v5759, %v5855
      %5857 = vmatpush.msra.mxu0 %v5856
      %v5858 = vand.u32 %v5757, 4294901760
      %v5859 = vsub.f32 %v5757, %v5858
      %5860 = vmatpush.msra.mxu0 %v5859
      %v5861 = vand.u32 %v5755, 4294901760
      %v5862 = vsub.f32 %v5755, %v5861
      %5863 = vmatpush.msra.mxu0 %v5862
      %v5864 = vand.u32 %v5766, 4294901760
      %v5865 = vsub.f32 %v5766, %v5864
      %5866 = vmatmul.f32.gmra.mxu0 %v5865
      %v5867 = vpop.f32.mrf.mxu0
      %v5868 = vadd.f32 %v5838, %v5867
      %5869 = vdwg.mxu0
      %5870 = vmatpush.msra.mxu0 0.0
      %5871 = vmatpush.msra.mxu0 0.0
      %5872 = vmatpush.msra.mxu0 0.0
      %5873 = vmatpush.msra.mxu0 0.0
      %5874 = vmatpush.msra.mxu0 0.0
      %5875 = vmatpush.msra.mxu0 0.0
      %5876 = vmatpush.msra.mxu0 0.0
      %5877 = vmatpush.msra.mxu0 0.0
      %5878 = vmatpush.msra.mxu0 0.0
      %5879 = vmatpush.msra.mxu0 0.0
      %5880 = vmatpush.msra.mxu0 0.0
      %5881 = vmatpush.msra.mxu0 0.0
      %v5882 = vand.u32 %v5768, 4294901760
      %5883 = vmatpush.msra.mxu0 %v5882
      %v5884 = vand.u32 %v5759, 4294901760
      %5885 = vmatpush.msra.mxu0 %v5884
      %v5886 = vand.u32 %v5757, 4294901760
      %5887 = vmatpush.msra.mxu0 %v5886
      %v5888 = vand.u32 %v5755, 4294901760
      %5889 = vmatpush.msra.mxu0 %v5888
      %v5890 = vand.u32 %v5766, 4294901760
      %v5891 = vsub.f32 %v5766, %v5890
      %v5892 = vand.u32 %v5891, 4294901760
      %5893 = vmatmul.f32.gmra.mxu0 %v5892
      %v5894 = vpop.f32.mrf.mxu0
      %v5895 = vadd.f32 %v5868, %v5894
      %5896 = vdwg.mxu0
      %5897 = vmatpush.msra.mxu0 0.0
      %5898 = vmatpush.msra.mxu0 0.0
      %5899 = vmatpush.msra.mxu0 0.0
      %5900 = vmatpush.msra.mxu0 0.0
      %5901 = vmatpush.msra.mxu0 0.0
      %5902 = vmatpush.msra.mxu0 0.0
      %5903 = vmatpush.msra.mxu0 0.0
      %5904 = vmatpush.msra.mxu0 0.0
      %5905 = vmatpush.msra.mxu0 0.0
      %5906 = vmatpush.msra.mxu0 0.0
      %5907 = vmatpush.msra.mxu0 0.0
      %5908 = vmatpush.msra.mxu0 0.0
      %v5909 = vand.u32 %v5768, 4294901760
      %v5910 = vsub.f32 %v5768, %v5909
      %v5911 = vand.u32 %v5910, 4294901760
      %5912 = vmatpush.msra.mxu0 %v5911
      %v5913 = vand.u32 %v5759, 4294901760
      %v5914 = vsub.f32 %v5759, %v5913
      %v5915 = vand.u32 %v5914, 4294901760
      %5916 = vmatpush.msra.mxu0 %v5915
      %v5917 = vand.u32 %v5757, 4294901760
      %v5918 = vsub.f32 %v5757, %v5917
      %v5919 = vand.u32 %v5918, 4294901760
      %5920 = vmatpush.msra.mxu0 %v5919
      %v5921 = vand.u32 %v5755, 4294901760
      %v5922 = vsub.f32 %v5755, %v5921
      %v5923 = vand.u32 %v5922, 4294901760
      %5924 = vmatpush.msra.mxu0 %v5923
      %v5925 = vand.u32 %v5766, 4294901760
      %5926 = vmatmul.f32.gmra.mxu0 %v5925
      %v5927 = vpop.f32.mrf.mxu0
      %v5928 = vadd.f32 %v5895, %v5927
      %5929 = vdwg.mxu0
      %5930 = vmatpush.msra.mxu0 0.0
      %5931 = vmatpush.msra.mxu0 0.0
      %5932 = vmatpush.msra.mxu0 0.0
      %5933 = vmatpush.msra.mxu0 0.0
      %5934 = vmatpush.msra.mxu0 0.0
      %5935 = vmatpush.msra.mxu0 0.0
      %5936 = vmatpush.msra.mxu0 0.0
      %5937 = vmatpush.msra.mxu0 0.0
      %5938 = vmatpush.msra.mxu0 0.0
      %5939 = vmatpush.msra.mxu0 0.0
      %5940 = vmatpush.msra.mxu0 0.0
      %5941 = vmatpush.msra.mxu0 0.0
      %v5942 = vand.u32 %v5768, 4294901760
      %5943 = vmatpush.msra.mxu0 %v5942
      %v5944 = vand.u32 %v5759, 4294901760
      %5945 = vmatpush.msra.mxu0 %v5944
      %v5946 = vand.u32 %v5757, 4294901760
      %5947 = vmatpush.msra.mxu0 %v5946
      %v5948 = vand.u32 %v5755, 4294901760
      %5949 = vmatpush.msra.mxu0 %v5948
      %v5950 = vand.u32 %v5766, 4294901760
      %5951 = vmatmul.f32.gmra.mxu0 %v5950
      %v5952 = vpop.f32.mrf.mxu0
      %v5953 = vadd.f32 %v5928, %v5952
      %5954 = vdwg.mxu0
      %v5955 = vadd.f32 %v5752, %v5953
      %v5956 = vld [vmem:[%s2] sm:$0xf]
      %5958 = vset.pattern.permute.xlu0 0
      %5959 = vperm.xlu0 %5958, %v5956
      %v5960 = vpop.permute.xlu0 %5959
      %v5962 = vadd.f32 %v5955, %v5960
      %vm5963 = vcmp.gt.f32.partialorder %v5962, 0.0
      %v5964 = vmin.f32 %v5962, 0.0
      %v5965 = vmul.f32 %v5964, 1.442695
      %v5966 = vpow.pop %v5965
      %v5967 = vsub.f32 %v5966, 1.0
      %v5968 = vsel %vm5963, %v5962, %v5967
      %s5969 = scalar_lea.vmem %s231, 12
      %5970 = vst.msk [vmem:[%s5969] sm:$0xf] %vm1673, %v5968
      %v5971 = vld [vmem:[%s3] sm:$0x1]
      %vm5972 = vcmp.eq.s32.totalorder %v5971, 0
      %v5973 = vlaneseq
      %v5974 = vand.u32 %v5973, 127
      %vm5975 = vcmp.lt.s32.totalorder %v5974, 8
      %v5976 = vmax.f32 %v1672, %v3104
      %v5977 = vmax.f32 %v4536, %v5968
      %v5978 = vmax.f32 %v5976, %v5977
      %vm5979 = vcmask 1048064
      %5980 = vrot.lane.b32.xlu0 %v3104, 64
      %v5981 = vpop.permute.xlu0 %5980
      %v5982 = vsel %vm5979, %v5981, %v3104
      %5983 = vrot.lane.b32.xlu0 %v5982, 64
      %v5984 = vpop.permute.xlu0 %5983
      %v5985 = vsel %vm5979, %v5984, %v3104
      %v5986 = vsel %vm5972, 1, 0
      %v5987 = vperm.slane %v5986, 0
      %vm5988 = vcmp.eq.s32.totalorder %v5987, 1
      %5990 = vrot.lane.b32.xlu0 %v5985, 65
      %v5991 = vpop.permute.xlu0 %5990
      %v5993 = vsel %vm5988, -inf, %v5991
      %v5994 = vmax.f32 %v5978, %v5993
      %5995 = vrot.lane.b32.xlu0 %v4536, 64
      %v5996 = vpop.permute.xlu0 %5995
      %v5997 = vsel %vm5979, %v5996, %v4536
      %5998 = vrot.lane.b32.xlu0 %v5997, 64
      %v5999 = vpop.permute.xlu0 %5998
      %v6000 = vsel %vm5979, %v5999, %v4536
      %v6001 = vsel %vm5975, 1, 0
      %vm6002 = vcmp.eq.s32.totalorder %v6001, 1
      %6004 = vrot.lane.b32.xlu0 %v6000, 72
      %v6005 = vpop.permute.xlu0 %6004
      %v6007 = vsel %vm6002, -inf, %v6005
      %v6008 = vmax.f32 %v5994, %v6007
      %6009 = vrot.lane.b32.xlu0 %v5968, 64
      %v6010 = vpop.permute.xlu0 %6009
      %v6011 = vsel %vm5979, %v6010, %v5968
      %6012 = vrot.lane.b32.xlu0 %v6011, 64
      %v6013 = vpop.permute.xlu0 %6012
      %v6014 = vsel %vm5979, %v6013, %v5968
      %6016 = vrot.lane.b32.xlu0 %v6014, 65
      %v6017 = vpop.permute.xlu0 %6016
      %v6019 = vsel %vm5988, -inf, %v6017
      %v6020 = vmax.f32 %v6008, %v6019
      %6021 = vrot.lane.b32.xlu0 %v6014, 72
      %v6022 = vpop.permute.xlu0 %6021
      %v6024 = vsel %vm6002, -inf, %v6022
      %v6025 = vmax.f32 %v6020, %v6024
      %vm6026 = vmor %vm5975, %vm5972
      %v6027 = vsel %vm6026, 1, 0
      %v6028 = vperm.slane %v6027, 0
      %vm6029 = vcmp.eq.s32.totalorder %v6028, 1
      %6030 = vrot.lane.b32.xlu0 %v6014, 73
      %v6031 = vpop.permute.xlu0 %6030
      %v6033 = vsel %vm6029, -inf, %v6031
      %v6034 = vmax.f32 %v6025, %v6033
      %6035 = vst.msk [vmem:[%s235] sm:$0xf] %vm1673, %v6034
      %p6036 = scmp.lt.s32.totalorder %s17, 1
      %s6037 = scalar_select %p6036, %s17, 1
      %s6038 = smul.addr %s6037, 4
      %s6039 = smul.addr %s6038, 4
      %s6040 = scalar_lea.vmem %s4, %s6039
      %p6041 = scmp.lt.s32.totalorder %s17, 1
      %s6042 = scalar_select %p6041, %s17, 1
      %s6043 = smul.addr %s6042, 4
      %s6044 = scalar_lea.vmem %s5, %s6043
      // Predicated region
      $region37: #{l0sx_forward.1} parent=35 // pred_check
        %p6045 = pneg %p124
      $region38: #{l0sx_forward.1} parent=35 // pred_check_branch
        %6047 = sbr.rel (%p6045) target = $region40
      $region39: #{l0sx_forward.1} parent=35 // pred_region
        _
      $region40: #{l0sx_forward.1} parent=35 // pred_fallthru
        _
      // Predicated region
      $region41: #{l0sx_forward.1} parent=35 // pred_check
        %p6048 = pneg %p150
      $region42: #{l0sx_forward.1} parent=35 // pred_check_branch
        %6050 = sbr.rel (%p6048) target = $region44
      $region43: #{l0sx_forward.1} parent=35 // pred_region
        _
      $region44: #{l0sx_forward.1} parent=35 // pred_fallthru
        _
    $region36: #{l0sx_forward.1} parent=5 // pred_fallthru
      _
    %p6051 = scmp.le.s32.totalorder 2, %s12
    // Predicated region
    $region45: #{l0sx_forward.1} parent=5 // pred_check
      %p6052 = pneg %p6051
    $region46: #{l0sx_forward.1} parent=5 // pred_check_branch
      %6054 = sbr.rel (%p6052) target = $region48
    $region47: #{l0sx_forward.1} parent=5 // pred_region
      %s6055 = ssub.s32 %s12, 2
      // Predicated region
      $region49: #{l0sx_forward.1} parent=47 // pred_check
        %p6056 = pneg %p130
      $region50: #{l0sx_forward.1} parent=47 // pred_check_branch
        %6058 = sbr.rel (%p6056) target = $region52
      $region51: #{l0sx_forward.1} parent=47 // pred_region
        %p6059 = scmp.lt.s32.totalorder %s18, 1
        %s6060 = scalar_select %p6059, %s18, 1
        %s6061 = smul.addr %s6060, 4
        %s6062 = smul.addr %s6061, 4
        %s6063 = scalar_lea.vmem %s4, %s6062
      $region52: #{l0sx_forward.1} parent=47 // pred_fallthru
        _
      // Predicated region
      $region53: #{l0sx_forward.1} parent=47 // pred_check
        %p6064 = pneg %p156
      $region54: #{l0sx_forward.1} parent=47 // pred_check_branch
        %6066 = sbr.rel (%p6064) target = $region56
      $region55: #{l0sx_forward.1} parent=47 // pred_region
        %p6067 = scmp.lt.s32.totalorder %s18, 1
        %s6068 = scalar_select %p6067, %s18, 1
        %s6069 = smul.addr %s6068, 4
        %s6070 = scalar_lea.vmem %s5, %s6069
      $region56: #{l0sx_forward.1} parent=47 // pred_fallthru
        _
    $region48: #{l0sx_forward.1} parent=5 // pred_fallthru
      _
  $region6: #{l0sx_forward.1} parent=0 // loop_footer
    %s16 = sadd.s32 1, %s12
  $region7: #{l0sx_forward.1} parent=0 // loop_footer_branch
    %11 = sbr.rel target = $region3
  $region8: #{l0sx_forward.1} parent=0 // loop_exit
    _

</llo_original>
